<compile_context>
chip_gen: v7x
topology: tpu7x:2x2x1
jax: 0.10.0
libtpu: 0.0.40
codegen_flags: <defaults>
</compile_context>

<pallas_src>
import functools

import jax
import jax.numpy as jnp
from jax import lax
from jax.experimental import pallas as pl
from jax.experimental.pallas import tpu as pltpu

HEAD_SIZE_DIVISOR = 8
LN_X_EPS = 1e-5 * (HEAD_SIZE_DIVISOR ** 2)   # GroupNorm eps used by ln_x in RWKV v7


def _vmem_limit_bytes():
    """Generation-dependent scoped-VMEM budget: big on v5e/v6e, capped on v7x."""
    try:
        cap = int(pltpu.get_tpu_info().vmem_capacity_bytes)
    except Exception:
        return 32 * 1024 * 1024              # conservative fallback, works everywhere
    if cap >= 100 * 1024 * 1024:             # v5e / v6e: 128 MiB physical
        return 64 * 1024 * 1024
    return 32 * 1024 * 1024                  # v7x: 64 MiB physical -> leave headroom


_VMEM_LIMIT = _vmem_limit_bytes()


def _cparams(*sem):
    return pltpu.CompilerParams(dimension_semantics=sem,
                                vmem_limit_bytes=_VMEM_LIMIT)


def _pick_tile(dim, prefs):
    """Largest preferred tile that evenly divides `dim` (full dim as fallback)."""
    for p in prefs:
        if dim % p == 0:
            return p
    return dim


# -------------------- elementwise helpers (kernel-safe) ----------------------

def _ident(x):
    return x


def _sigmoid(x):
    return 1.0 / (1.0 + jnp.exp(-x))


def _relu_sq(x):
    r = jnp.maximum(x, 0.0)
    return r * r


def _softplus(x):
    return jnp.maximum(x, 0.0) + jnp.log(1.0 + jnp.exp(-jnp.abs(x)))


def _w_act(x):                      # -softplus(-x) - 0.5
    return -_softplus(-x) - 0.5


# ----------------------------- matmul kernels --------------------------------
# All matmuls: bf16 operands on the MXU, f32 VMEM accumulator, fused prologue /
# bias / epilogue, ("parallel","parallel","arbitrary") grid semantics.

def _mm_kernel(*refs, prologue, epilogue, has_bias):
    if has_bias:
        x_ref, w_ref, b_ref, o_ref, acc_ref = refs
    else:
        x_ref, w_ref, o_ref, acc_ref = refs
        b_ref = None

    @pl.when(pl.program_id(2) == 0)
    def _init():
        acc_ref[...] = jnp.zeros_like(acc_ref)

    x = prologue(x_ref[...].astype(jnp.float32)).astype(jnp.bfloat16)
    acc_ref[...] += jnp.dot(x, w_ref[...], preferred_element_type=jnp.float32)

    @pl.when(pl.program_id(2) == pl.num_programs(2) - 1)
    def _done():
        acc = acc_ref[...]
        if has_bias:
            acc = acc + b_ref[...]
        o_ref[...] = epilogue(acc).astype(o_ref.dtype)


def _mm_gated_kernel(x_ref, g_ref, w_ref, o_ref, acc_ref):
    @pl.when(pl.program_id(2) == 0)
    def _init():
        acc_ref[...] = jnp.zeros_like(acc_ref)

    xg = (x_ref[...].astype(jnp.float32) *
          g_ref[...].astype(jnp.float32)).astype(jnp.bfloat16)
    acc_ref[...] += jnp.dot(xg, w_ref[...], preferred_element_type=jnp.float32)

    @pl.when(pl.program_id(2) == pl.num_programs(2) - 1)
    def _done():
        o_ref[...] = acc_ref[...].astype(o_ref.dtype)


def _mm_dual_kernel(x1_ref, x2_ref, w1_ref, w2_ref, o_ref, acc_ref, *, epilogue):
    @pl.when(pl.program_id(2) == 0)
    def _init():
        acc_ref[...] = jnp.zeros_like(acc_ref)

    acc_ref[...] += jnp.dot(x1_ref[...].astype(jnp.bfloat16), w1_ref[...],
                            preferred_element_type=jnp.float32)
    acc_ref[...] += jnp.dot(x2_ref[...].astype(jnp.bfloat16), w2_ref[...],
                            preferred_element_type=jnp.float32)

    @pl.when(pl.program_id(2) == pl.num_programs(2) - 1)
    def _done():
        o_ref[...] = epilogue(acc_ref[...]).astype(o_ref.dtype)


def _mm_grid(M, N, K):
    # Never starve the MXU: keep tm >= 128 unless M itself is small; megacore
    # parallelism can come from the N axis.
    tm = _pick_tile(M, (512, 256, 128)) if M >= 128 else M
    tn = _pick_tile(N, (256, 128))
    tk = _pick_tile(K, (1024, 512, 256, 128))
    return tm, tn, tk, (M // tm, N // tn, K // tk)


def pallas_matmul(x, w, bias=None, prologue=_ident, epilogue=_ident):
    """(M,K) @ (K,N) (+bias) with fused elementwise prologue/epilogue."""
    M, K = x.shape
    K2, N = w.shape
    assert K == K2
    tm, tn, tk, grid = _mm_grid(M, N, K)
    has_bias = bias is not None
    in_specs = [pl.BlockSpec((tm, tk), lambda i, j, k: (i, k)),
                pl.BlockSpec((tk, tn), lambda i, j, k: (k, j))]
    args = [x, w]
    if has_bias:
        in_specs.append(pl.BlockSpec((1, tn), lambda i, j, k: (0, j)))
        args.append(bias.reshape(1, N))
    return pl.pallas_call(
        functools.partial(_mm_kernel, prologue=prologue, epilogue=epilogue,
                          has_bias=has_bias),
        out_shape=jax.ShapeDtypeStruct((M, N), jnp.float32),
        grid=grid,
        in_specs=in_specs,
        out_specs=pl.BlockSpec((tm, tn), lambda i, j, k: (i, j)),
        scratch_shapes=[pltpu.VMEM((tm, tn), jnp.float32)],
        compiler_params=_cparams("parallel", "parallel", "arbitrary"),
    )(*args)


def pallas_matmul_gated(x, g, w):
    """(x*g) @ w  with the gate fused into the matmul prologue."""
    M, K = x.shape
    _, N = w.shape
    tm, tn, tk, grid = _mm_grid(M, N, K)
    xspec = pl.BlockSpec((tm, tk), lambda i, j, k: (i, k))
    return pl.pallas_call(
        _mm_gated_kernel,
        out_shape=jax.ShapeDtypeStruct((M, N), jnp.float32),
        grid=grid,
        in_specs=[xspec, xspec, pl.BlockSpec((tk, tn), lambda i, j, k: (k, j))],
        out_specs=pl.BlockSpec((tm, tn), lambda i, j, k: (i, j)),
        scratch_shapes=[pltpu.VMEM((tm, tn), jnp.float32)],
        compiler_params=_cparams("parallel", "parallel", "arbitrary"),
    )(x, g, w)


def pallas_matmul_dual(x1, x2, w1, w2, epilogue=_ident):
    """x1 @ w1 + x2 @ w2 (token-shift mix folded into the weights)."""
    M, K = x1.shape
    _, N = w1.shape
    tm, tn, tk, grid = _mm_grid(M, N, K)
    xspec = pl.BlockSpec((tm, tk), lambda i, j, k: (i, k))
    wspec = pl.BlockSpec((tk, tn), lambda i, j, k: (k, j))
    return pl.pallas_call(
        functools.partial(_mm_dual_kernel, epilogue=epilogue),
        out_shape=jax.ShapeDtypeStruct((M, N), jnp.float32),
        grid=grid,
        in_specs=[xspec, xspec, wspec, wspec],
        out_specs=pl.BlockSpec((tm, tn), lambda i, j, k: (i, j)),
        scratch_shapes=[pltpu.VMEM((tm, tn), jnp.float32)],
        compiler_params=_cparams("parallel", "parallel", "arbitrary"),
    )(x1, x2, w1, w2)


def linear3(x, w, *, bias=None, prologue=_ident, epilogue=_ident):
    B, T, K = x.shape
    out = pallas_matmul(x.reshape(B * T, K), w, bias, prologue, epilogue)
    return out.reshape(B, T, w.shape[1])


def linear3_gated(x, g, w):
    B, T, K = x.shape
    out = pallas_matmul_gated(x.reshape(B * T, K), g.reshape(B * T, K), w)
    return out.reshape(B, T, w.shape[1])


def linear3_dual(x1, x2, w1, w2, *, epilogue=_ident):
    B, T, K = x1.shape
    out = pallas_matmul_dual(x1.reshape(B * T, K), x2.reshape(B * T, K),
                             w1, w2, epilogue)
    return out.reshape(B, T, w1.shape[1])


# ------------------------------ LayerNorm kernel -----------------------------

def _ln_kernel(x_ref, w_ref, b_ref, o_ref, *, eps):
    x = x_ref[...].astype(jnp.float32)
    mu = jnp.mean(x, axis=-1, keepdims=True)
    xc = x - mu
    var = jnp.mean(xc * xc, axis=-1, keepdims=True)
    o_ref[...] = (xc * lax.rsqrt(var + eps) * w_ref[...] + b_ref[...]).astype(o_ref.dtype)


def layernorm(x, w, b, eps=1e-5):
    B, T, C = x.shape
    M = B * T
    tm = _pick_tile(M, (256, 128, 64, 32, 16, 8))
    out = pl.pallas_call(
        functools.partial(_ln_kernel, eps=eps),
        out_shape=jax.ShapeDtypeStruct((M, C), jnp.float32),
        grid=(M // tm,),
        in_specs=[pl.BlockSpec((tm, C), lambda i: (i, 0)),
                  pl.BlockSpec((1, C), lambda i: (0, 0)),
                  pl.BlockSpec((1, C), lambda i: (0, 0))],
        out_specs=pl.BlockSpec((tm, C), lambda i: (i, 0)),
        compiler_params=_cparams("parallel"),
    )(x.reshape(M, C), w.reshape(1, C), b.reshape(1, C))
    return out.reshape(B, T, C)


# ------------------ fused WKV7 + ln_x (GroupNorm) + rk bonus ------------------

def _wkv7_kernel(*refs, head_size, n_heads_blk, chunk, eps):
    """One (batch, 128-lane channel slab, T-chunk) grid cell.

    Sequence inputs (TC, L) with L = n_heads_blk*head_size lanes:
        r, w, k, v, a(=sigmoid lora);  per-channel (1, L): k_k, k_a, r_k, ln_x w/b.
    Output (TC, L):  ln_x(wkv7(...)) + (sum(r.k.r_k) * v)   per head.
    The (N,N) state per head is carried in VMEM scratch across T-chunks.
    """
    (r_ref, w_ref, k_ref, v_ref, a_ref,
     kkw_ref, kaw_ref, rkw_ref, lnw_ref, lnb_ref, o_ref) = refs[:11]
    hpb = n_heads_blk
    state_refs = refs[11:11 + hpb]
    stream_refs = refs[11 + hpb:]
    N = head_size
    TC = chunk
    f32 = jnp.float32

    # ---- reset the carried state at the start of every (batch, channel-slab) ----
    @pl.when(pl.program_id(2) == 0)
    def _reset():
        for h in range(hpb):
            state_refs[h][...] = jnp.zeros_like(state_refs[h])

    # ---- whole-chunk precompute: one EUP/VPU pass, hoisted out of the loop ------
    r_all = r_ref[...].astype(f32)
    k_all = k_ref[...].astype(f32)
    v_all = v_ref[...].astype(f32)
    a_all = a_ref[...].astype(f32)                              # sigmoid(a)
    dec_all = jnp.exp(-jnp.exp(w_ref[...].astype(f32)))         # decay in (0,1)
    ku_all = k_all * (1.0 + (a_all - 1.0) * kaw_ref[...])       # k * (1+(a-1)*k_a)
    kkraw = k_all * kkw_ref[...]                                # k * k_k
    lnw = lnw_ref[...]
    lnb = lnb_ref[...]
    rkw = rkw_ref[...]

    # eye turns a (1,N) row into an (N,1) column (and back) with a VPU broadcast +
    # XLU reduce only.  A dynamic-lane column read/write would cost an equivalent
    # relayout, so this stays; per-step transposes disappear only with the chunked
    # MXU formulation (see TODO below).
    eye = (lax.broadcasted_iota(jnp.int32, (N, N), 0)
           == lax.broadcasted_iota(jnp.int32, (N, N), 1)).astype(f32)

    heads = []
    for h in range(hpb):
        r_s, dec_s, ku_s, an_s, bn_s, v_s, y_s = stream_refs[7 * h: 7 * h + 7]
        lo, hi = h * N, (h + 1) * N

        kk_h = kkraw[:, lo:hi]
        inv = lax.rsqrt(jnp.maximum(                             # EUP rsqrt
            jnp.sum(kk_h * kk_h, axis=-1, keepdims=True), 1e-24))
        kkn = kk_h * inv                                         # F.normalize(k*k_k)

        r_s[...] = r_all[:, lo:hi]
        dec_s[...] = dec_all[:, lo:hi]
        ku_s[...] = ku_all[:, lo:hi]
        an_s[...] = -kkn                                         # "a" of wkv7
        bn_s[...] = kkn * a_all[:, lo:hi]                        # "b" of wkv7
        v_s[...] = v_all[:, lo:hi]
        heads.append((r_s, dec_s, ku_s, an_s, bn_s, v_s, y_s, lo, hi))

    # ---- serial recurrence over the chunk; both heads interleaved per step -----
    # TODO(synk): replace with a chunked WY/UT formulation on the MXU (block of
    # 16-64 timesteps as (TC,N)x(N,N) matmuls) once validated against this loop.
    def step(t, states):
        new_states = []
        for h in range(hpb):
            r_s, dec_s, ku_s, an_s, bn_s, v_s, y_s = heads[h][:7]
            st = states[h]
            rt = r_s[pl.ds(t, 1), :]
            wt = dec_s[pl.ds(t, 1), :]
            kt = ku_s[pl.ds(t, 1), :]
            at = an_s[pl.ds(t, 1), :]
            bt = bn_s[pl.ds(t, 1), :]
            vt = v_s[pl.ds(t, 1), :]
            # state[i, j]: i = value dim (sublanes), j = key dim (lanes)
            v_col = jnp.sum(vt * eye, axis=1, keepdims=True)            # (N,1)
            sa = jnp.sum(st * at, axis=1, keepdims=True)                # (N,1)
            st = st * wt + sa * bt + v_col * kt                         # (N,N)
            y_col = jnp.sum(st * rt, axis=1, keepdims=True)             # (N,1)
            y_s[pl.ds(t, 1), :] = jnp.sum(y_col * eye, axis=0, keepdims=True)
            new_states.append(st)
        return tuple(new_states)

    states0 = tuple(state_refs[h][...] for h in range(hpb))
    states = lax.fori_loop(0, TC, step, states0,
                           unroll=True if TC <= 16 else 8)
    for h in range(hpb):
        state_refs[h][...] = states[h]

    # ---- fused epilogue: ln_x GroupNorm (per head) + (r.k.r_k)*v bonus ----------
    out_heads = []
    for h in range(hpb):
        r_s, dec_s, ku_s, an_s, bn_s, v_s, y_s, lo, hi = heads[h]
        y = y_s[...]
        mu = jnp.mean(y, axis=-1, keepdims=True)
        yc = y - mu
        var = jnp.mean(yc * yc, axis=-1, keepdims=True)
        yn = yc * lax.rsqrt(var + eps) * lnw[:, lo:hi] + lnb[:, lo:hi]
        rk = jnp.sum(r_s[...] * ku_s[...] * rkw[:, lo:hi], axis=-1, keepdims=True)
        out_heads.append(yn + rk * v_s[...])

    out = out_heads[0] if len(out_heads) == 1 else jnp.concatenate(out_heads, axis=-1)
    o_ref[...] = out.astype(o_ref.dtype)                        # one dense store


def wkv7_ln_fused(r, w, k, v, a, att, n_head, head_size):
    """Fused WKV7 recurrence + ln_x + rk bonus.  Operands stay in (B,T,C);
    T is chunked so VMEM use is bounded independently of sequence length."""
    B, T, C = r.shape
    N = head_size
    assert C == n_head * N
    if C % 128 == 0 and N <= 128 and 128 % N == 0:
        L = 128                         # pack 128/N heads per grid cell (lane-dense)
    elif N % 128 == 0 and C % N == 0:
        L = N
    else:
        L = C
    hpb = L // N
    TC = _pick_tile(T, (128, 64, 32, 16, 8))
    grid = (B, C // L, T // TC)

    seq_spec = pl.BlockSpec((None, TC, L), lambda b, c, t: (b, t, c))
    vec_spec = pl.BlockSpec((1, L), lambda b, c, t: (0, c))

    kern = functools.partial(_wkv7_kernel, head_size=N, n_heads_blk=hpb,
                             chunk=TC, eps=LN_X_EPS)
    return pl.pallas_call(
        kern,
        out_shape=jax.ShapeDtypeStruct((B, T, C), jnp.float32),
        grid=grid,
        in_specs=[seq_spec] * 5 + [vec_spec] * 5,
        out_specs=seq_spec,
        scratch_shapes=([pltpu.VMEM((N, N), jnp.float32)] * hpb          # carried state
                        + [pltpu.VMEM((TC, N), jnp.float32)] * (7 * hpb)),  # chunk streams
        compiler_params=_cparams("parallel", "parallel", "arbitrary"),
    )(r, w, k, v, a,
      att['k_k'], att['k_a'], att['r_k'], att['lnx_w'], att['lnx_b'])


# ------------------------------ RWKV v7 model ---------------------------------

def time_shift(x):
    # nn.ZeroPad2d((0, 0, 1, -1)): shift sequence right by one, zero at t=0.
    # TODO(synk): fold the -1 row offset into the dual-matmul BlockSpecs to avoid
    # materializing this extra (B,T,C) activation in HBM per layer.
    B, T, C = x.shape
    return jnp.concatenate([jnp.zeros((B, 1, C), x.dtype), x[:, :-1, :]], axis=1)


def tmix_forward(p, x, v_first, layer_id, n_head, head_size):
    B, T, C = x.shape
    xs = time_shift(x)

    # One fused projection:  x @ W_cur + shift(x) @ W_shift  covers
    # r / k / v / LoRA-w1 / LoRA-a1 / (LoRA-v1) / LoRA-g1 (token-shift mixes folded
    # into the pre-prepared, lane-padded weights, so all take() offsets are
    # multiples of 128).
    big = linear3_dual(x, xs, p['w_cur'], p['w_sft'])

    d_lora = p['w2'].shape[0]           # padded LoRA width
    d_gate = p['g2'].shape[0]           # padded gate width
    off = 0

    def take(n):
        nonlocal off
        seg = big[..., off:off + n]
        off += n
        return seg

    r = take(C)
    k = take(C)
    v = take(C)
    hw = take(d_lora)
    ha = take(d_lora)
    hv = take(d_lora) if layer_id != 0 else None
    hg = take(d_gate)

    # LoRA second stages with fused activation prologue / bias / epilogue.
    w = linear3(hw, p['w2'], bias=p['w0'], prologue=jnp.tanh, epilogue=_w_act)
    a = linear3(ha, p['a2'], bias=p['a0'], epilogue=_sigmoid)
    g = linear3(hg, p['g2'], prologue=_sigmoid)

    if layer_id == 0:
        v_first = v
    else:
        vmix = linear3(hv, p['v2'], bias=p['v0'], epilogue=_sigmoid)
        v = v + (v_first - v) * vmix

    xo = wkv7_ln_fused(r, w, k, v, a, p, n_head, head_size)
    out = linear3_gated(xo, g, p['output'])      # (xo * g) @ W_o, gate fused
    return out, v_first


def cmix_forward(p, x):
    xs = time_shift(x)
    h = linear3_dual(x, xs, p['k_cur'], p['k_sft'], epilogue=_relu_sq)
    return linear3(h, p['value'])


def block_forward(p, x, v_first, layer_id, n_head, head_size):
    if layer_id == 0:
        x = layernorm(x, p['ln0_w'], p['ln0_b'])
    xa, v_first = tmix_forward(p['att'], layernorm(x, p['ln1_w'], p['ln1_b']),
                               v_first, layer_id, n_head, head_size)
    x = x + xa
    x = x + cmix_forward(p['ffn'], layernorm(x, p['ln2_w'], p['ln2_b']))
    return x, v_first


def rwkv_forward(params, idx, *, n_head, head_size):
    """forward_without_state path (states=None, dropout=0). Returns (logits, None)."""
    x = jnp.take(params['emb'], idx, axis=0)          # (B, T, C) embedding (glue)
    v_first = None
    for i, blk in enumerate(params['blocks']):
        x, v_first = block_forward(blk, x, v_first, i, n_head, head_size)
    x = layernorm(x, params['ln_out_w'], params['ln_out_b'])
    logits = linear3(x, params['head'])
    return logits, None


# --------------------------- deterministic init -------------------------------

def _init_block(keys, layer_id, C, head_size, dim_ffn, d_lora=32, d_gate=64):
    H, N = C // head_size, head_size

    def nrm(shape, scale=0.02):
        return jax.random.normal(next(keys), shape, jnp.float32) * scale

    def unif(shape):
        return jax.random.uniform(next(keys), shape, jnp.float32)

    att = {
        'x_r': unif((1, 1, C)), 'x_w': unif((1, 1, C)), 'x_k': unif((1, 1, C)),
        'x_v': unif((1, 1, C)), 'x_a': unif((1, 1, C)), 'x_g': unif((1, 1, C)),
        'w0': nrm((1, 1, C), 0.5) - 2.0,
        'w1': nrm((C, d_lora)), 'w2': nrm((d_lora, C)),
        'a0': nrm((1, 1, C), 0.1), 'a1': nrm((C, d_lora)), 'a2': nrm((d_lora, C)),
        'g1': nrm((C, d_gate)), 'g2': nrm((d_gate, C)),
        'k_k': jnp.full((1, 1, C), 0.85, jnp.float32),
        'k_a': jnp.ones((1, 1, C), jnp.float32),
        'r_k': nrm((H, N), 0.1),
        'receptance': nrm((C, C)), 'key': nrm((C, C)),
        'value': nrm((C, C)), 'output': nrm((C, C)),
        'ln_x_w': jnp.ones((C,), jnp.float32), 'ln_x_b': jnp.zeros((C,), jnp.float32),
    }
    if layer_id != 0:
        att['v0'] = jnp.ones((1, 1, C), jnp.float32)
        att['v1'] = nrm((C, d_lora))
        att['v2'] = nrm((d_lora, C))
    ffn = {
        'x_k': unif((1, 1, C)),
        'key': nrm((dim_ffn, C)),
        'value': nrm((C, dim_ffn)),
    }
    blk = {
        'ln1_w': jnp.ones((C,), jnp.float32), 'ln1_b': jnp.zeros((C,), jnp.float32),
        'ln2_w': jnp.ones((C,), jnp.float32), 'ln2_b': jnp.zeros((C,), jnp.float32),
        'att': att, 'ffn': ffn,
    }
    if layer_id == 0:
        blk['ln0_w'] = jnp.ones((C,), jnp.float32)
        blk['ln0_b'] = jnp.zeros((C,), jnp.float32)
    return blk


def init_rwkv_params(key, n_layer, n_embd, vocab_size, head_size, dim_ffn):
    keys = iter(jax.random.split(key, 1024))

    def nrm(shape, scale=0.02):
        return jax.random.normal(next(keys), shape, jnp.float32) * scale

    return {
        'emb': nrm((vocab_size, n_embd)),
        'blocks': [_init_block(keys, i, n_embd, head_size, dim_ffn)
                   for i in range(n_layer)],
        'ln_out_w': jnp.ones((n_embd,), jnp.float32),
        'ln_out_b': jnp.zeros((n_embd,), jnp.float32),
        'head': nrm((vocab_size, n_embd)),
    }


def _bf16(w):
    return w.astype(jnp.bfloat16)


def prepare_params(raw, n_head, head_size):
    """One-time weight prep: (out,in) -> (in,out) transposes, token-shift mixes
    folded into the weights, LoRA/gate segments zero-padded to 128 lanes, matmul
    weights stored in bf16, per-head params laid out as (1, C) f32 rows."""
    prepared = {
        'emb': raw['emb'],
        'ln_out_w': raw['ln_out_w'], 'ln_out_b': raw['ln_out_b'],
        'head': _bf16(raw['head'].T),
        'blocks': [],
    }
    for layer_id, blk in enumerate(raw['blocks']):
        att = blk['att']
        C = att['receptance'].shape[1]
        lane_pad = (C % 128 == 0)

        def padw(n):
            return ((n + 127) // 128) * 128 if lane_pad else n

        def pad_cols(w):
            n = w.shape[1]
            p = padw(n)
            if p == n:
                return w
            return jnp.concatenate([w, jnp.zeros((w.shape[0], p - n), w.dtype)], 1)

        def pad_rows(w):
            n = w.shape[0]
            p = padw(n)
            if p == n:
                return w
            return jnp.concatenate([w, jnp.zeros((p - n, w.shape[1]), w.dtype)], 0)

        def seg(w_in_out, mix):
            m = mix.reshape(C, 1)
            return (1.0 - m) * w_in_out, m * w_in_out

        segs = [seg(att['receptance'].T,  att['x_r']),
                seg(att['key'].T,         att['x_k']),
                seg(att['value'].T,       att['x_v']),
                seg(pad_cols(att['w1']),  att['x_w']),
                seg(pad_cols(att['a1']),  att['x_a'])]
        if layer_id != 0:
            segs.append(seg(pad_cols(att['v1']), att['x_v']))
        segs.append(seg(pad_cols(att['g1']),     att['x_g']))

        p_att = {
            'w_cur': _bf16(jnp.concatenate([s[0] for s in segs], axis=1)),
            'w_sft': _bf16(jnp.concatenate([s[1] for s in segs], axis=1)),
            'w0': att['w0'].reshape(1, C), 'w2': _bf16(pad_rows(att['w2'])),
            'a0': att['a0'].reshape(1, C), 'a2': _bf16(pad_rows(att['a2'])),
            'g2': _bf16(pad_rows(att['g2'])),
            'output': _bf16(att['output'].T),
            'k_k': att['k_k'].reshape(1, C),
            'k_a': att['k_a'].reshape(1, C),
            'r_k': att['r_k'].reshape(1, C),
            'lnx_w': att['ln_x_w'].reshape(1, C),
            'lnx_b': att['ln_x_b'].reshape(1, C),
        }
        if layer_id != 0:
            p_att['v0'] = att['v0'].reshape(1, C)
            p_att['v2'] = _bf16(pad_rows(att['v2']))

        fk = blk['ffn']['key'].T          # (C, dim_ffn)
        mf = blk['ffn']['x_k'].reshape(C, 1)
        p_ffn = {'k_cur': _bf16((1.0 - mf) * fk), 'k_sft': _bf16(mf * fk),
                 'value': _bf16(blk['ffn']['value'].T)}

        pblk = {'ln1_w': blk['ln1_w'], 'ln1_b': blk['ln1_b'],
                'ln2_w': blk['ln2_w'], 'ln2_b': blk['ln2_b'],
                'att': p_att, 'ffn': p_ffn}
        if layer_id == 0:
            pblk['ln0_w'] = blk['ln0_w']
            pblk['ln0_b'] = blk['ln0_b']
        prepared['blocks'].append(pblk)
    return prepared


# ----------------------------------- main --------------------------------------

if __name__ == "__main__":
    B, T = 2, 8
    n_embd, n_layer, vocab_size, head_size = 128, 2, 64, 64
    n_head = n_embd // head_size
    dim_ffn = int(n_embd * 3.5 // 32 * 32)      # matches RWKV.__init__ (=448 for C=128)

    key = jax.random.PRNGKey(0)
    kp, ki = jax.random.split(key)
    raw_params = init_rwkv_params(kp, n_layer, n_embd, vocab_size, head_size, dim_ffn)
    params = prepare_params(raw_params, n_head, head_size)
    idx = jax.random.randint(ki, (B, T), 0, vocab_size, dtype=jnp.int32)

    fwd = jax.jit(functools.partial(rwkv_forward, n_head=n_head, head_size=head_size))
    logits, _ = fwd(params, idx)
    logits = jax.block_until_ready(logits)

    assert logits.shape == (B, T, vocab_size), logits.shape
    assert bool(jnp.all(jnp.isfinite(logits)))
    # TODO(synk): training_step / DeepSpeed checkpointing / optimizer groups, dropout,
    # and the explicit-state (forward_with_state) path are out of scope for a
    # forward-only kernel implementation.
    print("KERNEL_OK")
</pallas_src>

<mosaic_0001>
module attributes {stable_mosaic.version = 11 : i64} {
  func.func @_mm_kernel(%arg0: i32, %arg1: i32, %arg2: i32, %arg3: memref<16x128xf32, #tpu.memory_space<vmem>>, %arg4: memref<128x128xbf16, #tpu.memory_space<vmem>>, %arg5: memref<1x128xf32, #tpu.memory_space<vmem>>, %arg6: memref<16x128xf32, #tpu.memory_space<vmem>>, %arg7: memref<16x128xf32, #tpu.memory_space<vmem>>) attributes {dimension_semantics = [#tpu.dimension_semantics<parallel>, #tpu.dimension_semantics<parallel>, #tpu.dimension_semantics<arbitrary>], iteration_bounds = array<i64: 1, 1, 1>, scalar_prefetch = 0 : i64, scratch_operands = 1 : i64, tpu.core_type = #tpu.core_type<tc>, window_params = [{transform_indices = @transform_0, window_bounds = array<i64: 16, 128>}, {transform_indices = @transform_1, window_bounds = array<i64: 128, 128>}, {transform_indices = @transform_2, window_bounds = array<i64: 1, 128>}, {transform_indices = @transform_3, window_bounds = array<i64: 16, 128>}]} {
    %c0_i32 = arith.constant 0 : i32
    %0 = arith.cmpi eq, %arg2, %c0_i32 : i32
    %1 = arith.extui %0 : i1 to i32
    %c0_i32_0 = arith.constant 0 : i32
    %2 = arith.cmpi ne, %1, %c0_i32_0 : i32
    scf.if %2 {
      %cst_10 = arith.constant 0.000000e+00 : f32
      %14 = vector.broadcast %cst_10 : f32 to vector<16x128xf32>
      %c0_11 = arith.constant 0 : index
      %c0_12 = arith.constant 0 : index
      %15 = vector.load %arg7[%c0_11, %c0_12] : memref<16x128xf32, #tpu.memory_space<vmem>>, vector<16x128xf32>
      tpu.vector_store %arg7[%c0_11, %c0_12], %14 {strides = array<i32>} : memref<16x128xf32, #tpu.memory_space<vmem>>, vector<16x128xf32>,
    } else {
    }
    %c0 = arith.constant 0 : index
    %c0_1 = arith.constant 0 : index
    %3 = vector.load %arg3[%c0, %c0_1] : memref<16x128xf32, #tpu.memory_space<vmem>>, vector<16x128xf32>
    %4 = math.tanh %3 : vector<16x128xf32>
    %5 = arith.truncf %4 : vector<16x128xf32> to vector<16x128xbf16>
    %c0_2 = arith.constant 0 : index
    %c0_3 = arith.constant 0 : index
    %6 = vector.load %arg7[%c0_2, %c0_3] : memref<16x128xf32, #tpu.memory_space<vmem>>, vector<16x128xf32>
    %c0_4 = arith.constant 0 : index
    %c0_5 = arith.constant 0 : index
    %7 = vector.load %arg4[%c0_4, %c0_5] : memref<128x128xbf16, #tpu.memory_space<vmem>>, vector<128x128xbf16>
    %cst = arith.constant dense<0.000000e+00> : vector<16x128xf32>
    %8 = tpu.matmul %5, %7, %cst {dimension_numbers = #tpu.dot_dimension_numbers<[1], [0], [0], [1], [0, 0, 1, 1], [], []>} : vector<16x128xbf16>, vector<128x128xbf16>, vector<16x128xf32> -> vector<16x128xf32>
    %9 = arith.addf %6, %8 : vector<16x128xf32>
    %c0_6 = arith.constant 0 : index
    %c0_7 = arith.constant 0 : index
    %10 = vector.load %arg7[%c0_6, %c0_7] : memref<16x128xf32, #tpu.memory_space<vmem>>, vector<16x128xf32>
    tpu.vector_store %arg7[%c0_6, %c0_7], %9 {strides = array<i32>} : memref<16x128xf32, #tpu.memory_space<vmem>>, vector<16x128xf32>,
    %c0_i32_8 = arith.constant 0 : i32
    %11 = arith.cmpi eq, %arg2, %c0_i32_8 : i32
    %12 = arith.extui %11 : i1 to i32
    %c0_i32_9 = arith.constant 0 : i32
    %13 = arith.cmpi ne, %12, %c0_i32_9 : i32
    scf.if %13 {
      %c0_10 = arith.constant 0 : index
      %c0_11 = arith.constant 0 : index
      %14 = vector.load %arg7[%c0_10, %c0_11] : memref<16x128xf32, #tpu.memory_space<vmem>>, vector<16x128xf32>
      %c0_12 = arith.constant 0 : index
      %c0_13 = arith.constant 0 : index
      %15 = vector.load %arg5[%c0_12, %c0_13] : memref<1x128xf32, #tpu.memory_space<vmem>>, vector<1x128xf32>
      %16 = vector.broadcast %15 : vector<1x128xf32> to vector<16x128xf32>
      %17 = arith.addf %14, %16 : vector<16x128xf32>
      %cst_14 = arith.constant 0.000000e+00 : f32
      %18 = vector.broadcast %cst_14 : f32 to vector<16x128xf32>
      %19 = arith.subf %18, %17 : vector<16x128xf32>
      %cst_15 = arith.constant 0.000000e+00 : f32
      %20 = vector.broadcast %cst_15 : f32 to vector<16x128xf32>
      %21 = arith.maximumf %19, %20 : vector<16x128xf32>
      %22 = math.absf %19 : vector<16x128xf32>
      %cst_16 = arith.constant 0.000000e+00 : f32
      %23 = vector.broadcast %cst_16 : f32 to vector<16x128xf32>
      %24 = arith.subf %23, %22 : vector<16x128xf32>
      %25 = math.exp %24 : vector<16x128xf32>
      %cst_17 = arith.constant 1.000000e+00 : f32
      %26 = vector.broadcast %cst_17 : f32 to vector<16x128xf32>
      %27 = arith.addf %26, %25 : vector<16x128xf32>
      %28 = math.log %27 : vector<16x128xf32>
      %29 = arith.addf %21, %28 : vector<16x128xf32>
      %cst_18 = arith.constant 0.000000e+00 : f32
      %30 = vector.broadcast %cst_18 : f32 to vector<16x128xf32>
      %31 = arith.subf %30, %29 : vector<16x128xf32>
      %cst_19 = arith.constant 5.000000e-01 : f32
      %32 = vector.broadcast %cst_19 : f32 to vector<16x128xf32>
      %33 = arith.subf %31, %32 : vector<16x128xf32>
      %c0_20 = arith.constant 0 : index
      %c0_21 = arith.constant 0 : index
      %34 = vector.load %arg6[%c0_20, %c0_21] : memref<16x128xf32, #tpu.memory_space<vmem>>, vector<16x128xf32>
      tpu.vector_store %arg6[%c0_20, %c0_21], %33 {strides = array<i32>} : memref<16x128xf32, #tpu.memory_space<vmem>>, vector<16x128xf32>,
    } else {
    }
    return
  }
  func.func @transform_0(%arg0: i32, %arg1: i32, %arg2: i32) -> (i32, i32) {
    %c0_i32 = arith.constant 0 : i32
    return %arg0, %arg2 : i32, i32
  }
  func.func @transform_1(%arg0: i32, %arg1: i32, %arg2: i32) -> (i32, i32) {
    %c0_i32 = arith.constant 0 : i32
    return %arg2, %arg1 : i32, i32
  }
  func.func @transform_2(%arg0: i32, %arg1: i32, %arg2: i32) -> (i32, i32) {
    %c0_i32 = arith.constant 0 : i32
    %c0_i32_0 = arith.constant 0 : i32
    return %c0_i32, %arg1 : i32, i32
  }
  func.func @transform_3(%arg0: i32, %arg1: i32, %arg2: i32) -> (i32, i32) {
    %c0_i32 = arith.constant 0 : i32
    return %arg0, %arg1 : i32, i32
  }
}

module attributes {stable_mosaic.version = 11 : i64} {
  func.func @_mm_kernel(%arg0: i32, %arg1: i32, %arg2: i32, %arg3: memref<16x128xf32, #tpu.memory_space<vmem>>, %arg4: memref<128x128xbf16, #tpu.memory_space<vmem>>, %arg5: memref<1x128xf32, #tpu.memory_space<vmem>>, %arg6: memref<16x128xf32, #tpu.memory_space<vmem>>, %arg7: memref<16x128xf32, #tpu.memory_space<vmem>>) attributes {dimension_semantics = [#tpu.dimension_semantics<parallel>, #tpu.dimension_semantics<parallel>, #tpu.dimension_semantics<arbitrary>], iteration_bounds = array<i64: 1, 1, 1>, scalar_prefetch = 0 : i64, scratch_operands = 1 : i64, tpu.core_type = #tpu.core_type<tc>, window_params = [{transform_indices = @transform_0, window_bounds = array<i64: 16, 128>}, {transform_indices = @transform_1, window_bounds = array<i64: 128, 128>}, {transform_indices = @transform_2, window_bounds = array<i64: 1, 128>}, {transform_indices = @transform_3, window_bounds = array<i64: 16, 128>}]} {
    %c0_i32 = arith.constant 0 : i32
    %0 = arith.cmpi eq, %arg2, %c0_i32 : i32
    %1 = arith.extui %0 : i1 to i32
    %c0_i32_0 = arith.constant 0 : i32
    %2 = arith.cmpi ne, %1, %c0_i32_0 : i32
    scf.if %2 {
      %cst_10 = arith.constant 0.000000e+00 : f32
      %13 = vector.broadcast %cst_10 : f32 to vector<16x128xf32>
      %c0_11 = arith.constant 0 : index
      %c0_12 = arith.constant 0 : index
      %14 = vector.load %arg7[%c0_11, %c0_12] : memref<16x128xf32, #tpu.memory_space<vmem>>, vector<16x128xf32>
      tpu.vector_store %arg7[%c0_11, %c0_12], %13 {strides = array<i32>} : memref<16x128xf32, #tpu.memory_space<vmem>>, vector<16x128xf32>,
    } else {
    }
    %c0 = arith.constant 0 : index
    %c0_1 = arith.constant 0 : index
    %3 = vector.load %arg3[%c0, %c0_1] : memref<16x128xf32, #tpu.memory_space<vmem>>, vector<16x128xf32>
    %4 = arith.truncf %3 : vector<16x128xf32> to vector<16x128xbf16>
    %c0_2 = arith.constant 0 : index
    %c0_3 = arith.constant 0 : index
    %5 = vector.load %arg7[%c0_2, %c0_3] : memref<16x128xf32, #tpu.memory_space<vmem>>, vector<16x128xf32>
    %c0_4 = arith.constant 0 : index
    %c0_5 = arith.constant 0 : index
    %6 = vector.load %arg4[%c0_4, %c0_5] : memref<128x128xbf16, #tpu.memory_space<vmem>>, vector<128x128xbf16>
    %cst = arith.constant dense<0.000000e+00> : vector<16x128xf32>
    %7 = tpu.matmul %4, %6, %cst {dimension_numbers = #tpu.dot_dimension_numbers<[1], [0], [0], [1], [0, 0, 1, 1], [], []>} : vector<16x128xbf16>, vector<128x128xbf16>, vector<16x128xf32> -> vector<16x128xf32>
    %8 = arith.addf %5, %7 : vector<16x128xf32>
    %c0_6 = arith.constant 0 : index
    %c0_7 = arith.constant 0 : index
    %9 = vector.load %arg7[%c0_6, %c0_7] : memref<16x128xf32, #tpu.memory_space<vmem>>, vector<16x128xf32>
    tpu.vector_store %arg7[%c0_6, %c0_7], %8 {strides = array<i32>} : memref<16x128xf32, #tpu.memory_space<vmem>>, vector<16x128xf32>,
    %c0_i32_8 = arith.constant 0 : i32
    %10 = arith.cmpi eq, %arg2, %c0_i32_8 : i32
    %11 = arith.extui %10 : i1 to i32
    %c0_i32_9 = arith.constant 0 : i32
    %12 = arith.cmpi ne, %11, %c0_i32_9 : i32
    scf.if %12 {
      %c0_10 = arith.constant 0 : index
      %c0_11 = arith.constant 0 : index
      %13 = vector.load %arg7[%c0_10, %c0_11] : memref<16x128xf32, #tpu.memory_space<vmem>>, vector<16x128xf32>
      %c0_12 = arith.constant 0 : index
      %c0_13 = arith.constant 0 : index
      %14 = vector.load %arg5[%c0_12, %c0_13] : memref<1x128xf32, #tpu.memory_space<vmem>>, vector<1x128xf32>
      %15 = vector.broadcast %14 : vector<1x128xf32> to vector<16x128xf32>
      %16 = arith.addf %13, %15 : vector<16x128xf32>
      %cst_14 = arith.constant 0.000000e+00 : f32
      %17 = vector.broadcast %cst_14 : f32 to vector<16x128xf32>
      %18 = arith.subf %17, %16 : vector<16x128xf32>
      %19 = math.exp %18 : vector<16x128xf32>
      %cst_15 = arith.constant 1.000000e+00 : f32
      %20 = vector.broadcast %cst_15 : f32 to vector<16x128xf32>
      %21 = arith.addf %20, %19 : vector<16x128xf32>
      %cst_16 = arith.constant 1.000000e+00 : f32
      %22 = vector.broadcast %cst_16 : f32 to vector<16x128xf32>
      %23 = arith.divf %22, %21 : vector<16x128xf32>
      %c0_17 = arith.constant 0 : index
      %c0_18 = arith.constant 0 : index
      %24 = vector.load %arg6[%c0_17, %c0_18] : memref<16x128xf32, #tpu.memory_space<vmem>>, vector<16x128xf32>
      tpu.vector_store %arg6[%c0_17, %c0_18], %23 {strides = array<i32>} : memref<16x128xf32, #tpu.memory_space<vmem>>, vector<16x128xf32>,
    } else {
    }
    return
  }
  func.func @transform_0(%arg0: i32, %arg1: i32, %arg2: i32) -> (i32, i32) {
    %c0_i32 = arith.constant 0 : i32
    return %arg0, %arg2 : i32, i32
  }
  func.func @transform_1(%arg0: i32, %arg1: i32, %arg2: i32) -> (i32, i32) {
    %c0_i32 = arith.constant 0 : i32
    return %arg2, %arg1 : i32, i32
  }
  func.func @transform_2(%arg0: i32, %arg1: i32, %arg2: i32) -> (i32, i32) {
    %c0_i32 = arith.constant 0 : i32
    %c0_i32_0 = arith.constant 0 : i32
    return %c0_i32, %arg1 : i32, i32
  }
  func.func @transform_3(%arg0: i32, %arg1: i32, %arg2: i32) -> (i32, i32) {
    %c0_i32 = arith.constant 0 : i32
    return %arg0, %arg1 : i32, i32
  }
}

module attributes {stable_mosaic.version = 11 : i64} {
  func.func @_mm_dual_kernel(%arg0: i32, %arg1: i32, %arg2: i32, %arg3: memref<16x128xf32, #tpu.memory_space<vmem>>, %arg4: memref<16x128xf32, #tpu.memory_space<vmem>>, %arg5: memref<128x256xbf16, #tpu.memory_space<vmem>>, %arg6: memref<128x256xbf16, #tpu.memory_space<vmem>>, %arg7: memref<16x256xf32, #tpu.memory_space<vmem>>, %arg8: memref<16x256xf32, #tpu.memory_space<vmem>>) attributes {dimension_semantics = [#tpu.dimension_semantics<parallel>, #tpu.dimension_semantics<parallel>, #tpu.dimension_semantics<arbitrary>], iteration_bounds = array<i64: 1, 3, 1>, scalar_prefetch = 0 : i64, scratch_operands = 1 : i64, tpu.core_type = #tpu.core_type<tc>, window_params = [{transform_indices = @transform_0, window_bounds = array<i64: 16, 128>}, {transform_indices = @transform_1, window_bounds = array<i64: 16, 128>}, {transform_indices = @transform_2, window_bounds = array<i64: 128, 256>}, {transform_indices = @transform_3, window_bounds = array<i64: 128, 256>}, {transform_indices = @transform_4, window_bounds = array<i64: 16, 256>}]} {
    %c0_i32 = arith.constant 0 : i32
    %0 = arith.cmpi eq, %arg2, %c0_i32 : i32
    %1 = arith.extui %0 : i1 to i32
    %c0_i32_0 = arith.constant 0 : i32
    %2 = arith.cmpi ne, %1, %c0_i32_0 : i32
    scf.if %2 {
      %cst_19 = arith.constant 0.000000e+00 : f32
      %20 = vector.broadcast %cst_19 : f32 to vector<16x256xf32>
      %c0_20 = arith.constant 0 : index
      %c0_21 = arith.constant 0 : index
      %21 = vector.load %arg8[%c0_20, %c0_21] : memref<16x256xf32, #tpu.memory_space<vmem>>, vector<16x256xf32>
      tpu.vector_store %arg8[%c0_20, %c0_21], %20 {strides = array<i32>} : memref<16x256xf32, #tpu.memory_space<vmem>>, vector<16x256xf32>,
    } else {
    }
    %c0 = arith.constant 0 : index
    %c0_1 = arith.constant 0 : index
    %3 = vector.load %arg8[%c0, %c0_1] : memref<16x256xf32, #tpu.memory_space<vmem>>, vector<16x256xf32>
    %c0_2 = arith.constant 0 : index
    %c0_3 = arith.constant 0 : index
    %4 = vector.load %arg3[%c0_2, %c0_3] : memref<16x128xf32, #tpu.memory_space<vmem>>, vector<16x128xf32>
    %5 = arith.truncf %4 : vector<16x128xf32> to vector<16x128xbf16>
    %c0_4 = arith.constant 0 : index
    %c0_5 = arith.constant 0 : index
    %6 = vector.load %arg5[%c0_4, %c0_5] : memref<128x256xbf16, #tpu.memory_space<vmem>>, vector<128x256xbf16>
    %cst = arith.constant dense<0.000000e+00> : vector<16x256xf32>
    %7 = tpu.matmul %5, %6, %cst {dimension_numbers = #tpu.dot_dimension_numbers<[1], [0], [0], [1], [0, 0, 1, 1], [], []>} : vector<16x128xbf16>, vector<128x256xbf16>, vector<16x256xf32> -> vector<16x256xf32>
    %8 = arith.addf %3, %7 : vector<16x256xf32>
    %c0_6 = arith.constant 0 : index
    %c0_7 = arith.constant 0 : index
    %9 = vector.load %arg8[%c0_6, %c0_7] : memref<16x256xf32, #tpu.memory_space<vmem>>, vector<16x256xf32>
    tpu.vector_store %arg8[%c0_6, %c0_7], %8 {strides = array<i32>} : memref<16x256xf32, #tpu.memory_space<vmem>>, vector<16x256xf32>,
    %c0_8 = arith.constant 0 : index
    %c0_9 = arith.constant 0 : index
    %10 = vector.load %arg8[%c0_8, %c0_9] : memref<16x256xf32, #tpu.memory_space<vmem>>, vector<16x256xf32>
    %c0_10 = arith.constant 0 : index
    %c0_11 = arith.constant 0 : index
    %11 = vector.load %arg4[%c0_10, %c0_11] : memref<16x128xf32, #tpu.memory_space<vmem>>, vector<16x128xf32>
    %12 = arith.truncf %11 : vector<16x128xf32> to vector<16x128xbf16>
    %c0_12 = arith.constant 0 : index
    %c0_13 = arith.constant 0 : index
    %13 = vector.load %arg6[%c0_12, %c0_13] : memref<128x256xbf16, #tpu.memory_space<vmem>>, vector<128x256xbf16>
    %cst_14 = arith.constant dense<0.000000e+00> : vector<16x256xf32>
    %14 = tpu.matmul %12, %13, %cst_14 {dimension_numbers = #tpu.dot_dimension_numbers<[1], [0], [0], [1], [0, 0, 1, 1], [], []>} : vector<16x128xbf16>, vector<128x256xbf16>, vector<16x256xf32> -> vector<16x256xf32>
    %15 = arith.addf %10, %14 : vector<16x256xf32>
    %c0_15 = arith.constant 0 : index
    %c0_16 = arith.constant 0 : index
    %16 = vector.load %arg8[%c0_15, %c0_16] : memref<16x256xf32, #tpu.memory_space<vmem>>, vector<16x256xf32>
    tpu.vector_store %arg8[%c0_15, %c0_16], %15 {strides = array<i32>} : memref<16x256xf32, #tpu.memory_space<vmem>>, vector<16x256xf32>,
    %c0_i32_17 = arith.constant 0 : i32
    %17 = arith.cmpi eq, %arg2, %c0_i32_17 : i32
    %18 = arith.extui %17 : i1 to i32
    %c0_i32_18 = arith.constant 0 : i32
    %19 = arith.cmpi ne, %18, %c0_i32_18 : i32
    scf.if %19 {
      %c0_19 = arith.constant 0 : index
      %c0_20 = arith.constant 0 : index
      %20 = vector.load %arg8[%c0_19, %c0_20] : memref<16x256xf32, #tpu.memory_space<vmem>>, vector<16x256xf32>
      %c0_21 = arith.constant 0 : index
      %c0_22 = arith.constant 0 : index
      %21 = vector.load %arg7[%c0_21, %c0_22] : memref<16x256xf32, #tpu.memory_space<vmem>>, vector<16x256xf32>
      tpu.vector_store %arg7[%c0_21, %c0_22], %20 {strides = array<i32>} : memref<16x256xf32, #tpu.memory_space<vmem>>, vector<16x256xf32>,
    } else {
    }
    return
  }
  func.func @transform_0(%arg0: i32, %arg1: i32, %arg2: i32) -> (i32, i32) {
    %c0_i32 = arith.constant 0 : i32
    return %arg0, %arg2 : i32, i32
  }
  func.func @transform_1(%arg0: i32, %arg1: i32, %arg2: i32) -> (i32, i32) {
    %c0_i32 = arith.constant 0 : i32
    return %arg0, %arg2 : i32, i32
  }
  func.func @transform_2(%arg0: i32, %arg1: i32, %arg2: i32) -> (i32, i32) {
    %c0_i32 = arith.constant 0 : i32
    return %arg2, %arg1 : i32, i32
  }
  func.func @transform_3(%arg0: i32, %arg1: i32, %arg2: i32) -> (i32, i32) {
    %c0_i32 = arith.constant 0 : i32
    return %arg2, %arg1 : i32, i32
  }
  func.func @transform_4(%arg0: i32, %arg1: i32, %arg2: i32) -> (i32, i32) {
    %c0_i32 = arith.constant 0 : i32
    return %arg0, %arg1 : i32, i32
  }
}

module attributes {stable_mosaic.version = 11 : i64} {
  func.func @_ln_kernel(%arg0: i32, %arg1: memref<16x128xf32, #tpu.memory_space<vmem>>, %arg2: memref<1x128xf32, #tpu.memory_space<vmem>>, %arg3: memref<1x128xf32, #tpu.memory_space<vmem>>, %arg4: memref<16x128xf32, #tpu.memory_space<vmem>>) attributes {dimension_semantics = [#tpu.dimension_semantics<parallel>], iteration_bounds = array<i64: 1>, scalar_prefetch = 0 : i64, scratch_operands = 0 : i64, tpu.core_type = #tpu.core_type<tc>, window_params = [{transform_indices = @transform_0, window_bounds = array<i64: 16, 128>}, {pipeline_mode = #tpu.pipeline_mode<synchronous>, transform_indices = @transform_1, window_bounds = array<i64: 1, 128>}, {pipeline_mode = #tpu.pipeline_mode<synchronous>, transform_indices = @transform_2, window_bounds = array<i64: 1, 128>}, {transform_indices = @transform_3, window_bounds = array<i64: 16, 128>}]} {
    %c0 = arith.constant 0 : index
    %c0_0 = arith.constant 0 : index
    %0 = vector.load %arg1[%c0, %c0_0] : memref<16x128xf32, #tpu.memory_space<vmem>>, vector<16x128xf32>
    %cst = arith.constant dense<0.000000e+00> : vector<16xf32>
    %1 = vector.multi_reduction <add>, %0, %cst [1] : vector<16x128xf32> to vector<16xf32>
    %2 = vector.shape_cast %1 : vector<16xf32> to vector<16x1xf32>
    %cst_1 = arith.constant 1.280000e+02 : f32
    %3 = vector.broadcast %cst_1 : f32 to vector<16x1xf32>
    %4 = arith.divf %2, %3 : vector<16x1xf32>
    %5 = vector.broadcast %4 : vector<16x1xf32> to vector<16x128xf32>
    %6 = arith.subf %0, %5 : vector<16x128xf32>
    %7 = arith.mulf %6, %6 : vector<16x128xf32>
    %cst_2 = arith.constant dense<0.000000e+00> : vector<16xf32>
    %8 = vector.multi_reduction <add>, %7, %cst_2 [1] : vector<16x128xf32> to vector<16xf32>
    %9 = vector.shape_cast %8 : vector<16xf32> to vector<16x1xf32>
    %cst_3 = arith.constant 1.280000e+02 : f32
    %10 = vector.broadcast %cst_3 : f32 to vector<16x1xf32>
    %11 = arith.divf %9, %10 : vector<16x1xf32>
    %cst_4 = arith.constant 9.99999974E-6 : f32
    %12 = vector.broadcast %cst_4 : f32 to vector<16x1xf32>
    %13 = arith.addf %11, %12 : vector<16x1xf32>
    %14 = math.rsqrt %13 : vector<16x1xf32>
    %15 = vector.broadcast %14 : vector<16x1xf32> to vector<16x128xf32>
    %16 = arith.mulf %6, %15 : vector<16x128xf32>
    %c0_5 = arith.constant 0 : index
    %c0_6 = arith.constant 0 : index
    %17 = vector.load %arg2[%c0_5, %c0_6] : memref<1x128xf32, #tpu.memory_space<vmem>>, vector<1x128xf32>
    %18 = vector.broadcast %17 : vector<1x128xf32> to vector<16x128xf32>
    %19 = arith.mulf %16, %18 : vector<16x128xf32>
    %c0_7 = arith.constant 0 : index
    %c0_8 = arith.constant 0 : index
    %20 = vector.load %arg3[%c0_7, %c0_8] : memref<1x128xf32, #tpu.memory_space<vmem>>, vector<1x128xf32>
    %21 = vector.broadcast %20 : vector<1x128xf32> to vector<16x128xf32>
    %22 = arith.addf %19, %21 : vector<16x128xf32>
    %c0_9 = arith.constant 0 : index
    %c0_10 = arith.constant 0 : index
    %23 = vector.load %arg4[%c0_9, %c0_10] : memref<16x128xf32, #tpu.memory_space<vmem>>, vector<16x128xf32>
    tpu.vector_store %arg4[%c0_9, %c0_10], %22 {strides = array<i32>} : memref<16x128xf32, #tpu.memory_space<vmem>>, vector<16x128xf32>,
    return
  }
  func.func @transform_0(%arg0: i32) -> (i32, i32) {
    %c0_i32 = arith.constant 0 : i32
    %c0_i32_0 = arith.constant 0 : i32
    return %arg0, %c0_i32 : i32, i32
  }
  func.func @transform_1(%arg0: i32) -> (i32, i32) {
    %c0_i32 = arith.constant 0 : i32
    %c0_i32_0 = arith.constant 0 : i32
    %c0_i32_1 = arith.constant 0 : i32
    return %c0_i32, %c0_i32_0 : i32, i32
  }
  func.func @transform_2(%arg0: i32) -> (i32, i32) {
    %c0_i32 = arith.constant 0 : i32
    %c0_i32_0 = arith.constant 0 : i32
    %c0_i32_1 = arith.constant 0 : i32
    return %c0_i32, %c0_i32_0 : i32, i32
  }
  func.func @transform_3(%arg0: i32) -> (i32, i32) {
    %c0_i32 = arith.constant 0 : i32
    %c0_i32_0 = arith.constant 0 : i32
    return %arg0, %c0_i32 : i32, i32
  }
}

module attributes {stable_mosaic.version = 11 : i64} {
  func.func @_mm_kernel(%arg0: i32, %arg1: i32, %arg2: i32, %arg3: memref<16x128xf32, #tpu.memory_space<vmem>>, %arg4: memref<128x128xbf16, #tpu.memory_space<vmem>>, %arg5: memref<16x128xf32, #tpu.memory_space<vmem>>, %arg6: memref<16x128xf32, #tpu.memory_space<vmem>>) attributes {dimension_semantics = [#tpu.dimension_semantics<parallel>, #tpu.dimension_semantics<parallel>, #tpu.dimension_semantics<arbitrary>], iteration_bounds = array<i64: 1, 1, 1>, scalar_prefetch = 0 : i64, scratch_operands = 1 : i64, tpu.core_type = #tpu.core_type<tc>, window_params = [{transform_indices = @transform_0, window_bounds = array<i64: 16, 128>}, {transform_indices = @transform_1, window_bounds = array<i64: 128, 128>}, {transform_indices = @transform_2, window_bounds = array<i64: 16, 128>}]} {
    %c0_i32 = arith.constant 0 : i32
    %0 = arith.cmpi eq, %arg2, %c0_i32 : i32
    %1 = arith.extui %0 : i1 to i32
    %c0_i32_0 = arith.constant 0 : i32
    %2 = arith.cmpi ne, %1, %c0_i32_0 : i32
    scf.if %2 {
      %cst_13 = arith.constant 0.000000e+00 : f32
      %20 = vector.broadcast %cst_13 : f32 to vector<16x128xf32>
      %c0_14 = arith.constant 0 : index
      %c0_15 = arith.constant 0 : index
      %21 = vector.load %arg6[%c0_14, %c0_15] : memref<16x128xf32, #tpu.memory_space<vmem>>, vector<16x128xf32>
      tpu.vector_store %arg6[%c0_14, %c0_15], %20 {strides = array<i32>} : memref<16x128xf32, #tpu.memory_space<vmem>>, vector<16x128xf32>,
    } else {
    }
    %c0 = arith.constant 0 : index
    %c0_1 = arith.constant 0 : index
    %3 = vector.load %arg3[%c0, %c0_1] : memref<16x128xf32, #tpu.memory_space<vmem>>, vector<16x128xf32>
    %cst = arith.constant 0.000000e+00 : f32
    %4 = vector.broadcast %cst : f32 to vector<16x128xf32>
    %5 = arith.subf %4, %3 : vector<16x128xf32>
    %6 = math.exp %5 : vector<16x128xf32>
    %cst_2 = arith.constant 1.000000e+00 : f32
    %7 = vector.broadcast %cst_2 : f32 to vector<16x128xf32>
    %8 = arith.addf %7, %6 : vector<16x128xf32>
    %cst_3 = arith.constant 1.000000e+00 : f32
    %9 = vector.broadcast %cst_3 : f32 to vector<16x128xf32>
    %10 = arith.divf %9, %8 : vector<16x128xf32>
    %11 = arith.truncf %10 : vector<16x128xf32> to vector<16x128xbf16>
    %c0_4 = arith.constant 0 : index
    %c0_5 = arith.constant 0 : index
    %12 = vector.load %arg6[%c0_4, %c0_5] : memref<16x128xf32, #tpu.memory_space<vmem>>, vector<16x128xf32>
    %c0_6 = arith.constant 0 : index
    %c0_7 = arith.constant 0 : index
    %13 = vector.load %arg4[%c0_6, %c0_7] : memref<128x128xbf16, #tpu.memory_space<vmem>>, vector<128x128xbf16>
    %cst_8 = arith.constant dense<0.000000e+00> : vector<16x128xf32>
    %14 = tpu.matmul %11, %13, %cst_8 {dimension_numbers = #tpu.dot_dimension_numbers<[1], [0], [0], [1], [0, 0, 1, 1], [], []>} : vector<16x128xbf16>, vector<128x128xbf16>, vector<16x128xf32> -> vector<16x128xf32>
    %15 = arith.addf %12, %14 : vector<16x128xf32>
    %c0_9 = arith.constant 0 : index
    %c0_10 = arith.constant 0 : index
    %16 = vector.load %arg6[%c0_9, %c0_10] : memref<16x128xf32, #tpu.memory_space<vmem>>, vector<16x128xf32>
    tpu.vector_store %arg6[%c0_9, %c0_10], %15 {strides = array<i32>} : memref<16x128xf32, #tpu.memory_space<vmem>>, vector<16x128xf32>,
    %c0_i32_11 = arith.constant 0 : i32
    %17 = arith.cmpi eq, %arg2, %c0_i32_11 : i32
    %18 = arith.extui %17 : i1 to i32
    %c0_i32_12 = arith.constant 0 : i32
    %19 = arith.cmpi ne, %18, %c0_i32_12 : i32
    scf.if %19 {
      %c0_13 = arith.constant 0 : index
      %c0_14 = arith.constant 0 : index
      %20 = vector.load %arg6[%c0_13, %c0_14] : memref<16x128xf32, #tpu.memory_space<vmem>>, vector<16x128xf32>
      %c0_15 = arith.constant 0 : index
      %c0_16 = arith.constant 0 : index
      %21 = vector.load %arg5[%c0_15, %c0_16] : memref<16x128xf32, #tpu.memory_space<vmem>>, vector<16x128xf32>
      tpu.vector_store %arg5[%c0_15, %c0_16], %20 {strides = array<i32>} : memref<16x128xf32, #tpu.memory_space<vmem>>, vector<16x128xf32>,
    } else {
    }
    return
  }
  func.func @transform_0(%arg0: i32, %arg1: i32, %arg2: i32) -> (i32, i32) {
    %c0_i32 = arith.constant 0 : i32
    return %arg0, %arg2 : i32, i32
  }
  func.func @transform_1(%arg0: i32, %arg1: i32, %arg2: i32) -> (i32, i32) {
    %c0_i32 = arith.constant 0 : i32
    return %arg2, %arg1 : i32, i32
  }
  func.func @transform_2(%arg0: i32, %arg1: i32, %arg2: i32) -> (i32, i32) {
    %c0_i32 = arith.constant 0 : i32
    return %arg0, %arg1 : i32, i32
  }
}

module attributes {stable_mosaic.version = 11 : i64} {
  func.func @_mm_gated_kernel(%arg0: i32, %arg1: i32, %arg2: i32, %arg3: memref<16x128xf32, #tpu.memory_space<vmem>>, %arg4: memref<16x128xf32, #tpu.memory_space<vmem>>, %arg5: memref<128x128xbf16, #tpu.memory_space<vmem>>, %arg6: memref<16x128xf32, #tpu.memory_space<vmem>>, %arg7: memref<16x128xf32, #tpu.memory_space<vmem>>) attributes {dimension_semantics = [#tpu.dimension_semantics<parallel>, #tpu.dimension_semantics<parallel>, #tpu.dimension_semantics<arbitrary>], iteration_bounds = array<i64: 1, 1, 1>, scalar_prefetch = 0 : i64, scratch_operands = 1 : i64, tpu.core_type = #tpu.core_type<tc>, window_params = [{transform_indices = @transform_0, window_bounds = array<i64: 16, 128>}, {transform_indices = @transform_1, window_bounds = array<i64: 16, 128>}, {transform_indices = @transform_2, window_bounds = array<i64: 128, 128>}, {transform_indices = @transform_3, window_bounds = array<i64: 16, 128>}]} {
    %c0_i32 = arith.constant 0 : i32
    %0 = arith.cmpi eq, %arg2, %c0_i32 : i32
    %1 = arith.extui %0 : i1 to i32
    %c0_i32_0 = arith.constant 0 : i32
    %2 = arith.cmpi ne, %1, %c0_i32_0 : i32
    scf.if %2 {
      %cst_12 = arith.constant 0.000000e+00 : f32
      %15 = vector.broadcast %cst_12 : f32 to vector<16x128xf32>
      %c0_13 = arith.constant 0 : index
      %c0_14 = arith.constant 0 : index
      %16 = vector.load %arg7[%c0_13, %c0_14] : memref<16x128xf32, #tpu.memory_space<vmem>>, vector<16x128xf32>
      tpu.vector_store %arg7[%c0_13, %c0_14], %15 {strides = array<i32>} : memref<16x128xf32, #tpu.memory_space<vmem>>, vector<16x128xf32>,
    } else {
    }
    %c0 = arith.constant 0 : index
    %c0_1 = arith.constant 0 : index
    %3 = vector.load %arg3[%c0, %c0_1] : memref<16x128xf32, #tpu.memory_space<vmem>>, vector<16x128xf32>
    %c0_2 = arith.constant 0 : index
    %c0_3 = arith.constant 0 : index
    %4 = vector.load %arg4[%c0_2, %c0_3] : memref<16x128xf32, #tpu.memory_space<vmem>>, vector<16x128xf32>
    %5 = arith.mulf %3, %4 : vector<16x128xf32>
    %6 = arith.truncf %5 : vector<16x128xf32> to vector<16x128xbf16>
    %c0_4 = arith.constant 0 : index
    %c0_5 = arith.constant 0 : index
    %7 = vector.load %arg7[%c0_4, %c0_5] : memref<16x128xf32, #tpu.memory_space<vmem>>, vector<16x128xf32>
    %c0_6 = arith.constant 0 : index
    %c0_7 = arith.constant 0 : index
    %8 = vector.load %arg5[%c0_6, %c0_7] : memref<128x128xbf16, #tpu.memory_space<vmem>>, vector<128x128xbf16>
    %cst = arith.constant dense<0.000000e+00> : vector<16x128xf32>
    %9 = tpu.matmul %6, %8, %cst {dimension_numbers = #tpu.dot_dimension_numbers<[1], [0], [0], [1], [0, 0, 1, 1], [], []>} : vector<16x128xbf16>, vector<128x128xbf16>, vector<16x128xf32> -> vector<16x128xf32>
    %10 = arith.addf %7, %9 : vector<16x128xf32>
    %c0_8 = arith.constant 0 : index
    %c0_9 = arith.constant 0 : index
    %11 = vector.load %arg7[%c0_8, %c0_9] : memref<16x128xf32, #tpu.memory_space<vmem>>, vector<16x128xf32>
    tpu.vector_store %arg7[%c0_8, %c0_9], %10 {strides = array<i32>} : memref<16x128xf32, #tpu.memory_space<vmem>>, vector<16x128xf32>,
    %c0_i32_10 = arith.constant 0 : i32
    %12 = arith.cmpi eq, %arg2, %c0_i32_10 : i32
    %13 = arith.extui %12 : i1 to i32
    %c0_i32_11 = arith.constant 0 : i32
    %14 = arith.cmpi ne, %13, %c0_i32_11 : i32
    scf.if %14 {
      %c0_12 = arith.constant 0 : index
      %c0_13 = arith.constant 0 : index
      %15 = vector.load %arg7[%c0_12, %c0_13] : memref<16x128xf32, #tpu.memory_space<vmem>>, vector<16x128xf32>
      %c0_14 = arith.constant 0 : index
      %c0_15 = arith.constant 0 : index
      %16 = vector.load %arg6[%c0_14, %c0_15] : memref<16x128xf32, #tpu.memory_space<vmem>>, vector<16x128xf32>
      tpu.vector_store %arg6[%c0_14, %c0_15], %15 {strides = array<i32>} : memref<16x128xf32, #tpu.memory_space<vmem>>, vector<16x128xf32>,
    } else {
    }
    return
  }
  func.func @transform_0(%arg0: i32, %arg1: i32, %arg2: i32) -> (i32, i32) {
    %c0_i32 = arith.constant 0 : i32
    return %arg0, %arg2 : i32, i32
  }
  func.func @transform_1(%arg0: i32, %arg1: i32, %arg2: i32) -> (i32, i32) {
    %c0_i32 = arith.constant 0 : i32
    return %arg0, %arg2 : i32, i32
  }
  func.func @transform_2(%arg0: i32, %arg1: i32, %arg2: i32) -> (i32, i32) {
    %c0_i32 = arith.constant 0 : i32
    return %arg2, %arg1 : i32, i32
  }
  func.func @transform_3(%arg0: i32, %arg1: i32, %arg2: i32) -> (i32, i32) {
    %c0_i32 = arith.constant 0 : i32
    return %arg0, %arg1 : i32, i32
  }
}

module attributes {stable_mosaic.version = 11 : i64} {
  func.func @_wkv7_kernel(%arg0: i32, %arg1: i32, %arg2: i32, %arg3: memref<1x8x128xf32, #tpu.memory_space<vmem>>, %arg4: memref<1x8x128xf32, #tpu.memory_space<vmem>>, %arg5: memref<1x8x128xf32, #tpu.memory_space<vmem>>, %arg6: memref<1x8x128xf32, #tpu.memory_space<vmem>>, %arg7: memref<1x8x128xf32, #tpu.memory_space<vmem>>, %arg8: memref<1x128xf32, #tpu.memory_space<vmem>>, %arg9: memref<1x128xf32, #tpu.memory_space<vmem>>, %arg10: memref<1x128xf32, #tpu.memory_space<vmem>>, %arg11: memref<1x128xf32, #tpu.memory_space<vmem>>, %arg12: memref<1x128xf32, #tpu.memory_space<vmem>>, %arg13: memref<1x8x128xf32, #tpu.memory_space<vmem>>, %arg14: memref<64x64xf32, #tpu.memory_space<vmem>>, %arg15: memref<64x64xf32, #tpu.memory_space<vmem>>, %arg16: memref<8x64xf32, #tpu.memory_space<vmem>>, %arg17: memref<8x64xf32, #tpu.memory_space<vmem>>, %arg18: memref<8x64xf32, #tpu.memory_space<vmem>>, %arg19: memref<8x64xf32, #tpu.memory_space<vmem>>, %arg20: memref<8x64xf32, #tpu.memory_space<vmem>>, %arg21: memref<8x64xf32, #tpu.memory_space<vmem>>, %arg22: memref<8x64xf32, #tpu.memory_space<vmem>>, %arg23: memref<8x64xf32, #tpu.memory_space<vmem>>, %arg24: memref<8x64xf32, #tpu.memory_space<vmem>>, %arg25: memref<8x64xf32, #tpu.memory_space<vmem>>, %arg26: memref<8x64xf32, #tpu.memory_space<vmem>>, %arg27: memref<8x64xf32, #tpu.memory_space<vmem>>, %arg28: memref<8x64xf32, #tpu.memory_space<vmem>>, %arg29: memref<8x64xf32, #tpu.memory_space<vmem>>) attributes {dimension_semantics = [#tpu.dimension_semantics<parallel>, #tpu.dimension_semantics<parallel>, #tpu.dimension_semantics<arbitrary>], iteration_bounds = array<i64: 2, 1, 1>, scalar_prefetch = 0 : i64, scratch_operands = 16 : i64, tpu.core_type = #tpu.core_type<tc>, window_params = [{transform_indices = @transform_0, window_bounds = array<i64: 1, 8, 128>}, {transform_indices = @transform_1, window_bounds = array<i64: 1, 8, 128>}, {transform_indices = @transform_2, window_bounds = array<i64: 1, 8, 128>}, {transform_indices = @transform_3, window_bounds = array<i64: 1, 8, 128>}, {transform_indices = @transform_4, window_bounds = array<i64: 1, 8, 128>}, {transform_indices = @transform_5, window_bounds = array<i64: 1, 128>}, {transform_indices = @transform_6, window_bounds = array<i64: 1, 128>}, {transform_indices = @transform_7, window_bounds = array<i64: 1, 128>}, {transform_indices = @transform_8, window_bounds = array<i64: 1, 128>}, {transform_indices = @transform_9, window_bounds = array<i64: 1, 128>}, {transform_indices = @transform_10, window_bounds = array<i64: 1, 8, 128>}]} {
    %c0_i32 = arith.constant 0 : i32
    %0 = arith.cmpi eq, %arg2, %c0_i32 : i32
    %1 = arith.extui %0 : i1 to i32
    %c0_i32_0 = arith.constant 0 : i32
    %2 = arith.cmpi ne, %1, %c0_i32_0 : i32
    scf.if %2 {
      %cst_273 = arith.constant 0.000000e+00 : f32
      %800 = vector.broadcast %cst_273 : f32 to vector<64x64xf32>
      %c0_274 = arith.constant 0 : index
      %c0_275 = arith.constant 0 : index
      %801 = vector.load %arg14[%c0_274, %c0_275] : memref<64x64xf32, #tpu.memory_space<vmem>>, vector<64x64xf32>
      tpu.vector_store %arg14[%c0_274, %c0_275], %800 {strides = array<i32>} : memref<64x64xf32, #tpu.memory_space<vmem>>, vector<64x64xf32>,
      %cst_276 = arith.constant 0.000000e+00 : f32
      %802 = vector.broadcast %cst_276 : f32 to vector<64x64xf32>
      %c0_277 = arith.constant 0 : index
      %c0_278 = arith.constant 0 : index
      %803 = vector.load %arg15[%c0_277, %c0_278] : memref<64x64xf32, #tpu.memory_space<vmem>>, vector<64x64xf32>
      tpu.vector_store %arg15[%c0_277, %c0_278], %802 {strides = array<i32>} : memref<64x64xf32, #tpu.memory_space<vmem>>, vector<64x64xf32>,
    } else {
    }
    %c0 = arith.constant 0 : index
    %c0_1 = arith.constant 0 : index
    %c0_2 = arith.constant 0 : index
    %3 = vector.load %arg3[%c0, %c0_1, %c0_2] : memref<1x8x128xf32, #tpu.memory_space<vmem>>, vector<1x8x128xf32>
    %4 = vector.shape_cast %3 : vector<1x8x128xf32> to vector<8x128xf32>
    %c0_3 = arith.constant 0 : index
    %c0_4 = arith.constant 0 : index
    %c0_5 = arith.constant 0 : index
    %5 = vector.load %arg5[%c0_3, %c0_4, %c0_5] : memref<1x8x128xf32, #tpu.memory_space<vmem>>, vector<1x8x128xf32>
    %6 = vector.shape_cast %5 : vector<1x8x128xf32> to vector<8x128xf32>
    %c0_6 = arith.constant 0 : index
    %c0_7 = arith.constant 0 : index
    %c0_8 = arith.constant 0 : index
    %7 = vector.load %arg6[%c0_6, %c0_7, %c0_8] : memref<1x8x128xf32, #tpu.memory_space<vmem>>, vector<1x8x128xf32>
    %8 = vector.shape_cast %7 : vector<1x8x128xf32> to vector<8x128xf32>
    %c0_9 = arith.constant 0 : index
    %c0_10 = arith.constant 0 : index
    %c0_11 = arith.constant 0 : index
    %9 = vector.load %arg7[%c0_9, %c0_10, %c0_11] : memref<1x8x128xf32, #tpu.memory_space<vmem>>, vector<1x8x128xf32>
    %10 = vector.shape_cast %9 : vector<1x8x128xf32> to vector<8x128xf32>
    %c0_12 = arith.constant 0 : index
    %c0_13 = arith.constant 0 : index
    %c0_14 = arith.constant 0 : index
    %11 = vector.load %arg4[%c0_12, %c0_13, %c0_14] : memref<1x8x128xf32, #tpu.memory_space<vmem>>, vector<1x8x128xf32>
    %12 = vector.shape_cast %11 : vector<1x8x128xf32> to vector<8x128xf32>
    %13 = math.exp %12 : vector<8x128xf32>
    %cst = arith.constant 0.000000e+00 : f32
    %14 = vector.broadcast %cst : f32 to vector<8x128xf32>
    %15 = arith.subf %14, %13 : vector<8x128xf32>
    %16 = math.exp %15 : vector<8x128xf32>
    %cst_15 = arith.constant 1.000000e+00 : f32
    %17 = vector.broadcast %cst_15 : f32 to vector<8x128xf32>
    %18 = arith.subf %10, %17 : vector<8x128xf32>
    %c0_16 = arith.constant 0 : index
    %c0_17 = arith.constant 0 : index
    %19 = vector.load %arg9[%c0_16, %c0_17] : memref<1x128xf32, #tpu.memory_space<vmem>>, vector<1x128xf32>
    %20 = vector.broadcast %19 : vector<1x128xf32> to vector<8x128xf32>
    %21 = arith.mulf %18, %20 : vector<8x128xf32>
    %cst_18 = arith.constant 1.000000e+00 : f32
    %22 = vector.broadcast %cst_18 : f32 to vector<8x128xf32>
    %23 = arith.addf %22, %21 : vector<8x128xf32>
    %24 = arith.mulf %6, %23 : vector<8x128xf32>
    %c0_19 = arith.constant 0 : index
    %c0_20 = arith.constant 0 : index
    %25 = vector.load %arg8[%c0_19, %c0_20] : memref<1x128xf32, #tpu.memory_space<vmem>>, vector<1x128xf32>
    %26 = vector.broadcast %25 : vector<1x128xf32> to vector<8x128xf32>
    %27 = arith.mulf %6, %26 : vector<8x128xf32>
    %c0_21 = arith.constant 0 : index
    %c0_22 = arith.constant 0 : index
    %28 = vector.load %arg11[%c0_21, %c0_22] : memref<1x128xf32, #tpu.memory_space<vmem>>, vector<1x128xf32>
    %c0_23 = arith.constant 0 : index
    %c0_24 = arith.constant 0 : index
    %29 = vector.load %arg12[%c0_23, %c0_24] : memref<1x128xf32, #tpu.memory_space<vmem>>, vector<1x128xf32>
    %c0_25 = arith.constant 0 : index
    %c0_26 = arith.constant 0 : index
    %30 = vector.load %arg10[%c0_25, %c0_26] : memref<1x128xf32, #tpu.memory_space<vmem>>, vector<1x128xf32>
    %31 = tpu.iota {dimensions = array<i32: 0>} : vector<64x64xi32>
    %32 = tpu.iota {dimensions = array<i32: 1>} : vector<64x64xi32>
    %33 = arith.cmpi eq, %31, %32 : vector<64x64xi32>
    %34 = arith.extui %33 : vector<64x64xi1> to vector<64x64xi32>
    %35 = arith.sitofp %34 : vector<64x64xi32> to vector<64x64xf32>
    %36 = vector.extract_strided_slice %27 {offsets = [0, 0], sizes = [8, 64], strides = [1, 1]} : vector<8x128xf32> to vector<8x64xf32>
    %37 = arith.mulf %36, %36 : vector<8x64xf32>
    %cst_27 = arith.constant dense<0.000000e+00> : vector<8xf32>
    %38 = vector.multi_reduction <add>, %37, %cst_27 [1] : vector<8x64xf32> to vector<8xf32>
    %39 = vector.shape_cast %38 : vector<8xf32> to vector<8x1xf32>
    %cst_28 = arith.constant 1.000000e-24 : f32
    %40 = vector.broadcast %cst_28 : f32 to vector<8x1xf32>
    %41 = arith.maximumf %39, %40 : vector<8x1xf32>
    %42 = math.rsqrt %41 : vector<8x1xf32>
    %43 = vector.broadcast %42 : vector<8x1xf32> to vector<8x64xf32>
    %44 = arith.mulf %36, %43 : vector<8x64xf32>
    %45 = vector.extract_strided_slice %4 {offsets = [0, 0], sizes = [8, 64], strides = [1, 1]} : vector<8x128xf32> to vector<8x64xf32>
    %c0_29 = arith.constant 0 : index
    %c0_30 = arith.constant 0 : index
    %46 = vector.load %arg16[%c0_29, %c0_30] : memref<8x64xf32, #tpu.memory_space<vmem>>, vector<8x64xf32>
    tpu.vector_store %arg16[%c0_29, %c0_30], %45 {strides = array<i32>} : memref<8x64xf32, #tpu.memory_space<vmem>>, vector<8x64xf32>,
    %47 = vector.extract_strided_slice %16 {offsets = [0, 0], sizes = [8, 64], strides = [1, 1]} : vector<8x128xf32> to vector<8x64xf32>
    %c0_31 = arith.constant 0 : index
    %c0_32 = arith.constant 0 : index
    %48 = vector.load %arg17[%c0_31, %c0_32] : memref<8x64xf32, #tpu.memory_space<vmem>>, vector<8x64xf32>
    tpu.vector_store %arg17[%c0_31, %c0_32], %47 {strides = array<i32>} : memref<8x64xf32, #tpu.memory_space<vmem>>, vector<8x64xf32>,
    %49 = vector.extract_strided_slice %24 {offsets = [0, 0], sizes = [8, 64], strides = [1, 1]} : vector<8x128xf32> to vector<8x64xf32>
    %c0_33 = arith.constant 0 : index
    %c0_34 = arith.constant 0 : index
    %50 = vector.load %arg18[%c0_33, %c0_34] : memref<8x64xf32, #tpu.memory_space<vmem>>, vector<8x64xf32>
    tpu.vector_store %arg18[%c0_33, %c0_34], %49 {strides = array<i32>} : memref<8x64xf32, #tpu.memory_space<vmem>>, vector<8x64xf32>,
    %cst_35 = arith.constant 0.000000e+00 : f32
    %51 = vector.broadcast %cst_35 : f32 to vector<8x64xf32>
    %52 = arith.subf %51, %44 : vector<8x64xf32>
    %c0_36 = arith.constant 0 : index
    %c0_37 = arith.constant 0 : index
    %53 = vector.load %arg19[%c0_36, %c0_37] : memref<8x64xf32, #tpu.memory_space<vmem>>, vector<8x64xf32>
    tpu.vector_store %arg19[%c0_36, %c0_37], %52 {strides = array<i32>} : memref<8x64xf32, #tpu.memory_space<vmem>>, vector<8x64xf32>,
    %54 = vector.extract_strided_slice %10 {offsets = [0, 0], sizes = [8, 64], strides = [1, 1]} : vector<8x128xf32> to vector<8x64xf32>
    %55 = arith.mulf %44, %54 : vector<8x64xf32>
    %c0_38 = arith.constant 0 : index
    %c0_39 = arith.constant 0 : index
    %56 = vector.load %arg20[%c0_38, %c0_39] : memref<8x64xf32, #tpu.memory_space<vmem>>, vector<8x64xf32>
    tpu.vector_store %arg20[%c0_38, %c0_39], %55 {strides = array<i32>} : memref<8x64xf32, #tpu.memory_space<vmem>>, vector<8x64xf32>,
    %57 = vector.extract_strided_slice %8 {offsets = [0, 0], sizes = [8, 64], strides = [1, 1]} : vector<8x128xf32> to vector<8x64xf32>
    %c0_40 = arith.constant 0 : index
    %c0_41 = arith.constant 0 : index
    %58 = vector.load %arg21[%c0_40, %c0_41] : memref<8x64xf32, #tpu.memory_space<vmem>>, vector<8x64xf32>
    tpu.vector_store %arg21[%c0_40, %c0_41], %57 {strides = array<i32>} : memref<8x64xf32, #tpu.memory_space<vmem>>, vector<8x64xf32>,
    %59 = vector.extract_strided_slice %27 {offsets = [0, 64], sizes = [8, 64], strides = [1, 1]} : vector<8x128xf32> to vector<8x64xf32>
    %60 = arith.mulf %59, %59 : vector<8x64xf32>
    %cst_42 = arith.constant dense<0.000000e+00> : vector<8xf32>
    %61 = vector.multi_reduction <add>, %60, %cst_42 [1] : vector<8x64xf32> to vector<8xf32>
    %62 = vector.shape_cast %61 : vector<8xf32> to vector<8x1xf32>
    %cst_43 = arith.constant 1.000000e-24 : f32
    %63 = vector.broadcast %cst_43 : f32 to vector<8x1xf32>
    %64 = arith.maximumf %62, %63 : vector<8x1xf32>
    %65 = math.rsqrt %64 : vector<8x1xf32>
    %66 = vector.broadcast %65 : vector<8x1xf32> to vector<8x64xf32>
    %67 = arith.mulf %59, %66 : vector<8x64xf32>
    %68 = vector.extract_strided_slice %4 {offsets = [0, 64], sizes = [8, 64], strides = [1, 1]} : vector<8x128xf32> to vector<8x64xf32>
    %c0_44 = arith.constant 0 : index
    %c0_45 = arith.constant 0 : index
    %69 = vector.load %arg23[%c0_44, %c0_45] : memref<8x64xf32, #tpu.memory_space<vmem>>, vector<8x64xf32>
    tpu.vector_store %arg23[%c0_44, %c0_45], %68 {strides = array<i32>} : memref<8x64xf32, #tpu.memory_space<vmem>>, vector<8x64xf32>,
    %70 = vector.extract_strided_slice %16 {offsets = [0, 64], sizes = [8, 64], strides = [1, 1]} : vector<8x128xf32> to vector<8x64xf32>
    %c0_46 = arith.constant 0 : index
    %c0_47 = arith.constant 0 : index
    %71 = vector.load %arg24[%c0_46, %c0_47] : memref<8x64xf32, #tpu.memory_space<vmem>>, vector<8x64xf32>
    tpu.vector_store %arg24[%c0_46, %c0_47], %70 {strides = array<i32>} : memref<8x64xf32, #tpu.memory_space<vmem>>, vector<8x64xf32>,
    %72 = vector.extract_strided_slice %24 {offsets = [0, 64], sizes = [8, 64], strides = [1, 1]} : vector<8x128xf32> to vector<8x64xf32>
    %c0_48 = arith.constant 0 : index
    %c0_49 = arith.constant 0 : index
    %73 = vector.load %arg25[%c0_48, %c0_49] : memref<8x64xf32, #tpu.memory_space<vmem>>, vector<8x64xf32>
    tpu.vector_store %arg25[%c0_48, %c0_49], %72 {strides = array<i32>} : memref<8x64xf32, #tpu.memory_space<vmem>>, vector<8x64xf32>,
    %cst_50 = arith.constant 0.000000e+00 : f32
    %74 = vector.broadcast %cst_50 : f32 to vector<8x64xf32>
    %75 = arith.subf %74, %67 : vector<8x64xf32>
    %c0_51 = arith.constant 0 : index
    %c0_52 = arith.constant 0 : index
    %76 = vector.load %arg26[%c0_51, %c0_52] : memref<8x64xf32, #tpu.memory_space<vmem>>, vector<8x64xf32>
    tpu.vector_store %arg26[%c0_51, %c0_52], %75 {strides = array<i32>} : memref<8x64xf32, #tpu.memory_space<vmem>>, vector<8x64xf32>,
    %77 = vector.extract_strided_slice %10 {offsets = [0, 64], sizes = [8, 64], strides = [1, 1]} : vector<8x128xf32> to vector<8x64xf32>
    %78 = arith.mulf %67, %77 : vector<8x64xf32>
    %c0_53 = arith.constant 0 : index
    %c0_54 = arith.constant 0 : index
    %79 = vector.load %arg27[%c0_53, %c0_54] : memref<8x64xf32, #tpu.memory_space<vmem>>, vector<8x64xf32>
    tpu.vector_store %arg27[%c0_53, %c0_54], %78 {strides = array<i32>} : memref<8x64xf32, #tpu.memory_space<vmem>>, vector<8x64xf32>,
    %80 = vector.extract_strided_slice %8 {offsets = [0, 64], sizes = [8, 64], strides = [1, 1]} : vector<8x128xf32> to vector<8x64xf32>
    %c0_55 = arith.constant 0 : index
    %c0_56 = arith.constant 0 : index
    %81 = vector.load %arg28[%c0_55, %c0_56] : memref<8x64xf32, #tpu.memory_space<vmem>>, vector<8x64xf32>
    tpu.vector_store %arg28[%c0_55, %c0_56], %80 {strides = array<i32>} : memref<8x64xf32, #tpu.memory_space<vmem>>, vector<8x64xf32>,
    %c0_57 = arith.constant 0 : index
    %c0_58 = arith.constant 0 : index
    %82 = vector.load %arg14[%c0_57, %c0_58] : memref<64x64xf32, #tpu.memory_space<vmem>>, vector<64x64xf32>
    %c0_59 = arith.constant 0 : index
    %c0_60 = arith.constant 0 : index
    %83 = vector.load %arg15[%c0_59, %c0_60] : memref<64x64xf32, #tpu.memory_space<vmem>>, vector<64x64xf32>
    %c0_i32_61 = arith.constant 0 : i32
    %84 = arith.index_cast %c0_i32_61 : i32 to index
    %c0_62 = arith.constant 0 : index
    %85 = vector.load %arg16[%84, %c0_62] : memref<8x64xf32, #tpu.memory_space<vmem>>, vector<1x64xf32>
    %86 = arith.index_cast %c0_i32_61 : i32 to index
    %c0_63 = arith.constant 0 : index
    %87 = vector.load %arg17[%86, %c0_63] : memref<8x64xf32, #tpu.memory_space<vmem>>, vector<1x64xf32>
    %88 = arith.index_cast %c0_i32_61 : i32 to index
    %c0_64 = arith.constant 0 : index
    %89 = vector.load %arg18[%88, %c0_64] : memref<8x64xf32, #tpu.memory_space<vmem>>, vector<1x64xf32>
    %90 = arith.index_cast %c0_i32_61 : i32 to index
    %c0_65 = arith.constant 0 : index
    %91 = vector.load %arg19[%90, %c0_65] : memref<8x64xf32, #tpu.memory_space<vmem>>, vector<1x64xf32>
    %92 = arith.index_cast %c0_i32_61 : i32 to index
    %c0_66 = arith.constant 0 : index
    %93 = vector.load %arg20[%92, %c0_66] : memref<8x64xf32, #tpu.memory_space<vmem>>, vector<1x64xf32>
    %94 = arith.index_cast %c0_i32_61 : i32 to index
    %c0_67 = arith.constant 0 : index
    %95 = vector.load %arg21[%94, %c0_67] : memref<8x64xf32, #tpu.memory_space<vmem>>, vector<1x64xf32>
    %96 = vector.broadcast %95 : vector<1x64xf32> to vector<64x64xf32>
    %97 = arith.mulf %96, %35 : vector<64x64xf32>
    %cst_68 = arith.constant dense<0.000000e+00> : vector<64xf32>
    %98 = vector.multi_reduction <add>, %97, %cst_68 [1] : vector<64x64xf32> to vector<64xf32>
    %99 = vector.shape_cast %98 : vector<64xf32> to vector<64x1xf32>
    %100 = vector.broadcast %91 : vector<1x64xf32> to vector<64x64xf32>
    %101 = arith.mulf %82, %100 : vector<64x64xf32>
    %cst_69 = arith.constant dense<0.000000e+00> : vector<64xf32>
    %102 = vector.multi_reduction <add>, %101, %cst_69 [1] : vector<64x64xf32> to vector<64xf32>
    %103 = vector.shape_cast %102 : vector<64xf32> to vector<64x1xf32>
    %104 = vector.broadcast %87 : vector<1x64xf32> to vector<64x64xf32>
    %105 = arith.mulf %82, %104 : vector<64x64xf32>
    %106 = vector.broadcast %103 : vector<64x1xf32> to vector<64x64xf32>
    %107 = vector.broadcast %93 : vector<1x64xf32> to vector<64x64xf32>
    %108 = arith.mulf %106, %107 : vector<64x64xf32>
    %109 = arith.addf %105, %108 : vector<64x64xf32>
    %110 = vector.broadcast %99 : vector<64x1xf32> to vector<64x64xf32>
    %111 = vector.broadcast %89 : vector<1x64xf32> to vector<64x64xf32>
    %112 = arith.mulf %110, %111 : vector<64x64xf32>
    %113 = arith.addf %109, %112 : vector<64x64xf32>
    %114 = vector.broadcast %85 : vector<1x64xf32> to vector<64x64xf32>
    %115 = arith.mulf %113, %114 : vector<64x64xf32>
    %cst_70 = arith.constant dense<0.000000e+00> : vector<64xf32>
    %116 = vector.multi_reduction <add>, %115, %cst_70 [1] : vector<64x64xf32> to vector<64xf32>
    %117 = vector.shape_cast %116 : vector<64xf32> to vector<64x1xf32>
    %118 = vector.broadcast %117 : vector<64x1xf32> to vector<64x64xf32>
    %119 = arith.mulf %118, %35 : vector<64x64xf32>
    %cst_71 = arith.constant dense<0.000000e+00> : vector<64xf32>
    %120 = vector.multi_reduction <add>, %119, %cst_71 [0] : vector<64x64xf32> to vector<64xf32>
    %121 = vector.shape_cast %120 : vector<64xf32> to vector<1x64xf32>
    %122 = arith.index_cast %c0_i32_61 : i32 to index
    %c0_72 = arith.constant 0 : index
    %123 = vector.load %arg22[%122, %c0_72] : memref<8x64xf32, #tpu.memory_space<vmem>>, vector<1x64xf32>
    tpu.vector_store %arg22[%122, %c0_72], %121 {strides = array<i32>} : memref<8x64xf32, #tpu.memory_space<vmem>>, vector<1x64xf32>,
    %124 = arith.index_cast %c0_i32_61 : i32 to index
    %c0_73 = arith.constant 0 : index
    %125 = vector.load %arg23[%124, %c0_73] : memref<8x64xf32, #tpu.memory_space<vmem>>, vector<1x64xf32>
    %126 = arith.index_cast %c0_i32_61 : i32 to index
    %c0_74 = arith.constant 0 : index
    %127 = vector.load %arg24[%126, %c0_74] : memref<8x64xf32, #tpu.memory_space<vmem>>, vector<1x64xf32>
    %128 = arith.index_cast %c0_i32_61 : i32 to index
    %c0_75 = arith.constant 0 : index
    %129 = vector.load %arg25[%128, %c0_75] : memref<8x64xf32, #tpu.memory_space<vmem>>, vector<1x64xf32>
    %130 = arith.index_cast %c0_i32_61 : i32 to index
    %c0_76 = arith.constant 0 : index
    %131 = vector.load %arg26[%130, %c0_76] : memref<8x64xf32, #tpu.memory_space<vmem>>, vector<1x64xf32>
    %132 = arith.index_cast %c0_i32_61 : i32 to index
    %c0_77 = arith.constant 0 : index
    %133 = vector.load %arg27[%132, %c0_77] : memref<8x64xf32, #tpu.memory_space<vmem>>, vector<1x64xf32>
    %134 = arith.index_cast %c0_i32_61 : i32 to index
    %c0_78 = arith.constant 0 : index
    %135 = vector.load %arg28[%134, %c0_78] : memref<8x64xf32, #tpu.memory_space<vmem>>, vector<1x64xf32>
    %136 = vector.broadcast %135 : vector<1x64xf32> to vector<64x64xf32>
    %137 = arith.mulf %136, %35 : vector<64x64xf32>
    %cst_79 = arith.constant dense<0.000000e+00> : vector<64xf32>
    %138 = vector.multi_reduction <add>, %137, %cst_79 [1] : vector<64x64xf32> to vector<64xf32>
    %139 = vector.shape_cast %138 : vector<64xf32> to vector<64x1xf32>
    %140 = vector.broadcast %131 : vector<1x64xf32> to vector<64x64xf32>
    %141 = arith.mulf %83, %140 : vector<64x64xf32>
    %cst_80 = arith.constant dense<0.000000e+00> : vector<64xf32>
    %142 = vector.multi_reduction <add>, %141, %cst_80 [1] : vector<64x64xf32> to vector<64xf32>
    %143 = vector.shape_cast %142 : vector<64xf32> to vector<64x1xf32>
    %144 = vector.broadcast %127 : vector<1x64xf32> to vector<64x64xf32>
    %145 = arith.mulf %83, %144 : vector<64x64xf32>
    %146 = vector.broadcast %143 : vector<64x1xf32> to vector<64x64xf32>
    %147 = vector.broadcast %133 : vector<1x64xf32> to vector<64x64xf32>
    %148 = arith.mulf %146, %147 : vector<64x64xf32>
    %149 = arith.addf %145, %148 : vector<64x64xf32>
    %150 = vector.broadcast %139 : vector<64x1xf32> to vector<64x64xf32>
    %151 = vector.broadcast %129 : vector<1x64xf32> to vector<64x64xf32>
    %152 = arith.mulf %150, %151 : vector<64x64xf32>
    %153 = arith.addf %149, %152 : vector<64x64xf32>
    %154 = vector.broadcast %125 : vector<1x64xf32> to vector<64x64xf32>
    %155 = arith.mulf %153, %154 : vector<64x64xf32>
    %cst_81 = arith.constant dense<0.000000e+00> : vector<64xf32>
    %156 = vector.multi_reduction <add>, %155, %cst_81 [1] : vector<64x64xf32> to vector<64xf32>
    %157 = vector.shape_cast %156 : vector<64xf32> to vector<64x1xf32>
    %158 = vector.broadcast %157 : vector<64x1xf32> to vector<64x64xf32>
    %159 = arith.mulf %158, %35 : vector<64x64xf32>
    %cst_82 = arith.constant dense<0.000000e+00> : vector<64xf32>
    %160 = vector.multi_reduction <add>, %159, %cst_82 [0] : vector<64x64xf32> to vector<64xf32>
    %161 = vector.shape_cast %160 : vector<64xf32> to vector<1x64xf32>
    %162 = arith.index_cast %c0_i32_61 : i32 to index
    %c0_83 = arith.constant 0 : index
    %163 = vector.load %arg29[%162, %c0_83] : memref<8x64xf32, #tpu.memory_space<vmem>>, vector<1x64xf32>
    tpu.vector_store %arg29[%162, %c0_83], %161 {strides = array<i32>} : memref<8x64xf32, #tpu.memory_space<vmem>>, vector<1x64xf32>,
    %c1_i32 = arith.constant 1 : i32
    %164 = arith.index_cast %c1_i32 : i32 to index
    %c0_84 = arith.constant 0 : index
    %165 = vector.load %arg16[%164, %c0_84] : memref<8x64xf32, #tpu.memory_space<vmem>>, vector<1x64xf32>
    %166 = arith.index_cast %c1_i32 : i32 to index
    %c0_85 = arith.constant 0 : index
    %167 = vector.load %arg17[%166, %c0_85] : memref<8x64xf32, #tpu.memory_space<vmem>>, vector<1x64xf32>
    %168 = arith.index_cast %c1_i32 : i32 to index
    %c0_86 = arith.constant 0 : index
    %169 = vector.load %arg18[%168, %c0_86] : memref<8x64xf32, #tpu.memory_space<vmem>>, vector<1x64xf32>
    %170 = arith.index_cast %c1_i32 : i32 to index
    %c0_87 = arith.constant 0 : index
    %171 = vector.load %arg19[%170, %c0_87] : memref<8x64xf32, #tpu.memory_space<vmem>>, vector<1x64xf32>
    %172 = arith.index_cast %c1_i32 : i32 to index
    %c0_88 = arith.constant 0 : index
    %173 = vector.load %arg20[%172, %c0_88] : memref<8x64xf32, #tpu.memory_space<vmem>>, vector<1x64xf32>
    %174 = arith.index_cast %c1_i32 : i32 to index
    %c0_89 = arith.constant 0 : index
    %175 = vector.load %arg21[%174, %c0_89] : memref<8x64xf32, #tpu.memory_space<vmem>>, vector<1x64xf32>
    %176 = vector.broadcast %175 : vector<1x64xf32> to vector<64x64xf32>
    %177 = arith.mulf %176, %35 : vector<64x64xf32>
    %cst_90 = arith.constant dense<0.000000e+00> : vector<64xf32>
    %178 = vector.multi_reduction <add>, %177, %cst_90 [1] : vector<64x64xf32> to vector<64xf32>
    %179 = vector.shape_cast %178 : vector<64xf32> to vector<64x1xf32>
    %180 = vector.broadcast %171 : vector<1x64xf32> to vector<64x64xf32>
    %181 = arith.mulf %113, %180 : vector<64x64xf32>
    %cst_91 = arith.constant dense<0.000000e+00> : vector<64xf32>
    %182 = vector.multi_reduction <add>, %181, %cst_91 [1] : vector<64x64xf32> to vector<64xf32>
    %183 = vector.shape_cast %182 : vector<64xf32> to vector<64x1xf32>
    %184 = vector.broadcast %167 : vector<1x64xf32> to vector<64x64xf32>
    %185 = arith.mulf %113, %184 : vector<64x64xf32>
    %186 = vector.broadcast %183 : vector<64x1xf32> to vector<64x64xf32>
    %187 = vector.broadcast %173 : vector<1x64xf32> to vector<64x64xf32>
    %188 = arith.mulf %186, %187 : vector<64x64xf32>
    %189 = arith.addf %185, %188 : vector<64x64xf32>
    %190 = vector.broadcast %179 : vector<64x1xf32> to vector<64x64xf32>
    %191 = vector.broadcast %169 : vector<1x64xf32> to vector<64x64xf32>
    %192 = arith.mulf %190, %191 : vector<64x64xf32>
    %193 = arith.addf %189, %192 : vector<64x64xf32>
    %194 = vector.broadcast %165 : vector<1x64xf32> to vector<64x64xf32>
    %195 = arith.mulf %193, %194 : vector<64x64xf32>
    %cst_92 = arith.constant dense<0.000000e+00> : vector<64xf32>
    %196 = vector.multi_reduction <add>, %195, %cst_92 [1] : vector<64x64xf32> to vector<64xf32>
    %197 = vector.shape_cast %196 : vector<64xf32> to vector<64x1xf32>
    %198 = vector.broadcast %197 : vector<64x1xf32> to vector<64x64xf32>
    %199 = arith.mulf %198, %35 : vector<64x64xf32>
    %cst_93 = arith.constant dense<0.000000e+00> : vector<64xf32>
    %200 = vector.multi_reduction <add>, %199, %cst_93 [0] : vector<64x64xf32> to vector<64xf32>
    %201 = vector.shape_cast %200 : vector<64xf32> to vector<1x64xf32>
    %202 = arith.index_cast %c1_i32 : i32 to index
    %c0_94 = arith.constant 0 : index
    %203 = vector.load %arg22[%202, %c0_94] : memref<8x64xf32, #tpu.memory_space<vmem>>, vector<1x64xf32>
    tpu.vector_store %arg22[%202, %c0_94], %201 {strides = array<i32>} : memref<8x64xf32, #tpu.memory_space<vmem>>, vector<1x64xf32>,
    %204 = arith.index_cast %c1_i32 : i32 to index
    %c0_95 = arith.constant 0 : index
    %205 = vector.load %arg23[%204, %c0_95] : memref<8x64xf32, #tpu.memory_space<vmem>>, vector<1x64xf32>
    %206 = arith.index_cast %c1_i32 : i32 to index
    %c0_96 = arith.constant 0 : index
    %207 = vector.load %arg24[%206, %c0_96] : memref<8x64xf32, #tpu.memory_space<vmem>>, vector<1x64xf32>
    %208 = arith.index_cast %c1_i32 : i32 to index
    %c0_97 = arith.constant 0 : index
    %209 = vector.load %arg25[%208, %c0_97] : memref<8x64xf32, #tpu.memory_space<vmem>>, vector<1x64xf32>
    %210 = arith.index_cast %c1_i32 : i32 to index
    %c0_98 = arith.constant 0 : index
    %211 = vector.load %arg26[%210, %c0_98] : memref<8x64xf32, #tpu.memory_space<vmem>>, vector<1x64xf32>
    %212 = arith.index_cast %c1_i32 : i32 to index
    %c0_99 = arith.constant 0 : index
    %213 = vector.load %arg27[%212, %c0_99] : memref<8x64xf32, #tpu.memory_space<vmem>>, vector<1x64xf32>
    %214 = arith.index_cast %c1_i32 : i32 to index
    %c0_100 = arith.constant 0 : index
    %215 = vector.load %arg28[%214, %c0_100] : memref<8x64xf32, #tpu.memory_space<vmem>>, vector<1x64xf32>
    %216 = vector.broadcast %215 : vector<1x64xf32> to vector<64x64xf32>
    %217 = arith.mulf %216, %35 : vector<64x64xf32>
    %cst_101 = arith.constant dense<0.000000e+00> : vector<64xf32>
    %218 = vector.multi_reduction <add>, %217, %cst_101 [1] : vector<64x64xf32> to vector<64xf32>
    %219 = vector.shape_cast %218 : vector<64xf32> to vector<64x1xf32>
    %220 = vector.broadcast %211 : vector<1x64xf32> to vector<64x64xf32>
    %221 = arith.mulf %153, %220 : vector<64x64xf32>
    %cst_102 = arith.constant dense<0.000000e+00> : vector<64xf32>
    %222 = vector.multi_reduction <add>, %221, %cst_102 [1] : vector<64x64xf32> to vector<64xf32>
    %223 = vector.shape_cast %222 : vector<64xf32> to vector<64x1xf32>
    %224 = vector.broadcast %207 : vector<1x64xf32> to vector<64x64xf32>
    %225 = arith.mulf %153, %224 : vector<64x64xf32>
    %226 = vector.broadcast %223 : vector<64x1xf32> to vector<64x64xf32>
    %227 = vector.broadcast %213 : vector<1x64xf32> to vector<64x64xf32>
    %228 = arith.mulf %226, %227 : vector<64x64xf32>
    %229 = arith.addf %225, %228 : vector<64x64xf32>
    %230 = vector.broadcast %219 : vector<64x1xf32> to vector<64x64xf32>
    %231 = vector.broadcast %209 : vector<1x64xf32> to vector<64x64xf32>
    %232 = arith.mulf %230, %231 : vector<64x64xf32>
    %233 = arith.addf %229, %232 : vector<64x64xf32>
    %234 = vector.broadcast %205 : vector<1x64xf32> to vector<64x64xf32>
    %235 = arith.mulf %233, %234 : vector<64x64xf32>
    %cst_103 = arith.constant dense<0.000000e+00> : vector<64xf32>
    %236 = vector.multi_reduction <add>, %235, %cst_103 [1] : vector<64x64xf32> to vector<64xf32>
    %237 = vector.shape_cast %236 : vector<64xf32> to vector<64x1xf32>
    %238 = vector.broadcast %237 : vector<64x1xf32> to vector<64x64xf32>
    %239 = arith.mulf %238, %35 : vector<64x64xf32>
    %cst_104 = arith.constant dense<0.000000e+00> : vector<64xf32>
    %240 = vector.multi_reduction <add>, %239, %cst_104 [0] : vector<64x64xf32> to vector<64xf32>
    %241 = vector.shape_cast %240 : vector<64xf32> to vector<1x64xf32>
    %242 = arith.index_cast %c1_i32 : i32 to index
    %c0_105 = arith.constant 0 : index
    %243 = vector.load %arg29[%242, %c0_105] : memref<8x64xf32, #tpu.memory_space<vmem>>, vector<1x64xf32>
    tpu.vector_store %arg29[%242, %c0_105], %241 {strides = array<i32>} : memref<8x64xf32, #tpu.memory_space<vmem>>, vector<1x64xf32>,
    %c2_i32 = arith.constant 2 : i32
    %244 = arith.index_cast %c2_i32 : i32 to index
    %c0_106 = arith.constant 0 : index
    %245 = vector.load %arg16[%244, %c0_106] : memref<8x64xf32, #tpu.memory_space<vmem>>, vector<1x64xf32>
    %246 = arith.index_cast %c2_i32 : i32 to index
    %c0_107 = arith.constant 0 : index
    %247 = vector.load %arg17[%246, %c0_107] : memref<8x64xf32, #tpu.memory_space<vmem>>, vector<1x64xf32>
    %248 = arith.index_cast %c2_i32 : i32 to index
    %c0_108 = arith.constant 0 : index
    %249 = vector.load %arg18[%248, %c0_108] : memref<8x64xf32, #tpu.memory_space<vmem>>, vector<1x64xf32>
    %250 = arith.index_cast %c2_i32 : i32 to index
    %c0_109 = arith.constant 0 : index
    %251 = vector.load %arg19[%250, %c0_109] : memref<8x64xf32, #tpu.memory_space<vmem>>, vector<1x64xf32>
    %252 = arith.index_cast %c2_i32 : i32 to index
    %c0_110 = arith.constant 0 : index
    %253 = vector.load %arg20[%252, %c0_110] : memref<8x64xf32, #tpu.memory_space<vmem>>, vector<1x64xf32>
    %254 = arith.index_cast %c2_i32 : i32 to index
    %c0_111 = arith.constant 0 : index
    %255 = vector.load %arg21[%254, %c0_111] : memref<8x64xf32, #tpu.memory_space<vmem>>, vector<1x64xf32>
    %256 = vector.broadcast %255 : vector<1x64xf32> to vector<64x64xf32>
    %257 = arith.mulf %256, %35 : vector<64x64xf32>
    %cst_112 = arith.constant dense<0.000000e+00> : vector<64xf32>
    %258 = vector.multi_reduction <add>, %257, %cst_112 [1] : vector<64x64xf32> to vector<64xf32>
    %259 = vector.shape_cast %258 : vector<64xf32> to vector<64x1xf32>
    %260 = vector.broadcast %251 : vector<1x64xf32> to vector<64x64xf32>
    %261 = arith.mulf %193, %260 : vector<64x64xf32>
    %cst_113 = arith.constant dense<0.000000e+00> : vector<64xf32>
    %262 = vector.multi_reduction <add>, %261, %cst_113 [1] : vector<64x64xf32> to vector<64xf32>
    %263 = vector.shape_cast %262 : vector<64xf32> to vector<64x1xf32>
    %264 = vector.broadcast %247 : vector<1x64xf32> to vector<64x64xf32>
    %265 = arith.mulf %193, %264 : vector<64x64xf32>
    %266 = vector.broadcast %263 : vector<64x1xf32> to vector<64x64xf32>
    %267 = vector.broadcast %253 : vector<1x64xf32> to vector<64x64xf32>
    %268 = arith.mulf %266, %267 : vector<64x64xf32>
    %269 = arith.addf %265, %268 : vector<64x64xf32>
    %270 = vector.broadcast %259 : vector<64x1xf32> to vector<64x64xf32>
    %271 = vector.broadcast %249 : vector<1x64xf32> to vector<64x64xf32>
    %272 = arith.mulf %270, %271 : vector<64x64xf32>
    %273 = arith.addf %269, %272 : vector<64x64xf32>
    %274 = vector.broadcast %245 : vector<1x64xf32> to vector<64x64xf32>
    %275 = arith.mulf %273, %274 : vector<64x64xf32>
    %cst_114 = arith.constant dense<0.000000e+00> : vector<64xf32>
    %276 = vector.multi_reduction <add>, %275, %cst_114 [1] : vector<64x64xf32> to vector<64xf32>
    %277 = vector.shape_cast %276 : vector<64xf32> to vector<64x1xf32>
    %278 = vector.broadcast %277 : vector<64x1xf32> to vector<64x64xf32>
    %279 = arith.mulf %278, %35 : vector<64x64xf32>
    %cst_115 = arith.constant dense<0.000000e+00> : vector<64xf32>
    %280 = vector.multi_reduction <add>, %279, %cst_115 [0] : vector<64x64xf32> to vector<64xf32>
    %281 = vector.shape_cast %280 : vector<64xf32> to vector<1x64xf32>
    %282 = arith.index_cast %c2_i32 : i32 to index
    %c0_116 = arith.constant 0 : index
    %283 = vector.load %arg22[%282, %c0_116] : memref<8x64xf32, #tpu.memory_space<vmem>>, vector<1x64xf32>
    tpu.vector_store %arg22[%282, %c0_116], %281 {strides = array<i32>} : memref<8x64xf32, #tpu.memory_space<vmem>>, vector<1x64xf32>,
    %284 = arith.index_cast %c2_i32 : i32 to index
    %c0_117 = arith.constant 0 : index
    %285 = vector.load %arg23[%284, %c0_117] : memref<8x64xf32, #tpu.memory_space<vmem>>, vector<1x64xf32>
    %286 = arith.index_cast %c2_i32 : i32 to index
    %c0_118 = arith.constant 0 : index
    %287 = vector.load %arg24[%286, %c0_118] : memref<8x64xf32, #tpu.memory_space<vmem>>, vector<1x64xf32>
    %288 = arith.index_cast %c2_i32 : i32 to index
    %c0_119 = arith.constant 0 : index
    %289 = vector.load %arg25[%288, %c0_119] : memref<8x64xf32, #tpu.memory_space<vmem>>, vector<1x64xf32>
    %290 = arith.index_cast %c2_i32 : i32 to index
    %c0_120 = arith.constant 0 : index
    %291 = vector.load %arg26[%290, %c0_120] : memref<8x64xf32, #tpu.memory_space<vmem>>, vector<1x64xf32>
    %292 = arith.index_cast %c2_i32 : i32 to index
    %c0_121 = arith.constant 0 : index
    %293 = vector.load %arg27[%292, %c0_121] : memref<8x64xf32, #tpu.memory_space<vmem>>, vector<1x64xf32>
    %294 = arith.index_cast %c2_i32 : i32 to index
    %c0_122 = arith.constant 0 : index
    %295 = vector.load %arg28[%294, %c0_122] : memref<8x64xf32, #tpu.memory_space<vmem>>, vector<1x64xf32>
    %296 = vector.broadcast %295 : vector<1x64xf32> to vector<64x64xf32>
    %297 = arith.mulf %296, %35 : vector<64x64xf32>
    %cst_123 = arith.constant dense<0.000000e+00> : vector<64xf32>
    %298 = vector.multi_reduction <add>, %297, %cst_123 [1] : vector<64x64xf32> to vector<64xf32>
    %299 = vector.shape_cast %298 : vector<64xf32> to vector<64x1xf32>
    %300 = vector.broadcast %291 : vector<1x64xf32> to vector<64x64xf32>
    %301 = arith.mulf %233, %300 : vector<64x64xf32>
    %cst_124 = arith.constant dense<0.000000e+00> : vector<64xf32>
    %302 = vector.multi_reduction <add>, %301, %cst_124 [1] : vector<64x64xf32> to vector<64xf32>
    %303 = vector.shape_cast %302 : vector<64xf32> to vector<64x1xf32>
    %304 = vector.broadcast %287 : vector<1x64xf32> to vector<64x64xf32>
    %305 = arith.mulf %233, %304 : vector<64x64xf32>
    %306 = vector.broadcast %303 : vector<64x1xf32> to vector<64x64xf32>
    %307 = vector.broadcast %293 : vector<1x64xf32> to vector<64x64xf32>
    %308 = arith.mulf %306, %307 : vector<64x64xf32>
    %309 = arith.addf %305, %308 : vector<64x64xf32>
    %310 = vector.broadcast %299 : vector<64x1xf32> to vector<64x64xf32>
    %311 = vector.broadcast %289 : vector<1x64xf32> to vector<64x64xf32>
    %312 = arith.mulf %310, %311 : vector<64x64xf32>
    %313 = arith.addf %309, %312 : vector<64x64xf32>
    %314 = vector.broadcast %285 : vector<1x64xf32> to vector<64x64xf32>
    %315 = arith.mulf %313, %314 : vector<64x64xf32>
    %cst_125 = arith.constant dense<0.000000e+00> : vector<64xf32>
    %316 = vector.multi_reduction <add>, %315, %cst_125 [1] : vector<64x64xf32> to vector<64xf32>
    %317 = vector.shape_cast %316 : vector<64xf32> to vector<64x1xf32>
    %318 = vector.broadcast %317 : vector<64x1xf32> to vector<64x64xf32>
    %319 = arith.mulf %318, %35 : vector<64x64xf32>
    %cst_126 = arith.constant dense<0.000000e+00> : vector<64xf32>
    %320 = vector.multi_reduction <add>, %319, %cst_126 [0] : vector<64x64xf32> to vector<64xf32>
    %321 = vector.shape_cast %320 : vector<64xf32> to vector<1x64xf32>
    %322 = arith.index_cast %c2_i32 : i32 to index
    %c0_127 = arith.constant 0 : index
    %323 = vector.load %arg29[%322, %c0_127] : memref<8x64xf32, #tpu.memory_space<vmem>>, vector<1x64xf32>
    tpu.vector_store %arg29[%322, %c0_127], %321 {strides = array<i32>} : memref<8x64xf32, #tpu.memory_space<vmem>>, vector<1x64xf32>,
    %c3_i32 = arith.constant 3 : i32
    %324 = arith.index_cast %c3_i32 : i32 to index
    %c0_128 = arith.constant 0 : index
    %325 = vector.load %arg16[%324, %c0_128] : memref<8x64xf32, #tpu.memory_space<vmem>>, vector<1x64xf32>
    %326 = arith.index_cast %c3_i32 : i32 to index
    %c0_129 = arith.constant 0 : index
    %327 = vector.load %arg17[%326, %c0_129] : memref<8x64xf32, #tpu.memory_space<vmem>>, vector<1x64xf32>
    %328 = arith.index_cast %c3_i32 : i32 to index
    %c0_130 = arith.constant 0 : index
    %329 = vector.load %arg18[%328, %c0_130] : memref<8x64xf32, #tpu.memory_space<vmem>>, vector<1x64xf32>
    %330 = arith.index_cast %c3_i32 : i32 to index
    %c0_131 = arith.constant 0 : index
    %331 = vector.load %arg19[%330, %c0_131] : memref<8x64xf32, #tpu.memory_space<vmem>>, vector<1x64xf32>
    %332 = arith.index_cast %c3_i32 : i32 to index
    %c0_132 = arith.constant 0 : index
    %333 = vector.load %arg20[%332, %c0_132] : memref<8x64xf32, #tpu.memory_space<vmem>>, vector<1x64xf32>
    %334 = arith.index_cast %c3_i32 : i32 to index
    %c0_133 = arith.constant 0 : index
    %335 = vector.load %arg21[%334, %c0_133] : memref<8x64xf32, #tpu.memory_space<vmem>>, vector<1x64xf32>
    %336 = vector.broadcast %335 : vector<1x64xf32> to vector<64x64xf32>
    %337 = arith.mulf %336, %35 : vector<64x64xf32>
    %cst_134 = arith.constant dense<0.000000e+00> : vector<64xf32>
    %338 = vector.multi_reduction <add>, %337, %cst_134 [1] : vector<64x64xf32> to vector<64xf32>
    %339 = vector.shape_cast %338 : vector<64xf32> to vector<64x1xf32>
    %340 = vector.broadcast %331 : vector<1x64xf32> to vector<64x64xf32>
    %341 = arith.mulf %273, %340 : vector<64x64xf32>
    %cst_135 = arith.constant dense<0.000000e+00> : vector<64xf32>
    %342 = vector.multi_reduction <add>, %341, %cst_135 [1] : vector<64x64xf32> to vector<64xf32>
    %343 = vector.shape_cast %342 : vector<64xf32> to vector<64x1xf32>
    %344 = vector.broadcast %327 : vector<1x64xf32> to vector<64x64xf32>
    %345 = arith.mulf %273, %344 : vector<64x64xf32>
    %346 = vector.broadcast %343 : vector<64x1xf32> to vector<64x64xf32>
    %347 = vector.broadcast %333 : vector<1x64xf32> to vector<64x64xf32>
    %348 = arith.mulf %346, %347 : vector<64x64xf32>
    %349 = arith.addf %345, %348 : vector<64x64xf32>
    %350 = vector.broadcast %339 : vector<64x1xf32> to vector<64x64xf32>
    %351 = vector.broadcast %329 : vector<1x64xf32> to vector<64x64xf32>
    %352 = arith.mulf %350, %351 : vector<64x64xf32>
    %353 = arith.addf %349, %352 : vector<64x64xf32>
    %354 = vector.broadcast %325 : vector<1x64xf32> to vector<64x64xf32>
    %355 = arith.mulf %353, %354 : vector<64x64xf32>
    %cst_136 = arith.constant dense<0.000000e+00> : vector<64xf32>
    %356 = vector.multi_reduction <add>, %355, %cst_136 [1] : vector<64x64xf32> to vector<64xf32>
    %357 = vector.shape_cast %356 : vector<64xf32> to vector<64x1xf32>
    %358 = vector.broadcast %357 : vector<64x1xf32> to vector<64x64xf32>
    %359 = arith.mulf %358, %35 : vector<64x64xf32>
    %cst_137 = arith.constant dense<0.000000e+00> : vector<64xf32>
    %360 = vector.multi_reduction <add>, %359, %cst_137 [0] : vector<64x64xf32> to vector<64xf32>
    %361 = vector.shape_cast %360 : vector<64xf32> to vector<1x64xf32>
    %362 = arith.index_cast %c3_i32 : i32 to index
    %c0_138 = arith.constant 0 : index
    %363 = vector.load %arg22[%362, %c0_138] : memref<8x64xf32, #tpu.memory_space<vmem>>, vector<1x64xf32>
    tpu.vector_store %arg22[%362, %c0_138], %361 {strides = array<i32>} : memref<8x64xf32, #tpu.memory_space<vmem>>, vector<1x64xf32>,
    %364 = arith.index_cast %c3_i32 : i32 to index
    %c0_139 = arith.constant 0 : index
    %365 = vector.load %arg23[%364, %c0_139] : memref<8x64xf32, #tpu.memory_space<vmem>>, vector<1x64xf32>
    %366 = arith.index_cast %c3_i32 : i32 to index
    %c0_140 = arith.constant 0 : index
    %367 = vector.load %arg24[%366, %c0_140] : memref<8x64xf32, #tpu.memory_space<vmem>>, vector<1x64xf32>
    %368 = arith.index_cast %c3_i32 : i32 to index
    %c0_141 = arith.constant 0 : index
    %369 = vector.load %arg25[%368, %c0_141] : memref<8x64xf32, #tpu.memory_space<vmem>>, vector<1x64xf32>
    %370 = arith.index_cast %c3_i32 : i32 to index
    %c0_142 = arith.constant 0 : index
    %371 = vector.load %arg26[%370, %c0_142] : memref<8x64xf32, #tpu.memory_space<vmem>>, vector<1x64xf32>
    %372 = arith.index_cast %c3_i32 : i32 to index
    %c0_143 = arith.constant 0 : index
    %373 = vector.load %arg27[%372, %c0_143] : memref<8x64xf32, #tpu.memory_space<vmem>>, vector<1x64xf32>
    %374 = arith.index_cast %c3_i32 : i32 to index
    %c0_144 = arith.constant 0 : index
    %375 = vector.load %arg28[%374, %c0_144] : memref<8x64xf32, #tpu.memory_space<vmem>>, vector<1x64xf32>
    %376 = vector.broadcast %375 : vector<1x64xf32> to vector<64x64xf32>
    %377 = arith.mulf %376, %35 : vector<64x64xf32>
    %cst_145 = arith.constant dense<0.000000e+00> : vector<64xf32>
    %378 = vector.multi_reduction <add>, %377, %cst_145 [1] : vector<64x64xf32> to vector<64xf32>
    %379 = vector.shape_cast %378 : vector<64xf32> to vector<64x1xf32>
    %380 = vector.broadcast %371 : vector<1x64xf32> to vector<64x64xf32>
    %381 = arith.mulf %313, %380 : vector<64x64xf32>
    %cst_146 = arith.constant dense<0.000000e+00> : vector<64xf32>
    %382 = vector.multi_reduction <add>, %381, %cst_146 [1] : vector<64x64xf32> to vector<64xf32>
    %383 = vector.shape_cast %382 : vector<64xf32> to vector<64x1xf32>
    %384 = vector.broadcast %367 : vector<1x64xf32> to vector<64x64xf32>
    %385 = arith.mulf %313, %384 : vector<64x64xf32>
    %386 = vector.broadcast %383 : vector<64x1xf32> to vector<64x64xf32>
    %387 = vector.broadcast %373 : vector<1x64xf32> to vector<64x64xf32>
    %388 = arith.mulf %386, %387 : vector<64x64xf32>
    %389 = arith.addf %385, %388 : vector<64x64xf32>
    %390 = vector.broadcast %379 : vector<64x1xf32> to vector<64x64xf32>
    %391 = vector.broadcast %369 : vector<1x64xf32> to vector<64x64xf32>
    %392 = arith.mulf %390, %391 : vector<64x64xf32>
    %393 = arith.addf %389, %392 : vector<64x64xf32>
    %394 = vector.broadcast %365 : vector<1x64xf32> to vector<64x64xf32>
    %395 = arith.mulf %393, %394 : vector<64x64xf32>
    %cst_147 = arith.constant dense<0.000000e+00> : vector<64xf32>
    %396 = vector.multi_reduction <add>, %395, %cst_147 [1] : vector<64x64xf32> to vector<64xf32>
    %397 = vector.shape_cast %396 : vector<64xf32> to vector<64x1xf32>
    %398 = vector.broadcast %397 : vector<64x1xf32> to vector<64x64xf32>
    %399 = arith.mulf %398, %35 : vector<64x64xf32>
    %cst_148 = arith.constant dense<0.000000e+00> : vector<64xf32>
    %400 = vector.multi_reduction <add>, %399, %cst_148 [0] : vector<64x64xf32> to vector<64xf32>
    %401 = vector.shape_cast %400 : vector<64xf32> to vector<1x64xf32>
    %402 = arith.index_cast %c3_i32 : i32 to index
    %c0_149 = arith.constant 0 : index
    %403 = vector.load %arg29[%402, %c0_149] : memref<8x64xf32, #tpu.memory_space<vmem>>, vector<1x64xf32>
    tpu.vector_store %arg29[%402, %c0_149], %401 {strides = array<i32>} : memref<8x64xf32, #tpu.memory_space<vmem>>, vector<1x64xf32>,
    %c4_i32 = arith.constant 4 : i32
    %404 = arith.index_cast %c4_i32 : i32 to index
    %c0_150 = arith.constant 0 : index
    %405 = vector.load %arg16[%404, %c0_150] : memref<8x64xf32, #tpu.memory_space<vmem>>, vector<1x64xf32>
    %406 = arith.index_cast %c4_i32 : i32 to index
    %c0_151 = arith.constant 0 : index
    %407 = vector.load %arg17[%406, %c0_151] : memref<8x64xf32, #tpu.memory_space<vmem>>, vector<1x64xf32>
    %408 = arith.index_cast %c4_i32 : i32 to index
    %c0_152 = arith.constant 0 : index
    %409 = vector.load %arg18[%408, %c0_152] : memref<8x64xf32, #tpu.memory_space<vmem>>, vector<1x64xf32>
    %410 = arith.index_cast %c4_i32 : i32 to index
    %c0_153 = arith.constant 0 : index
    %411 = vector.load %arg19[%410, %c0_153] : memref<8x64xf32, #tpu.memory_space<vmem>>, vector<1x64xf32>
    %412 = arith.index_cast %c4_i32 : i32 to index
    %c0_154 = arith.constant 0 : index
    %413 = vector.load %arg20[%412, %c0_154] : memref<8x64xf32, #tpu.memory_space<vmem>>, vector<1x64xf32>
    %414 = arith.index_cast %c4_i32 : i32 to index
    %c0_155 = arith.constant 0 : index
    %415 = vector.load %arg21[%414, %c0_155] : memref<8x64xf32, #tpu.memory_space<vmem>>, vector<1x64xf32>
    %416 = vector.broadcast %415 : vector<1x64xf32> to vector<64x64xf32>
    %417 = arith.mulf %416, %35 : vector<64x64xf32>
    %cst_156 = arith.constant dense<0.000000e+00> : vector<64xf32>
    %418 = vector.multi_reduction <add>, %417, %cst_156 [1] : vector<64x64xf32> to vector<64xf32>
    %419 = vector.shape_cast %418 : vector<64xf32> to vector<64x1xf32>
    %420 = vector.broadcast %411 : vector<1x64xf32> to vector<64x64xf32>
    %421 = arith.mulf %353, %420 : vector<64x64xf32>
    %cst_157 = arith.constant dense<0.000000e+00> : vector<64xf32>
    %422 = vector.multi_reduction <add>, %421, %cst_157 [1] : vector<64x64xf32> to vector<64xf32>
    %423 = vector.shape_cast %422 : vector<64xf32> to vector<64x1xf32>
    %424 = vector.broadcast %407 : vector<1x64xf32> to vector<64x64xf32>
    %425 = arith.mulf %353, %424 : vector<64x64xf32>
    %426 = vector.broadcast %423 : vector<64x1xf32> to vector<64x64xf32>
    %427 = vector.broadcast %413 : vector<1x64xf32> to vector<64x64xf32>
    %428 = arith.mulf %426, %427 : vector<64x64xf32>
    %429 = arith.addf %425, %428 : vector<64x64xf32>
    %430 = vector.broadcast %419 : vector<64x1xf32> to vector<64x64xf32>
    %431 = vector.broadcast %409 : vector<1x64xf32> to vector<64x64xf32>
    %432 = arith.mulf %430, %431 : vector<64x64xf32>
    %433 = arith.addf %429, %432 : vector<64x64xf32>
    %434 = vector.broadcast %405 : vector<1x64xf32> to vector<64x64xf32>
    %435 = arith.mulf %433, %434 : vector<64x64xf32>
    %cst_158 = arith.constant dense<0.000000e+00> : vector<64xf32>
    %436 = vector.multi_reduction <add>, %435, %cst_158 [1] : vector<64x64xf32> to vector<64xf32>
    %437 = vector.shape_cast %436 : vector<64xf32> to vector<64x1xf32>
    %438 = vector.broadcast %437 : vector<64x1xf32> to vector<64x64xf32>
    %439 = arith.mulf %438, %35 : vector<64x64xf32>
    %cst_159 = arith.constant dense<0.000000e+00> : vector<64xf32>
    %440 = vector.multi_reduction <add>, %439, %cst_159 [0] : vector<64x64xf32> to vector<64xf32>
    %441 = vector.shape_cast %440 : vector<64xf32> to vector<1x64xf32>
    %442 = arith.index_cast %c4_i32 : i32 to index
    %c0_160 = arith.constant 0 : index
    %443 = vector.load %arg22[%442, %c0_160] : memref<8x64xf32, #tpu.memory_space<vmem>>, vector<1x64xf32>
    tpu.vector_store %arg22[%442, %c0_160], %441 {strides = array<i32>} : memref<8x64xf32, #tpu.memory_space<vmem>>, vector<1x64xf32>,
    %444 = arith.index_cast %c4_i32 : i32 to index
    %c0_161 = arith.constant 0 : index
    %445 = vector.load %arg23[%444, %c0_161] : memref<8x64xf32, #tpu.memory_space<vmem>>, vector<1x64xf32>
    %446 = arith.index_cast %c4_i32 : i32 to index
    %c0_162 = arith.constant 0 : index
    %447 = vector.load %arg24[%446, %c0_162] : memref<8x64xf32, #tpu.memory_space<vmem>>, vector<1x64xf32>
    %448 = arith.index_cast %c4_i32 : i32 to index
    %c0_163 = arith.constant 0 : index
    %449 = vector.load %arg25[%448, %c0_163] : memref<8x64xf32, #tpu.memory_space<vmem>>, vector<1x64xf32>
    %450 = arith.index_cast %c4_i32 : i32 to index
    %c0_164 = arith.constant 0 : index
    %451 = vector.load %arg26[%450, %c0_164] : memref<8x64xf32, #tpu.memory_space<vmem>>, vector<1x64xf32>
    %452 = arith.index_cast %c4_i32 : i32 to index
    %c0_165 = arith.constant 0 : index
    %453 = vector.load %arg27[%452, %c0_165] : memref<8x64xf32, #tpu.memory_space<vmem>>, vector<1x64xf32>
    %454 = arith.index_cast %c4_i32 : i32 to index
    %c0_166 = arith.constant 0 : index
    %455 = vector.load %arg28[%454, %c0_166] : memref<8x64xf32, #tpu.memory_space<vmem>>, vector<1x64xf32>
    %456 = vector.broadcast %455 : vector<1x64xf32> to vector<64x64xf32>
    %457 = arith.mulf %456, %35 : vector<64x64xf32>
    %cst_167 = arith.constant dense<0.000000e+00> : vector<64xf32>
    %458 = vector.multi_reduction <add>, %457, %cst_167 [1] : vector<64x64xf32> to vector<64xf32>
    %459 = vector.shape_cast %458 : vector<64xf32> to vector<64x1xf32>
    %460 = vector.broadcast %451 : vector<1x64xf32> to vector<64x64xf32>
    %461 = arith.mulf %393, %460 : vector<64x64xf32>
    %cst_168 = arith.constant dense<0.000000e+00> : vector<64xf32>
    %462 = vector.multi_reduction <add>, %461, %cst_168 [1] : vector<64x64xf32> to vector<64xf32>
    %463 = vector.shape_cast %462 : vector<64xf32> to vector<64x1xf32>
    %464 = vector.broadcast %447 : vector<1x64xf32> to vector<64x64xf32>
    %465 = arith.mulf %393, %464 : vector<64x64xf32>
    %466 = vector.broadcast %463 : vector<64x1xf32> to vector<64x64xf32>
    %467 = vector.broadcast %453 : vector<1x64xf32> to vector<64x64xf32>
    %468 = arith.mulf %466, %467 : vector<64x64xf32>
    %469 = arith.addf %465, %468 : vector<64x64xf32>
    %470 = vector.broadcast %459 : vector<64x1xf32> to vector<64x64xf32>
    %471 = vector.broadcast %449 : vector<1x64xf32> to vector<64x64xf32>
    %472 = arith.mulf %470, %471 : vector<64x64xf32>
    %473 = arith.addf %469, %472 : vector<64x64xf32>
    %474 = vector.broadcast %445 : vector<1x64xf32> to vector<64x64xf32>
    %475 = arith.mulf %473, %474 : vector<64x64xf32>
    %cst_169 = arith.constant dense<0.000000e+00> : vector<64xf32>
    %476 = vector.multi_reduction <add>, %475, %cst_169 [1] : vector<64x64xf32> to vector<64xf32>
    %477 = vector.shape_cast %476 : vector<64xf32> to vector<64x1xf32>
    %478 = vector.broadcast %477 : vector<64x1xf32> to vector<64x64xf32>
    %479 = arith.mulf %478, %35 : vector<64x64xf32>
    %cst_170 = arith.constant dense<0.000000e+00> : vector<64xf32>
    %480 = vector.multi_reduction <add>, %479, %cst_170 [0] : vector<64x64xf32> to vector<64xf32>
    %481 = vector.shape_cast %480 : vector<64xf32> to vector<1x64xf32>
    %482 = arith.index_cast %c4_i32 : i32 to index
    %c0_171 = arith.constant 0 : index
    %483 = vector.load %arg29[%482, %c0_171] : memref<8x64xf32, #tpu.memory_space<vmem>>, vector<1x64xf32>
    tpu.vector_store %arg29[%482, %c0_171], %481 {strides = array<i32>} : memref<8x64xf32, #tpu.memory_space<vmem>>, vector<1x64xf32>,
    %c5_i32 = arith.constant 5 : i32
    %484 = arith.index_cast %c5_i32 : i32 to index
    %c0_172 = arith.constant 0 : index
    %485 = vector.load %arg16[%484, %c0_172] : memref<8x64xf32, #tpu.memory_space<vmem>>, vector<1x64xf32>
    %486 = arith.index_cast %c5_i32 : i32 to index
    %c0_173 = arith.constant 0 : index
    %487 = vector.load %arg17[%486, %c0_173] : memref<8x64xf32, #tpu.memory_space<vmem>>, vector<1x64xf32>
    %488 = arith.index_cast %c5_i32 : i32 to index
    %c0_174 = arith.constant 0 : index
    %489 = vector.load %arg18[%488, %c0_174] : memref<8x64xf32, #tpu.memory_space<vmem>>, vector<1x64xf32>
    %490 = arith.index_cast %c5_i32 : i32 to index
    %c0_175 = arith.constant 0 : index
    %491 = vector.load %arg19[%490, %c0_175] : memref<8x64xf32, #tpu.memory_space<vmem>>, vector<1x64xf32>
    %492 = arith.index_cast %c5_i32 : i32 to index
    %c0_176 = arith.constant 0 : index
    %493 = vector.load %arg20[%492, %c0_176] : memref<8x64xf32, #tpu.memory_space<vmem>>, vector<1x64xf32>
    %494 = arith.index_cast %c5_i32 : i32 to index
    %c0_177 = arith.constant 0 : index
    %495 = vector.load %arg21[%494, %c0_177] : memref<8x64xf32, #tpu.memory_space<vmem>>, vector<1x64xf32>
    %496 = vector.broadcast %495 : vector<1x64xf32> to vector<64x64xf32>
    %497 = arith.mulf %496, %35 : vector<64x64xf32>
    %cst_178 = arith.constant dense<0.000000e+00> : vector<64xf32>
    %498 = vector.multi_reduction <add>, %497, %cst_178 [1] : vector<64x64xf32> to vector<64xf32>
    %499 = vector.shape_cast %498 : vector<64xf32> to vector<64x1xf32>
    %500 = vector.broadcast %491 : vector<1x64xf32> to vector<64x64xf32>
    %501 = arith.mulf %433, %500 : vector<64x64xf32>
    %cst_179 = arith.constant dense<0.000000e+00> : vector<64xf32>
    %502 = vector.multi_reduction <add>, %501, %cst_179 [1] : vector<64x64xf32> to vector<64xf32>
    %503 = vector.shape_cast %502 : vector<64xf32> to vector<64x1xf32>
    %504 = vector.broadcast %487 : vector<1x64xf32> to vector<64x64xf32>
    %505 = arith.mulf %433, %504 : vector<64x64xf32>
    %506 = vector.broadcast %503 : vector<64x1xf32> to vector<64x64xf32>
    %507 = vector.broadcast %493 : vector<1x64xf32> to vector<64x64xf32>
    %508 = arith.mulf %506, %507 : vector<64x64xf32>
    %509 = arith.addf %505, %508 : vector<64x64xf32>
    %510 = vector.broadcast %499 : vector<64x1xf32> to vector<64x64xf32>
    %511 = vector.broadcast %489 : vector<1x64xf32> to vector<64x64xf32>
    %512 = arith.mulf %510, %511 : vector<64x64xf32>
    %513 = arith.addf %509, %512 : vector<64x64xf32>
    %514 = vector.broadcast %485 : vector<1x64xf32> to vector<64x64xf32>
    %515 = arith.mulf %513, %514 : vector<64x64xf32>
    %cst_180 = arith.constant dense<0.000000e+00> : vector<64xf32>
    %516 = vector.multi_reduction <add>, %515, %cst_180 [1] : vector<64x64xf32> to vector<64xf32>
    %517 = vector.shape_cast %516 : vector<64xf32> to vector<64x1xf32>
    %518 = vector.broadcast %517 : vector<64x1xf32> to vector<64x64xf32>
    %519 = arith.mulf %518, %35 : vector<64x64xf32>
    %cst_181 = arith.constant dense<0.000000e+00> : vector<64xf32>
    %520 = vector.multi_reduction <add>, %519, %cst_181 [0] : vector<64x64xf32> to vector<64xf32>
    %521 = vector.shape_cast %520 : vector<64xf32> to vector<1x64xf32>
    %522 = arith.index_cast %c5_i32 : i32 to index
    %c0_182 = arith.constant 0 : index
    %523 = vector.load %arg22[%522, %c0_182] : memref<8x64xf32, #tpu.memory_space<vmem>>, vector<1x64xf32>
    tpu.vector_store %arg22[%522, %c0_182], %521 {strides = array<i32>} : memref<8x64xf32, #tpu.memory_space<vmem>>, vector<1x64xf32>,
    %524 = arith.index_cast %c5_i32 : i32 to index
    %c0_183 = arith.constant 0 : index
    %525 = vector.load %arg23[%524, %c0_183] : memref<8x64xf32, #tpu.memory_space<vmem>>, vector<1x64xf32>
    %526 = arith.index_cast %c5_i32 : i32 to index
    %c0_184 = arith.constant 0 : index
    %527 = vector.load %arg24[%526, %c0_184] : memref<8x64xf32, #tpu.memory_space<vmem>>, vector<1x64xf32>
    %528 = arith.index_cast %c5_i32 : i32 to index
    %c0_185 = arith.constant 0 : index
    %529 = vector.load %arg25[%528, %c0_185] : memref<8x64xf32, #tpu.memory_space<vmem>>, vector<1x64xf32>
    %530 = arith.index_cast %c5_i32 : i32 to index
    %c0_186 = arith.constant 0 : index
    %531 = vector.load %arg26[%530, %c0_186] : memref<8x64xf32, #tpu.memory_space<vmem>>, vector<1x64xf32>
    %532 = arith.index_cast %c5_i32 : i32 to index
    %c0_187 = arith.constant 0 : index
    %533 = vector.load %arg27[%532, %c0_187] : memref<8x64xf32, #tpu.memory_space<vmem>>, vector<1x64xf32>
    %534 = arith.index_cast %c5_i32 : i32 to index
    %c0_188 = arith.constant 0 : index
    %535 = vector.load %arg28[%534, %c0_188] : memref<8x64xf32, #tpu.memory_space<vmem>>, vector<1x64xf32>
    %536 = vector.broadcast %535 : vector<1x64xf32> to vector<64x64xf32>
    %537 = arith.mulf %536, %35 : vector<64x64xf32>
    %cst_189 = arith.constant dense<0.000000e+00> : vector<64xf32>
    %538 = vector.multi_reduction <add>, %537, %cst_189 [1] : vector<64x64xf32> to vector<64xf32>
    %539 = vector.shape_cast %538 : vector<64xf32> to vector<64x1xf32>
    %540 = vector.broadcast %531 : vector<1x64xf32> to vector<64x64xf32>
    %541 = arith.mulf %473, %540 : vector<64x64xf32>
    %cst_190 = arith.constant dense<0.000000e+00> : vector<64xf32>
    %542 = vector.multi_reduction <add>, %541, %cst_190 [1] : vector<64x64xf32> to vector<64xf32>
    %543 = vector.shape_cast %542 : vector<64xf32> to vector<64x1xf32>
    %544 = vector.broadcast %527 : vector<1x64xf32> to vector<64x64xf32>
    %545 = arith.mulf %473, %544 : vector<64x64xf32>
    %546 = vector.broadcast %543 : vector<64x1xf32> to vector<64x64xf32>
    %547 = vector.broadcast %533 : vector<1x64xf32> to vector<64x64xf32>
    %548 = arith.mulf %546, %547 : vector<64x64xf32>
    %549 = arith.addf %545, %548 : vector<64x64xf32>
    %550 = vector.broadcast %539 : vector<64x1xf32> to vector<64x64xf32>
    %551 = vector.broadcast %529 : vector<1x64xf32> to vector<64x64xf32>
    %552 = arith.mulf %550, %551 : vector<64x64xf32>
    %553 = arith.addf %549, %552 : vector<64x64xf32>
    %554 = vector.broadcast %525 : vector<1x64xf32> to vector<64x64xf32>
    %555 = arith.mulf %553, %554 : vector<64x64xf32>
    %cst_191 = arith.constant dense<0.000000e+00> : vector<64xf32>
    %556 = vector.multi_reduction <add>, %555, %cst_191 [1] : vector<64x64xf32> to vector<64xf32>
    %557 = vector.shape_cast %556 : vector<64xf32> to vector<64x1xf32>
    %558 = vector.broadcast %557 : vector<64x1xf32> to vector<64x64xf32>
    %559 = arith.mulf %558, %35 : vector<64x64xf32>
    %cst_192 = arith.constant dense<0.000000e+00> : vector<64xf32>
    %560 = vector.multi_reduction <add>, %559, %cst_192 [0] : vector<64x64xf32> to vector<64xf32>
    %561 = vector.shape_cast %560 : vector<64xf32> to vector<1x64xf32>
    %562 = arith.index_cast %c5_i32 : i32 to index
    %c0_193 = arith.constant 0 : index
    %563 = vector.load %arg29[%562, %c0_193] : memref<8x64xf32, #tpu.memory_space<vmem>>, vector<1x64xf32>
    tpu.vector_store %arg29[%562, %c0_193], %561 {strides = array<i32>} : memref<8x64xf32, #tpu.memory_space<vmem>>, vector<1x64xf32>,
    %c6_i32 = arith.constant 6 : i32
    %564 = arith.index_cast %c6_i32 : i32 to index
    %c0_194 = arith.constant 0 : index
    %565 = vector.load %arg16[%564, %c0_194] : memref<8x64xf32, #tpu.memory_space<vmem>>, vector<1x64xf32>
    %566 = arith.index_cast %c6_i32 : i32 to index
    %c0_195 = arith.constant 0 : index
    %567 = vector.load %arg17[%566, %c0_195] : memref<8x64xf32, #tpu.memory_space<vmem>>, vector<1x64xf32>
    %568 = arith.index_cast %c6_i32 : i32 to index
    %c0_196 = arith.constant 0 : index
    %569 = vector.load %arg18[%568, %c0_196] : memref<8x64xf32, #tpu.memory_space<vmem>>, vector<1x64xf32>
    %570 = arith.index_cast %c6_i32 : i32 to index
    %c0_197 = arith.constant 0 : index
    %571 = vector.load %arg19[%570, %c0_197] : memref<8x64xf32, #tpu.memory_space<vmem>>, vector<1x64xf32>
    %572 = arith.index_cast %c6_i32 : i32 to index
    %c0_198 = arith.constant 0 : index
    %573 = vector.load %arg20[%572, %c0_198] : memref<8x64xf32, #tpu.memory_space<vmem>>, vector<1x64xf32>
    %574 = arith.index_cast %c6_i32 : i32 to index
    %c0_199 = arith.constant 0 : index
    %575 = vector.load %arg21[%574, %c0_199] : memref<8x64xf32, #tpu.memory_space<vmem>>, vector<1x64xf32>
    %576 = vector.broadcast %575 : vector<1x64xf32> to vector<64x64xf32>
    %577 = arith.mulf %576, %35 : vector<64x64xf32>
    %cst_200 = arith.constant dense<0.000000e+00> : vector<64xf32>
    %578 = vector.multi_reduction <add>, %577, %cst_200 [1] : vector<64x64xf32> to vector<64xf32>
    %579 = vector.shape_cast %578 : vector<64xf32> to vector<64x1xf32>
    %580 = vector.broadcast %571 : vector<1x64xf32> to vector<64x64xf32>
    %581 = arith.mulf %513, %580 : vector<64x64xf32>
    %cst_201 = arith.constant dense<0.000000e+00> : vector<64xf32>
    %582 = vector.multi_reduction <add>, %581, %cst_201 [1] : vector<64x64xf32> to vector<64xf32>
    %583 = vector.shape_cast %582 : vector<64xf32> to vector<64x1xf32>
    %584 = vector.broadcast %567 : vector<1x64xf32> to vector<64x64xf32>
    %585 = arith.mulf %513, %584 : vector<64x64xf32>
    %586 = vector.broadcast %583 : vector<64x1xf32> to vector<64x64xf32>
    %587 = vector.broadcast %573 : vector<1x64xf32> to vector<64x64xf32>
    %588 = arith.mulf %586, %587 : vector<64x64xf32>
    %589 = arith.addf %585, %588 : vector<64x64xf32>
    %590 = vector.broadcast %579 : vector<64x1xf32> to vector<64x64xf32>
    %591 = vector.broadcast %569 : vector<1x64xf32> to vector<64x64xf32>
    %592 = arith.mulf %590, %591 : vector<64x64xf32>
    %593 = arith.addf %589, %592 : vector<64x64xf32>
    %594 = vector.broadcast %565 : vector<1x64xf32> to vector<64x64xf32>
    %595 = arith.mulf %593, %594 : vector<64x64xf32>
    %cst_202 = arith.constant dense<0.000000e+00> : vector<64xf32>
    %596 = vector.multi_reduction <add>, %595, %cst_202 [1] : vector<64x64xf32> to vector<64xf32>
    %597 = vector.shape_cast %596 : vector<64xf32> to vector<64x1xf32>
    %598 = vector.broadcast %597 : vector<64x1xf32> to vector<64x64xf32>
    %599 = arith.mulf %598, %35 : vector<64x64xf32>
    %cst_203 = arith.constant dense<0.000000e+00> : vector<64xf32>
    %600 = vector.multi_reduction <add>, %599, %cst_203 [0] : vector<64x64xf32> to vector<64xf32>
    %601 = vector.shape_cast %600 : vector<64xf32> to vector<1x64xf32>
    %602 = arith.index_cast %c6_i32 : i32 to index
    %c0_204 = arith.constant 0 : index
    %603 = vector.load %arg22[%602, %c0_204] : memref<8x64xf32, #tpu.memory_space<vmem>>, vector<1x64xf32>
    tpu.vector_store %arg22[%602, %c0_204], %601 {strides = array<i32>} : memref<8x64xf32, #tpu.memory_space<vmem>>, vector<1x64xf32>,
    %604 = arith.index_cast %c6_i32 : i32 to index
    %c0_205 = arith.constant 0 : index
    %605 = vector.load %arg23[%604, %c0_205] : memref<8x64xf32, #tpu.memory_space<vmem>>, vector<1x64xf32>
    %606 = arith.index_cast %c6_i32 : i32 to index
    %c0_206 = arith.constant 0 : index
    %607 = vector.load %arg24[%606, %c0_206] : memref<8x64xf32, #tpu.memory_space<vmem>>, vector<1x64xf32>
    %608 = arith.index_cast %c6_i32 : i32 to index
    %c0_207 = arith.constant 0 : index
    %609 = vector.load %arg25[%608, %c0_207] : memref<8x64xf32, #tpu.memory_space<vmem>>, vector<1x64xf32>
    %610 = arith.index_cast %c6_i32 : i32 to index
    %c0_208 = arith.constant 0 : index
    %611 = vector.load %arg26[%610, %c0_208] : memref<8x64xf32, #tpu.memory_space<vmem>>, vector<1x64xf32>
    %612 = arith.index_cast %c6_i32 : i32 to index
    %c0_209 = arith.constant 0 : index
    %613 = vector.load %arg27[%612, %c0_209] : memref<8x64xf32, #tpu.memory_space<vmem>>, vector<1x64xf32>
    %614 = arith.index_cast %c6_i32 : i32 to index
    %c0_210 = arith.constant 0 : index
    %615 = vector.load %arg28[%614, %c0_210] : memref<8x64xf32, #tpu.memory_space<vmem>>, vector<1x64xf32>
    %616 = vector.broadcast %615 : vector<1x64xf32> to vector<64x64xf32>
    %617 = arith.mulf %616, %35 : vector<64x64xf32>
    %cst_211 = arith.constant dense<0.000000e+00> : vector<64xf32>
    %618 = vector.multi_reduction <add>, %617, %cst_211 [1] : vector<64x64xf32> to vector<64xf32>
    %619 = vector.shape_cast %618 : vector<64xf32> to vector<64x1xf32>
    %620 = vector.broadcast %611 : vector<1x64xf32> to vector<64x64xf32>
    %621 = arith.mulf %553, %620 : vector<64x64xf32>
    %cst_212 = arith.constant dense<0.000000e+00> : vector<64xf32>
    %622 = vector.multi_reduction <add>, %621, %cst_212 [1] : vector<64x64xf32> to vector<64xf32>
    %623 = vector.shape_cast %622 : vector<64xf32> to vector<64x1xf32>
    %624 = vector.broadcast %607 : vector<1x64xf32> to vector<64x64xf32>
    %625 = arith.mulf %553, %624 : vector<64x64xf32>
    %626 = vector.broadcast %623 : vector<64x1xf32> to vector<64x64xf32>
    %627 = vector.broadcast %613 : vector<1x64xf32> to vector<64x64xf32>
    %628 = arith.mulf %626, %627 : vector<64x64xf32>
    %629 = arith.addf %625, %628 : vector<64x64xf32>
    %630 = vector.broadcast %619 : vector<64x1xf32> to vector<64x64xf32>
    %631 = vector.broadcast %609 : vector<1x64xf32> to vector<64x64xf32>
    %632 = arith.mulf %630, %631 : vector<64x64xf32>
    %633 = arith.addf %629, %632 : vector<64x64xf32>
    %634 = vector.broadcast %605 : vector<1x64xf32> to vector<64x64xf32>
    %635 = arith.mulf %633, %634 : vector<64x64xf32>
    %cst_213 = arith.constant dense<0.000000e+00> : vector<64xf32>
    %636 = vector.multi_reduction <add>, %635, %cst_213 [1] : vector<64x64xf32> to vector<64xf32>
    %637 = vector.shape_cast %636 : vector<64xf32> to vector<64x1xf32>
    %638 = vector.broadcast %637 : vector<64x1xf32> to vector<64x64xf32>
    %639 = arith.mulf %638, %35 : vector<64x64xf32>
    %cst_214 = arith.constant dense<0.000000e+00> : vector<64xf32>
    %640 = vector.multi_reduction <add>, %639, %cst_214 [0] : vector<64x64xf32> to vector<64xf32>
    %641 = vector.shape_cast %640 : vector<64xf32> to vector<1x64xf32>
    %642 = arith.index_cast %c6_i32 : i32 to index
    %c0_215 = arith.constant 0 : index
    %643 = vector.load %arg29[%642, %c0_215] : memref<8x64xf32, #tpu.memory_space<vmem>>, vector<1x64xf32>
    tpu.vector_store %arg29[%642, %c0_215], %641 {strides = array<i32>} : memref<8x64xf32, #tpu.memory_space<vmem>>, vector<1x64xf32>,
    %c7_i32 = arith.constant 7 : i32
    %644 = arith.index_cast %c7_i32 : i32 to index
    %c0_216 = arith.constant 0 : index
    %645 = vector.load %arg16[%644, %c0_216] : memref<8x64xf32, #tpu.memory_space<vmem>>, vector<1x64xf32>
    %646 = arith.index_cast %c7_i32 : i32 to index
    %c0_217 = arith.constant 0 : index
    %647 = vector.load %arg17[%646, %c0_217] : memref<8x64xf32, #tpu.memory_space<vmem>>, vector<1x64xf32>
    %648 = arith.index_cast %c7_i32 : i32 to index
    %c0_218 = arith.constant 0 : index
    %649 = vector.load %arg18[%648, %c0_218] : memref<8x64xf32, #tpu.memory_space<vmem>>, vector<1x64xf32>
    %650 = arith.index_cast %c7_i32 : i32 to index
    %c0_219 = arith.constant 0 : index
    %651 = vector.load %arg19[%650, %c0_219] : memref<8x64xf32, #tpu.memory_space<vmem>>, vector<1x64xf32>
    %652 = arith.index_cast %c7_i32 : i32 to index
    %c0_220 = arith.constant 0 : index
    %653 = vector.load %arg20[%652, %c0_220] : memref<8x64xf32, #tpu.memory_space<vmem>>, vector<1x64xf32>
    %654 = arith.index_cast %c7_i32 : i32 to index
    %c0_221 = arith.constant 0 : index
    %655 = vector.load %arg21[%654, %c0_221] : memref<8x64xf32, #tpu.memory_space<vmem>>, vector<1x64xf32>
    %656 = vector.broadcast %655 : vector<1x64xf32> to vector<64x64xf32>
    %657 = arith.mulf %656, %35 : vector<64x64xf32>
    %cst_222 = arith.constant dense<0.000000e+00> : vector<64xf32>
    %658 = vector.multi_reduction <add>, %657, %cst_222 [1] : vector<64x64xf32> to vector<64xf32>
    %659 = vector.shape_cast %658 : vector<64xf32> to vector<64x1xf32>
    %660 = vector.broadcast %651 : vector<1x64xf32> to vector<64x64xf32>
    %661 = arith.mulf %593, %660 : vector<64x64xf32>
    %cst_223 = arith.constant dense<0.000000e+00> : vector<64xf32>
    %662 = vector.multi_reduction <add>, %661, %cst_223 [1] : vector<64x64xf32> to vector<64xf32>
    %663 = vector.shape_cast %662 : vector<64xf32> to vector<64x1xf32>
    %664 = vector.broadcast %647 : vector<1x64xf32> to vector<64x64xf32>
    %665 = arith.mulf %593, %664 : vector<64x64xf32>
    %666 = vector.broadcast %663 : vector<64x1xf32> to vector<64x64xf32>
    %667 = vector.broadcast %653 : vector<1x64xf32> to vector<64x64xf32>
    %668 = arith.mulf %666, %667 : vector<64x64xf32>
    %669 = arith.addf %665, %668 : vector<64x64xf32>
    %670 = vector.broadcast %659 : vector<64x1xf32> to vector<64x64xf32>
    %671 = vector.broadcast %649 : vector<1x64xf32> to vector<64x64xf32>
    %672 = arith.mulf %670, %671 : vector<64x64xf32>
    %673 = arith.addf %669, %672 : vector<64x64xf32>
    %674 = vector.broadcast %645 : vector<1x64xf32> to vector<64x64xf32>
    %675 = arith.mulf %673, %674 : vector<64x64xf32>
    %cst_224 = arith.constant dense<0.000000e+00> : vector<64xf32>
    %676 = vector.multi_reduction <add>, %675, %cst_224 [1] : vector<64x64xf32> to vector<64xf32>
    %677 = vector.shape_cast %676 : vector<64xf32> to vector<64x1xf32>
    %678 = vector.broadcast %677 : vector<64x1xf32> to vector<64x64xf32>
    %679 = arith.mulf %678, %35 : vector<64x64xf32>
    %cst_225 = arith.constant dense<0.000000e+00> : vector<64xf32>
    %680 = vector.multi_reduction <add>, %679, %cst_225 [0] : vector<64x64xf32> to vector<64xf32>
    %681 = vector.shape_cast %680 : vector<64xf32> to vector<1x64xf32>
    %682 = arith.index_cast %c7_i32 : i32 to index
    %c0_226 = arith.constant 0 : index
    %683 = vector.load %arg22[%682, %c0_226] : memref<8x64xf32, #tpu.memory_space<vmem>>, vector<1x64xf32>
    tpu.vector_store %arg22[%682, %c0_226], %681 {strides = array<i32>} : memref<8x64xf32, #tpu.memory_space<vmem>>, vector<1x64xf32>,
    %684 = arith.index_cast %c7_i32 : i32 to index
    %c0_227 = arith.constant 0 : index
    %685 = vector.load %arg23[%684, %c0_227] : memref<8x64xf32, #tpu.memory_space<vmem>>, vector<1x64xf32>
    %686 = arith.index_cast %c7_i32 : i32 to index
    %c0_228 = arith.constant 0 : index
    %687 = vector.load %arg24[%686, %c0_228] : memref<8x64xf32, #tpu.memory_space<vmem>>, vector<1x64xf32>
    %688 = arith.index_cast %c7_i32 : i32 to index
    %c0_229 = arith.constant 0 : index
    %689 = vector.load %arg25[%688, %c0_229] : memref<8x64xf32, #tpu.memory_space<vmem>>, vector<1x64xf32>
    %690 = arith.index_cast %c7_i32 : i32 to index
    %c0_230 = arith.constant 0 : index
    %691 = vector.load %arg26[%690, %c0_230] : memref<8x64xf32, #tpu.memory_space<vmem>>, vector<1x64xf32>
    %692 = arith.index_cast %c7_i32 : i32 to index
    %c0_231 = arith.constant 0 : index
    %693 = vector.load %arg27[%692, %c0_231] : memref<8x64xf32, #tpu.memory_space<vmem>>, vector<1x64xf32>
    %694 = arith.index_cast %c7_i32 : i32 to index
    %c0_232 = arith.constant 0 : index
    %695 = vector.load %arg28[%694, %c0_232] : memref<8x64xf32, #tpu.memory_space<vmem>>, vector<1x64xf32>
    %696 = vector.broadcast %695 : vector<1x64xf32> to vector<64x64xf32>
    %697 = arith.mulf %696, %35 : vector<64x64xf32>
    %cst_233 = arith.constant dense<0.000000e+00> : vector<64xf32>
    %698 = vector.multi_reduction <add>, %697, %cst_233 [1] : vector<64x64xf32> to vector<64xf32>
    %699 = vector.shape_cast %698 : vector<64xf32> to vector<64x1xf32>
    %700 = vector.broadcast %691 : vector<1x64xf32> to vector<64x64xf32>
    %701 = arith.mulf %633, %700 : vector<64x64xf32>
    %cst_234 = arith.constant dense<0.000000e+00> : vector<64xf32>
    %702 = vector.multi_reduction <add>, %701, %cst_234 [1] : vector<64x64xf32> to vector<64xf32>
    %703 = vector.shape_cast %702 : vector<64xf32> to vector<64x1xf32>
    %704 = vector.broadcast %687 : vector<1x64xf32> to vector<64x64xf32>
    %705 = arith.mulf %633, %704 : vector<64x64xf32>
    %706 = vector.broadcast %703 : vector<64x1xf32> to vector<64x64xf32>
    %707 = vector.broadcast %693 : vector<1x64xf32> to vector<64x64xf32>
    %708 = arith.mulf %706, %707 : vector<64x64xf32>
    %709 = arith.addf %705, %708 : vector<64x64xf32>
    %710 = vector.broadcast %699 : vector<64x1xf32> to vector<64x64xf32>
    %711 = vector.broadcast %689 : vector<1x64xf32> to vector<64x64xf32>
    %712 = arith.mulf %710, %711 : vector<64x64xf32>
    %713 = arith.addf %709, %712 : vector<64x64xf32>
    %714 = vector.broadcast %685 : vector<1x64xf32> to vector<64x64xf32>
    %715 = arith.mulf %713, %714 : vector<64x64xf32>
    %cst_235 = arith.constant dense<0.000000e+00> : vector<64xf32>
    %716 = vector.multi_reduction <add>, %715, %cst_235 [1] : vector<64x64xf32> to vector<64xf32>
    %717 = vector.shape_cast %716 : vector<64xf32> to vector<64x1xf32>
    %718 = vector.broadcast %717 : vector<64x1xf32> to vector<64x64xf32>
    %719 = arith.mulf %718, %35 : vector<64x64xf32>
    %cst_236 = arith.constant dense<0.000000e+00> : vector<64xf32>
    %720 = vector.multi_reduction <add>, %719, %cst_236 [0] : vector<64x64xf32> to vector<64xf32>
    %721 = vector.shape_cast %720 : vector<64xf32> to vector<1x64xf32>
    %722 = arith.index_cast %c7_i32 : i32 to index
    %c0_237 = arith.constant 0 : index
    %723 = vector.load %arg29[%722, %c0_237] : memref<8x64xf32, #tpu.memory_space<vmem>>, vector<1x64xf32>
    tpu.vector_store %arg29[%722, %c0_237], %721 {strides = array<i32>} : memref<8x64xf32, #tpu.memory_space<vmem>>, vector<1x64xf32>,
    %c8_i32 = arith.constant 8 : i32
    %c0_238 = arith.constant 0 : index
    %c0_239 = arith.constant 0 : index
    %724 = vector.load %arg14[%c0_238, %c0_239] : memref<64x64xf32, #tpu.memory_space<vmem>>, vector<64x64xf32>
    tpu.vector_store %arg14[%c0_238, %c0_239], %673 {strides = array<i32>} : memref<64x64xf32, #tpu.memory_space<vmem>>, vector<64x64xf32>,
    %c0_240 = arith.constant 0 : index
    %c0_241 = arith.constant 0 : index
    %725 = vector.load %arg15[%c0_240, %c0_241] : memref<64x64xf32, #tpu.memory_space<vmem>>, vector<64x64xf32>
    tpu.vector_store %arg15[%c0_240, %c0_241], %713 {strides = array<i32>} : memref<64x64xf32, #tpu.memory_space<vmem>>, vector<64x64xf32>,
    %c0_242 = arith.constant 0 : index
    %c0_243 = arith.constant 0 : index
    %726 = vector.load %arg22[%c0_242, %c0_243] : memref<8x64xf32, #tpu.memory_space<vmem>>, vector<8x64xf32>
    %cst_244 = arith.constant dense<0.000000e+00> : vector<8xf32>
    %727 = vector.multi_reduction <add>, %726, %cst_244 [1] : vector<8x64xf32> to vector<8xf32>
    %728 = vector.shape_cast %727 : vector<8xf32> to vector<8x1xf32>
    %cst_245 = arith.constant 6.400000e+01 : f32
    %729 = vector.broadcast %cst_245 : f32 to vector<8x1xf32>
    %730 = arith.divf %728, %729 : vector<8x1xf32>
    %731 = vector.broadcast %730 : vector<8x1xf32> to vector<8x64xf32>
    %732 = arith.subf %726, %731 : vector<8x64xf32>
    %733 = arith.mulf %732, %732 : vector<8x64xf32>
    %cst_246 = arith.constant dense<0.000000e+00> : vector<8xf32>
    %734 = vector.multi_reduction <add>, %733, %cst_246 [1] : vector<8x64xf32> to vector<8xf32>
    %735 = vector.shape_cast %734 : vector<8xf32> to vector<8x1xf32>
    %cst_247 = arith.constant 6.400000e+01 : f32
    %736 = vector.broadcast %cst_247 : f32 to vector<8x1xf32>
    %737 = arith.divf %735, %736 : vector<8x1xf32>
    %cst_248 = arith.constant 6.400000e-04 : f32
    %738 = vector.broadcast %cst_248 : f32 to vector<8x1xf32>
    %739 = arith.addf %737, %738 : vector<8x1xf32>
    %740 = math.rsqrt %739 : vector<8x1xf32>
    %741 = vector.broadcast %740 : vector<8x1xf32> to vector<8x64xf32>
    %742 = arith.mulf %732, %741 : vector<8x64xf32>
    %743 = vector.extract_strided_slice %28 {offsets = [0, 0], sizes = [1, 64], strides = [1, 1]} : vector<1x128xf32> to vector<1x64xf32>
    %744 = vector.broadcast %743 : vector<1x64xf32> to vector<8x64xf32>
    %745 = arith.mulf %742, %744 : vector<8x64xf32>
    %746 = vector.extract_strided_slice %29 {offsets = [0, 0], sizes = [1, 64], strides = [1, 1]} : vector<1x128xf32> to vector<1x64xf32>
    %747 = vector.broadcast %746 : vector<1x64xf32> to vector<8x64xf32>
    %748 = arith.addf %745, %747 : vector<8x64xf32>
    %c0_249 = arith.constant 0 : index
    %c0_250 = arith.constant 0 : index
    %749 = vector.load %arg16[%c0_249, %c0_250] : memref<8x64xf32, #tpu.memory_space<vmem>>, vector<8x64xf32>
    %c0_251 = arith.constant 0 : index
    %c0_252 = arith.constant 0 : index
    %750 = vector.load %arg18[%c0_251, %c0_252] : memref<8x64xf32, #tpu.memory_space<vmem>>, vector<8x64xf32>
    %751 = arith.mulf %749, %750 : vector<8x64xf32>
    %752 = vector.extract_strided_slice %30 {offsets = [0, 0], sizes = [1, 64], strides = [1, 1]} : vector<1x128xf32> to vector<1x64xf32>
    %753 = vector.broadcast %752 : vector<1x64xf32> to vector<8x64xf32>
    %754 = arith.mulf %751, %753 : vector<8x64xf32>
    %cst_253 = arith.constant dense<0.000000e+00> : vector<8xf32>
    %755 = vector.multi_reduction <add>, %754, %cst_253 [1] : vector<8x64xf32> to vector<8xf32>
    %756 = vector.shape_cast %755 : vector<8xf32> to vector<8x1xf32>
    %c0_254 = arith.constant 0 : index
    %c0_255 = arith.constant 0 : index
    %757 = vector.load %arg21[%c0_254, %c0_255] : memref<8x64xf32, #tpu.memory_space<vmem>>, vector<8x64xf32>
    %758 = vector.broadcast %756 : vector<8x1xf32> to vector<8x64xf32>
    %759 = arith.mulf %758, %757 : vector<8x64xf32>
    %760 = arith.addf %748, %759 : vector<8x64xf32>
    %c0_256 = arith.constant 0 : index
    %c0_257 = arith.constant 0 : index
    %761 = vector.load %arg29[%c0_256, %c0_257] : memref<8x64xf32, #tpu.memory_space<vmem>>, vector<8x64xf32>
    %cst_258 = arith.constant dense<0.000000e+00> : vector<8xf32>
    %762 = vector.multi_reduction <add>, %761, %cst_258 [1] : vector<8x64xf32> to vector<8xf32>
    %763 = vector.shape_cast %762 : vector<8xf32> to vector<8x1xf32>
    %cst_259 = arith.constant 6.400000e+01 : f32
    %764 = vector.broadcast %cst_259 : f32 to vector<8x1xf32>
    %765 = arith.divf %763, %764 : vector<8x1xf32>
    %766 = vector.broadcast %765 : vector<8x1xf32> to vector<8x64xf32>
    %767 = arith.subf %761, %766 : vector<8x64xf32>
    %768 = arith.mulf %767, %767 : vector<8x64xf32>
    %cst_260 = arith.constant dense<0.000000e+00> : vector<8xf32>
    %769 = vector.multi_reduction <add>, %768, %cst_260 [1] : vector<8x64xf32> to vector<8xf32>
    %770 = vector.shape_cast %769 : vector<8xf32> to vector<8x1xf32>
    %cst_261 = arith.constant 6.400000e+01 : f32
    %771 = vector.broadcast %cst_261 : f32 to vector<8x1xf32>
    %772 = arith.divf %770, %771 : vector<8x1xf32>
    %cst_262 = arith.constant 6.400000e-04 : f32
    %773 = vector.broadcast %cst_262 : f32 to vector<8x1xf32>
    %774 = arith.addf %772, %773 : vector<8x1xf32>
    %775 = math.rsqrt %774 : vector<8x1xf32>
    %776 = vector.broadcast %775 : vector<8x1xf32> to vector<8x64xf32>
    %777 = arith.mulf %767, %776 : vector<8x64xf32>
    %778 = vector.extract_strided_slice %28 {offsets = [0, 64], sizes = [1, 64], strides = [1, 1]} : vector<1x128xf32> to vector<1x64xf32>
    %779 = vector.broadcast %778 : vector<1x64xf32> to vector<8x64xf32>
    %780 = arith.mulf %777, %779 : vector<8x64xf32>
    %781 = vector.extract_strided_slice %29 {offsets = [0, 64], sizes = [1, 64], strides = [1, 1]} : vector<1x128xf32> to vector<1x64xf32>
    %782 = vector.broadcast %781 : vector<1x64xf32> to vector<8x64xf32>
    %783 = arith.addf %780, %782 : vector<8x64xf32>
    %c0_263 = arith.constant 0 : index
    %c0_264 = arith.constant 0 : index
    %784 = vector.load %arg23[%c0_263, %c0_264] : memref<8x64xf32, #tpu.memory_space<vmem>>, vector<8x64xf32>
    %c0_265 = arith.constant 0 : index
    %c0_266 = arith.constant 0 : index
    %785 = vector.load %arg25[%c0_265, %c0_266] : memref<8x64xf32, #tpu.memory_space<vmem>>, vector<8x64xf32>
    %786 = arith.mulf %784, %785 : vector<8x64xf32>
    %787 = vector.extract_strided_slice %30 {offsets = [0, 64], sizes = [1, 64], strides = [1, 1]} : vector<1x128xf32> to vector<1x64xf32>
    %788 = vector.broadcast %787 : vector<1x64xf32> to vector<8x64xf32>
    %789 = arith.mulf %786, %788 : vector<8x64xf32>
    %cst_267 = arith.constant dense<0.000000e+00> : vector<8xf32>
    %790 = vector.multi_reduction <add>, %789, %cst_267 [1] : vector<8x64xf32> to vector<8xf32>
    %791 = vector.shape_cast %790 : vector<8xf32> to vector<8x1xf32>
    %c0_268 = arith.constant 0 : index
    %c0_269 = arith.constant 0 : index
    %792 = vector.load %arg28[%c0_268, %c0_269] : memref<8x64xf32, #tpu.memory_space<vmem>>, vector<8x64xf32>
    %793 = vector.broadcast %791 : vector<8x1xf32> to vector<8x64xf32>
    %794 = arith.mulf %793, %792 : vector<8x64xf32>
    %795 = arith.addf %783, %794 : vector<8x64xf32>
    %796 = tpu.concatenate %760, %795 in 1 : vector<8x64xf32>, vector<8x64xf32> -> vector<8x128xf32>
    %c0_270 = arith.constant 0 : index
    %c0_271 = arith.constant 0 : index
    %c0_272 = arith.constant 0 : index
    %797 = vector.load %arg13[%c0_270, %c0_271, %c0_272] : memref<1x8x128xf32, #tpu.memory_space<vmem>>, vector<1x8x128xf32>
    %798 = vector.shape_cast %797 : vector<1x8x128xf32> to vector<8x128xf32>
    %799 = vector.shape_cast %796 : vector<8x128xf32> to vector<1x8x128xf32>
    tpu.vector_store %arg13[%c0_270, %c0_271, %c0_272], %799 {strides = array<i32>} : memref<1x8x128xf32, #tpu.memory_space<vmem>>, vector<1x8x128xf32>,
    return
  }
  func.func @transform_0(%arg0: i32, %arg1: i32, %arg2: i32) -> (i32, i32, i32) {
    %c0_i32 = arith.constant 0 : i32
    return %arg0, %arg2, %arg1 : i32, i32, i32
  }
  func.func @transform_1(%arg0: i32, %arg1: i32, %arg2: i32) -> (i32, i32, i32) {
    %c0_i32 = arith.constant 0 : i32
    return %arg0, %arg2, %arg1 : i32, i32, i32
  }
  func.func @transform_2(%arg0: i32, %arg1: i32, %arg2: i32) -> (i32, i32, i32) {
    %c0_i32 = arith.constant 0 : i32
    return %arg0, %arg2, %arg1 : i32, i32, i32
  }
  func.func @transform_3(%arg0: i32, %arg1: i32, %arg2: i32) -> (i32, i32, i32) {
    %c0_i32 = arith.constant 0 : i32
    return %arg0, %arg2, %arg1 : i32, i32, i32
  }
  func.func @transform_4(%arg0: i32, %arg1: i32, %arg2: i32) -> (i32, i32, i32) {
    %c0_i32 = arith.constant 0 : i32
    return %arg0, %arg2, %arg1 : i32, i32, i32
  }
  func.func @transform_5(%arg0: i32, %arg1: i32, %arg2: i32) -> (i32, i32) {
    %c0_i32 = arith.constant 0 : i32
    %c0_i32_0 = arith.constant 0 : i32
    return %c0_i32, %arg1 : i32, i32
  }
  func.func @transform_6(%arg0: i32, %arg1: i32, %arg2: i32) -> (i32, i32) {
    %c0_i32 = arith.constant 0 : i32
    %c0_i32_0 = arith.constant 0 : i32
    return %c0_i32, %arg1 : i32, i32
  }
  func.func @transform_7(%arg0: i32, %arg1: i32, %arg2: i32) -> (i32, i32) {
    %c0_i32 = arith.constant 0 : i32
    %c0_i32_0 = arith.constant 0 : i32
    return %c0_i32, %arg1 : i32, i32
  }
  func.func @transform_8(%arg0: i32, %arg1: i32, %arg2: i32) -> (i32, i32) {
    %c0_i32 = arith.constant 0 : i32
    %c0_i32_0 = arith.constant 0 : i32
    return %c0_i32, %arg1 : i32, i32
  }
  func.func @transform_9(%arg0: i32, %arg1: i32, %arg2: i32) -> (i32, i32) {
    %c0_i32 = arith.constant 0 : i32
    %c0_i32_0 = arith.constant 0 : i32
    return %c0_i32, %arg1 : i32, i32
  }
  func.func @transform_10(%arg0: i32, %arg1: i32, %arg2: i32) -> (i32, i32, i32) {
    %c0_i32 = arith.constant 0 : i32
    return %arg0, %arg2, %arg1 : i32, i32, i32
  }
}

module attributes {stable_mosaic.version = 11 : i64} {
  func.func @_mm_dual_kernel(%arg0: i32, %arg1: i32, %arg2: i32, %arg3: memref<16x128xf32, #tpu.memory_space<vmem>>, %arg4: memref<16x128xf32, #tpu.memory_space<vmem>>, %arg5: memref<128x448xbf16, #tpu.memory_space<vmem>>, %arg6: memref<128x448xbf16, #tpu.memory_space<vmem>>, %arg7: memref<16x448xf32, #tpu.memory_space<vmem>>, %arg8: memref<16x448xf32, #tpu.memory_space<vmem>>) attributes {dimension_semantics = [#tpu.dimension_semantics<parallel>, #tpu.dimension_semantics<parallel>, #tpu.dimension_semantics<arbitrary>], iteration_bounds = array<i64: 1, 1, 1>, scalar_prefetch = 0 : i64, scratch_operands = 1 : i64, tpu.core_type = #tpu.core_type<tc>, window_params = [{transform_indices = @transform_0, window_bounds = array<i64: 16, 128>}, {transform_indices = @transform_1, window_bounds = array<i64: 16, 128>}, {transform_indices = @transform_2, window_bounds = array<i64: 128, 448>}, {transform_indices = @transform_3, window_bounds = array<i64: 128, 448>}, {transform_indices = @transform_4, window_bounds = array<i64: 16, 448>}]} {
    %c0_i32 = arith.constant 0 : i32
    %0 = arith.cmpi eq, %arg2, %c0_i32 : i32
    %1 = arith.extui %0 : i1 to i32
    %c0_i32_0 = arith.constant 0 : i32
    %2 = arith.cmpi ne, %1, %c0_i32_0 : i32
    scf.if %2 {
      %cst_19 = arith.constant 0.000000e+00 : f32
      %20 = vector.broadcast %cst_19 : f32 to vector<16x448xf32>
      %c0_20 = arith.constant 0 : index
      %c0_21 = arith.constant 0 : index
      %21 = vector.load %arg8[%c0_20, %c0_21] : memref<16x448xf32, #tpu.memory_space<vmem>>, vector<16x448xf32>
      tpu.vector_store %arg8[%c0_20, %c0_21], %20 {strides = array<i32>} : memref<16x448xf32, #tpu.memory_space<vmem>>, vector<16x448xf32>,
    } else {
    }
    %c0 = arith.constant 0 : index
    %c0_1 = arith.constant 0 : index
    %3 = vector.load %arg8[%c0, %c0_1] : memref<16x448xf32, #tpu.memory_space<vmem>>, vector<16x448xf32>
    %c0_2 = arith.constant 0 : index
    %c0_3 = arith.constant 0 : index
    %4 = vector.load %arg3[%c0_2, %c0_3] : memref<16x128xf32, #tpu.memory_space<vmem>>, vector<16x128xf32>
    %5 = arith.truncf %4 : vector<16x128xf32> to vector<16x128xbf16>
    %c0_4 = arith.constant 0 : index
    %c0_5 = arith.constant 0 : index
    %6 = vector.load %arg5[%c0_4, %c0_5] : memref<128x448xbf16, #tpu.memory_space<vmem>>, vector<128x448xbf16>
    %cst = arith.constant dense<0.000000e+00> : vector<16x448xf32>
    %7 = tpu.matmul %5, %6, %cst {dimension_numbers = #tpu.dot_dimension_numbers<[1], [0], [0], [1], [0, 0, 1, 1], [], []>} : vector<16x128xbf16>, vector<128x448xbf16>, vector<16x448xf32> -> vector<16x448xf32>
    %8 = arith.addf %3, %7 : vector<16x448xf32>
    %c0_6 = arith.constant 0 : index
    %c0_7 = arith.constant 0 : index
    %9 = vector.load %arg8[%c0_6, %c0_7] : memref<16x448xf32, #tpu.memory_space<vmem>>, vector<16x448xf32>
    tpu.vector_store %arg8[%c0_6, %c0_7], %8 {strides = array<i32>} : memref<16x448xf32, #tpu.memory_space<vmem>>, vector<16x448xf32>,
    %c0_8 = arith.constant 0 : index
    %c0_9 = arith.constant 0 : index
    %10 = vector.load %arg8[%c0_8, %c0_9] : memref<16x448xf32, #tpu.memory_space<vmem>>, vector<16x448xf32>
    %c0_10 = arith.constant 0 : index
    %c0_11 = arith.constant 0 : index
    %11 = vector.load %arg4[%c0_10, %c0_11] : memref<16x128xf32, #tpu.memory_space<vmem>>, vector<16x128xf32>
    %12 = arith.truncf %11 : vector<16x128xf32> to vector<16x128xbf16>
    %c0_12 = arith.constant 0 : index
    %c0_13 = arith.constant 0 : index
    %13 = vector.load %arg6[%c0_12, %c0_13] : memref<128x448xbf16, #tpu.memory_space<vmem>>, vector<128x448xbf16>
    %cst_14 = arith.constant dense<0.000000e+00> : vector<16x448xf32>
    %14 = tpu.matmul %12, %13, %cst_14 {dimension_numbers = #tpu.dot_dimension_numbers<[1], [0], [0], [1], [0, 0, 1, 1], [], []>} : vector<16x128xbf16>, vector<128x448xbf16>, vector<16x448xf32> -> vector<16x448xf32>
    %15 = arith.addf %10, %14 : vector<16x448xf32>
    %c0_15 = arith.constant 0 : index
    %c0_16 = arith.constant 0 : index
    %16 = vector.load %arg8[%c0_15, %c0_16] : memref<16x448xf32, #tpu.memory_space<vmem>>, vector<16x448xf32>
    tpu.vector_store %arg8[%c0_15, %c0_16], %15 {strides = array<i32>} : memref<16x448xf32, #tpu.memory_space<vmem>>, vector<16x448xf32>,
    %c0_i32_17 = arith.constant 0 : i32
    %17 = arith.cmpi eq, %arg2, %c0_i32_17 : i32
    %18 = arith.extui %17 : i1 to i32
    %c0_i32_18 = arith.constant 0 : i32
    %19 = arith.cmpi ne, %18, %c0_i32_18 : i32
    scf.if %19 {
      %c0_19 = arith.constant 0 : index
      %c0_20 = arith.constant 0 : index
      %20 = vector.load %arg8[%c0_19, %c0_20] : memref<16x448xf32, #tpu.memory_space<vmem>>, vector<16x448xf32>
      %cst_21 = arith.constant 0.000000e+00 : f32
      %21 = vector.broadcast %cst_21 : f32 to vector<16x448xf32>
      %22 = arith.maximumf %20, %21 : vector<16x448xf32>
      %23 = arith.mulf %22, %22 : vector<16x448xf32>
      %c0_22 = arith.constant 0 : index
      %c0_23 = arith.constant 0 : index
      %24 = vector.load %arg7[%c0_22, %c0_23] : memref<16x448xf32, #tpu.memory_space<vmem>>, vector<16x448xf32>
      tpu.vector_store %arg7[%c0_22, %c0_23], %23 {strides = array<i32>} : memref<16x448xf32, #tpu.memory_space<vmem>>, vector<16x448xf32>,
    } else {
    }
    return
  }
  func.func @transform_0(%arg0: i32, %arg1: i32, %arg2: i32) -> (i32, i32) {
    %c0_i32 = arith.constant 0 : i32
    return %arg0, %arg2 : i32, i32
  }
  func.func @transform_1(%arg0: i32, %arg1: i32, %arg2: i32) -> (i32, i32) {
    %c0_i32 = arith.constant 0 : i32
    return %arg0, %arg2 : i32, i32
  }
  func.func @transform_2(%arg0: i32, %arg1: i32, %arg2: i32) -> (i32, i32) {
    %c0_i32 = arith.constant 0 : i32
    return %arg2, %arg1 : i32, i32
  }
  func.func @transform_3(%arg0: i32, %arg1: i32, %arg2: i32) -> (i32, i32) {
    %c0_i32 = arith.constant 0 : i32
    return %arg2, %arg1 : i32, i32
  }
  func.func @transform_4(%arg0: i32, %arg1: i32, %arg2: i32) -> (i32, i32) {
    %c0_i32 = arith.constant 0 : i32
    return %arg0, %arg1 : i32, i32
  }
}

module attributes {stable_mosaic.version = 11 : i64} {
  func.func @_mm_kernel(%arg0: i32, %arg1: i32, %arg2: i32, %arg3: memref<16x448xf32, #tpu.memory_space<vmem>>, %arg4: memref<448x128xbf16, #tpu.memory_space<vmem>>, %arg5: memref<16x128xf32, #tpu.memory_space<vmem>>, %arg6: memref<16x128xf32, #tpu.memory_space<vmem>>) attributes {dimension_semantics = [#tpu.dimension_semantics<parallel>, #tpu.dimension_semantics<parallel>, #tpu.dimension_semantics<arbitrary>], iteration_bounds = array<i64: 1, 1, 1>, scalar_prefetch = 0 : i64, scratch_operands = 1 : i64, tpu.core_type = #tpu.core_type<tc>, window_params = [{transform_indices = @transform_0, window_bounds = array<i64: 16, 448>}, {transform_indices = @transform_1, window_bounds = array<i64: 448, 128>}, {transform_indices = @transform_2, window_bounds = array<i64: 16, 128>}]} {
    %c0_i32 = arith.constant 0 : i32
    %0 = arith.cmpi eq, %arg2, %c0_i32 : i32
    %1 = arith.extui %0 : i1 to i32
    %c0_i32_0 = arith.constant 0 : i32
    %2 = arith.cmpi ne, %1, %c0_i32_0 : i32
    scf.if %2 {
      %cst_10 = arith.constant 0.000000e+00 : f32
      %13 = vector.broadcast %cst_10 : f32 to vector<16x128xf32>
      %c0_11 = arith.constant 0 : index
      %c0_12 = arith.constant 0 : index
      %14 = vector.load %arg6[%c0_11, %c0_12] : memref<16x128xf32, #tpu.memory_space<vmem>>, vector<16x128xf32>
      tpu.vector_store %arg6[%c0_11, %c0_12], %13 {strides = array<i32>} : memref<16x128xf32, #tpu.memory_space<vmem>>, vector<16x128xf32>,
    } else {
    }
    %c0 = arith.constant 0 : index
    %c0_1 = arith.constant 0 : index
    %3 = vector.load %arg3[%c0, %c0_1] : memref<16x448xf32, #tpu.memory_space<vmem>>, vector<16x448xf32>
    %4 = arith.truncf %3 : vector<16x448xf32> to vector<16x448xbf16>
    %c0_2 = arith.constant 0 : index
    %c0_3 = arith.constant 0 : index
    %5 = vector.load %arg6[%c0_2, %c0_3] : memref<16x128xf32, #tpu.memory_space<vmem>>, vector<16x128xf32>
    %c0_4 = arith.constant 0 : index
    %c0_5 = arith.constant 0 : index
    %6 = vector.load %arg4[%c0_4, %c0_5] : memref<448x128xbf16, #tpu.memory_space<vmem>>, vector<448x128xbf16>
    %cst = arith.constant dense<0.000000e+00> : vector<16x128xf32>
    %7 = tpu.matmul %4, %6, %cst {dimension_numbers = #tpu.dot_dimension_numbers<[1], [0], [0], [1], [0, 0, 1, 1], [], []>} : vector<16x448xbf16>, vector<448x128xbf16>, vector<16x128xf32> -> vector<16x128xf32>
    %8 = arith.addf %5, %7 : vector<16x128xf32>
    %c0_6 = arith.constant 0 : index
    %c0_7 = arith.constant 0 : index
    %9 = vector.load %arg6[%c0_6, %c0_7] : memref<16x128xf32, #tpu.memory_space<vmem>>, vector<16x128xf32>
    tpu.vector_store %arg6[%c0_6, %c0_7], %8 {strides = array<i32>} : memref<16x128xf32, #tpu.memory_space<vmem>>, vector<16x128xf32>,
    %c0_i32_8 = arith.constant 0 : i32
    %10 = arith.cmpi eq, %arg2, %c0_i32_8 : i32
    %11 = arith.extui %10 : i1 to i32
    %c0_i32_9 = arith.constant 0 : i32
    %12 = arith.cmpi ne, %11, %c0_i32_9 : i32
    scf.if %12 {
      %c0_10 = arith.constant 0 : index
      %c0_11 = arith.constant 0 : index
      %13 = vector.load %arg6[%c0_10, %c0_11] : memref<16x128xf32, #tpu.memory_space<vmem>>, vector<16x128xf32>
      %c0_12 = arith.constant 0 : index
      %c0_13 = arith.constant 0 : index
      %14 = vector.load %arg5[%c0_12, %c0_13] : memref<16x128xf32, #tpu.memory_space<vmem>>, vector<16x128xf32>
      tpu.vector_store %arg5[%c0_12, %c0_13], %13 {strides = array<i32>} : memref<16x128xf32, #tpu.memory_space<vmem>>, vector<16x128xf32>,
    } else {
    }
    return
  }
  func.func @transform_0(%arg0: i32, %arg1: i32, %arg2: i32) -> (i32, i32) {
    %c0_i32 = arith.constant 0 : i32
    return %arg0, %arg2 : i32, i32
  }
  func.func @transform_1(%arg0: i32, %arg1: i32, %arg2: i32) -> (i32, i32) {
    %c0_i32 = arith.constant 0 : i32
    return %arg2, %arg1 : i32, i32
  }
  func.func @transform_2(%arg0: i32, %arg1: i32, %arg2: i32) -> (i32, i32) {
    %c0_i32 = arith.constant 0 : i32
    return %arg0, %arg1 : i32, i32
  }
}

module attributes {stable_mosaic.version = 11 : i64} {
  func.func @_mm_dual_kernel(%arg0: i32, %arg1: i32, %arg2: i32, %arg3: memref<16x128xf32, #tpu.memory_space<vmem>>, %arg4: memref<16x128xf32, #tpu.memory_space<vmem>>, %arg5: memref<128x128xbf16, #tpu.memory_space<vmem>>, %arg6: memref<128x128xbf16, #tpu.memory_space<vmem>>, %arg7: memref<16x128xf32, #tpu.memory_space<vmem>>, %arg8: memref<16x128xf32, #tpu.memory_space<vmem>>) attributes {dimension_semantics = [#tpu.dimension_semantics<parallel>, #tpu.dimension_semantics<parallel>, #tpu.dimension_semantics<arbitrary>], iteration_bounds = array<i64: 1, 7, 1>, scalar_prefetch = 0 : i64, scratch_operands = 1 : i64, tpu.core_type = #tpu.core_type<tc>, window_params = [{transform_indices = @transform_0, window_bounds = array<i64: 16, 128>}, {transform_indices = @transform_1, window_bounds = array<i64: 16, 128>}, {transform_indices = @transform_2, window_bounds = array<i64: 128, 128>}, {transform_indices = @transform_3, window_bounds = array<i64: 128, 128>}, {transform_indices = @transform_4, window_bounds = array<i64: 16, 128>}]} {
    %c0_i32 = arith.constant 0 : i32
    %0 = arith.cmpi eq, %arg2, %c0_i32 : i32
    %1 = arith.extui %0 : i1 to i32
    %c0_i32_0 = arith.constant 0 : i32
    %2 = arith.cmpi ne, %1, %c0_i32_0 : i32
    scf.if %2 {
      %cst_19 = arith.constant 0.000000e+00 : f32
      %20 = vector.broadcast %cst_19 : f32 to vector<16x128xf32>
      %c0_20 = arith.constant 0 : index
      %c0_21 = arith.constant 0 : index
      %21 = vector.load %arg8[%c0_20, %c0_21] : memref<16x128xf32, #tpu.memory_space<vmem>>, vector<16x128xf32>
      tpu.vector_store %arg8[%c0_20, %c0_21], %20 {strides = array<i32>} : memref<16x128xf32, #tpu.memory_space<vmem>>, vector<16x128xf32>,
    } else {
    }
    %c0 = arith.constant 0 : index
    %c0_1 = arith.constant 0 : index
    %3 = vector.load %arg8[%c0, %c0_1] : memref<16x128xf32, #tpu.memory_space<vmem>>, vector<16x128xf32>
    %c0_2 = arith.constant 0 : index
    %c0_3 = arith.constant 0 : index
    %4 = vector.load %arg3[%c0_2, %c0_3] : memref<16x128xf32, #tpu.memory_space<vmem>>, vector<16x128xf32>
    %5 = arith.truncf %4 : vector<16x128xf32> to vector<16x128xbf16>
    %c0_4 = arith.constant 0 : index
    %c0_5 = arith.constant 0 : index
    %6 = vector.load %arg5[%c0_4, %c0_5] : memref<128x128xbf16, #tpu.memory_space<vmem>>, vector<128x128xbf16>
    %cst = arith.constant dense<0.000000e+00> : vector<16x128xf32>
    %7 = tpu.matmul %5, %6, %cst {dimension_numbers = #tpu.dot_dimension_numbers<[1], [0], [0], [1], [0, 0, 1, 1], [], []>} : vector<16x128xbf16>, vector<128x128xbf16>, vector<16x128xf32> -> vector<16x128xf32>
    %8 = arith.addf %3, %7 : vector<16x128xf32>
    %c0_6 = arith.constant 0 : index
    %c0_7 = arith.constant 0 : index
    %9 = vector.load %arg8[%c0_6, %c0_7] : memref<16x128xf32, #tpu.memory_space<vmem>>, vector<16x128xf32>
    tpu.vector_store %arg8[%c0_6, %c0_7], %8 {strides = array<i32>} : memref<16x128xf32, #tpu.memory_space<vmem>>, vector<16x128xf32>,
    %c0_8 = arith.constant 0 : index
    %c0_9 = arith.constant 0 : index
    %10 = vector.load %arg8[%c0_8, %c0_9] : memref<16x128xf32, #tpu.memory_space<vmem>>, vector<16x128xf32>
    %c0_10 = arith.constant 0 : index
    %c0_11 = arith.constant 0 : index
    %11 = vector.load %arg4[%c0_10, %c0_11] : memref<16x128xf32, #tpu.memory_space<vmem>>, vector<16x128xf32>
    %12 = arith.truncf %11 : vector<16x128xf32> to vector<16x128xbf16>
    %c0_12 = arith.constant 0 : index
    %c0_13 = arith.constant 0 : index
    %13 = vector.load %arg6[%c0_12, %c0_13] : memref<128x128xbf16, #tpu.memory_space<vmem>>, vector<128x128xbf16>
    %cst_14 = arith.constant dense<0.000000e+00> : vector<16x128xf32>
    %14 = tpu.matmul %12, %13, %cst_14 {dimension_numbers = #tpu.dot_dimension_numbers<[1], [0], [0], [1], [0, 0, 1, 1], [], []>} : vector<16x128xbf16>, vector<128x128xbf16>, vector<16x128xf32> -> vector<16x128xf32>
    %15 = arith.addf %10, %14 : vector<16x128xf32>
    %c0_15 = arith.constant 0 : index
    %c0_16 = arith.constant 0 : index
    %16 = vector.load %arg8[%c0_15, %c0_16] : memref<16x128xf32, #tpu.memory_space<vmem>>, vector<16x128xf32>
    tpu.vector_store %arg8[%c0_15, %c0_16], %15 {strides = array<i32>} : memref<16x128xf32, #tpu.memory_space<vmem>>, vector<16x128xf32>,
    %c0_i32_17 = arith.constant 0 : i32
    %17 = arith.cmpi eq, %arg2, %c0_i32_17 : i32
    %18 = arith.extui %17 : i1 to i32
    %c0_i32_18 = arith.constant 0 : i32
    %19 = arith.cmpi ne, %18, %c0_i32_18 : i32
    scf.if %19 {
      %c0_19 = arith.constant 0 : index
      %c0_20 = arith.constant 0 : index
      %20 = vector.load %arg8[%c0_19, %c0_20] : memref<16x128xf32, #tpu.memory_space<vmem>>, vector<16x128xf32>
      %c0_21 = arith.constant 0 : index
      %c0_22 = arith.constant 0 : index
      %21 = vector.load %arg7[%c0_21, %c0_22] : memref<16x128xf32, #tpu.memory_space<vmem>>, vector<16x128xf32>
      tpu.vector_store %arg7[%c0_21, %c0_22], %20 {strides = array<i32>} : memref<16x128xf32, #tpu.memory_space<vmem>>, vector<16x128xf32>,
    } else {
    }
    return
  }
  func.func @transform_0(%arg0: i32, %arg1: i32, %arg2: i32) -> (i32, i32) {
    %c0_i32 = arith.constant 0 : i32
    return %arg0, %arg2 : i32, i32
  }
  func.func @transform_1(%arg0: i32, %arg1: i32, %arg2: i32) -> (i32, i32) {
    %c0_i32 = arith.constant 0 : i32
    return %arg0, %arg2 : i32, i32
  }
  func.func @transform_2(%arg0: i32, %arg1: i32, %arg2: i32) -> (i32, i32) {
    %c0_i32 = arith.constant 0 : i32
    return %arg2, %arg1 : i32, i32
  }
  func.func @transform_3(%arg0: i32, %arg1: i32, %arg2: i32) -> (i32, i32) {
    %c0_i32 = arith.constant 0 : i32
    return %arg2, %arg1 : i32, i32
  }
  func.func @transform_4(%arg0: i32, %arg1: i32, %arg2: i32) -> (i32, i32) {
    %c0_i32 = arith.constant 0 : i32
    return %arg0, %arg1 : i32, i32
  }
}

module attributes {stable_mosaic.version = 11 : i64} {
  func.func @_mm_kernel(%arg0: i32, %arg1: i32, %arg2: i32, %arg3: memref<16x128xf32, #tpu.memory_space<vmem>>, %arg4: memref<128x64xbf16, #tpu.memory_space<vmem>>, %arg5: memref<16x64xf32, #tpu.memory_space<vmem>>, %arg6: memref<16x64xf32, #tpu.memory_space<vmem>>) attributes {dimension_semantics = [#tpu.dimension_semantics<parallel>, #tpu.dimension_semantics<parallel>, #tpu.dimension_semantics<arbitrary>], iteration_bounds = array<i64: 1, 1, 1>, scalar_prefetch = 0 : i64, scratch_operands = 1 : i64, tpu.core_type = #tpu.core_type<tc>, window_params = [{transform_indices = @transform_0, window_bounds = array<i64: 16, 128>}, {transform_indices = @transform_1, window_bounds = array<i64: 128, 64>}, {transform_indices = @transform_2, window_bounds = array<i64: 16, 64>}]} {
    %c0_i32 = arith.constant 0 : i32
    %0 = arith.cmpi eq, %arg2, %c0_i32 : i32
    %1 = arith.extui %0 : i1 to i32
    %c0_i32_0 = arith.constant 0 : i32
    %2 = arith.cmpi ne, %1, %c0_i32_0 : i32
    scf.if %2 {
      %cst_10 = arith.constant 0.000000e+00 : f32
      %13 = vector.broadcast %cst_10 : f32 to vector<16x64xf32>
      %c0_11 = arith.constant 0 : index
      %c0_12 = arith.constant 0 : index
      %14 = vector.load %arg6[%c0_11, %c0_12] : memref<16x64xf32, #tpu.memory_space<vmem>>, vector<16x64xf32>
      tpu.vector_store %arg6[%c0_11, %c0_12], %13 {strides = array<i32>} : memref<16x64xf32, #tpu.memory_space<vmem>>, vector<16x64xf32>,
    } else {
    }
    %c0 = arith.constant 0 : index
    %c0_1 = arith.constant 0 : index
    %3 = vector.load %arg3[%c0, %c0_1] : memref<16x128xf32, #tpu.memory_space<vmem>>, vector<16x128xf32>
    %4 = arith.truncf %3 : vector<16x128xf32> to vector<16x128xbf16>
    %c0_2 = arith.constant 0 : index
    %c0_3 = arith.constant 0 : index
    %5 = vector.load %arg6[%c0_2, %c0_3] : memref<16x64xf32, #tpu.memory_space<vmem>>, vector<16x64xf32>
    %c0_4 = arith.constant 0 : index
    %c0_5 = arith.constant 0 : index
    %6 = vector.load %arg4[%c0_4, %c0_5] : memref<128x64xbf16, #tpu.memory_space<vmem>>, vector<128x64xbf16>
    %cst = arith.constant dense<0.000000e+00> : vector<16x64xf32>
    %7 = tpu.matmul %4, %6, %cst {dimension_numbers = #tpu.dot_dimension_numbers<[1], [0], [0], [1], [0, 0, 1, 1], [], []>} : vector<16x128xbf16>, vector<128x64xbf16>, vector<16x64xf32> -> vector<16x64xf32>
    %8 = arith.addf %5, %7 : vector<16x64xf32>
    %c0_6 = arith.constant 0 : index
    %c0_7 = arith.constant 0 : index
    %9 = vector.load %arg6[%c0_6, %c0_7] : memref<16x64xf32, #tpu.memory_space<vmem>>, vector<16x64xf32>
    tpu.vector_store %arg6[%c0_6, %c0_7], %8 {strides = array<i32>} : memref<16x64xf32, #tpu.memory_space<vmem>>, vector<16x64xf32>,
    %c0_i32_8 = arith.constant 0 : i32
    %10 = arith.cmpi eq, %arg2, %c0_i32_8 : i32
    %11 = arith.extui %10 : i1 to i32
    %c0_i32_9 = arith.constant 0 : i32
    %12 = arith.cmpi ne, %11, %c0_i32_9 : i32
    scf.if %12 {
      %c0_10 = arith.constant 0 : index
      %c0_11 = arith.constant 0 : index
      %13 = vector.load %arg6[%c0_10, %c0_11] : memref<16x64xf32, #tpu.memory_space<vmem>>, vector<16x64xf32>
      %c0_12 = arith.constant 0 : index
      %c0_13 = arith.constant 0 : index
      %14 = vector.load %arg5[%c0_12, %c0_13] : memref<16x64xf32, #tpu.memory_space<vmem>>, vector<16x64xf32>
      tpu.vector_store %arg5[%c0_12, %c0_13], %13 {strides = array<i32>} : memref<16x64xf32, #tpu.memory_space<vmem>>, vector<16x64xf32>,
    } else {
    }
    return
  }
  func.func @transform_0(%arg0: i32, %arg1: i32, %arg2: i32) -> (i32, i32) {
    %c0_i32 = arith.constant 0 : i32
    return %arg0, %arg2 : i32, i32
  }
  func.func @transform_1(%arg0: i32, %arg1: i32, %arg2: i32) -> (i32, i32) {
    %c0_i32 = arith.constant 0 : i32
    return %arg2, %arg1 : i32, i32
  }
  func.func @transform_2(%arg0: i32, %arg1: i32, %arg2: i32) -> (i32, i32) {
    %c0_i32 = arith.constant 0 : i32
    return %arg0, %arg1 : i32, i32
  }
}

</mosaic_0001>

<llo_original>
// kernel: rwkv_forward.27
$region0: #{rwkv_forward.27}
  #allocation0 [shape = 'u32[]', space=smem, size = 0x4, offset = 0x4, fixed_abs, tag = 'smem constant byte address 0x4 - core index']
  #allocation1 [shape = 'u32[144,128]{1,0:T(1,128)}', space=vmem, size = 0x12000, scoped, tag = 'internal scratch']
  #allocation2 [shape = 'f32[16,128]{1,0:T(8,128)}', space=vmem, size = 0x2000, scoped, tag = 'scratch operand']
  %s0 = inlined_call_operand.vmem [shape: f32[16,128], index: 0, kind: input, shape index: {}]
  %s1 = inlined_call_operand.vmem [shape: bf16[128,128], index: 1, kind: input, shape index: {}]
  %s2 = inlined_call_operand.vmem [shape: f32[1,128], index: 2, kind: input, shape index: {}]
  %s3 = inlined_call_operand.vmem [shape: f32[16,128], index: 3, kind: output, shape index: {}]
  %s4 = sld [smem:[#allocation0]]
  $region30: #{rwkv_forward.27} parent=0
    _
  %s6 = ssub.s32 1, %s4
  %s7 = scalar_select 0, %s6, %s4
  // Predicated region
  $region2: #{rwkv_forward.27} parent=0 // pred_check
    _
  $region3: #{rwkv_forward.27} parent=0 // pred_check_branch
    %9 = sbr.rel (0) target = $region5
  $region4: #{rwkv_forward.27} parent=0 // pred_region
    _
  $region5: #{rwkv_forward.27} parent=0 // pred_fallthru
    _
  // Predicated region
  $region6: #{rwkv_forward.27} parent=0 // pred_check
    _
  $region7: #{rwkv_forward.27} parent=0 // pred_check_branch
    %11 = sbr.rel (0) target = $region9
  $region8: #{rwkv_forward.27} parent=0 // pred_region
    _
  $region9: #{rwkv_forward.27} parent=0 // pred_fallthru
    _
  // Predicated region
  $region10: #{rwkv_forward.27} parent=0 // pred_check
    _
  $region11: #{rwkv_forward.27} parent=0 // pred_check_branch
    %13 = sbr.rel (0) target = $region13
  $region12: #{rwkv_forward.27} parent=0 // pred_region
    _
  $region13: #{rwkv_forward.27} parent=0 // pred_fallthru
    _
  %p15 = scmp.eq.s32.totalorder 0, 0
  // Predicated region
  $region14: #{rwkv_forward.27} parent=0 // pred_check
    %p16 = pneg %p15
  $region15: #{rwkv_forward.27} parent=0 // pred_check_branch
    %18 = sbr.rel (%p16) target = $region17
  $region16: #{rwkv_forward.27} parent=0 // pred_region
    %19 = vst [vmem:[#allocation2] sm:$0xff] 0.0
    %20 = vst [vmem:[#allocation2 + $0x8] sm:$0xff] 0.0
  $region17: #{rwkv_forward.27} parent=0 // pred_fallthru
    _
  %v21 = vld [vmem:[%s0] sm:$0xff]
  %v22 = vld [vmem:[%s0 + $0x8] sm:$0xff]
  %v23 = vtanh.pop %v21
  %v24 = vtanh.pop %v22
  %v25 = vpack.c.bf16 %v24, %v23
  %v26 = vld [vmem:[#allocation2] sm:$0xff]
  %v27 = vld [vmem:[#allocation2 + $0x8] sm:$0xff]
  %v28 = vld [vmem:[%s1] sm:$0xf]
  %v29 = vld [vmem:[%s1 + $0x4] sm:$0xf]
  %v30 = vld [vmem:[%s1 + $0x8] sm:$0xf]
  %v31 = vld [vmem:[%s1 + $0xc] sm:$0xf]
  %v32 = vld [vmem:[%s1 + $0x10] sm:$0xf]
  %v33 = vld [vmem:[%s1 + $0x14] sm:$0xf]
  %v34 = vld [vmem:[%s1 + $0x18] sm:$0xf]
  %v35 = vld [vmem:[%s1 + $0x1c] sm:$0xf]
  %v36 = vld [vmem:[%s1 + $0x20] sm:$0xf]
  %v37 = vld [vmem:[%s1 + $0x24] sm:$0xf]
  %v38 = vld [vmem:[%s1 + $0x28] sm:$0xf]
  %v39 = vld [vmem:[%s1 + $0x2c] sm:$0xf]
  %v40 = vld [vmem:[%s1 + $0x30] sm:$0xf]
  %v41 = vld [vmem:[%s1 + $0x34] sm:$0xf]
  %v42 = vld [vmem:[%s1 + $0x38] sm:$0xf]
  %v43 = vld [vmem:[%s1 + $0x3c] sm:$0xf]
  %v60 = vunpack.c.l.b16 %v28
  %v61 = vunpack.c.l.b16 %v29
  %v62 = vunpack.c.l.b16 %v30
  %v63 = vunpack.c.l.b16 %v31
  %v64 = vunpack.c.l.b16 %v32
  %v65 = vunpack.c.l.b16 %v33
  %v66 = vunpack.c.l.b16 %v34
  %v67 = vunpack.c.l.b16 %v35
  %v68 = vunpack.c.l.b16 %v36
  %v69 = vunpack.c.l.b16 %v37
  %v70 = vunpack.c.l.b16 %v38
  %v71 = vunpack.c.l.b16 %v39
  %v72 = vunpack.c.l.b16 %v40
  %v73 = vunpack.c.l.b16 %v41
  %v74 = vunpack.c.l.b16 %v42
  %v75 = vunpack.c.l.b16 %v43
  %v76 = vpack.c.b16 %v61, %v60
  %v77 = vpack.c.b16 %v63, %v62
  %v78 = vpack.c.b16 %v65, %v64
  %v79 = vpack.c.b16 %v67, %v66
  %v80 = vpack.c.b16 %v69, %v68
  %v81 = vpack.c.b16 %v71, %v70
  %v82 = vpack.c.b16 %v73, %v72
  %v83 = vpack.c.b16 %v75, %v74
  %92 = vmatprep.subr.bf16.mxu0 0
  %93 = vmatpush1.bf16.msra.mxu0 %v76
  %94 = vmatprep.subr.bf16.mxu0 0
  %95 = vmatpush1.bf16.msra.mxu0 %v77
  %96 = vmatprep.subr.bf16.mxu0 0
  %97 = vmatpush1.bf16.msra.mxu0 %v78
  %98 = vmatprep.subr.bf16.mxu0 0
  %99 = vmatpush1.bf16.msra.mxu0 %v79
  %100 = vmatprep.subr.bf16.mxu0 0
  %101 = vmatpush1.bf16.msra.mxu0 %v80
  %102 = vmatprep.subr.bf16.mxu0 0
  %103 = vmatpush1.bf16.msra.mxu0 %v81
  %104 = vmatprep.subr.bf16.mxu0 0
  %105 = vmatpush1.bf16.msra.mxu0 %v82
  %106 = vmatprep.subr.bf16.mxu0 0
  %107 = vmatpush1.bf16.msra.mxu0 %v83
  %108 = vmatprep.subr.bf16.mxu0 0
  %109 = vmatpush1.bf16.msra.mxu0 0
  %110 = vmatprep.subr.bf16.mxu0 0
  %111 = vmatpush1.bf16.msra.mxu0 0
  %112 = vmatprep.subr.bf16.mxu0 0
  %113 = vmatpush1.bf16.msra.mxu0 0
  %114 = vmatprep.subr.bf16.mxu0 0
  %115 = vmatpush1.bf16.msra.mxu0 0
  %116 = vmatprep.subr.bf16.mxu0 0
  %117 = vmatpush1.bf16.msra.mxu0 0
  %118 = vmatprep.subr.bf16.mxu0 0
  %119 = vmatpush1.bf16.msra.mxu0 0
  %120 = vmatprep.subr.bf16.mxu0 0
  %121 = vmatpush1.bf16.msra.mxu0 0
  %122 = vmatprep.subr.bf16.mxu0 0
  %123 = vmatpush1.bf16.msra.mxu0 0
  %124 = vmatprep.mubr.bf16.mxu0 0
  %125 = vmatmul.mubr.bf16.gmra.mrb[0].mxu0 %v25
  %v126 = vpop.f32.mrb[0].mxu0
  %v127 = vadd.f32 0.0, %v126
  %v128 = vpop.f32.mrb[0].mxu0
  %v129 = vpop.f32.mrb[0].mxu0
  %v130 = vadd.f32 0.0, %v129
  %v131 = vpop.f32.mrb[0].mxu0
  %132 = vdwg.mxu0
  %v133 = vadd.f32 %v26, %v127
  %v134 = vadd.f32 %v27, %v130
  %135 = vst [vmem:[#allocation2] sm:$0xff] %v133
  %136 = vst [vmem:[#allocation2 + $0x8] sm:$0xff] %v134
  // Predicated region
  $region18: #{rwkv_forward.27} parent=0 // pred_check
    %p137 = pneg %p15
  $region19: #{rwkv_forward.27} parent=0 // pred_check_branch
    %139 = sbr.rel (%p137) target = $region21
  $region20: #{rwkv_forward.27} parent=0 // pred_region
    %v140 = vld [vmem:[#allocation2] sm:$0xff]
    %v141 = vld [vmem:[#allocation2 + $0x8] sm:$0xff]
    %v142 = vld [vmem:[%s2] sm:$0x1]
    %v144 = vlaneseq
    %v145 = vshrl.u32 %v144, 7
    %v146 = vsub.s32 0, %v145
    %v147 = vrot.slane %v142, %v146
    %v149 = vadd.f32 %v140, %v147
    %v150 = vadd.f32 %v141, %v147
    %v151 = vsub.f32 0.0, %v149
    %v152 = vsub.f32 0.0, %v150
    %v153 = vmax.f32 %v151, 0.0
    %v154 = vmax.f32 %v152, 0.0
    %v155 = vand.u32 2147483647, %v151
    %v156 = vand.u32 2147483647, %v152
    %v157 = vsub.f32 0.0, %v155
    %v158 = vsub.f32 0.0, %v156
    %v159 = vmul.f32 %v157, 1.442695
    %v160 = vpow.pop %v159
    %v161 = vmul.f32 %v158, 1.442695
    %v162 = vpow.pop %v161
    %v163 = vadd.f32 %v160, 1.0
    %v164 = vadd.f32 %v162, 1.0
    %v165 = vlog2.pop %v163
    %v166 = vmul.f32 %v165, 0.6931472
    %v167 = vlog2.pop %v164
    %v168 = vmul.f32 %v167, 0.6931472
    %v169 = vadd.f32 %v153, %v166
    %v170 = vadd.f32 %v154, %v168
    %v171 = vsub.f32 0.0, %v169
    %v172 = vsub.f32 0.0, %v170
    %v173 = vsub.f32 %v171, 0.5
    %v174 = vsub.f32 %v172, 0.5
    %175 = vst [vmem:[%s3] sm:$0xff] %v173
    %176 = vst [vmem:[%s3 + $0x8] sm:$0xff] %v174
  $region21: #{rwkv_forward.27} parent=0 // pred_fallthru
    _
  // Predicated region
  $region22: #{rwkv_forward.27} parent=0 // pred_check
    _
  $region23: #{rwkv_forward.27} parent=0 // pred_check_branch
    %178 = sbr.rel (0) target = $region25
  $region24: #{rwkv_forward.27} parent=0 // pred_region
    _
  $region25: #{rwkv_forward.27} parent=0 // pred_fallthru
    _
  // Predicated region
  $region26: #{rwkv_forward.27} parent=0 // pred_check
    _
  $region27: #{rwkv_forward.27} parent=0 // pred_check_branch
    %180 = sbr.rel (0) target = $region29
  $region28: #{rwkv_forward.27} parent=0 // pred_region
    _
  $region29: #{rwkv_forward.27} parent=0 // pred_fallthru
    _

// kernel: rwkv_forward.28
$region0: #{rwkv_forward.28}
  #allocation0 [shape = 'u32[]', space=smem, size = 0x4, offset = 0x4, fixed_abs, tag = 'smem constant byte address 0x4 - core index']
  #allocation1 [shape = 'u32[144,128]{1,0:T(1,128)}', space=vmem, size = 0x12000, scoped, tag = 'internal scratch']
  #allocation2 [shape = 'f32[16,128]{1,0:T(8,128)}', space=vmem, size = 0x2000, scoped, tag = 'scratch operand']
  %s0 = inlined_call_operand.vmem [shape: f32[16,128], index: 0, kind: input, shape index: {}]
  %s1 = inlined_call_operand.vmem [shape: bf16[128,128], index: 1, kind: input, shape index: {}]
  %s2 = inlined_call_operand.vmem [shape: f32[1,128], index: 2, kind: input, shape index: {}]
  %s3 = inlined_call_operand.vmem [shape: f32[16,128], index: 3, kind: output, shape index: {}]
  %s4 = sld [smem:[#allocation0]]
  $region30: #{rwkv_forward.28} parent=0
    _
  %s6 = ssub.s32 1, %s4
  %s7 = scalar_select 0, %s6, %s4
  // Predicated region
  $region2: #{rwkv_forward.28} parent=0 // pred_check
    _
  $region3: #{rwkv_forward.28} parent=0 // pred_check_branch
    %9 = sbr.rel (0) target = $region5
  $region4: #{rwkv_forward.28} parent=0 // pred_region
    _
  $region5: #{rwkv_forward.28} parent=0 // pred_fallthru
    _
  // Predicated region
  $region6: #{rwkv_forward.28} parent=0 // pred_check
    _
  $region7: #{rwkv_forward.28} parent=0 // pred_check_branch
    %11 = sbr.rel (0) target = $region9
  $region8: #{rwkv_forward.28} parent=0 // pred_region
    _
  $region9: #{rwkv_forward.28} parent=0 // pred_fallthru
    _
  // Predicated region
  $region10: #{rwkv_forward.28} parent=0 // pred_check
    _
  $region11: #{rwkv_forward.28} parent=0 // pred_check_branch
    %13 = sbr.rel (0) target = $region13
  $region12: #{rwkv_forward.28} parent=0 // pred_region
    _
  $region13: #{rwkv_forward.28} parent=0 // pred_fallthru
    _
  %p15 = scmp.eq.s32.totalorder 0, 0
  // Predicated region
  $region14: #{rwkv_forward.28} parent=0 // pred_check
    %p16 = pneg %p15
  $region15: #{rwkv_forward.28} parent=0 // pred_check_branch
    %18 = sbr.rel (%p16) target = $region17
  $region16: #{rwkv_forward.28} parent=0 // pred_region
    %19 = vst [vmem:[#allocation2] sm:$0xff] 0.0
    %20 = vst [vmem:[#allocation2 + $0x8] sm:$0xff] 0.0
  $region17: #{rwkv_forward.28} parent=0 // pred_fallthru
    _
  %v21 = vld [vmem:[%s0] sm:$0xff]
  %v22 = vld [vmem:[%s0 + $0x8] sm:$0xff]
  %v23 = vpack.c.bf16 %v22, %v21
  %v24 = vld [vmem:[#allocation2] sm:$0xff]
  %v25 = vld [vmem:[#allocation2 + $0x8] sm:$0xff]
  %v26 = vld [vmem:[%s1] sm:$0xf]
  %v27 = vld [vmem:[%s1 + $0x4] sm:$0xf]
  %v28 = vld [vmem:[%s1 + $0x8] sm:$0xf]
  %v29 = vld [vmem:[%s1 + $0xc] sm:$0xf]
  %v30 = vld [vmem:[%s1 + $0x10] sm:$0xf]
  %v31 = vld [vmem:[%s1 + $0x14] sm:$0xf]
  %v32 = vld [vmem:[%s1 + $0x18] sm:$0xf]
  %v33 = vld [vmem:[%s1 + $0x1c] sm:$0xf]
  %v34 = vld [vmem:[%s1 + $0x20] sm:$0xf]
  %v35 = vld [vmem:[%s1 + $0x24] sm:$0xf]
  %v36 = vld [vmem:[%s1 + $0x28] sm:$0xf]
  %v37 = vld [vmem:[%s1 + $0x2c] sm:$0xf]
  %v38 = vld [vmem:[%s1 + $0x30] sm:$0xf]
  %v39 = vld [vmem:[%s1 + $0x34] sm:$0xf]
  %v40 = vld [vmem:[%s1 + $0x38] sm:$0xf]
  %v41 = vld [vmem:[%s1 + $0x3c] sm:$0xf]
  %v58 = vunpack.c.l.b16 %v26
  %v59 = vunpack.c.l.b16 %v27
  %v60 = vunpack.c.l.b16 %v28
  %v61 = vunpack.c.l.b16 %v29
  %v62 = vunpack.c.l.b16 %v30
  %v63 = vunpack.c.l.b16 %v31
  %v64 = vunpack.c.l.b16 %v32
  %v65 = vunpack.c.l.b16 %v33
  %v66 = vunpack.c.l.b16 %v34
  %v67 = vunpack.c.l.b16 %v35
  %v68 = vunpack.c.l.b16 %v36
  %v69 = vunpack.c.l.b16 %v37
  %v70 = vunpack.c.l.b16 %v38
  %v71 = vunpack.c.l.b16 %v39
  %v72 = vunpack.c.l.b16 %v40
  %v73 = vunpack.c.l.b16 %v41
  %v74 = vpack.c.b16 %v59, %v58
  %v75 = vpack.c.b16 %v61, %v60
  %v76 = vpack.c.b16 %v63, %v62
  %v77 = vpack.c.b16 %v65, %v64
  %v78 = vpack.c.b16 %v67, %v66
  %v79 = vpack.c.b16 %v69, %v68
  %v80 = vpack.c.b16 %v71, %v70
  %v81 = vpack.c.b16 %v73, %v72
  %90 = vmatprep.subr.bf16.mxu0 0
  %91 = vmatpush1.bf16.msra.mxu0 %v74
  %92 = vmatprep.subr.bf16.mxu0 0
  %93 = vmatpush1.bf16.msra.mxu0 %v75
  %94 = vmatprep.subr.bf16.mxu0 0
  %95 = vmatpush1.bf16.msra.mxu0 %v76
  %96 = vmatprep.subr.bf16.mxu0 0
  %97 = vmatpush1.bf16.msra.mxu0 %v77
  %98 = vmatprep.subr.bf16.mxu0 0
  %99 = vmatpush1.bf16.msra.mxu0 %v78
  %100 = vmatprep.subr.bf16.mxu0 0
  %101 = vmatpush1.bf16.msra.mxu0 %v79
  %102 = vmatprep.subr.bf16.mxu0 0
  %103 = vmatpush1.bf16.msra.mxu0 %v80
  %104 = vmatprep.subr.bf16.mxu0 0
  %105 = vmatpush1.bf16.msra.mxu0 %v81
  %106 = vmatprep.subr.bf16.mxu0 0
  %107 = vmatpush1.bf16.msra.mxu0 0
  %108 = vmatprep.subr.bf16.mxu0 0
  %109 = vmatpush1.bf16.msra.mxu0 0
  %110 = vmatprep.subr.bf16.mxu0 0
  %111 = vmatpush1.bf16.msra.mxu0 0
  %112 = vmatprep.subr.bf16.mxu0 0
  %113 = vmatpush1.bf16.msra.mxu0 0
  %114 = vmatprep.subr.bf16.mxu0 0
  %115 = vmatpush1.bf16.msra.mxu0 0
  %116 = vmatprep.subr.bf16.mxu0 0
  %117 = vmatpush1.bf16.msra.mxu0 0
  %118 = vmatprep.subr.bf16.mxu0 0
  %119 = vmatpush1.bf16.msra.mxu0 0
  %120 = vmatprep.subr.bf16.mxu0 0
  %121 = vmatpush1.bf16.msra.mxu0 0
  %122 = vmatprep.mubr.bf16.mxu0 0
  %123 = vmatmul.mubr.bf16.gmra.mrb[0].mxu0 %v23
  %v124 = vpop.f32.mrb[0].mxu0
  %v125 = vadd.f32 0.0, %v124
  %v126 = vpop.f32.mrb[0].mxu0
  %v127 = vpop.f32.mrb[0].mxu0
  %v128 = vadd.f32 0.0, %v127
  %v129 = vpop.f32.mrb[0].mxu0
  %130 = vdwg.mxu0
  %v131 = vadd.f32 %v24, %v125
  %v132 = vadd.f32 %v25, %v128
  %133 = vst [vmem:[#allocation2] sm:$0xff] %v131
  %134 = vst [vmem:[#allocation2 + $0x8] sm:$0xff] %v132
  // Predicated region
  $region18: #{rwkv_forward.28} parent=0 // pred_check
    %p135 = pneg %p15
  $region19: #{rwkv_forward.28} parent=0 // pred_check_branch
    %137 = sbr.rel (%p135) target = $region21
  $region20: #{rwkv_forward.28} parent=0 // pred_region
    %v138 = vld [vmem:[#allocation2] sm:$0xff]
    %v139 = vld [vmem:[#allocation2 + $0x8] sm:$0xff]
    %v140 = vld [vmem:[%s2] sm:$0x1]
    %v142 = vlaneseq
    %v143 = vshrl.u32 %v142, 7
    %v144 = vsub.s32 0, %v143
    %v145 = vrot.slane %v140, %v144
    %v147 = vadd.f32 %v138, %v145
    %v148 = vadd.f32 %v139, %v145
    %v149 = vsub.f32 0.0, %v147
    %v150 = vsub.f32 0.0, %v148
    %v151 = vmul.f32 %v149, 1.442695
    %v152 = vpow.pop %v151
    %v153 = vmul.f32 %v150, 1.442695
    %v154 = vpow.pop %v153
    %v155 = vadd.f32 %v152, 1.0
    %v156 = vadd.f32 %v154, 1.0
    %v157 = vrcp.pop %v155
    %v158 = vmul.f32 1.0, %v157
    %v159 = vrcp.pop %v156
    %v160 = vmul.f32 1.0, %v159
    %161 = vst [vmem:[%s3] sm:$0xff] %v158
    %162 = vst [vmem:[%s3 + $0x8] sm:$0xff] %v160
  $region21: #{rwkv_forward.28} parent=0 // pred_fallthru
    _
  // Predicated region
  $region22: #{rwkv_forward.28} parent=0 // pred_check
    _
  $region23: #{rwkv_forward.28} parent=0 // pred_check_branch
    %164 = sbr.rel (0) target = $region25
  $region24: #{rwkv_forward.28} parent=0 // pred_region
    _
  $region25: #{rwkv_forward.28} parent=0 // pred_fallthru
    _
  // Predicated region
  $region26: #{rwkv_forward.28} parent=0 // pred_check
    _
  $region27: #{rwkv_forward.28} parent=0 // pred_check_branch
    %166 = sbr.rel (0) target = $region29
  $region28: #{rwkv_forward.28} parent=0 // pred_region
    _
  $region29: #{rwkv_forward.28} parent=0 // pred_fallthru
    _

// kernel: rwkv_forward.24
$region0: #{rwkv_forward.24}
  #allocation0 [shape = 'u32[]', space=smem, size = 0x4, offset = 0x4, fixed_abs, tag = 'smem constant byte address 0x4 - core index']
  #allocation1 [shape = 'u32[144,128]{1,0:T(1,128)}', space=vmem, size = 0x12000, scoped, tag = 'internal scratch']
  %s0 = inlined_call_operand.vmem [shape: f32[16,128], index: 0, kind: input, shape index: {}]
  %s1 = inlined_call_operand.vmem [shape: f32[1,128], index: 1, kind: input, shape index: {}]
  %s2 = inlined_call_operand.vmem [shape: f32[1,128], index: 2, kind: input, shape index: {}]
  %s3 = inlined_call_operand.vmem [shape: f32[16,128], index: 3, kind: output, shape index: {}]
  %s4 = sld [smem:[#allocation0]]
  $region22: #{rwkv_forward.24} parent=0
    _
  %s6 = ssub.s32 1, %s4
  %s7 = scalar_select 0, %s6, %s4
  // Predicated region
  $region2: #{rwkv_forward.24} parent=0 // pred_check
    _
  $region3: #{rwkv_forward.24} parent=0 // pred_check_branch
    %9 = sbr.rel (0) target = $region5
  $region4: #{rwkv_forward.24} parent=0 // pred_region
    _
  $region5: #{rwkv_forward.24} parent=0 // pred_fallthru
    _
  // Predicated region
  $region6: #{rwkv_forward.24} parent=0 // pred_check
    _
  $region7: #{rwkv_forward.24} parent=0 // pred_check_branch
    %11 = sbr.rel (0) target = $region9
  $region8: #{rwkv_forward.24} parent=0 // pred_region
    _
  $region9: #{rwkv_forward.24} parent=0 // pred_fallthru
    _
  // Predicated region
  $region10: #{rwkv_forward.24} parent=0 // pred_check
    _
  $region11: #{rwkv_forward.24} parent=0 // pred_check_branch
    %13 = sbr.rel (0) target = $region13
  $region12: #{rwkv_forward.24} parent=0 // pred_region
    _
  $region13: #{rwkv_forward.24} parent=0 // pred_fallthru
    _
  %v14 = vld [vmem:[%s0] sm:$0xff]
  %v15 = vld [vmem:[%s0 + $0x8] sm:$0xff]
  %16 = vadd.xlane.f32.xlu0 %v14
  %v17 = vpop.xlane.xlu0 %16
  %18 = vadd.xlane.f32.xlu0 %v15
  %v19 = vpop.xlane.xlu0 %18
  %v20 = vrcp.pop 128.0
  %v21 = vmul.f32 %v17, %v20
  %v22 = vmul.f32 %v19, %v20
  %v23 = vsub.f32 %v14, %v21
  %v24 = vsub.f32 %v15, %v22
  %v25 = vmul.f32 %v23, %v23
  %v26 = vmul.f32 %v24, %v24
  %27 = vadd.xlane.f32.xlu0 %v25
  %v28 = vpop.xlane.xlu0 %27
  %29 = vadd.xlane.f32.xlu0 %v26
  %v30 = vpop.xlane.xlu0 %29
  %v31 = vmul.f32 %v28, %v20
  %v32 = vmul.f32 %v30, %v20
  %v33 = vadd.f32 %v31, 1e-05
  %v34 = vadd.f32 %v32, 1e-05
  %v35 = vrsqrt.pop %v33
  %v36 = vrsqrt.pop %v34
  %v37 = vmul.f32 %v23, %v35
  %v38 = vmul.f32 %v24, %v36
  %v39 = vld [vmem:[%s1] sm:$0x1]
  %v41 = vlaneseq
  %v42 = vshrl.u32 %v41, 7
  %v43 = vsub.s32 0, %v42
  %v44 = vrot.slane %v39, %v43
  %v46 = vmul.f32 %v37, %v44
  %v47 = vmul.f32 %v38, %v44
  %v48 = vld [vmem:[%s2] sm:$0x1]
  %v50 = vlaneseq
  %v51 = vshrl.u32 %v50, 7
  %v52 = vsub.s32 0, %v51
  %v53 = vrot.slane %v48, %v52
  %v55 = vadd.f32 %v46, %v53
  %v56 = vadd.f32 %v47, %v53
  %57 = vst [vmem:[%s3] sm:$0xff] %v55
  %58 = vst [vmem:[%s3 + $0x8] sm:$0xff] %v56
  // Predicated region
  $region14: #{rwkv_forward.24} parent=0 // pred_check
    _
  $region15: #{rwkv_forward.24} parent=0 // pred_check_branch
    %60 = sbr.rel (0) target = $region17
  $region16: #{rwkv_forward.24} parent=0 // pred_region
    _
  $region17: #{rwkv_forward.24} parent=0 // pred_fallthru
    _
  // Predicated region
  $region18: #{rwkv_forward.24} parent=0 // pred_check
    _
  $region19: #{rwkv_forward.24} parent=0 // pred_check_branch
    %62 = sbr.rel (0) target = $region21
  $region20: #{rwkv_forward.24} parent=0 // pred_region
    _
  $region21: #{rwkv_forward.24} parent=0 // pred_fallthru
    _

// kernel: rwkv_forward.26
$region0: #{rwkv_forward.26}
  #allocation0 [shape = 'u32[]', space=smem, size = 0x4, offset = 0x4, fixed_abs, tag = 'smem constant byte address 0x4 - core index']
  #allocation1 [shape = 'u32[144,128]{1,0:T(1,128)}', space=vmem, size = 0x12000, scoped, tag = 'internal scratch']
  #allocation2 [shape = 'f32[16,256]{1,0:T(8,128)}', space=vmem, size = 0x4000, scoped, tag = 'scratch operand']
  %s0 = inlined_call_operand.vmem [shape: f32[16,128], index: 0, kind: input, shape index: {}]
  %s1 = inlined_call_operand.vmem [shape: f32[16,128], index: 1, kind: input, shape index: {}]
  %s2 = inlined_call_operand.vmem [shape: bf16[128,768], index: 2, kind: input, shape index: {}]
  %s3 = inlined_call_operand.hbm [shape: bf16[128,768], index: 3, kind: input, shape index: {}]
  %s4 = inlined_call_operand.vmem [shape: f32[16,768], index: 4, kind: output, shape index: {}]
  %s5 = sld [smem:[#allocation0]]
  $region118: #{rwkv_forward.26} parent=0
    _
  %s7 = ssub.s32 1, %s5
  %s8 = scalar_select 0, %s7, %s5
  $region1: #{rwkv_forward.26} parent=0
    #allocation3 [shape = 'u8[131072]{0}', space=vmem, size = 0x20000, scoped, tag = 'input window, operand 2']
    #allocation4 [shape = 'u8[131072]{0}', space=vmem, size = 0x20000, scoped, tag = 'input window, operand 3']
    #allocation5 [shape = 's32[2]{0}', space=sflag, size = 0x8, scoped, tag = 'scoped memory for rwkv_forward.26']
    #allocation6 [shape = 'u8[32768]{0}', space=vmem, size = 0x8000, scoped, tag = 'output window, operand 0']
    %9 = vsyncpa [#allocation5], 0
    %s10 = scalar_lea.sflag [#allocation5], 1
    %11 = vsyncpa %s10, 0
    loop: start=0, step=1, limit=5
    $region2: #{rwkv_forward.26} parent=1 // loop_pre_header
      _
    $region3: #{rwkv_forward.26} parent=1 // loop_header
      %s13 = sphi 0, %s17
      %p14 = scmp.ge.s32.totalorder %s13, 5
      %s20 = sphi 0, %s39
      %s21 = sphi 0, %s35
      %s22 = sphi 0, %s31
      %s23 = sphi 0, %s20
      %s24 = sphi 0, %s21
      %s25 = sphi 0, %s22
      %s26 = sphi 0, %s23
      %s27 = sphi 0, %s24
      %s28 = sphi 0, %s25
      %s44 = sphi 0, %s46
      %s47 = sphi 0, %s44
      %s48 = sphi 0, %s47
      %s64 = sphi 0, %s48
      %s72 = sphi 0, %s74
      %s75 = sphi 0, %s72
      %s76 = sphi 0, %s75
      %s92 = sphi 0, %s76
      %s100 = sphi 0, %s102
      %s103 = sphi 0, %s100
      %s104 = sphi 0, %s103
      %s120 = sphi 0, %s104
      %s128 = sphi 0, %s130
      %s131 = sphi 0, %s128
      %s132 = sphi 0, %s131
      %s148 = sphi 0, %s132
      %s156 = sphi 0, %s158
      %s159 = sphi 0, %s156
      %s160 = sphi 0, %s159
      %s176 = sphi 0, %s160
    $region4: #{rwkv_forward.26} parent=1 // loop_header_branch
      %16 = sbr.rel (%p14) target = $region8
    $region5: #{rwkv_forward.26} parent=1 // loop_body
      %s18 = ssub.s32 %s13, 1
      %s19 = ssub.s32 %s13, 2
      %s29 = sadd.s32 1, %s22
      %p30 = scmp.ge.s32.totalorder %s29, 1
      %s31 = scalar_select %p30, 0, %s29
      %s32 = sadd.s32 1, %s21
      %s33 = scalar_select %p30, %s32, %s21
      %p34 = scmp.ge.s32.totalorder %s33, 3
      %s35 = scalar_select %p34, 0, %s33
      %s36 = sadd.s32 1, %s20
      %s37 = scalar_select %p34, %s36, %s20
      %p38 = scmp.ge.s32.totalorder %s37, 1
      %s39 = scalar_select %p38, 0, %s37
      %s40 = ssub.s32 %s20, %s39
      %s41 = ssub.s32 %s22, %s31
      %s42 = sor.u32 %s40, %s41
      %p43 = scmp.eq.s32.totalorder %s42, 0
      %s45 = sadd.s32 %s44, 1
      %s46 = scalar_select %p43, %s44, %s45
      %p49 = pneg %p43
      %p50 = scmp.eq.s32.totalorder %s13, 2
      %p51 = por %p49, %p50
      %p52 = scmp.ne.s32.totalorder %s44, %s47
      %p53 = scmp.eq.s32.totalorder %s13, 0
      %p54 = por %p52, %p53
      %p55 = scmp.ne.s32.totalorder %s44, %s47
      %p56 = scmp.eq.s32.totalorder %s18, 2
      %p57 = por %p55, %p56
      %p58 = scmp.ne.s32.totalorder %s47, %s48
      %p59 = scmp.eq.s32.totalorder %s18, 0
      %p60 = por %p58, %p59
      %p61 = scmp.ne.s32.totalorder %s47, %s48
      %p62 = scmp.eq.s32.totalorder %s19, 2
      %p63 = por %p61, %p62
      %p65 = scmp.ne.s32.totalorder %s48, %s64
      %p66 = scmp.eq.s32.totalorder %s19, 0
      %p67 = por %p65, %p66
      %s68 = ssub.s32 %s20, %s39
      %s69 = ssub.s32 %s22, %s31
      %s70 = sor.u32 %s68, %s69
      %p71 = scmp.eq.s32.totalorder %s70, 0
      %s73 = sadd.s32 %s72, 1
      %s74 = scalar_select %p71, %s72, %s73
      %p77 = pneg %p71
      %p78 = scmp.eq.s32.totalorder %s13, 2
      %p79 = por %p77, %p78
      %p80 = scmp.ne.s32.totalorder %s72, %s75
      %p81 = scmp.eq.s32.totalorder %s13, 0
      %p82 = por %p80, %p81
      %p83 = scmp.ne.s32.totalorder %s72, %s75
      %p84 = scmp.eq.s32.totalorder %s18, 2
      %p85 = por %p83, %p84
      %p86 = scmp.ne.s32.totalorder %s75, %s76
      %p87 = scmp.eq.s32.totalorder %s18, 0
      %p88 = por %p86, %p87
      %p89 = scmp.ne.s32.totalorder %s75, %s76
      %p90 = scmp.eq.s32.totalorder %s19, 2
      %p91 = por %p89, %p90
      %p93 = scmp.ne.s32.totalorder %s76, %s92
      %p94 = scmp.eq.s32.totalorder %s19, 0
      %p95 = por %p93, %p94
      %s96 = ssub.s32 %s22, %s31
      %s97 = ssub.s32 %s21, %s35
      %s98 = sor.u32 %s96, %s97
      %p99 = scmp.eq.s32.totalorder %s98, 0
      %s101 = sadd.s32 %s100, 1
      %s102 = scalar_select %p99, %s100, %s101
      %p105 = pneg %p99
      %p106 = scmp.eq.s32.totalorder %s13, 2
      %p107 = por %p105, %p106
      %p108 = scmp.ne.s32.totalorder %s100, %s103
      %p109 = scmp.eq.s32.totalorder %s13, 0
      %p110 = por %p108, %p109
      %p111 = scmp.ne.s32.totalorder %s100, %s103
      %p112 = scmp.eq.s32.totalorder %s18, 2
      %p113 = por %p111, %p112
      %p114 = scmp.ne.s32.totalorder %s103, %s104
      %p115 = scmp.eq.s32.totalorder %s18, 0
      %p116 = por %p114, %p115
      %p117 = scmp.ne.s32.totalorder %s103, %s104
      %p118 = scmp.eq.s32.totalorder %s19, 2
      %p119 = por %p117, %p118
      %p121 = scmp.ne.s32.totalorder %s104, %s120
      %p122 = scmp.eq.s32.totalorder %s19, 0
      %p123 = por %p121, %p122
      %s124 = ssub.s32 %s22, %s31
      %s125 = ssub.s32 %s21, %s35
      %s126 = sor.u32 %s124, %s125
      %p127 = scmp.eq.s32.totalorder %s126, 0
      %s129 = sadd.s32 %s128, 1
      %s130 = scalar_select %p127, %s128, %s129
      %p133 = pneg %p127
      %p134 = scmp.eq.s32.totalorder %s13, 2
      %p135 = por %p133, %p134
      %p136 = scmp.ne.s32.totalorder %s128, %s131
      %p137 = scmp.eq.s32.totalorder %s13, 0
      %p138 = por %p136, %p137
      %p139 = scmp.ne.s32.totalorder %s128, %s131
      %p140 = scmp.eq.s32.totalorder %s18, 2
      %p141 = por %p139, %p140
      %p142 = scmp.ne.s32.totalorder %s131, %s132
      %p143 = scmp.eq.s32.totalorder %s18, 0
      %p144 = por %p142, %p143
      %p145 = scmp.ne.s32.totalorder %s131, %s132
      %p146 = scmp.eq.s32.totalorder %s19, 2
      %p147 = por %p145, %p146
      %p149 = scmp.ne.s32.totalorder %s132, %s148
      %p150 = scmp.eq.s32.totalorder %s19, 0
      %p151 = por %p149, %p150
      %s152 = ssub.s32 %s20, %s39
      %s153 = ssub.s32 %s21, %s35
      %s154 = sor.u32 %s152, %s153
      %p155 = scmp.eq.s32.totalorder %s154, 0
      %s157 = sadd.s32 %s156, 1
      %s158 = scalar_select %p155, %s156, %s157
      %p161 = pneg %p155
      %p162 = scmp.eq.s32.totalorder %s13, 2
      %p163 = por %p161, %p162
      %p164 = scmp.ne.s32.totalorder %s156, %s159
      %p165 = scmp.eq.s32.totalorder %s13, 0
      %p166 = por %p164, %p165
      %p167 = scmp.ne.s32.totalorder %s156, %s159
      %p168 = scmp.eq.s32.totalorder %s18, 2
      %p169 = por %p167, %p168
      %p170 = scmp.ne.s32.totalorder %s159, %s160
      %p171 = scmp.eq.s32.totalorder %s18, 0
      %p172 = por %p170, %p171
      %p173 = scmp.ne.s32.totalorder %s159, %s160
      %p174 = scmp.eq.s32.totalorder %s19, 2
      %p175 = por %p173, %p174
      %p177 = scmp.ne.s32.totalorder %s160, %s176
      %p178 = scmp.eq.s32.totalorder %s19, 0
      %p179 = por %p177, %p178
      %p180 = scmp.le.s32.totalorder 1, %s13
      %p181 = scmp.lt.s32.totalorder %s13, 4
      %p182 = pnand %p180, %p181
      %p183 = pneg %p182
      // Predicated region
      $region9: #{rwkv_forward.26} parent=5 // pred_check
        _
      $region10: #{rwkv_forward.26} parent=5 // pred_check_branch
        %185 = sbr.rel (%p182) target = $region12
      $region11: #{rwkv_forward.26} parent=5 // pred_region
        %s186 = ssub.s32 %s13, 1
        // Predicated region
        $region13: #{rwkv_forward.26} parent=11 // pred_check
          %p187 = pneg %p60
        $region14: #{rwkv_forward.26} parent=11 // pred_check_branch
          %189 = sbr.rel (%p187) target = $region16
        $region15: #{rwkv_forward.26} parent=11 // pred_region
          %s190 = smul.u32 2, %s23
          %p191 = scmp.lt.s32.totalorder %s190, 1
          %s192 = scalar_select %p191, %s190, 1
          %p193 = scmp.lt.s32.totalorder %s25, 0
          %s194 = scalar_select %p193, %s25, 0
          %s195 = sadd.s32 %s194, %s192
          %s196 = smul.addr %s195, 8
          %s197 = scalar_lea.vmem %s0, %s196
          %s198 = smul.u32 2, %s23
        $region16: #{rwkv_forward.26} parent=11 // pred_fallthru
          _
        // Predicated region
        $region17: #{rwkv_forward.26} parent=11 // pred_check
          %p199 = pneg %p88
        $region18: #{rwkv_forward.26} parent=11 // pred_check_branch
          %201 = sbr.rel (%p199) target = $region20
        $region19: #{rwkv_forward.26} parent=11 // pred_region
          %s202 = smul.u32 2, %s23
          %p203 = scmp.lt.s32.totalorder %s202, 1
          %s204 = scalar_select %p203, %s202, 1
          %p205 = scmp.lt.s32.totalorder %s25, 0
          %s206 = scalar_select %p205, %s25, 0
          %s207 = sadd.s32 %s206, %s204
          %s208 = smul.addr %s207, 8
          %s209 = scalar_lea.vmem %s1, %s208
          %s210 = smul.u32 2, %s23
        $region20: #{rwkv_forward.26} parent=11 // pred_fallthru
          _
      $region12: #{rwkv_forward.26} parent=5 // pred_fallthru
        _
      %p211 = scmp.lt.s32.totalorder %s13, 3
      // Predicated region
      $region21: #{rwkv_forward.26} parent=5 // pred_check
        %p212 = pneg %p211
      $region22: #{rwkv_forward.26} parent=5 // pred_check_branch
        %214 = sbr.rel (%p212) target = $region24
      $region23: #{rwkv_forward.26} parent=5 // pred_region
        // Predicated region
        $region25: #{rwkv_forward.26} parent=23 // pred_check
          %p215 = pneg %p110
        $region26: #{rwkv_forward.26} parent=23 // pred_check_branch
          %217 = sbr.rel (%p215) target = $region28
        $region27: #{rwkv_forward.26} parent=23 // pred_region
          %s218 = sand.u32 %s100, 1
          %s219 = sand.u32 %s100, 1
          %s220 = smul.addr %s219, 128
          %s221 = scalar_lea.vmem [#allocation3], %s220
          %s222 = smul.u32 16, %s22
          %s223 = smul.u32 2, %s21
          %s224 = smul.addr %s222, 6
          %s225 = sadd.s32 %s223, %s224
          %s226 = smul.addr %s225, 4
          %s227 = scalar_lea.vmem %s2, %s226
          // Predicated region
          $region29: #{rwkv_forward.26} parent=27 // pred_check
            _
          $region30: #{rwkv_forward.26} parent=27 // pred_check_branch
            %229 = sbr.rel (0) target = $region32
          $region31: #{rwkv_forward.26} parent=27 // pred_region
            // Predicated region
            $region33: #{rwkv_forward.26} parent=31 // pred_check
              _
            $region34: #{rwkv_forward.26} parent=31 // pred_check_branch
              %231 = sbr.rel (0) target = $region36
            $region35: #{rwkv_forward.26} parent=31 // pred_region
              // Predicated region
              $region48: #{rwkv_forward.26} parent=35 // pred_check
                _
              $region49: #{rwkv_forward.26} parent=35 // pred_check_branch
                %276 = sbr.rel (0) target = $region51
              $region50: #{rwkv_forward.26} parent=35 // pred_region
                loop: start=0, step=1, limit=1
                $region52: #{rwkv_forward.26} parent=50 // loop_pre_header
                  _
                $region53: #{rwkv_forward.26} parent=50 // loop_header
                  %s278 = sphi 0, %s282
                  %p279 = scmp.ge.s32.totalorder %s278, 1
                  %s283 = sphi %s227, %s227
                  %s284 = sphi %s221, %s221
                $region54: #{rwkv_forward.26} parent=50 // loop_header_branch
                  %281 = sbr.rel (%p279) target = $region58
                $region55: #{rwkv_forward.26} parent=50 // loop_body
                  %v285 = vld [vmem:[%s283] sm:$0xff]
                  %286 = vst [vmem:[%s284] sm:$0xff] %v285
                  %v287 = vld [vmem:[%s283 + $0x18] sm:$0xff]
                  %288 = vst [vmem:[%s284 + $0x8] sm:$0xff] %v287
                  %v289 = vld [vmem:[%s283 + $0x30] sm:$0xff]
                  %290 = vst [vmem:[%s284 + $0x10] sm:$0xff] %v289
                  %v291 = vld [vmem:[%s283 + $0x48] sm:$0xff]
                  %292 = vst [vmem:[%s284 + $0x18] sm:$0xff] %v291
                  %v293 = vld [vmem:[%s283 + $0x60] sm:$0xff]
                  %294 = vst [vmem:[%s284 + $0x20] sm:$0xff] %v293
                  %v295 = vld [vmem:[%s283 + $0x78] sm:$0xff]
                  %296 = vst [vmem:[%s284 + $0x28] sm:$0xff] %v295
                  %v297 = vld [vmem:[%s283 + $0x90] sm:$0xff]
                  %298 = vst [vmem:[%s284 + $0x30] sm:$0xff] %v297
                  %v299 = vld [vmem:[%s283 + $0xa8] sm:$0xff]
                  %300 = vst [vmem:[%s284 + $0x38] sm:$0xff] %v299
                  %v301 = vld [vmem:[%s283 + $0xc0] sm:$0xff]
                  %302 = vst [vmem:[%s284 + $0x40] sm:$0xff] %v301
                  %v303 = vld [vmem:[%s283 + $0xd8] sm:$0xff]
                  %304 = vst [vmem:[%s284 + $0x48] sm:$0xff] %v303
                  %v305 = vld [vmem:[%s283 + $0xf0] sm:$0xff]
                  %306 = vst [vmem:[%s284 + $0x50] sm:$0xff] %v305
                  %v307 = vld [vmem:[%s283 + $0x108] sm:$0xff]
                  %308 = vst [vmem:[%s284 + $0x58] sm:$0xff] %v307
                  %v309 = vld [vmem:[%s283 + $0x120] sm:$0xff]
                  %310 = vst [vmem:[%s284 + $0x60] sm:$0xff] %v309
                  %v311 = vld [vmem:[%s283 + $0x138] sm:$0xff]
                  %312 = vst [vmem:[%s284 + $0x68] sm:$0xff] %v311
                  %v313 = vld [vmem:[%s283 + $0x150] sm:$0xff]
                  %314 = vst [vmem:[%s284 + $0x70] sm:$0xff] %v313
                  %v315 = vld [vmem:[%s283 + $0x168] sm:$0xff]
                  %316 = vst [vmem:[%s284 + $0x78] sm:$0xff] %v315
                $region56: #{rwkv_forward.26} parent=50 // loop_footer
                  %s282 = sadd.s32 1, %s278
                $region57: #{rwkv_forward.26} parent=50 // loop_footer_branch
                  %277 = sbr.rel target = $region53
                $region58: #{rwkv_forward.26} parent=50 // loop_exit
                  _
              $region51: #{rwkv_forward.26} parent=35 // pred_fallthru
                _
              // Predicated region
              $region59: #{rwkv_forward.26} parent=35 // pred_check
                _
              $region60: #{rwkv_forward.26} parent=35 // pred_check_branch
                %318 = sbr.rel target = $region62
              $region61: #{rwkv_forward.26} parent=35 // pred_region
                _
              $region62: #{rwkv_forward.26} parent=35 // pred_fallthru
                _
            $region36: #{rwkv_forward.26} parent=31 // pred_fallthru
              _
            // Predicated region
            $region37: #{rwkv_forward.26} parent=31 // pred_check
              _
            $region38: #{rwkv_forward.26} parent=31 // pred_check_branch
              %233 = sbr.rel target = $region40
            $region39: #{rwkv_forward.26} parent=31 // pred_region
              loop: start=0, step=1, limit=1
              $region41: #{rwkv_forward.26} parent=39 // loop_pre_header
                _
              $region42: #{rwkv_forward.26} parent=39 // loop_header
                %s236 = sphi 0, %s240
                %p237 = scmp.ge.s32.totalorder %s236, 1
                %s241 = sphi %s227, %s227
                %s242 = sphi %s221, %s221
              $region43: #{rwkv_forward.26} parent=39 // loop_header_branch
                %239 = sbr.rel (%p237) target = $region47
              $region44: #{rwkv_forward.26} parent=39 // loop_body
                %v243 = vld [vmem:[%s241] sm:$0xff]
                %244 = vst [vmem:[%s242] sm:$0xff] %v243
                %v245 = vld [vmem:[%s241 + $0x18] sm:$0xff]
                %246 = vst [vmem:[%s242 + $0x8] sm:$0xff] %v245
                %v247 = vld [vmem:[%s241 + $0x30] sm:$0xff]
                %248 = vst [vmem:[%s242 + $0x10] sm:$0xff] %v247
                %v249 = vld [vmem:[%s241 + $0x48] sm:$0xff]
                %250 = vst [vmem:[%s242 + $0x18] sm:$0xff] %v249
                %v251 = vld [vmem:[%s241 + $0x60] sm:$0xff]
                %252 = vst [vmem:[%s242 + $0x20] sm:$0xff] %v251
                %v253 = vld [vmem:[%s241 + $0x78] sm:$0xff]
                %254 = vst [vmem:[%s242 + $0x28] sm:$0xff] %v253
                %v255 = vld [vmem:[%s241 + $0x90] sm:$0xff]
                %256 = vst [vmem:[%s242 + $0x30] sm:$0xff] %v255
                %v257 = vld [vmem:[%s241 + $0xa8] sm:$0xff]
                %258 = vst [vmem:[%s242 + $0x38] sm:$0xff] %v257
                %v259 = vld [vmem:[%s241 + $0xc0] sm:$0xff]
                %260 = vst [vmem:[%s242 + $0x40] sm:$0xff] %v259
                %v261 = vld [vmem:[%s241 + $0xd8] sm:$0xff]
                %262 = vst [vmem:[%s242 + $0x48] sm:$0xff] %v261
                %v263 = vld [vmem:[%s241 + $0xf0] sm:$0xff]
                %264 = vst [vmem:[%s242 + $0x50] sm:$0xff] %v263
                %v265 = vld [vmem:[%s241 + $0x108] sm:$0xff]
                %266 = vst [vmem:[%s242 + $0x58] sm:$0xff] %v265
                %v267 = vld [vmem:[%s241 + $0x120] sm:$0xff]
                %268 = vst [vmem:[%s242 + $0x60] sm:$0xff] %v267
                %v269 = vld [vmem:[%s241 + $0x138] sm:$0xff]
                %270 = vst [vmem:[%s242 + $0x68] sm:$0xff] %v269
                %v271 = vld [vmem:[%s241 + $0x150] sm:$0xff]
                %272 = vst [vmem:[%s242 + $0x70] sm:$0xff] %v271
                %v273 = vld [vmem:[%s241 + $0x168] sm:$0xff]
                %274 = vst [vmem:[%s242 + $0x78] sm:$0xff] %v273
              $region45: #{rwkv_forward.26} parent=39 // loop_footer
                %s240 = sadd.s32 1, %s236
              $region46: #{rwkv_forward.26} parent=39 // loop_footer_branch
                %235 = sbr.rel target = $region42
              $region47: #{rwkv_forward.26} parent=39 // loop_exit
                _
            $region40: #{rwkv_forward.26} parent=31 // pred_fallthru
              _
          $region32: #{rwkv_forward.26} parent=27 // pred_fallthru
            _
          %319 = vnop
        $region28: #{rwkv_forward.26} parent=23 // pred_fallthru
          _
        // Predicated region
        $region63: #{rwkv_forward.26} parent=23 // pred_check
          %p320 = pneg %p138
        $region64: #{rwkv_forward.26} parent=23 // pred_check_branch
          %322 = sbr.rel (%p320) target = $region66
        $region65: #{rwkv_forward.26} parent=23 // pred_region
          %s323 = sand.u32 %s128, 1
          %s324 = scalar_lea.sflag [#allocation5], %s323
          %s325 = sand.u32 %s128, 1
          %s326 = smul.addr %s325, 128
          %s327 = scalar_lea.vmem [#allocation4], %s326
          %s328 = smul.u32 16, %s22
          %s329 = smul.u32 2, %s21
          %s331 = ssub.s32 2048, 2048
          %332 = vsyncadd %s324, %s331
          %s333 = smul.addr %s328, 6
          %s334 = sadd.s32 %s329, %s333
          %s335 = smul.addr %s334, 64
          %s336 = scalar_lea.hbm %s3, %s335
          %s337 = sshll.u32 %s327, 4
          %s338 = int_to_ptr.vmem [resolvable:$true] %s337
          %343 = dma.hbm_to_vmem [thread:$0]  %s336, 2048, %s338, %s324, 384, 128, 8
        $region66: #{rwkv_forward.26} parent=23 // pred_fallthru
          _
      $region24: #{rwkv_forward.26} parent=5 // pred_fallthru
        _
      %p344 = scmp.le.s32.totalorder 1, %s13
      %p345 = scmp.lt.s32.totalorder %s13, 4
      %p346 = pnand %p344, %p345
      %p347 = pneg %p346
      // Predicated region
      $region67: #{rwkv_forward.26} parent=5 // pred_check
        _
      $region68: #{rwkv_forward.26} parent=5 // pred_check_branch
        %349 = sbr.rel (%p346) target = $region70
      $region69: #{rwkv_forward.26} parent=5 // pred_region
        %s350 = ssub.s32 %s13, 1
        %s351 = sand.u32 %s103, 1
        %s352 = sand.u32 %s103, 1
        %s353 = smul.addr %s352, 128
        %s354 = scalar_lea.vmem [#allocation3], %s353
        // Predicated region
        $region71: #{rwkv_forward.26} parent=69 // pred_check
          %p355 = pneg %p116
        $region72: #{rwkv_forward.26} parent=69 // pred_check_branch
          %357 = sbr.rel (%p355) target = $region74
        $region73: #{rwkv_forward.26} parent=69 // pred_region
          _
        $region74: #{rwkv_forward.26} parent=69 // pred_fallthru
          _
        %s358 = sand.u32 %s131, 1
        %s359 = scalar_lea.sflag [#allocation5], %s358
        %s360 = sand.u32 %s131, 1
        %s361 = smul.addr %s360, 128
        %s362 = scalar_lea.vmem [#allocation4], %s361
        // Predicated region
        $region75: #{rwkv_forward.26} parent=69 // pred_check
          %p363 = pneg %p144
        $region76: #{rwkv_forward.26} parent=69 // pred_check_branch
          %365 = sbr.rel (%p363) target = $region78
        $region77: #{rwkv_forward.26} parent=69 // pred_region
          %366 = dma.done %s359, 2048
        $region78: #{rwkv_forward.26} parent=69 // pred_fallthru
          _
        %s367 = smul.u32 2, %s23
        %p368 = scmp.lt.s32.totalorder %s367, 1
        %s369 = scalar_select %p368, %s367, 1
        %p370 = scmp.lt.s32.totalorder %s25, 0
        %s371 = scalar_select %p370, %s25, 0
        %s372 = sadd.s32 %s371, %s369
        %s373 = smul.addr %s372, 8
        %s374 = scalar_lea.vmem %s0, %s373
        %p375 = pneg %p60
        %p376 = pneg %p57
        %s377 = smul.u32 2, %s23
        %p378 = scmp.lt.s32.totalorder %s377, 1
        %s379 = scalar_select %p378, %s377, 1
        %p380 = scmp.lt.s32.totalorder %s25, 0
        %s381 = scalar_select %p380, %s25, 0
        %s382 = sadd.s32 %s381, %s379
        %s383 = smul.addr %s382, 8
        %s384 = scalar_lea.vmem %s1, %s383
        %p385 = pneg %p88
        %p386 = pneg %p85
        %s387 = sand.u32 %s103, 1
        %s388 = sand.u32 %s103, 1
        %s389 = smul.addr %s388, 128
        %s390 = scalar_lea.vmem [#allocation3], %s389
        %p391 = pneg %p116
        %p392 = pneg %p113
        %s393 = sand.u32 %s131, 1
        %s394 = scalar_lea.sflag [#allocation5], %s393
        %s395 = sand.u32 %s131, 1
        %s396 = smul.addr %s395, 128
        %s397 = scalar_lea.vmem [#allocation4], %s396
        %p398 = pneg %p144
        %p399 = pneg %p141
        %p400 = pneg %p172
        %p401 = pneg %p169
        %s402 = sand.u32 %s159, 1
        %s403 = sand.u32 %s159, 1
        %s404 = smul.addr %s403, 32
        %s405 = scalar_lea.vmem [#allocation6], %s404
        %s406 = smul.u32 2, %s23
        %p407 = scmp.lt.s32.totalorder %s406, 1
        %s408 = scalar_select %p407, %s406, 1
        %p409 = scmp.lt.s32.totalorder %s25, 0
        %s410 = scalar_select %p409, %s25, 0
        %s411 = sadd.s32 %s410, %s408
        %s412 = smul.addr %s411, 8
        %s413 = scalar_lea.vmem %s0, %s412
        %s414 = smul.u32 2, %s23
        %s415 = smul.u32 2, %s23
        %p416 = scmp.lt.s32.totalorder %s415, 1
        %s417 = scalar_select %p416, %s415, 1
        %p418 = scmp.lt.s32.totalorder %s25, 0
        %s419 = scalar_select %p418, %s25, 0
        %s420 = sadd.s32 %s419, %s417
        %s421 = smul.addr %s420, 8
        %s422 = scalar_lea.vmem %s1, %s421
        %s423 = smul.u32 2, %s23
        %s424 = smul.u32 16, %s25
        %s425 = smul.u32 2, %s24
        %s426 = smul.u32 16, %s25
        %s427 = smul.u32 2, %s24
        %s428 = smul.u32 2, %s23
        %s429 = smul.u32 2, %s24
        %p431 = scmp.eq.s32.totalorder %s25, 0
        // Predicated region
        $region79: #{rwkv_forward.26} parent=69 // pred_check
          %p432 = pneg %p431
        $region80: #{rwkv_forward.26} parent=69 // pred_check_branch
          %434 = sbr.rel (%p432) target = $region82
        $region81: #{rwkv_forward.26} parent=69 // pred_region
          %435 = vst [vmem:[#allocation2] sm:$0xff] 0.0
          %436 = vst [vmem:[#allocation2 + $0x8] sm:$0xff] 0.0
          %437 = vst [vmem:[#allocation2 + $0x10] sm:$0xff] 0.0
          %438 = vst [vmem:[#allocation2 + $0x18] sm:$0xff] 0.0
        $region82: #{rwkv_forward.26} parent=69 // pred_fallthru
          _
        %v439 = vld [vmem:[#allocation2] sm:$0xff]
        %v440 = vld [vmem:[#allocation2 + $0x8] sm:$0xff]
        %v441 = vld [vmem:[#allocation2 + $0x10] sm:$0xff]
        %v442 = vld [vmem:[#allocation2 + $0x18] sm:$0xff]
        %v443 = vld [vmem:[%s413] sm:$0xff]
        %v444 = vld [vmem:[%s413 + $0x8] sm:$0xff]
        %v445 = vpack.c.bf16 %v444, %v443
        %v446 = vld [vmem:[%s354] sm:$0xff]
        %v447 = vld [vmem:[%s354 + $0x8] sm:$0xff]
        %v448 = vld [vmem:[%s354 + $0x10] sm:$0xff]
        %v449 = vld [vmem:[%s354 + $0x18] sm:$0xff]
        %v450 = vld [vmem:[%s354 + $0x20] sm:$0xff]
        %v451 = vld [vmem:[%s354 + $0x28] sm:$0xff]
        %v452 = vld [vmem:[%s354 + $0x30] sm:$0xff]
        %v453 = vld [vmem:[%s354 + $0x38] sm:$0xff]
        %v454 = vld [vmem:[%s354 + $0x40] sm:$0xff]
        %v455 = vld [vmem:[%s354 + $0x48] sm:$0xff]
        %v456 = vld [vmem:[%s354 + $0x50] sm:$0xff]
        %v457 = vld [vmem:[%s354 + $0x58] sm:$0xff]
        %v458 = vld [vmem:[%s354 + $0x60] sm:$0xff]
        %v459 = vld [vmem:[%s354 + $0x68] sm:$0xff]
        %v460 = vld [vmem:[%s354 + $0x70] sm:$0xff]
        %v461 = vld [vmem:[%s354 + $0x78] sm:$0xff]
        %v478 = vunpack.c.l.b16 %v446
        %v479 = vunpack.c.h.b16 %v446
        %v480 = vunpack.c.l.b16 %v447
        %v481 = vunpack.c.h.b16 %v447
        %v482 = vunpack.c.l.b16 %v448
        %v483 = vunpack.c.h.b16 %v448
        %v484 = vunpack.c.l.b16 %v449
        %v485 = vunpack.c.h.b16 %v449
        %v486 = vunpack.c.l.b16 %v450
        %v487 = vunpack.c.h.b16 %v450
        %v488 = vunpack.c.l.b16 %v451
        %v489 = vunpack.c.h.b16 %v451
        %v490 = vunpack.c.l.b16 %v452
        %v491 = vunpack.c.h.b16 %v452
        %v492 = vunpack.c.l.b16 %v453
        %v493 = vunpack.c.h.b16 %v453
        %v494 = vunpack.c.l.b16 %v454
        %v495 = vunpack.c.h.b16 %v454
        %v496 = vunpack.c.l.b16 %v455
        %v497 = vunpack.c.h.b16 %v455
        %v498 = vunpack.c.l.b16 %v456
        %v499 = vunpack.c.h.b16 %v456
        %v500 = vunpack.c.l.b16 %v457
        %v501 = vunpack.c.h.b16 %v457
        %v502 = vunpack.c.l.b16 %v458
        %v503 = vunpack.c.h.b16 %v458
        %v504 = vunpack.c.l.b16 %v459
        %v505 = vunpack.c.h.b16 %v459
        %v506 = vunpack.c.l.b16 %v460
        %v507 = vunpack.c.h.b16 %v460
        %v508 = vunpack.c.l.b16 %v461
        %v509 = vunpack.c.h.b16 %v461
        %v510 = vpack.c.b16 %v480, %v478
        %v511 = vpack.c.b16 %v481, %v479
        %v512 = vpack.c.b16 %v484, %v482
        %v513 = vpack.c.b16 %v485, %v483
        %v514 = vpack.c.b16 %v488, %v486
        %v515 = vpack.c.b16 %v489, %v487
        %v516 = vpack.c.b16 %v492, %v490
        %v517 = vpack.c.b16 %v493, %v491
        %v518 = vpack.c.b16 %v496, %v494
        %v519 = vpack.c.b16 %v497, %v495
        %v520 = vpack.c.b16 %v500, %v498
        %v521 = vpack.c.b16 %v501, %v499
        %v522 = vpack.c.b16 %v504, %v502
        %v523 = vpack.c.b16 %v505, %v503
        %v524 = vpack.c.b16 %v508, %v506
        %v525 = vpack.c.b16 %v509, %v507
        %542 = vmatprep.subr.bf16.mxu0 %v511
        %543 = vmatpush1.bf16.msra.mxu0 %v510
        %544 = vmatprep.subr.bf16.mxu0 %v513
        %545 = vmatpush1.bf16.msra.mxu0 %v512
        %546 = vmatprep.subr.bf16.mxu0 %v515
        %547 = vmatpush1.bf16.msra.mxu0 %v514
        %548 = vmatprep.subr.bf16.mxu0 %v517
        %549 = vmatpush1.bf16.msra.mxu0 %v516
        %550 = vmatprep.subr.bf16.mxu0 %v519
        %551 = vmatpush1.bf16.msra.mxu0 %v518
        %552 = vmatprep.subr.bf16.mxu0 %v521
        %553 = vmatpush1.bf16.msra.mxu0 %v520
        %554 = vmatprep.subr.bf16.mxu0 %v523
        %555 = vmatpush1.bf16.msra.mxu0 %v522
        %556 = vmatprep.subr.bf16.mxu0 %v525
        %557 = vmatpush1.bf16.msra.mxu0 %v524
        %558 = vmatprep.subr.bf16.mxu0 0
        %559 = vmatpush1.bf16.msra.mxu0 0
        %560 = vmatprep.subr.bf16.mxu0 0
        %561 = vmatpush1.bf16.msra.mxu0 0
        %562 = vmatprep.subr.bf16.mxu0 0
        %563 = vmatpush1.bf16.msra.mxu0 0
        %564 = vmatprep.subr.bf16.mxu0 0
        %565 = vmatpush1.bf16.msra.mxu0 0
        %566 = vmatprep.subr.bf16.mxu0 0
        %567 = vmatpush1.bf16.msra.mxu0 0
        %568 = vmatprep.subr.bf16.mxu0 0
        %569 = vmatpush1.bf16.msra.mxu0 0
        %570 = vmatprep.subr.bf16.mxu0 0
        %571 = vmatpush1.bf16.msra.mxu0 0
        %572 = vmatprep.subr.bf16.mxu0 0
        %573 = vmatpush1.bf16.msra.mxu0 0
        %574 = vmatprep.mubr.bf16.mxu0 0
        %575 = vmatmul.mubr.bf16.gmra.mrb[0].mxu0 %v445
        %v576 = vpop.f32.mrb[0].mxu0
        %v577 = vadd.f32 0.0, %v576
        %v578 = vpop.f32.mrb[0].mxu0
        %v579 = vadd.f32 0.0, %v578
        %v580 = vpop.f32.mrb[0].mxu0
        %v581 = vadd.f32 0.0, %v580
        %v582 = vpop.f32.mrb[0].mxu0
        %v583 = vadd.f32 0.0, %v582
        %584 = vdwg.mxu0
        %v585 = vadd.f32 %v439, %v577
        %v586 = vadd.f32 %v440, %v579
        %v587 = vadd.f32 %v441, %v581
        %v588 = vadd.f32 %v442, %v583
        %589 = vst [vmem:[#allocation2] sm:$0xff] %v585
        %590 = vst [vmem:[#allocation2 + $0x8] sm:$0xff] %v586
        %591 = vst [vmem:[#allocation2 + $0x10] sm:$0xff] %v587
        %592 = vst [vmem:[#allocation2 + $0x18] sm:$0xff] %v588
        %v593 = vld [vmem:[#allocation2] sm:$0xff]
        %v594 = vld [vmem:[#allocation2 + $0x8] sm:$0xff]
        %v595 = vld [vmem:[#allocation2 + $0x10] sm:$0xff]
        %v596 = vld [vmem:[#allocation2 + $0x18] sm:$0xff]
        %v597 = vld [vmem:[%s422] sm:$0xff]
        %v598 = vld [vmem:[%s422 + $0x8] sm:$0xff]
        %v599 = vpack.c.bf16 %v598, %v597
        %v600 = vld [vmem:[%s362] sm:$0xff]
        %v601 = vld [vmem:[%s362 + $0x8] sm:$0xff]
        %v602 = vld [vmem:[%s362 + $0x10] sm:$0xff]
        %v603 = vld [vmem:[%s362 + $0x18] sm:$0xff]
        %v604 = vld [vmem:[%s362 + $0x20] sm:$0xff]
        %v605 = vld [vmem:[%s362 + $0x28] sm:$0xff]
        %v606 = vld [vmem:[%s362 + $0x30] sm:$0xff]
        %v607 = vld [vmem:[%s362 + $0x38] sm:$0xff]
        %v608 = vld [vmem:[%s362 + $0x40] sm:$0xff]
        %v609 = vld [vmem:[%s362 + $0x48] sm:$0xff]
        %v610 = vld [vmem:[%s362 + $0x50] sm:$0xff]
        %v611 = vld [vmem:[%s362 + $0x58] sm:$0xff]
        %v612 = vld [vmem:[%s362 + $0x60] sm:$0xff]
        %v613 = vld [vmem:[%s362 + $0x68] sm:$0xff]
        %v614 = vld [vmem:[%s362 + $0x70] sm:$0xff]
        %v615 = vld [vmem:[%s362 + $0x78] sm:$0xff]
        %v632 = vunpack.c.l.b16 %v600
        %v633 = vunpack.c.h.b16 %v600
        %v634 = vunpack.c.l.b16 %v601
        %v635 = vunpack.c.h.b16 %v601
        %v636 = vunpack.c.l.b16 %v602
        %v637 = vunpack.c.h.b16 %v602
        %v638 = vunpack.c.l.b16 %v603
        %v639 = vunpack.c.h.b16 %v603
        %v640 = vunpack.c.l.b16 %v604
        %v641 = vunpack.c.h.b16 %v604
        %v642 = vunpack.c.l.b16 %v605
        %v643 = vunpack.c.h.b16 %v605
        %v644 = vunpack.c.l.b16 %v606
        %v645 = vunpack.c.h.b16 %v606
        %v646 = vunpack.c.l.b16 %v607
        %v647 = vunpack.c.h.b16 %v607
        %v648 = vunpack.c.l.b16 %v608
        %v649 = vunpack.c.h.b16 %v608
        %v650 = vunpack.c.l.b16 %v609
        %v651 = vunpack.c.h.b16 %v609
        %v652 = vunpack.c.l.b16 %v610
        %v653 = vunpack.c.h.b16 %v610
        %v654 = vunpack.c.l.b16 %v611
        %v655 = vunpack.c.h.b16 %v611
        %v656 = vunpack.c.l.b16 %v612
        %v657 = vunpack.c.h.b16 %v612
        %v658 = vunpack.c.l.b16 %v613
        %v659 = vunpack.c.h.b16 %v613
        %v660 = vunpack.c.l.b16 %v614
        %v661 = vunpack.c.h.b16 %v614
        %v662 = vunpack.c.l.b16 %v615
        %v663 = vunpack.c.h.b16 %v615
        %v664 = vpack.c.b16 %v634, %v632
        %v665 = vpack.c.b16 %v635, %v633
        %v666 = vpack.c.b16 %v638, %v636
        %v667 = vpack.c.b16 %v639, %v637
        %v668 = vpack.c.b16 %v642, %v640
        %v669 = vpack.c.b16 %v643, %v641
        %v670 = vpack.c.b16 %v646, %v644
        %v671 = vpack.c.b16 %v647, %v645
        %v672 = vpack.c.b16 %v650, %v648
        %v673 = vpack.c.b16 %v651, %v649
        %v674 = vpack.c.b16 %v654, %v652
        %v675 = vpack.c.b16 %v655, %v653
        %v676 = vpack.c.b16 %v658, %v656
        %v677 = vpack.c.b16 %v659, %v657
        %v678 = vpack.c.b16 %v662, %v660
        %v679 = vpack.c.b16 %v663, %v661
        %696 = vmatprep.subr.bf16.mxu0 %v665
        %697 = vmatpush1.bf16.msra.mxu0 %v664
        %698 = vmatprep.subr.bf16.mxu0 %v667
        %699 = vmatpush1.bf16.msra.mxu0 %v666
        %700 = vmatprep.subr.bf16.mxu0 %v669
        %701 = vmatpush1.bf16.msra.mxu0 %v668
        %702 = vmatprep.subr.bf16.mxu0 %v671
        %703 = vmatpush1.bf16.msra.mxu0 %v670
        %704 = vmatprep.subr.bf16.mxu0 %v673
        %705 = vmatpush1.bf16.msra.mxu0 %v672
        %706 = vmatprep.subr.bf16.mxu0 %v675
        %707 = vmatpush1.bf16.msra.mxu0 %v674
        %708 = vmatprep.subr.bf16.mxu0 %v677
        %709 = vmatpush1.bf16.msra.mxu0 %v676
        %710 = vmatprep.subr.bf16.mxu0 %v679
        %711 = vmatpush1.bf16.msra.mxu0 %v678
        %712 = vmatprep.subr.bf16.mxu0 0
        %713 = vmatpush1.bf16.msra.mxu0 0
        %714 = vmatprep.subr.bf16.mxu0 0
        %715 = vmatpush1.bf16.msra.mxu0 0
        %716 = vmatprep.subr.bf16.mxu0 0
        %717 = vmatpush1.bf16.msra.mxu0 0
        %718 = vmatprep.subr.bf16.mxu0 0
        %719 = vmatpush1.bf16.msra.mxu0 0
        %720 = vmatprep.subr.bf16.mxu0 0
        %721 = vmatpush1.bf16.msra.mxu0 0
        %722 = vmatprep.subr.bf16.mxu0 0
        %723 = vmatpush1.bf16.msra.mxu0 0
        %724 = vmatprep.subr.bf16.mxu0 0
        %725 = vmatpush1.bf16.msra.mxu0 0
        %726 = vmatprep.subr.bf16.mxu0 0
        %727 = vmatpush1.bf16.msra.mxu0 0
        %728 = vmatprep.mubr.bf16.mxu0 0
        %729 = vmatmul.mubr.bf16.gmra.mrb[0].mxu0 %v599
        %v730 = vpop.f32.mrb[0].mxu0
        %v731 = vadd.f32 0.0, %v730
        %v732 = vpop.f32.mrb[0].mxu0
        %v733 = vadd.f32 0.0, %v732
        %v734 = vpop.f32.mrb[0].mxu0
        %v735 = vadd.f32 0.0, %v734
        %v736 = vpop.f32.mrb[0].mxu0
        %v737 = vadd.f32 0.0, %v736
        %738 = vdwg.mxu0
        %v739 = vadd.f32 %v593, %v731
        %v740 = vadd.f32 %v594, %v733
        %v741 = vadd.f32 %v595, %v735
        %v742 = vadd.f32 %v596, %v737
        %743 = vst [vmem:[#allocation2] sm:$0xff] %v739
        %744 = vst [vmem:[#allocation2 + $0x8] sm:$0xff] %v740
        %745 = vst [vmem:[#allocation2 + $0x10] sm:$0xff] %v741
        %746 = vst [vmem:[#allocation2 + $0x18] sm:$0xff] %v742
        // Predicated region
        $region83: #{rwkv_forward.26} parent=69 // pred_check
          %p747 = pneg %p431
        $region84: #{rwkv_forward.26} parent=69 // pred_check_branch
          %749 = sbr.rel (%p747) target = $region86
        $region85: #{rwkv_forward.26} parent=69 // pred_region
          %v750 = vld [vmem:[#allocation2] sm:$0xff]
          %v751 = vld [vmem:[#allocation2 + $0x8] sm:$0xff]
          %v752 = vld [vmem:[#allocation2 + $0x10] sm:$0xff]
          %v753 = vld [vmem:[#allocation2 + $0x18] sm:$0xff]
          %754 = vst [vmem:[%s405] sm:$0xff] %v750
          %755 = vst [vmem:[%s405 + $0x8] sm:$0xff] %v751
          %756 = vst [vmem:[%s405 + $0x10] sm:$0xff] %v752
          %757 = vst [vmem:[%s405 + $0x18] sm:$0xff] %v753
        $region86: #{rwkv_forward.26} parent=69 // pred_fallthru
          _
        %s758 = sand.u32 %s159, 1
        %s759 = sand.u32 %s159, 1
        %s760 = smul.addr %s759, 32
        %s761 = scalar_lea.vmem [#allocation6], %s760
        // Predicated region
        $region87: #{rwkv_forward.26} parent=69 // pred_check
          %p762 = pneg %p169
        $region88: #{rwkv_forward.26} parent=69 // pred_check_branch
          %764 = sbr.rel (%p762) target = $region90
        $region89: #{rwkv_forward.26} parent=69 // pred_region
          %s765 = smul.u32 2, %s23
          %s766 = smul.u32 2, %s24
          %s767 = smul.addr %s765, 6
          %s768 = sadd.s32 %s766, %s767
          %s769 = smul.addr %s768, 8
          %s770 = scalar_lea.vmem %s4, %s769
          // Predicated region
          $region91: #{rwkv_forward.26} parent=89 // pred_check
            _
          $region92: #{rwkv_forward.26} parent=89 // pred_check_branch
            %772 = sbr.rel (0) target = $region94
          $region93: #{rwkv_forward.26} parent=89 // pred_region
            // Predicated region
            $region95: #{rwkv_forward.26} parent=93 // pred_check
              _
            $region96: #{rwkv_forward.26} parent=93 // pred_check_branch
              %774 = sbr.rel (0) target = $region98
            $region97: #{rwkv_forward.26} parent=93 // pred_region
              loop: start=0, step=1, limit=1
              $region99: #{rwkv_forward.26} parent=97 // loop_pre_header
                _
              $region100: #{rwkv_forward.26} parent=97 // loop_header
                %s776 = sphi 0, %s780
                %p777 = scmp.ge.s32.totalorder %s776, 1
                %s781 = sphi %s761, %s761
                %s782 = sphi %s770, %s770
              $region101: #{rwkv_forward.26} parent=97 // loop_header_branch
                %779 = sbr.rel (%p777) target = $region105
              $region102: #{rwkv_forward.26} parent=97 // loop_body
                %v783 = vld [vmem:[%s781] sm:$0xff]
                %784 = vst [vmem:[%s782] sm:$0xff] %v783
                %v785 = vld [vmem:[%s781 + $0x8] sm:$0xff]
                %786 = vst [vmem:[%s782 + $0x8] sm:$0xff] %v785
                %v787 = vld [vmem:[%s781 + $0x10] sm:$0xff]
                %788 = vst [vmem:[%s782 + $0x30] sm:$0xff] %v787
                %v789 = vld [vmem:[%s781 + $0x18] sm:$0xff]
                %790 = vst [vmem:[%s782 + $0x38] sm:$0xff] %v789
              $region103: #{rwkv_forward.26} parent=97 // loop_footer
                %s780 = sadd.s32 1, %s776
              $region104: #{rwkv_forward.26} parent=97 // loop_footer_branch
                %775 = sbr.rel target = $region100
              $region105: #{rwkv_forward.26} parent=97 // loop_exit
                _
            $region98: #{rwkv_forward.26} parent=93 // pred_fallthru
              _
            // Predicated region
            $region106: #{rwkv_forward.26} parent=93 // pred_check
              _
            $region107: #{rwkv_forward.26} parent=93 // pred_check_branch
              %792 = sbr.rel target = $region109
            $region108: #{rwkv_forward.26} parent=93 // pred_region
              _
            $region109: #{rwkv_forward.26} parent=93 // pred_fallthru
              _
          $region94: #{rwkv_forward.26} parent=89 // pred_fallthru
            _
          %793 = vnop
        $region90: #{rwkv_forward.26} parent=69 // pred_fallthru
          _
      $region70: #{rwkv_forward.26} parent=5 // pred_fallthru
        _
      %p794 = scmp.le.s32.totalorder 2, %s13
      // Predicated region
      $region110: #{rwkv_forward.26} parent=5 // pred_check
        %p795 = pneg %p794
      $region111: #{rwkv_forward.26} parent=5 // pred_check_branch
        %797 = sbr.rel (%p795) target = $region113
      $region112: #{rwkv_forward.26} parent=5 // pred_region
        %s798 = ssub.s32 %s13, 2
        // Predicated region
        $region114: #{rwkv_forward.26} parent=112 // pred_check
          %p799 = pneg %p175
        $region115: #{rwkv_forward.26} parent=112 // pred_check_branch
          %801 = sbr.rel (%p799) target = $region117
        $region116: #{rwkv_forward.26} parent=112 // pred_region
          %s802 = sand.u32 %s160, 1
          %s803 = sand.u32 %s160, 1
          %s804 = smul.addr %s803, 32
          %s805 = scalar_lea.vmem [#allocation6], %s804
        $region117: #{rwkv_forward.26} parent=112 // pred_fallthru
          _
      $region113: #{rwkv_forward.26} parent=5 // pred_fallthru
        _
    $region6: #{rwkv_forward.26} parent=1 // loop_footer
      %s17 = sadd.s32 1, %s13
    $region7: #{rwkv_forward.26} parent=1 // loop_footer_branch
      %12 = sbr.rel target = $region3
    $region8: #{rwkv_forward.26} parent=1 // loop_exit
      _
    %806 = vsyncpa [#allocation5], 1
    %s807 = scalar_lea.sflag [#allocation5], 1
    %808 = vsyncpa %s807, 1

// kernel: rwkv_forward.29
$region0: #{rwkv_forward.29}
  #allocation0 [shape = 'u32[]', space=smem, size = 0x4, offset = 0x4, fixed_abs, tag = 'smem constant byte address 0x4 - core index']
  #allocation1 [shape = 'u32[144,128]{1,0:T(1,128)}', space=vmem, size = 0x12000, scoped, tag = 'internal scratch']
  #allocation2 [shape = 'f32[16,128]{1,0:T(8,128)}', space=vmem, size = 0x2000, scoped, tag = 'scratch operand']
  %s0 = inlined_call_operand.vmem [shape: f32[16,128], index: 0, kind: input, shape index: {}]
  %s1 = inlined_call_operand.vmem [shape: bf16[128,128], index: 1, kind: input, shape index: {}]
  %s2 = inlined_call_operand.vmem [shape: f32[16,128], index: 2, kind: output, shape index: {}]
  %s3 = sld [smem:[#allocation0]]
  $region26: #{rwkv_forward.29} parent=0
    _
  %s5 = ssub.s32 1, %s3
  %s6 = scalar_select 0, %s5, %s3
  // Predicated region
  $region2: #{rwkv_forward.29} parent=0 // pred_check
    _
  $region3: #{rwkv_forward.29} parent=0 // pred_check_branch
    %8 = sbr.rel (0) target = $region5
  $region4: #{rwkv_forward.29} parent=0 // pred_region
    _
  $region5: #{rwkv_forward.29} parent=0 // pred_fallthru
    _
  // Predicated region
  $region6: #{rwkv_forward.29} parent=0 // pred_check
    _
  $region7: #{rwkv_forward.29} parent=0 // pred_check_branch
    %10 = sbr.rel (0) target = $region9
  $region8: #{rwkv_forward.29} parent=0 // pred_region
    _
  $region9: #{rwkv_forward.29} parent=0 // pred_fallthru
    _
  %p12 = scmp.eq.s32.totalorder 0, 0
  // Predicated region
  $region10: #{rwkv_forward.29} parent=0 // pred_check
    %p13 = pneg %p12
  $region11: #{rwkv_forward.29} parent=0 // pred_check_branch
    %15 = sbr.rel (%p13) target = $region13
  $region12: #{rwkv_forward.29} parent=0 // pred_region
    %16 = vst [vmem:[#allocation2] sm:$0xff] 0.0
    %17 = vst [vmem:[#allocation2 + $0x8] sm:$0xff] 0.0
  $region13: #{rwkv_forward.29} parent=0 // pred_fallthru
    _
  %v18 = vld [vmem:[%s0] sm:$0xff]
  %v19 = vld [vmem:[%s0 + $0x8] sm:$0xff]
  %v20 = vsub.f32 0.0, %v18
  %v21 = vsub.f32 0.0, %v19
  %v22 = vmul.f32 %v20, 1.442695
  %v23 = vpow.pop %v22
  %v24 = vmul.f32 %v21, 1.442695
  %v25 = vpow.pop %v24
  %v26 = vadd.f32 %v23, 1.0
  %v27 = vadd.f32 %v25, 1.0
  %v28 = vrcp.pop %v26
  %v29 = vmul.f32 1.0, %v28
  %v30 = vrcp.pop %v27
  %v31 = vmul.f32 1.0, %v30
  %v32 = vpack.c.bf16 %v31, %v29
  %v33 = vld [vmem:[#allocation2] sm:$0xff]
  %v34 = vld [vmem:[#allocation2 + $0x8] sm:$0xff]
  %v35 = vld [vmem:[%s1] sm:$0xf]
  %v36 = vld [vmem:[%s1 + $0x4] sm:$0xf]
  %v37 = vld [vmem:[%s1 + $0x8] sm:$0xf]
  %v38 = vld [vmem:[%s1 + $0xc] sm:$0xf]
  %v39 = vld [vmem:[%s1 + $0x10] sm:$0xf]
  %v40 = vld [vmem:[%s1 + $0x14] sm:$0xf]
  %v41 = vld [vmem:[%s1 + $0x18] sm:$0xf]
  %v42 = vld [vmem:[%s1 + $0x1c] sm:$0xf]
  %v43 = vld [vmem:[%s1 + $0x20] sm:$0xf]
  %v44 = vld [vmem:[%s1 + $0x24] sm:$0xf]
  %v45 = vld [vmem:[%s1 + $0x28] sm:$0xf]
  %v46 = vld [vmem:[%s1 + $0x2c] sm:$0xf]
  %v47 = vld [vmem:[%s1 + $0x30] sm:$0xf]
  %v48 = vld [vmem:[%s1 + $0x34] sm:$0xf]
  %v49 = vld [vmem:[%s1 + $0x38] sm:$0xf]
  %v50 = vld [vmem:[%s1 + $0x3c] sm:$0xf]
  %v67 = vunpack.c.l.b16 %v35
  %v68 = vunpack.c.l.b16 %v36
  %v69 = vunpack.c.l.b16 %v37
  %v70 = vunpack.c.l.b16 %v38
  %v71 = vunpack.c.l.b16 %v39
  %v72 = vunpack.c.l.b16 %v40
  %v73 = vunpack.c.l.b16 %v41
  %v74 = vunpack.c.l.b16 %v42
  %v75 = vunpack.c.l.b16 %v43
  %v76 = vunpack.c.l.b16 %v44
  %v77 = vunpack.c.l.b16 %v45
  %v78 = vunpack.c.l.b16 %v46
  %v79 = vunpack.c.l.b16 %v47
  %v80 = vunpack.c.l.b16 %v48
  %v81 = vunpack.c.l.b16 %v49
  %v82 = vunpack.c.l.b16 %v50
  %v83 = vpack.c.b16 %v68, %v67
  %v84 = vpack.c.b16 %v70, %v69
  %v85 = vpack.c.b16 %v72, %v71
  %v86 = vpack.c.b16 %v74, %v73
  %v87 = vpack.c.b16 %v76, %v75
  %v88 = vpack.c.b16 %v78, %v77
  %v89 = vpack.c.b16 %v80, %v79
  %v90 = vpack.c.b16 %v82, %v81
  %99 = vmatprep.subr.bf16.mxu0 0
  %100 = vmatpush1.bf16.msra.mxu0 %v83
  %101 = vmatprep.subr.bf16.mxu0 0
  %102 = vmatpush1.bf16.msra.mxu0 %v84
  %103 = vmatprep.subr.bf16.mxu0 0
  %104 = vmatpush1.bf16.msra.mxu0 %v85
  %105 = vmatprep.subr.bf16.mxu0 0
  %106 = vmatpush1.bf16.msra.mxu0 %v86
  %107 = vmatprep.subr.bf16.mxu0 0
  %108 = vmatpush1.bf16.msra.mxu0 %v87
  %109 = vmatprep.subr.bf16.mxu0 0
  %110 = vmatpush1.bf16.msra.mxu0 %v88
  %111 = vmatprep.subr.bf16.mxu0 0
  %112 = vmatpush1.bf16.msra.mxu0 %v89
  %113 = vmatprep.subr.bf16.mxu0 0
  %114 = vmatpush1.bf16.msra.mxu0 %v90
  %115 = vmatprep.subr.bf16.mxu0 0
  %116 = vmatpush1.bf16.msra.mxu0 0
  %117 = vmatprep.subr.bf16.mxu0 0
  %118 = vmatpush1.bf16.msra.mxu0 0
  %119 = vmatprep.subr.bf16.mxu0 0
  %120 = vmatpush1.bf16.msra.mxu0 0
  %121 = vmatprep.subr.bf16.mxu0 0
  %122 = vmatpush1.bf16.msra.mxu0 0
  %123 = vmatprep.subr.bf16.mxu0 0
  %124 = vmatpush1.bf16.msra.mxu0 0
  %125 = vmatprep.subr.bf16.mxu0 0
  %126 = vmatpush1.bf16.msra.mxu0 0
  %127 = vmatprep.subr.bf16.mxu0 0
  %128 = vmatpush1.bf16.msra.mxu0 0
  %129 = vmatprep.subr.bf16.mxu0 0
  %130 = vmatpush1.bf16.msra.mxu0 0
  %131 = vmatprep.mubr.bf16.mxu0 0
  %132 = vmatmul.mubr.bf16.gmra.mrb[0].mxu0 %v32
  %v133 = vpop.f32.mrb[0].mxu0
  %v134 = vadd.f32 0.0, %v133
  %v135 = vpop.f32.mrb[0].mxu0
  %v136 = vpop.f32.mrb[0].mxu0
  %v137 = vadd.f32 0.0, %v136
  %v138 = vpop.f32.mrb[0].mxu0
  %139 = vdwg.mxu0
  %v140 = vadd.f32 %v33, %v134
  %v141 = vadd.f32 %v34, %v137
  %142 = vst [vmem:[#allocation2] sm:$0xff] %v140
  %143 = vst [vmem:[#allocation2 + $0x8] sm:$0xff] %v141
  // Predicated region
  $region14: #{rwkv_forward.29} parent=0 // pred_check
    %p144 = pneg %p12
  $region15: #{rwkv_forward.29} parent=0 // pred_check_branch
    %146 = sbr.rel (%p144) target = $region17
  $region16: #{rwkv_forward.29} parent=0 // pred_region
    %v147 = vld [vmem:[#allocation2] sm:$0xff]
    %v148 = vld [vmem:[#allocation2 + $0x8] sm:$0xff]
    %149 = vst [vmem:[%s2] sm:$0xff] %v147
    %150 = vst [vmem:[%s2 + $0x8] sm:$0xff] %v148
  $region17: #{rwkv_forward.29} parent=0 // pred_fallthru
    _
  // Predicated region
  $region18: #{rwkv_forward.29} parent=0 // pred_check
    _
  $region19: #{rwkv_forward.29} parent=0 // pred_check_branch
    %152 = sbr.rel (0) target = $region21
  $region20: #{rwkv_forward.29} parent=0 // pred_region
    _
  $region21: #{rwkv_forward.29} parent=0 // pred_fallthru
    _
  // Predicated region
  $region22: #{rwkv_forward.29} parent=0 // pred_check
    _
  $region23: #{rwkv_forward.29} parent=0 // pred_check_branch
    %154 = sbr.rel (0) target = $region25
  $region24: #{rwkv_forward.29} parent=0 // pred_region
    _
  $region25: #{rwkv_forward.29} parent=0 // pred_fallthru
    _

// kernel: rwkv_forward.31
$region0: #{rwkv_forward.31}
  #allocation0 [shape = 'u32[]', space=smem, size = 0x4, offset = 0x4, fixed_abs, tag = 'smem constant byte address 0x4 - core index']
  #allocation1 [shape = 'u32[144,128]{1,0:T(1,128)}', space=vmem, size = 0x12000, scoped, tag = 'internal scratch']
  #allocation2 [shape = 'f32[16,128]{1,0:T(8,128)}', space=vmem, size = 0x2000, scoped, tag = 'scratch operand']
  %s0 = inlined_call_operand.vmem [shape: f32[16,128], index: 0, kind: input, shape index: {}]
  %s1 = inlined_call_operand.vmem [shape: f32[16,128], index: 1, kind: input, shape index: {}]
  %s2 = inlined_call_operand.vmem [shape: bf16[128,128], index: 2, kind: input, shape index: {}]
  %s3 = inlined_call_operand.vmem [shape: f32[16,128], index: 3, kind: output, shape index: {}]
  %s4 = sld [smem:[#allocation0]]
  $region30: #{rwkv_forward.31} parent=0
    _
  %s6 = ssub.s32 1, %s4
  %s7 = scalar_select 0, %s6, %s4
  // Predicated region
  $region2: #{rwkv_forward.31} parent=0 // pred_check
    _
  $region3: #{rwkv_forward.31} parent=0 // pred_check_branch
    %9 = sbr.rel (0) target = $region5
  $region4: #{rwkv_forward.31} parent=0 // pred_region
    _
  $region5: #{rwkv_forward.31} parent=0 // pred_fallthru
    _
  // Predicated region
  $region6: #{rwkv_forward.31} parent=0 // pred_check
    _
  $region7: #{rwkv_forward.31} parent=0 // pred_check_branch
    %11 = sbr.rel (0) target = $region9
  $region8: #{rwkv_forward.31} parent=0 // pred_region
    _
  $region9: #{rwkv_forward.31} parent=0 // pred_fallthru
    _
  // Predicated region
  $region10: #{rwkv_forward.31} parent=0 // pred_check
    _
  $region11: #{rwkv_forward.31} parent=0 // pred_check_branch
    %13 = sbr.rel (0) target = $region13
  $region12: #{rwkv_forward.31} parent=0 // pred_region
    _
  $region13: #{rwkv_forward.31} parent=0 // pred_fallthru
    _
  %p15 = scmp.eq.s32.totalorder 0, 0
  // Predicated region
  $region14: #{rwkv_forward.31} parent=0 // pred_check
    %p16 = pneg %p15
  $region15: #{rwkv_forward.31} parent=0 // pred_check_branch
    %18 = sbr.rel (%p16) target = $region17
  $region16: #{rwkv_forward.31} parent=0 // pred_region
    %19 = vst [vmem:[#allocation2] sm:$0xff] 0.0
    %20 = vst [vmem:[#allocation2 + $0x8] sm:$0xff] 0.0
  $region17: #{rwkv_forward.31} parent=0 // pred_fallthru
    _
  %v21 = vld [vmem:[%s0] sm:$0xff]
  %v22 = vld [vmem:[%s0 + $0x8] sm:$0xff]
  %v23 = vld [vmem:[%s1] sm:$0xff]
  %v24 = vld [vmem:[%s1 + $0x8] sm:$0xff]
  %v25 = vmul.f32 %v21, %v23
  %v26 = vmul.f32 %v22, %v24
  %v27 = vpack.c.bf16 %v26, %v25
  %v28 = vld [vmem:[#allocation2] sm:$0xff]
  %v29 = vld [vmem:[#allocation2 + $0x8] sm:$0xff]
  %v30 = vld [vmem:[%s2] sm:$0xf]
  %v31 = vld [vmem:[%s2 + $0x4] sm:$0xf]
  %v32 = vld [vmem:[%s2 + $0x8] sm:$0xf]
  %v33 = vld [vmem:[%s2 + $0xc] sm:$0xf]
  %v34 = vld [vmem:[%s2 + $0x10] sm:$0xf]
  %v35 = vld [vmem:[%s2 + $0x14] sm:$0xf]
  %v36 = vld [vmem:[%s2 + $0x18] sm:$0xf]
  %v37 = vld [vmem:[%s2 + $0x1c] sm:$0xf]
  %v38 = vld [vmem:[%s2 + $0x20] sm:$0xf]
  %v39 = vld [vmem:[%s2 + $0x24] sm:$0xf]
  %v40 = vld [vmem:[%s2 + $0x28] sm:$0xf]
  %v41 = vld [vmem:[%s2 + $0x2c] sm:$0xf]
  %v42 = vld [vmem:[%s2 + $0x30] sm:$0xf]
  %v43 = vld [vmem:[%s2 + $0x34] sm:$0xf]
  %v44 = vld [vmem:[%s2 + $0x38] sm:$0xf]
  %v45 = vld [vmem:[%s2 + $0x3c] sm:$0xf]
  %v62 = vunpack.c.l.b16 %v30
  %v63 = vunpack.c.l.b16 %v31
  %v64 = vunpack.c.l.b16 %v32
  %v65 = vunpack.c.l.b16 %v33
  %v66 = vunpack.c.l.b16 %v34
  %v67 = vunpack.c.l.b16 %v35
  %v68 = vunpack.c.l.b16 %v36
  %v69 = vunpack.c.l.b16 %v37
  %v70 = vunpack.c.l.b16 %v38
  %v71 = vunpack.c.l.b16 %v39
  %v72 = vunpack.c.l.b16 %v40
  %v73 = vunpack.c.l.b16 %v41
  %v74 = vunpack.c.l.b16 %v42
  %v75 = vunpack.c.l.b16 %v43
  %v76 = vunpack.c.l.b16 %v44
  %v77 = vunpack.c.l.b16 %v45
  %v78 = vpack.c.b16 %v63, %v62
  %v79 = vpack.c.b16 %v65, %v64
  %v80 = vpack.c.b16 %v67, %v66
  %v81 = vpack.c.b16 %v69, %v68
  %v82 = vpack.c.b16 %v71, %v70
  %v83 = vpack.c.b16 %v73, %v72
  %v84 = vpack.c.b16 %v75, %v74
  %v85 = vpack.c.b16 %v77, %v76
  %94 = vmatprep.subr.bf16.mxu0 0
  %95 = vmatpush1.bf16.msra.mxu0 %v78
  %96 = vmatprep.subr.bf16.mxu0 0
  %97 = vmatpush1.bf16.msra.mxu0 %v79
  %98 = vmatprep.subr.bf16.mxu0 0
  %99 = vmatpush1.bf16.msra.mxu0 %v80
  %100 = vmatprep.subr.bf16.mxu0 0
  %101 = vmatpush1.bf16.msra.mxu0 %v81
  %102 = vmatprep.subr.bf16.mxu0 0
  %103 = vmatpush1.bf16.msra.mxu0 %v82
  %104 = vmatprep.subr.bf16.mxu0 0
  %105 = vmatpush1.bf16.msra.mxu0 %v83
  %106 = vmatprep.subr.bf16.mxu0 0
  %107 = vmatpush1.bf16.msra.mxu0 %v84
  %108 = vmatprep.subr.bf16.mxu0 0
  %109 = vmatpush1.bf16.msra.mxu0 %v85
  %110 = vmatprep.subr.bf16.mxu0 0
  %111 = vmatpush1.bf16.msra.mxu0 0
  %112 = vmatprep.subr.bf16.mxu0 0
  %113 = vmatpush1.bf16.msra.mxu0 0
  %114 = vmatprep.subr.bf16.mxu0 0
  %115 = vmatpush1.bf16.msra.mxu0 0
  %116 = vmatprep.subr.bf16.mxu0 0
  %117 = vmatpush1.bf16.msra.mxu0 0
  %118 = vmatprep.subr.bf16.mxu0 0
  %119 = vmatpush1.bf16.msra.mxu0 0
  %120 = vmatprep.subr.bf16.mxu0 0
  %121 = vmatpush1.bf16.msra.mxu0 0
  %122 = vmatprep.subr.bf16.mxu0 0
  %123 = vmatpush1.bf16.msra.mxu0 0
  %124 = vmatprep.subr.bf16.mxu0 0
  %125 = vmatpush1.bf16.msra.mxu0 0
  %126 = vmatprep.mubr.bf16.mxu0 0
  %127 = vmatmul.mubr.bf16.gmra.mrb[0].mxu0 %v27
  %v128 = vpop.f32.mrb[0].mxu0
  %v129 = vadd.f32 0.0, %v128
  %v130 = vpop.f32.mrb[0].mxu0
  %v131 = vpop.f32.mrb[0].mxu0
  %v132 = vadd.f32 0.0, %v131
  %v133 = vpop.f32.mrb[0].mxu0
  %134 = vdwg.mxu0
  %v135 = vadd.f32 %v28, %v129
  %v136 = vadd.f32 %v29, %v132
  %137 = vst [vmem:[#allocation2] sm:$0xff] %v135
  %138 = vst [vmem:[#allocation2 + $0x8] sm:$0xff] %v136
  // Predicated region
  $region18: #{rwkv_forward.31} parent=0 // pred_check
    %p139 = pneg %p15
  $region19: #{rwkv_forward.31} parent=0 // pred_check_branch
    %141 = sbr.rel (%p139) target = $region21
  $region20: #{rwkv_forward.31} parent=0 // pred_region
    %v142 = vld [vmem:[#allocation2] sm:$0xff]
    %v143 = vld [vmem:[#allocation2 + $0x8] sm:$0xff]
    %144 = vst [vmem:[%s3] sm:$0xff] %v142
    %145 = vst [vmem:[%s3 + $0x8] sm:$0xff] %v143
  $region21: #{rwkv_forward.31} parent=0 // pred_fallthru
    _
  // Predicated region
  $region22: #{rwkv_forward.31} parent=0 // pred_check
    _
  $region23: #{rwkv_forward.31} parent=0 // pred_check_branch
    %147 = sbr.rel (0) target = $region25
  $region24: #{rwkv_forward.31} parent=0 // pred_region
    _
  $region25: #{rwkv_forward.31} parent=0 // pred_fallthru
    _
  // Predicated region
  $region26: #{rwkv_forward.31} parent=0 // pred_check
    _
  $region27: #{rwkv_forward.31} parent=0 // pred_check_branch
    %149 = sbr.rel (0) target = $region29
  $region28: #{rwkv_forward.31} parent=0 // pred_region
    _
  $region29: #{rwkv_forward.31} parent=0 // pred_fallthru
    _

// kernel: rwkv_forward.33
$region0: #{rwkv_forward.33}
  #allocation0 [shape = 'u32[]', space=smem, size = 0x4, offset = 0x4, fixed_abs, tag = 'smem constant byte address 0x4 - core index']
  #allocation1 [shape = 'u32[144,128]{1,0:T(1,128)}', space=vmem, size = 0x12000, scoped, tag = 'internal scratch']
  #allocation2 [shape = 'f32[16,448]{1,0:T(8,128)}', space=vmem, size = 0x8000, scoped, tag = 'scratch operand']
  %s0 = inlined_call_operand.vmem [shape: f32[16,128], index: 0, kind: input, shape index: {}]
  %s1 = inlined_call_operand.vmem [shape: f32[16,128], index: 1, kind: input, shape index: {}]
  %s2 = inlined_call_operand.vmem [shape: bf16[128,448], index: 2, kind: input, shape index: {}]
  %s3 = inlined_call_operand.vmem [shape: bf16[128,448], index: 3, kind: input, shape index: {}]
  %s4 = inlined_call_operand.vmem [shape: f32[16,448], index: 4, kind: output, shape index: {}]
  %s5 = sld [smem:[#allocation0]]
  $region34: #{rwkv_forward.33} parent=0
    _
  %s7 = ssub.s32 1, %s5
  %s8 = scalar_select 0, %s7, %s5
  // Predicated region
  $region2: #{rwkv_forward.33} parent=0 // pred_check
    _
  $region3: #{rwkv_forward.33} parent=0 // pred_check_branch
    %10 = sbr.rel (0) target = $region5
  $region4: #{rwkv_forward.33} parent=0 // pred_region
    _
  $region5: #{rwkv_forward.33} parent=0 // pred_fallthru
    _
  // Predicated region
  $region6: #{rwkv_forward.33} parent=0 // pred_check
    _
  $region7: #{rwkv_forward.33} parent=0 // pred_check_branch
    %12 = sbr.rel (0) target = $region9
  $region8: #{rwkv_forward.33} parent=0 // pred_region
    _
  $region9: #{rwkv_forward.33} parent=0 // pred_fallthru
    _
  // Predicated region
  $region10: #{rwkv_forward.33} parent=0 // pred_check
    _
  $region11: #{rwkv_forward.33} parent=0 // pred_check_branch
    %14 = sbr.rel (0) target = $region13
  $region12: #{rwkv_forward.33} parent=0 // pred_region
    _
  $region13: #{rwkv_forward.33} parent=0 // pred_fallthru
    _
  // Predicated region
  $region14: #{rwkv_forward.33} parent=0 // pred_check
    _
  $region15: #{rwkv_forward.33} parent=0 // pred_check_branch
    %16 = sbr.rel (0) target = $region17
  $region16: #{rwkv_forward.33} parent=0 // pred_region
    _
  $region17: #{rwkv_forward.33} parent=0 // pred_fallthru
    _
  %p18 = scmp.eq.s32.totalorder 0, 0
  // Predicated region
  $region18: #{rwkv_forward.33} parent=0 // pred_check
    %p19 = pneg %p18
  $region19: #{rwkv_forward.33} parent=0 // pred_check_branch
    %21 = sbr.rel (%p19) target = $region21
  $region20: #{rwkv_forward.33} parent=0 // pred_region
    %22 = vst [vmem:[#allocation2] sm:$0xff] 0.0
    %23 = vst [vmem:[#allocation2 + $0x8] sm:$0xff] 0.0
    %24 = vst [vmem:[#allocation2 + $0x10] sm:$0xff] 0.0
    %vm25 = vcmask 523264
    %26 = vst.msk [vmem:[#allocation2 + $0x18] sm:$0xff] %vm25, 0.0
    %27 = vst [vmem:[#allocation2 + $0x20] sm:$0xff] 0.0
    %28 = vst [vmem:[#allocation2 + $0x28] sm:$0xff] 0.0
    %29 = vst [vmem:[#allocation2 + $0x30] sm:$0xff] 0.0
    %30 = vst.msk [vmem:[#allocation2 + $0x38] sm:$0xff] %vm25, 0.0
  $region21: #{rwkv_forward.33} parent=0 // pred_fallthru
    _
  %v31 = vld [vmem:[#allocation2] sm:$0xff]
  %v32 = vld [vmem:[#allocation2 + $0x8] sm:$0xff]
  %v33 = vld [vmem:[#allocation2 + $0x10] sm:$0xff]
  %v34 = vld [vmem:[#allocation2 + $0x18] sm:$0xff]
  %v35 = vld [vmem:[#allocation2 + $0x20] sm:$0xff]
  %v36 = vld [vmem:[#allocation2 + $0x28] sm:$0xff]
  %v37 = vld [vmem:[#allocation2 + $0x30] sm:$0xff]
  %v38 = vld [vmem:[#allocation2 + $0x38] sm:$0xff]
  %v39 = vld [vmem:[%s0] sm:$0xff]
  %v40 = vld [vmem:[%s0 + $0x8] sm:$0xff]
  %v41 = vpack.c.bf16 %v40, %v39
  %v42 = vld [vmem:[%s2] sm:$0xff]
  %v43 = vld [vmem:[%s2 + $0x8] sm:$0xff]
  %v44 = vld [vmem:[%s2 + $0x10] sm:$0xff]
  %v45 = vld [vmem:[%s2 + $0x18] sm:$0xff]
  %v46 = vld [vmem:[%s2 + $0x20] sm:$0xff]
  %v47 = vld [vmem:[%s2 + $0x28] sm:$0xff]
  %v48 = vld [vmem:[%s2 + $0x30] sm:$0xff]
  %v49 = vld [vmem:[%s2 + $0x38] sm:$0xff]
  %v50 = vld [vmem:[%s2 + $0x40] sm:$0xff]
  %v51 = vld [vmem:[%s2 + $0x48] sm:$0xff]
  %v52 = vld [vmem:[%s2 + $0x50] sm:$0xff]
  %v53 = vld [vmem:[%s2 + $0x58] sm:$0xff]
  %v54 = vld [vmem:[%s2 + $0x60] sm:$0xff]
  %v55 = vld [vmem:[%s2 + $0x68] sm:$0xff]
  %v56 = vld [vmem:[%s2 + $0x70] sm:$0xff]
  %v57 = vld [vmem:[%s2 + $0x78] sm:$0xff]
  %v58 = vld [vmem:[%s2 + $0x80] sm:$0xff]
  %v59 = vld [vmem:[%s2 + $0x88] sm:$0xff]
  %v60 = vld [vmem:[%s2 + $0x90] sm:$0xff]
  %v61 = vld [vmem:[%s2 + $0x98] sm:$0xff]
  %v62 = vld [vmem:[%s2 + $0xa0] sm:$0xff]
  %v63 = vld [vmem:[%s2 + $0xa8] sm:$0xff]
  %v64 = vld [vmem:[%s2 + $0xb0] sm:$0xff]
  %v65 = vld [vmem:[%s2 + $0xb8] sm:$0xff]
  %v66 = vld [vmem:[%s2 + $0xc0] sm:$0xff]
  %v67 = vld [vmem:[%s2 + $0xc8] sm:$0xff]
  %v68 = vld [vmem:[%s2 + $0xd0] sm:$0xff]
  %v69 = vld [vmem:[%s2 + $0xd8] sm:$0xff]
  %v70 = vld [vmem:[%s2 + $0xe0] sm:$0xff]
  %v71 = vld [vmem:[%s2 + $0xe8] sm:$0xff]
  %v72 = vld [vmem:[%s2 + $0xf0] sm:$0xff]
  %v73 = vld [vmem:[%s2 + $0xf8] sm:$0xff]
  %v106 = vunpack.c.l.b16 %v42
  %v107 = vunpack.c.h.b16 %v42
  %v108 = vunpack.c.l.b16 %v43
  %v109 = vunpack.c.h.b16 %v43
  %v110 = vunpack.c.l.b16 %v44
  %v111 = vunpack.c.h.b16 %v44
  %v112 = vunpack.c.l.b16 %v45
  %v113 = vunpack.c.h.b16 %v45
  %v114 = vunpack.c.l.b16 %v46
  %v115 = vunpack.c.h.b16 %v46
  %v116 = vunpack.c.l.b16 %v47
  %v117 = vunpack.c.h.b16 %v47
  %v118 = vunpack.c.l.b16 %v48
  %v119 = vunpack.c.h.b16 %v48
  %v120 = vunpack.c.l.b16 %v49
  %v121 = vunpack.c.h.b16 %v49
  %v122 = vunpack.c.l.b16 %v50
  %v123 = vunpack.c.h.b16 %v50
  %v124 = vunpack.c.l.b16 %v51
  %v125 = vunpack.c.h.b16 %v51
  %v126 = vunpack.c.l.b16 %v52
  %v127 = vunpack.c.h.b16 %v52
  %v128 = vunpack.c.l.b16 %v53
  %v129 = vunpack.c.h.b16 %v53
  %v130 = vunpack.c.l.b16 %v54
  %v131 = vunpack.c.h.b16 %v54
  %v132 = vunpack.c.l.b16 %v55
  %v133 = vunpack.c.h.b16 %v55
  %v134 = vunpack.c.l.b16 %v56
  %v135 = vunpack.c.h.b16 %v56
  %v136 = vunpack.c.l.b16 %v57
  %v137 = vunpack.c.h.b16 %v57
  %v138 = vunpack.c.l.b16 %v58
  %v139 = vunpack.c.h.b16 %v58
  %v140 = vunpack.c.l.b16 %v59
  %v141 = vunpack.c.h.b16 %v59
  %v142 = vunpack.c.l.b16 %v60
  %v143 = vunpack.c.h.b16 %v60
  %v144 = vunpack.c.l.b16 %v61
  %v145 = vunpack.c.h.b16 %v61
  %v146 = vunpack.c.l.b16 %v62
  %v147 = vunpack.c.h.b16 %v62
  %v148 = vunpack.c.l.b16 %v63
  %v149 = vunpack.c.h.b16 %v63
  %v150 = vunpack.c.l.b16 %v64
  %v151 = vunpack.c.h.b16 %v64
  %v152 = vunpack.c.l.b16 %v65
  %v153 = vunpack.c.h.b16 %v65
  %v154 = vunpack.c.l.b16 %v66
  %v155 = vunpack.c.h.b16 %v66
  %v156 = vunpack.c.l.b16 %v67
  %v157 = vunpack.c.h.b16 %v67
  %v158 = vunpack.c.l.b16 %v68
  %v159 = vunpack.c.h.b16 %v68
  %v160 = vunpack.c.l.b16 %v69
  %v161 = vunpack.c.h.b16 %v69
  %v162 = vunpack.c.l.b16 %v70
  %v163 = vunpack.c.h.b16 %v70
  %v164 = vunpack.c.l.b16 %v71
  %v165 = vunpack.c.h.b16 %v71
  %v166 = vunpack.c.l.b16 %v72
  %v167 = vunpack.c.h.b16 %v72
  %v168 = vunpack.c.l.b16 %v73
  %v169 = vunpack.c.h.b16 %v73
  %v170 = vpack.c.b16 %v110, %v106
  %v171 = vpack.c.b16 %v111, %v107
  %v172 = vpack.c.b16 %v112, %v108
  %v173 = vpack.c.b16 %v113, %v109
  %v174 = vpack.c.b16 %v118, %v114
  %v175 = vpack.c.b16 %v119, %v115
  %v176 = vpack.c.b16 %v120, %v116
  %v177 = vpack.c.b16 %v121, %v117
  %v178 = vpack.c.b16 %v126, %v122
  %v179 = vpack.c.b16 %v127, %v123
  %v180 = vpack.c.b16 %v128, %v124
  %v181 = vpack.c.b16 %v129, %v125
  %v182 = vpack.c.b16 %v134, %v130
  %v183 = vpack.c.b16 %v135, %v131
  %v184 = vpack.c.b16 %v136, %v132
  %v185 = vpack.c.b16 %v137, %v133
  %v186 = vpack.c.b16 %v142, %v138
  %v187 = vpack.c.b16 %v143, %v139
  %v188 = vpack.c.b16 %v144, %v140
  %v189 = vpack.c.b16 %v145, %v141
  %v190 = vpack.c.b16 %v150, %v146
  %v191 = vpack.c.b16 %v151, %v147
  %v192 = vpack.c.b16 %v152, %v148
  %v193 = vpack.c.b16 %v153, %v149
  %v194 = vpack.c.b16 %v158, %v154
  %v195 = vpack.c.b16 %v159, %v155
  %v196 = vpack.c.b16 %v160, %v156
  %v197 = vpack.c.b16 %v161, %v157
  %v198 = vpack.c.b16 %v166, %v162
  %v199 = vpack.c.b16 %v167, %v163
  %v200 = vpack.c.b16 %v168, %v164
  %v201 = vpack.c.b16 %v169, %v165
  %234 = vmatprep.subr.bf16.mxu0 %v171
  %235 = vmatpush1.bf16.msra.mxu0 %v170
  %236 = vmatprep.subr.bf16.mxu0 %v175
  %237 = vmatpush1.bf16.msra.mxu0 %v174
  %238 = vmatprep.subr.bf16.mxu0 %v179
  %239 = vmatpush1.bf16.msra.mxu0 %v178
  %240 = vmatprep.subr.bf16.mxu0 %v183
  %241 = vmatpush1.bf16.msra.mxu0 %v182
  %242 = vmatprep.subr.bf16.mxu0 %v187
  %243 = vmatpush1.bf16.msra.mxu0 %v186
  %244 = vmatprep.subr.bf16.mxu0 %v191
  %245 = vmatpush1.bf16.msra.mxu0 %v190
  %246 = vmatprep.subr.bf16.mxu0 %v195
  %247 = vmatpush1.bf16.msra.mxu0 %v194
  %248 = vmatprep.subr.bf16.mxu0 %v199
  %249 = vmatpush1.bf16.msra.mxu0 %v198
  %250 = vmatprep.subr.bf16.mxu0 0
  %251 = vmatpush1.bf16.msra.mxu0 0
  %252 = vmatprep.subr.bf16.mxu0 0
  %253 = vmatpush1.bf16.msra.mxu0 0
  %254 = vmatprep.subr.bf16.mxu0 0
  %255 = vmatpush1.bf16.msra.mxu0 0
  %256 = vmatprep.subr.bf16.mxu0 0
  %257 = vmatpush1.bf16.msra.mxu0 0
  %258 = vmatprep.subr.bf16.mxu0 0
  %259 = vmatpush1.bf16.msra.mxu0 0
  %260 = vmatprep.subr.bf16.mxu0 0
  %261 = vmatpush1.bf16.msra.mxu0 0
  %262 = vmatprep.subr.bf16.mxu0 0
  %263 = vmatpush1.bf16.msra.mxu0 0
  %264 = vmatprep.subr.bf16.mxu0 0
  %265 = vmatpush1.bf16.msra.mxu0 0
  %266 = vmatprep.mubr.bf16.mxu0 0
  %267 = vmatmul.mubr.bf16.gmra.mrb[0].mxu0 %v41
  %v268 = vpop.f32.mrb[0].mxu0
  %v269 = vadd.f32 0.0, %v268
  %v270 = vpop.f32.mrb[0].mxu0
  %v271 = vadd.f32 0.0, %v270
  %v272 = vpop.f32.mrb[0].mxu0
  %v273 = vadd.f32 0.0, %v272
  %v274 = vpop.f32.mrb[0].mxu0
  %v275 = vadd.f32 0.0, %v274
  %276 = vdwg.mxu0
  %277 = vmatprep.subr.bf16.mxu0 %v173
  %278 = vmatpush1.bf16.msra.mxu0 %v172
  %279 = vmatprep.subr.bf16.mxu0 %v177
  %280 = vmatpush1.bf16.msra.mxu0 %v176
  %281 = vmatprep.subr.bf16.mxu0 %v181
  %282 = vmatpush1.bf16.msra.mxu0 %v180
  %283 = vmatprep.subr.bf16.mxu0 %v185
  %284 = vmatpush1.bf16.msra.mxu0 %v184
  %285 = vmatprep.subr.bf16.mxu0 %v189
  %286 = vmatpush1.bf16.msra.mxu0 %v188
  %287 = vmatprep.subr.bf16.mxu0 %v193
  %288 = vmatpush1.bf16.msra.mxu0 %v192
  %289 = vmatprep.subr.bf16.mxu0 %v197
  %290 = vmatpush1.bf16.msra.mxu0 %v196
  %291 = vmatprep.subr.bf16.mxu0 %v201
  %292 = vmatpush1.bf16.msra.mxu0 %v200
  %293 = vmatprep.subr.bf16.mxu0 0
  %294 = vmatpush1.bf16.msra.mxu0 0
  %295 = vmatprep.subr.bf16.mxu0 0
  %296 = vmatpush1.bf16.msra.mxu0 0
  %297 = vmatprep.subr.bf16.mxu0 0
  %298 = vmatpush1.bf16.msra.mxu0 0
  %299 = vmatprep.subr.bf16.mxu0 0
  %300 = vmatpush1.bf16.msra.mxu0 0
  %301 = vmatprep.subr.bf16.mxu0 0
  %302 = vmatpush1.bf16.msra.mxu0 0
  %303 = vmatprep.subr.bf16.mxu0 0
  %304 = vmatpush1.bf16.msra.mxu0 0
  %305 = vmatprep.subr.bf16.mxu0 0
  %306 = vmatpush1.bf16.msra.mxu0 0
  %307 = vmatprep.subr.bf16.mxu0 0
  %308 = vmatpush1.bf16.msra.mxu0 0
  %309 = vmatprep.mubr.bf16.mxu0 0
  %310 = vmatmul.mubr.bf16.gmra.mrb[0].mxu0 %v41
  %v311 = vpop.f32.mrb[0].mxu0
  %v312 = vadd.f32 0.0, %v311
  %v313 = vpop.f32.mrb[0].mxu0
  %v314 = vadd.f32 0.0, %v313
  %v315 = vpop.f32.mrb[0].mxu0
  %v316 = vadd.f32 0.0, %v315
  %v317 = vpop.f32.mrb[0].mxu0
  %v318 = vadd.f32 0.0, %v317
  %319 = vdwg.mxu0
  %v320 = vadd.f32 %v31, %v269
  %v321 = vadd.f32 %v32, %v271
  %v322 = vadd.f32 %v33, %v312
  %v323 = vadd.f32 %v34, %v314
  %v324 = vadd.f32 %v35, %v273
  %v325 = vadd.f32 %v36, %v275
  %v326 = vadd.f32 %v37, %v316
  %v327 = vadd.f32 %v38, %v318
  %328 = vst [vmem:[#allocation2] sm:$0xff] %v320
  %329 = vst [vmem:[#allocation2 + $0x8] sm:$0xff] %v321
  %330 = vst [vmem:[#allocation2 + $0x10] sm:$0xff] %v322
  %vm331 = vcmask 523264
  %332 = vst.msk [vmem:[#allocation2 + $0x18] sm:$0xff] %vm331, %v323
  %333 = vst [vmem:[#allocation2 + $0x20] sm:$0xff] %v324
  %334 = vst [vmem:[#allocation2 + $0x28] sm:$0xff] %v325
  %335 = vst [vmem:[#allocation2 + $0x30] sm:$0xff] %v326
  %336 = vst.msk [vmem:[#allocation2 + $0x38] sm:$0xff] %vm331, %v327
  %v337 = vld [vmem:[#allocation2] sm:$0xff]
  %v338 = vld [vmem:[#allocation2 + $0x8] sm:$0xff]
  %v339 = vld [vmem:[#allocation2 + $0x10] sm:$0xff]
  %v340 = vld [vmem:[#allocation2 + $0x18] sm:$0xff]
  %v341 = vld [vmem:[#allocation2 + $0x20] sm:$0xff]
  %v342 = vld [vmem:[#allocation2 + $0x28] sm:$0xff]
  %v343 = vld [vmem:[#allocation2 + $0x30] sm:$0xff]
  %v344 = vld [vmem:[#allocation2 + $0x38] sm:$0xff]
  %v345 = vld [vmem:[%s1] sm:$0xff]
  %v346 = vld [vmem:[%s1 + $0x8] sm:$0xff]
  %v347 = vpack.c.bf16 %v346, %v345
  %v348 = vld [vmem:[%s3] sm:$0xff]
  %v349 = vld [vmem:[%s3 + $0x8] sm:$0xff]
  %v350 = vld [vmem:[%s3 + $0x10] sm:$0xff]
  %v351 = vld [vmem:[%s3 + $0x18] sm:$0xff]
  %v352 = vld [vmem:[%s3 + $0x20] sm:$0xff]
  %v353 = vld [vmem:[%s3 + $0x28] sm:$0xff]
  %v354 = vld [vmem:[%s3 + $0x30] sm:$0xff]
  %v355 = vld [vmem:[%s3 + $0x38] sm:$0xff]
  %v356 = vld [vmem:[%s3 + $0x40] sm:$0xff]
  %v357 = vld [vmem:[%s3 + $0x48] sm:$0xff]
  %v358 = vld [vmem:[%s3 + $0x50] sm:$0xff]
  %v359 = vld [vmem:[%s3 + $0x58] sm:$0xff]
  %v360 = vld [vmem:[%s3 + $0x60] sm:$0xff]
  %v361 = vld [vmem:[%s3 + $0x68] sm:$0xff]
  %v362 = vld [vmem:[%s3 + $0x70] sm:$0xff]
  %v363 = vld [vmem:[%s3 + $0x78] sm:$0xff]
  %v364 = vld [vmem:[%s3 + $0x80] sm:$0xff]
  %v365 = vld [vmem:[%s3 + $0x88] sm:$0xff]
  %v366 = vld [vmem:[%s3 + $0x90] sm:$0xff]
  %v367 = vld [vmem:[%s3 + $0x98] sm:$0xff]
  %v368 = vld [vmem:[%s3 + $0xa0] sm:$0xff]
  %v369 = vld [vmem:[%s3 + $0xa8] sm:$0xff]
  %v370 = vld [vmem:[%s3 + $0xb0] sm:$0xff]
  %v371 = vld [vmem:[%s3 + $0xb8] sm:$0xff]
  %v372 = vld [vmem:[%s3 + $0xc0] sm:$0xff]
  %v373 = vld [vmem:[%s3 + $0xc8] sm:$0xff]
  %v374 = vld [vmem:[%s3 + $0xd0] sm:$0xff]
  %v375 = vld [vmem:[%s3 + $0xd8] sm:$0xff]
  %v376 = vld [vmem:[%s3 + $0xe0] sm:$0xff]
  %v377 = vld [vmem:[%s3 + $0xe8] sm:$0xff]
  %v378 = vld [vmem:[%s3 + $0xf0] sm:$0xff]
  %v379 = vld [vmem:[%s3 + $0xf8] sm:$0xff]
  %v412 = vunpack.c.l.b16 %v348
  %v413 = vunpack.c.h.b16 %v348
  %v414 = vunpack.c.l.b16 %v349
  %v415 = vunpack.c.h.b16 %v349
  %v416 = vunpack.c.l.b16 %v350
  %v417 = vunpack.c.h.b16 %v350
  %v418 = vunpack.c.l.b16 %v351
  %v419 = vunpack.c.h.b16 %v351
  %v420 = vunpack.c.l.b16 %v352
  %v421 = vunpack.c.h.b16 %v352
  %v422 = vunpack.c.l.b16 %v353
  %v423 = vunpack.c.h.b16 %v353
  %v424 = vunpack.c.l.b16 %v354
  %v425 = vunpack.c.h.b16 %v354
  %v426 = vunpack.c.l.b16 %v355
  %v427 = vunpack.c.h.b16 %v355
  %v428 = vunpack.c.l.b16 %v356
  %v429 = vunpack.c.h.b16 %v356
  %v430 = vunpack.c.l.b16 %v357
  %v431 = vunpack.c.h.b16 %v357
  %v432 = vunpack.c.l.b16 %v358
  %v433 = vunpack.c.h.b16 %v358
  %v434 = vunpack.c.l.b16 %v359
  %v435 = vunpack.c.h.b16 %v359
  %v436 = vunpack.c.l.b16 %v360
  %v437 = vunpack.c.h.b16 %v360
  %v438 = vunpack.c.l.b16 %v361
  %v439 = vunpack.c.h.b16 %v361
  %v440 = vunpack.c.l.b16 %v362
  %v441 = vunpack.c.h.b16 %v362
  %v442 = vunpack.c.l.b16 %v363
  %v443 = vunpack.c.h.b16 %v363
  %v444 = vunpack.c.l.b16 %v364
  %v445 = vunpack.c.h.b16 %v364
  %v446 = vunpack.c.l.b16 %v365
  %v447 = vunpack.c.h.b16 %v365
  %v448 = vunpack.c.l.b16 %v366
  %v449 = vunpack.c.h.b16 %v366
  %v450 = vunpack.c.l.b16 %v367
  %v451 = vunpack.c.h.b16 %v367
  %v452 = vunpack.c.l.b16 %v368
  %v453 = vunpack.c.h.b16 %v368
  %v454 = vunpack.c.l.b16 %v369
  %v455 = vunpack.c.h.b16 %v369
  %v456 = vunpack.c.l.b16 %v370
  %v457 = vunpack.c.h.b16 %v370
  %v458 = vunpack.c.l.b16 %v371
  %v459 = vunpack.c.h.b16 %v371
  %v460 = vunpack.c.l.b16 %v372
  %v461 = vunpack.c.h.b16 %v372
  %v462 = vunpack.c.l.b16 %v373
  %v463 = vunpack.c.h.b16 %v373
  %v464 = vunpack.c.l.b16 %v374
  %v465 = vunpack.c.h.b16 %v374
  %v466 = vunpack.c.l.b16 %v375
  %v467 = vunpack.c.h.b16 %v375
  %v468 = vunpack.c.l.b16 %v376
  %v469 = vunpack.c.h.b16 %v376
  %v470 = vunpack.c.l.b16 %v377
  %v471 = vunpack.c.h.b16 %v377
  %v472 = vunpack.c.l.b16 %v378
  %v473 = vunpack.c.h.b16 %v378
  %v474 = vunpack.c.l.b16 %v379
  %v475 = vunpack.c.h.b16 %v379
  %v476 = vpack.c.b16 %v416, %v412
  %v477 = vpack.c.b16 %v417, %v413
  %v478 = vpack.c.b16 %v418, %v414
  %v479 = vpack.c.b16 %v419, %v415
  %v480 = vpack.c.b16 %v424, %v420
  %v481 = vpack.c.b16 %v425, %v421
  %v482 = vpack.c.b16 %v426, %v422
  %v483 = vpack.c.b16 %v427, %v423
  %v484 = vpack.c.b16 %v432, %v428
  %v485 = vpack.c.b16 %v433, %v429
  %v486 = vpack.c.b16 %v434, %v430
  %v487 = vpack.c.b16 %v435, %v431
  %v488 = vpack.c.b16 %v440, %v436
  %v489 = vpack.c.b16 %v441, %v437
  %v490 = vpack.c.b16 %v442, %v438
  %v491 = vpack.c.b16 %v443, %v439
  %v492 = vpack.c.b16 %v448, %v444
  %v493 = vpack.c.b16 %v449, %v445
  %v494 = vpack.c.b16 %v450, %v446
  %v495 = vpack.c.b16 %v451, %v447
  %v496 = vpack.c.b16 %v456, %v452
  %v497 = vpack.c.b16 %v457, %v453
  %v498 = vpack.c.b16 %v458, %v454
  %v499 = vpack.c.b16 %v459, %v455
  %v500 = vpack.c.b16 %v464, %v460
  %v501 = vpack.c.b16 %v465, %v461
  %v502 = vpack.c.b16 %v466, %v462
  %v503 = vpack.c.b16 %v467, %v463
  %v504 = vpack.c.b16 %v472, %v468
  %v505 = vpack.c.b16 %v473, %v469
  %v506 = vpack.c.b16 %v474, %v470
  %v507 = vpack.c.b16 %v475, %v471
  %540 = vmatprep.subr.bf16.mxu0 %v477
  %541 = vmatpush1.bf16.msra.mxu0 %v476
  %542 = vmatprep.subr.bf16.mxu0 %v481
  %543 = vmatpush1.bf16.msra.mxu0 %v480
  %544 = vmatprep.subr.bf16.mxu0 %v485
  %545 = vmatpush1.bf16.msra.mxu0 %v484
  %546 = vmatprep.subr.bf16.mxu0 %v489
  %547 = vmatpush1.bf16.msra.mxu0 %v488
  %548 = vmatprep.subr.bf16.mxu0 %v493
  %549 = vmatpush1.bf16.msra.mxu0 %v492
  %550 = vmatprep.subr.bf16.mxu0 %v497
  %551 = vmatpush1.bf16.msra.mxu0 %v496
  %552 = vmatprep.subr.bf16.mxu0 %v501
  %553 = vmatpush1.bf16.msra.mxu0 %v500
  %554 = vmatprep.subr.bf16.mxu0 %v505
  %555 = vmatpush1.bf16.msra.mxu0 %v504
  %556 = vmatprep.subr.bf16.mxu0 0
  %557 = vmatpush1.bf16.msra.mxu0 0
  %558 = vmatprep.subr.bf16.mxu0 0
  %559 = vmatpush1.bf16.msra.mxu0 0
  %560 = vmatprep.subr.bf16.mxu0 0
  %561 = vmatpush1.bf16.msra.mxu0 0
  %562 = vmatprep.subr.bf16.mxu0 0
  %563 = vmatpush1.bf16.msra.mxu0 0
  %564 = vmatprep.subr.bf16.mxu0 0
  %565 = vmatpush1.bf16.msra.mxu0 0
  %566 = vmatprep.subr.bf16.mxu0 0
  %567 = vmatpush1.bf16.msra.mxu0 0
  %568 = vmatprep.subr.bf16.mxu0 0
  %569 = vmatpush1.bf16.msra.mxu0 0
  %570 = vmatprep.subr.bf16.mxu0 0
  %571 = vmatpush1.bf16.msra.mxu0 0
  %572 = vmatprep.mubr.bf16.mxu0 0
  %573 = vmatmul.mubr.bf16.gmra.mrb[0].mxu0 %v347
  %v574 = vpop.f32.mrb[0].mxu0
  %v575 = vadd.f32 0.0, %v574
  %v576 = vpop.f32.mrb[0].mxu0
  %v577 = vadd.f32 0.0, %v576
  %v578 = vpop.f32.mrb[0].mxu0
  %v579 = vadd.f32 0.0, %v578
  %v580 = vpop.f32.mrb[0].mxu0
  %v581 = vadd.f32 0.0, %v580
  %582 = vdwg.mxu0
  %583 = vmatprep.subr.bf16.mxu0 %v479
  %584 = vmatpush1.bf16.msra.mxu0 %v478
  %585 = vmatprep.subr.bf16.mxu0 %v483
  %586 = vmatpush1.bf16.msra.mxu0 %v482
  %587 = vmatprep.subr.bf16.mxu0 %v487
  %588 = vmatpush1.bf16.msra.mxu0 %v486
  %589 = vmatprep.subr.bf16.mxu0 %v491
  %590 = vmatpush1.bf16.msra.mxu0 %v490
  %591 = vmatprep.subr.bf16.mxu0 %v495
  %592 = vmatpush1.bf16.msra.mxu0 %v494
  %593 = vmatprep.subr.bf16.mxu0 %v499
  %594 = vmatpush1.bf16.msra.mxu0 %v498
  %595 = vmatprep.subr.bf16.mxu0 %v503
  %596 = vmatpush1.bf16.msra.mxu0 %v502
  %597 = vmatprep.subr.bf16.mxu0 %v507
  %598 = vmatpush1.bf16.msra.mxu0 %v506
  %599 = vmatprep.subr.bf16.mxu0 0
  %600 = vmatpush1.bf16.msra.mxu0 0
  %601 = vmatprep.subr.bf16.mxu0 0
  %602 = vmatpush1.bf16.msra.mxu0 0
  %603 = vmatprep.subr.bf16.mxu0 0
  %604 = vmatpush1.bf16.msra.mxu0 0
  %605 = vmatprep.subr.bf16.mxu0 0
  %606 = vmatpush1.bf16.msra.mxu0 0
  %607 = vmatprep.subr.bf16.mxu0 0
  %608 = vmatpush1.bf16.msra.mxu0 0
  %609 = vmatprep.subr.bf16.mxu0 0
  %610 = vmatpush1.bf16.msra.mxu0 0
  %611 = vmatprep.subr.bf16.mxu0 0
  %612 = vmatpush1.bf16.msra.mxu0 0
  %613 = vmatprep.subr.bf16.mxu0 0
  %614 = vmatpush1.bf16.msra.mxu0 0
  %615 = vmatprep.mubr.bf16.mxu0 0
  %616 = vmatmul.mubr.bf16.gmra.mrb[0].mxu0 %v347
  %v617 = vpop.f32.mrb[0].mxu0
  %v618 = vadd.f32 0.0, %v617
  %v619 = vpop.f32.mrb[0].mxu0
  %v620 = vadd.f32 0.0, %v619
  %v621 = vpop.f32.mrb[0].mxu0
  %v622 = vadd.f32 0.0, %v621
  %v623 = vpop.f32.mrb[0].mxu0
  %v624 = vadd.f32 0.0, %v623
  %625 = vdwg.mxu0
  %v626 = vadd.f32 %v337, %v575
  %v627 = vadd.f32 %v338, %v577
  %v628 = vadd.f32 %v339, %v618
  %v629 = vadd.f32 %v340, %v620
  %v630 = vadd.f32 %v341, %v579
  %v631 = vadd.f32 %v342, %v581
  %v632 = vadd.f32 %v343, %v622
  %v633 = vadd.f32 %v344, %v624
  %634 = vst [vmem:[#allocation2] sm:$0xff] %v626
  %635 = vst [vmem:[#allocation2 + $0x8] sm:$0xff] %v627
  %636 = vst [vmem:[#allocation2 + $0x10] sm:$0xff] %v628
  %637 = vst.msk [vmem:[#allocation2 + $0x18] sm:$0xff] %vm331, %v629
  %638 = vst [vmem:[#allocation2 + $0x20] sm:$0xff] %v630
  %639 = vst [vmem:[#allocation2 + $0x28] sm:$0xff] %v631
  %640 = vst [vmem:[#allocation2 + $0x30] sm:$0xff] %v632
  %641 = vst.msk [vmem:[#allocation2 + $0x38] sm:$0xff] %vm331, %v633
  // Predicated region
  $region22: #{rwkv_forward.33} parent=0 // pred_check
    %p642 = pneg %p18
  $region23: #{rwkv_forward.33} parent=0 // pred_check_branch
    %644 = sbr.rel (%p642) target = $region25
  $region24: #{rwkv_forward.33} parent=0 // pred_region
    %v645 = vld [vmem:[#allocation2] sm:$0xff]
    %v646 = vld [vmem:[#allocation2 + $0x8] sm:$0xff]
    %v647 = vld [vmem:[#allocation2 + $0x10] sm:$0xff]
    %v648 = vld [vmem:[#allocation2 + $0x18] sm:$0xff]
    %v649 = vld [vmem:[#allocation2 + $0x20] sm:$0xff]
    %v650 = vld [vmem:[#allocation2 + $0x28] sm:$0xff]
    %v651 = vld [vmem:[#allocation2 + $0x30] sm:$0xff]
    %v652 = vld [vmem:[#allocation2 + $0x38] sm:$0xff]
    %v653 = vmax.f32 %v645, 0.0
    %v654 = vmax.f32 %v646, 0.0
    %v655 = vmax.f32 %v647, 0.0
    %v656 = vmax.f32 %v648, 0.0
    %v657 = vmax.f32 %v649, 0.0
    %v658 = vmax.f32 %v650, 0.0
    %v659 = vmax.f32 %v651, 0.0
    %v660 = vmax.f32 %v652, 0.0
    %v661 = vmul.f32 %v653, %v653
    %v662 = vmul.f32 %v654, %v654
    %v663 = vmul.f32 %v655, %v655
    %v664 = vmul.f32 %v656, %v656
    %v665 = vmul.f32 %v657, %v657
    %v666 = vmul.f32 %v658, %v658
    %v667 = vmul.f32 %v659, %v659
    %v668 = vmul.f32 %v660, %v660
    %669 = vst [vmem:[%s4] sm:$0xff] %v661
    %670 = vst [vmem:[%s4 + $0x8] sm:$0xff] %v662
    %671 = vst [vmem:[%s4 + $0x10] sm:$0xff] %v663
    %672 = vst.msk [vmem:[%s4 + $0x18] sm:$0xff] %vm331, %v664
    %673 = vst [vmem:[%s4 + $0x20] sm:$0xff] %v665
    %674 = vst [vmem:[%s4 + $0x28] sm:$0xff] %v666
    %675 = vst [vmem:[%s4 + $0x30] sm:$0xff] %v667
    %676 = vst.msk [vmem:[%s4 + $0x38] sm:$0xff] %vm331, %v668
  $region25: #{rwkv_forward.33} parent=0 // pred_fallthru
    _
  // Predicated region
  $region26: #{rwkv_forward.33} parent=0 // pred_check
    _
  $region27: #{rwkv_forward.33} parent=0 // pred_check_branch
    %678 = sbr.rel (0) target = $region29
  $region28: #{rwkv_forward.33} parent=0 // pred_region
    _
  $region29: #{rwkv_forward.33} parent=0 // pred_fallthru
    _
  // Predicated region
  $region30: #{rwkv_forward.33} parent=0 // pred_check
    _
  $region31: #{rwkv_forward.33} parent=0 // pred_check_branch
    %680 = sbr.rel (0) target = $region33
  $region32: #{rwkv_forward.33} parent=0 // pred_region
    _
  $region33: #{rwkv_forward.33} parent=0 // pred_fallthru
    _

// kernel: rwkv_forward.34
$region0: #{rwkv_forward.34}
  #allocation0 [shape = 'u32[]', space=smem, size = 0x4, offset = 0x4, fixed_abs, tag = 'smem constant byte address 0x4 - core index']
  #allocation1 [shape = 'u32[144,128]{1,0:T(1,128)}', space=vmem, size = 0x12000, scoped, tag = 'internal scratch']
  #allocation2 [shape = 'f32[16,128]{1,0:T(8,128)}', space=vmem, size = 0x2000, scoped, tag = 'scratch operand']
  %s0 = inlined_call_operand.vmem [shape: f32[16,448], index: 0, kind: input, shape index: {}]
  %s1 = inlined_call_operand.vmem [shape: bf16[448,128], index: 1, kind: input, shape index: {}]
  %s2 = inlined_call_operand.vmem [shape: f32[16,128], index: 2, kind: output, shape index: {}]
  %s3 = sld [smem:[#allocation0]]
  $region26: #{rwkv_forward.34} parent=0
    _
  %s5 = ssub.s32 1, %s3
  %s6 = scalar_select 0, %s5, %s3
  // Predicated region
  $region2: #{rwkv_forward.34} parent=0 // pred_check
    _
  $region3: #{rwkv_forward.34} parent=0 // pred_check_branch
    %8 = sbr.rel (0) target = $region5
  $region4: #{rwkv_forward.34} parent=0 // pred_region
    _
  $region5: #{rwkv_forward.34} parent=0 // pred_fallthru
    _
  // Predicated region
  $region6: #{rwkv_forward.34} parent=0 // pred_check
    _
  $region7: #{rwkv_forward.34} parent=0 // pred_check_branch
    %10 = sbr.rel (0) target = $region9
  $region8: #{rwkv_forward.34} parent=0 // pred_region
    _
  $region9: #{rwkv_forward.34} parent=0 // pred_fallthru
    _
  %p12 = scmp.eq.s32.totalorder 0, 0
  // Predicated region
  $region10: #{rwkv_forward.34} parent=0 // pred_check
    %p13 = pneg %p12
  $region11: #{rwkv_forward.34} parent=0 // pred_check_branch
    %15 = sbr.rel (%p13) target = $region13
  $region12: #{rwkv_forward.34} parent=0 // pred_region
    %16 = vst [vmem:[#allocation2] sm:$0xff] 0.0
    %17 = vst [vmem:[#allocation2 + $0x8] sm:$0xff] 0.0
  $region13: #{rwkv_forward.34} parent=0 // pred_fallthru
    _
  %v18 = vld [vmem:[%s0] sm:$0xff]
  %v19 = vld [vmem:[%s0 + $0x8] sm:$0xff]
  %v20 = vld [vmem:[%s0 + $0x10] sm:$0xff]
  %v21 = vld [vmem:[%s0 + $0x18] sm:$0xff]
  %v22 = vld [vmem:[%s0 + $0x20] sm:$0xff]
  %v23 = vld [vmem:[%s0 + $0x28] sm:$0xff]
  %v24 = vld [vmem:[%s0 + $0x30] sm:$0xff]
  %v25 = vld [vmem:[%s0 + $0x38] sm:$0xff]
  %v26 = vpack.c.bf16 %v22, %v18
  %v27 = vpack.c.bf16 %v23, %v19
  %v28 = vpack.c.bf16 %v24, %v20
  %v29 = vpack.c.bf16 %v25, %v21
  %v30 = vld [vmem:[#allocation2] sm:$0xff]
  %v31 = vld [vmem:[#allocation2 + $0x8] sm:$0xff]
  %v32 = vld [vmem:[%s1] sm:$0xf]
  %v33 = vld [vmem:[%s1 + $0x4] sm:$0xf]
  %v34 = vld [vmem:[%s1 + $0x8] sm:$0xf]
  %v35 = vld [vmem:[%s1 + $0xc] sm:$0xf]
  %v36 = vld [vmem:[%s1 + $0x10] sm:$0xf]
  %v37 = vld [vmem:[%s1 + $0x14] sm:$0xf]
  %v38 = vld [vmem:[%s1 + $0x18] sm:$0xf]
  %v39 = vld [vmem:[%s1 + $0x1c] sm:$0xf]
  %v40 = vld [vmem:[%s1 + $0x20] sm:$0xf]
  %v41 = vld [vmem:[%s1 + $0x24] sm:$0xf]
  %v42 = vld [vmem:[%s1 + $0x28] sm:$0xf]
  %v43 = vld [vmem:[%s1 + $0x2c] sm:$0xf]
  %v44 = vld [vmem:[%s1 + $0x30] sm:$0xf]
  %v45 = vld [vmem:[%s1 + $0x34] sm:$0xf]
  %v46 = vld [vmem:[%s1 + $0x38] sm:$0xf]
  %v47 = vld [vmem:[%s1 + $0x3c] sm:$0xf]
  %v48 = vld [vmem:[%s1 + $0x40] sm:$0xf]
  %v49 = vld [vmem:[%s1 + $0x44] sm:$0xf]
  %v50 = vld [vmem:[%s1 + $0x48] sm:$0xf]
  %v51 = vld [vmem:[%s1 + $0x4c] sm:$0xf]
  %v52 = vld [vmem:[%s1 + $0x50] sm:$0xf]
  %v53 = vld [vmem:[%s1 + $0x54] sm:$0xf]
  %v54 = vld [vmem:[%s1 + $0x58] sm:$0xf]
  %v55 = vld [vmem:[%s1 + $0x5c] sm:$0xf]
  %v56 = vld [vmem:[%s1 + $0x60] sm:$0xf]
  %v57 = vld [vmem:[%s1 + $0x64] sm:$0xf]
  %v58 = vld [vmem:[%s1 + $0x68] sm:$0xf]
  %v59 = vld [vmem:[%s1 + $0x6c] sm:$0xf]
  %v60 = vld [vmem:[%s1 + $0x70] sm:$0xf]
  %v61 = vld [vmem:[%s1 + $0x74] sm:$0xf]
  %v62 = vld [vmem:[%s1 + $0x78] sm:$0xf]
  %v63 = vld [vmem:[%s1 + $0x7c] sm:$0xf]
  %v64 = vld [vmem:[%s1 + $0x80] sm:$0xf]
  %v65 = vld [vmem:[%s1 + $0x84] sm:$0xf]
  %v66 = vld [vmem:[%s1 + $0x88] sm:$0xf]
  %v67 = vld [vmem:[%s1 + $0x8c] sm:$0xf]
  %v68 = vld [vmem:[%s1 + $0x90] sm:$0xf]
  %v69 = vld [vmem:[%s1 + $0x94] sm:$0xf]
  %v70 = vld [vmem:[%s1 + $0x98] sm:$0xf]
  %v71 = vld [vmem:[%s1 + $0x9c] sm:$0xf]
  %v72 = vld [vmem:[%s1 + $0xa0] sm:$0xf]
  %v73 = vld [vmem:[%s1 + $0xa4] sm:$0xf]
  %v74 = vld [vmem:[%s1 + $0xa8] sm:$0xf]
  %v75 = vld [vmem:[%s1 + $0xac] sm:$0xf]
  %v76 = vld [vmem:[%s1 + $0xb0] sm:$0xf]
  %v77 = vld [vmem:[%s1 + $0xb4] sm:$0xf]
  %v78 = vld [vmem:[%s1 + $0xb8] sm:$0xf]
  %v79 = vld [vmem:[%s1 + $0xbc] sm:$0xf]
  %v80 = vld [vmem:[%s1 + $0xc0] sm:$0xf]
  %v81 = vld [vmem:[%s1 + $0xc4] sm:$0xf]
  %v82 = vld [vmem:[%s1 + $0xc8] sm:$0xf]
  %v83 = vld [vmem:[%s1 + $0xcc] sm:$0xf]
  %v84 = vld [vmem:[%s1 + $0xd0] sm:$0xf]
  %v85 = vld [vmem:[%s1 + $0xd4] sm:$0xf]
  %v86 = vld [vmem:[%s1 + $0xd8] sm:$0xf]
  %v87 = vld [vmem:[%s1 + $0xdc] sm:$0xf]
  %v144 = vunpack.c.l.b16 %v32
  %v145 = vunpack.c.l.b16 %v33
  %v146 = vunpack.c.l.b16 %v34
  %v147 = vunpack.c.l.b16 %v35
  %v148 = vunpack.c.l.b16 %v36
  %v149 = vunpack.c.l.b16 %v37
  %v150 = vunpack.c.l.b16 %v38
  %v151 = vunpack.c.l.b16 %v39
  %v152 = vunpack.c.l.b16 %v40
  %v153 = vunpack.c.l.b16 %v41
  %v154 = vunpack.c.l.b16 %v42
  %v155 = vunpack.c.l.b16 %v43
  %v156 = vunpack.c.l.b16 %v44
  %v157 = vunpack.c.l.b16 %v45
  %v158 = vunpack.c.l.b16 %v46
  %v159 = vunpack.c.l.b16 %v47
  %v160 = vunpack.c.l.b16 %v48
  %v161 = vunpack.c.l.b16 %v49
  %v162 = vunpack.c.l.b16 %v50
  %v163 = vunpack.c.l.b16 %v51
  %v164 = vunpack.c.l.b16 %v52
  %v165 = vunpack.c.l.b16 %v53
  %v166 = vunpack.c.l.b16 %v54
  %v167 = vunpack.c.l.b16 %v55
  %v168 = vunpack.c.l.b16 %v56
  %v169 = vunpack.c.l.b16 %v57
  %v170 = vunpack.c.l.b16 %v58
  %v171 = vunpack.c.l.b16 %v59
  %v172 = vunpack.c.l.b16 %v60
  %v173 = vunpack.c.l.b16 %v61
  %v174 = vunpack.c.l.b16 %v62
  %v175 = vunpack.c.l.b16 %v63
  %v176 = vunpack.c.l.b16 %v64
  %v177 = vunpack.c.l.b16 %v65
  %v178 = vunpack.c.l.b16 %v66
  %v179 = vunpack.c.l.b16 %v67
  %v180 = vunpack.c.l.b16 %v68
  %v181 = vunpack.c.l.b16 %v69
  %v182 = vunpack.c.l.b16 %v70
  %v183 = vunpack.c.l.b16 %v71
  %v184 = vunpack.c.l.b16 %v72
  %v185 = vunpack.c.l.b16 %v73
  %v186 = vunpack.c.l.b16 %v74
  %v187 = vunpack.c.l.b16 %v75
  %v188 = vunpack.c.l.b16 %v76
  %v189 = vunpack.c.l.b16 %v77
  %v190 = vunpack.c.l.b16 %v78
  %v191 = vunpack.c.l.b16 %v79
  %v192 = vunpack.c.l.b16 %v80
  %v193 = vunpack.c.l.b16 %v81
  %v194 = vunpack.c.l.b16 %v82
  %v195 = vunpack.c.l.b16 %v83
  %v196 = vunpack.c.l.b16 %v84
  %v197 = vunpack.c.l.b16 %v85
  %v198 = vunpack.c.l.b16 %v86
  %v199 = vunpack.c.l.b16 %v87
  %v200 = vpack.c.b16 %v145, %v144
  %v201 = vpack.c.b16 %v147, %v146
  %v202 = vpack.c.b16 %v149, %v148
  %v203 = vpack.c.b16 %v151, %v150
  %v204 = vpack.c.b16 %v153, %v152
  %v205 = vpack.c.b16 %v155, %v154
  %v206 = vpack.c.b16 %v157, %v156
  %v207 = vpack.c.b16 %v159, %v158
  %v208 = vpack.c.b16 %v161, %v160
  %v209 = vpack.c.b16 %v163, %v162
  %v210 = vpack.c.b16 %v165, %v164
  %v211 = vpack.c.b16 %v167, %v166
  %v212 = vpack.c.b16 %v169, %v168
  %v213 = vpack.c.b16 %v171, %v170
  %v214 = vpack.c.b16 %v173, %v172
  %v215 = vpack.c.b16 %v175, %v174
  %v216 = vpack.c.b16 %v177, %v176
  %v217 = vpack.c.b16 %v179, %v178
  %v218 = vpack.c.b16 %v181, %v180
  %v219 = vpack.c.b16 %v183, %v182
  %v220 = vpack.c.b16 %v185, %v184
  %v221 = vpack.c.b16 %v187, %v186
  %v222 = vpack.c.b16 %v189, %v188
  %v223 = vpack.c.b16 %v191, %v190
  %v224 = vpack.c.b16 %v193, %v192
  %v225 = vpack.c.b16 %v195, %v194
  %v226 = vpack.c.b16 %v197, %v196
  %v227 = vpack.c.b16 %v199, %v198
  %vm256 = vcmask 523264
  %v258 = vsel %vm256, %v29, 0
  %260 = vmatprep.subr.bf16.mxu0 0
  %261 = vmatpush1.bf16.msra.mxu0 %v200
  %262 = vmatprep.subr.bf16.mxu0 0
  %263 = vmatpush1.bf16.msra.mxu0 %v201
  %264 = vmatprep.subr.bf16.mxu0 0
  %265 = vmatpush1.bf16.msra.mxu0 %v202
  %266 = vmatprep.subr.bf16.mxu0 0
  %267 = vmatpush1.bf16.msra.mxu0 %v203
  %268 = vmatprep.subr.bf16.mxu0 0
  %269 = vmatpush1.bf16.msra.mxu0 %v204
  %270 = vmatprep.subr.bf16.mxu0 0
  %271 = vmatpush1.bf16.msra.mxu0 %v205
  %272 = vmatprep.subr.bf16.mxu0 0
  %273 = vmatpush1.bf16.msra.mxu0 %v206
  %274 = vmatprep.subr.bf16.mxu0 0
  %275 = vmatpush1.bf16.msra.mxu0 %v207
  %276 = vmatprep.subr.bf16.mxu0 0
  %277 = vmatpush1.bf16.msra.mxu0 %v208
  %278 = vmatprep.subr.bf16.mxu0 0
  %279 = vmatpush1.bf16.msra.mxu0 %v209
  %280 = vmatprep.subr.bf16.mxu0 0
  %281 = vmatpush1.bf16.msra.mxu0 %v210
  %282 = vmatprep.subr.bf16.mxu0 0
  %283 = vmatpush1.bf16.msra.mxu0 %v211
  %284 = vmatprep.subr.bf16.mxu0 0
  %285 = vmatpush1.bf16.msra.mxu0 %v212
  %286 = vmatprep.subr.bf16.mxu0 0
  %287 = vmatpush1.bf16.msra.mxu0 %v213
  %288 = vmatprep.subr.bf16.mxu0 0
  %289 = vmatpush1.bf16.msra.mxu0 %v214
  %290 = vmatprep.subr.bf16.mxu0 0
  %291 = vmatpush1.bf16.msra.mxu0 %v215
  %292 = vmatprep.mubr.bf16.mxu0 %v27
  %293 = vmatmul.mubr.bf16.gmra.mrb[0].mxu0 %v26
  %v294 = vpop.f32.mrb[0].mxu0
  %v295 = vadd.f32 0.0, %v294
  %v296 = vpop.f32.mrb[0].mxu0
  %v297 = vpop.f32.mrb[0].mxu0
  %v298 = vadd.f32 0.0, %v297
  %v299 = vpop.f32.mrb[0].mxu0
  %300 = vdwg.mxu0
  %301 = vmatprep.subr.bf16.mxu0 0
  %302 = vmatpush1.bf16.msra.mxu0 %v216
  %303 = vmatprep.subr.bf16.mxu0 0
  %304 = vmatpush1.bf16.msra.mxu0 %v217
  %305 = vmatprep.subr.bf16.mxu0 0
  %306 = vmatpush1.bf16.msra.mxu0 %v218
  %307 = vmatprep.subr.bf16.mxu0 0
  %308 = vmatpush1.bf16.msra.mxu0 %v219
  %309 = vmatprep.subr.bf16.mxu0 0
  %310 = vmatpush1.bf16.msra.mxu0 %v220
  %311 = vmatprep.subr.bf16.mxu0 0
  %312 = vmatpush1.bf16.msra.mxu0 %v221
  %313 = vmatprep.subr.bf16.mxu0 0
  %314 = vmatpush1.bf16.msra.mxu0 %v222
  %315 = vmatprep.subr.bf16.mxu0 0
  %316 = vmatpush1.bf16.msra.mxu0 %v223
  %317 = vmatprep.subr.bf16.mxu0 0
  %318 = vmatpush1.bf16.msra.mxu0 %v224
  %319 = vmatprep.subr.bf16.mxu0 0
  %320 = vmatpush1.bf16.msra.mxu0 %v225
  %321 = vmatprep.subr.bf16.mxu0 0
  %322 = vmatpush1.bf16.msra.mxu0 %v226
  %323 = vmatprep.subr.bf16.mxu0 0
  %324 = vmatpush1.bf16.msra.mxu0 %v227
  %325 = vmatprep.subr.bf16.mxu0 0
  %326 = vmatpush1.bf16.msra.mxu0 0
  %327 = vmatprep.subr.bf16.mxu0 0
  %328 = vmatpush1.bf16.msra.mxu0 0
  %329 = vmatprep.subr.bf16.mxu0 0
  %330 = vmatpush1.bf16.msra.mxu0 0
  %331 = vmatprep.subr.bf16.mxu0 0
  %332 = vmatpush1.bf16.msra.mxu0 0
  %333 = vmatprep.mubr.bf16.mxu0 %v258
  %334 = vmatmul.mubr.bf16.gmra.mrb[0].mxu0 %v28
  %v335 = vpop.f32.mrb[0].mxu0
  %v336 = vadd.f32 %v295, %v335
  %v337 = vpop.f32.mrb[0].mxu0
  %v338 = vpop.f32.mrb[0].mxu0
  %v339 = vadd.f32 %v298, %v338
  %v340 = vpop.f32.mrb[0].mxu0
  %341 = vdwg.mxu0
  %v342 = vadd.f32 %v30, %v336
  %v343 = vadd.f32 %v31, %v339
  %344 = vst [vmem:[#allocation2] sm:$0xff] %v342
  %345 = vst [vmem:[#allocation2 + $0x8] sm:$0xff] %v343
  // Predicated region
  $region14: #{rwkv_forward.34} parent=0 // pred_check
    %p346 = pneg %p12
  $region15: #{rwkv_forward.34} parent=0 // pred_check_branch
    %348 = sbr.rel (%p346) target = $region17
  $region16: #{rwkv_forward.34} parent=0 // pred_region
    %v349 = vld [vmem:[#allocation2] sm:$0xff]
    %v350 = vld [vmem:[#allocation2 + $0x8] sm:$0xff]
    %351 = vst [vmem:[%s2] sm:$0xff] %v349
    %352 = vst [vmem:[%s2 + $0x8] sm:$0xff] %v350
  $region17: #{rwkv_forward.34} parent=0 // pred_fallthru
    _
  // Predicated region
  $region18: #{rwkv_forward.34} parent=0 // pred_check
    _
  $region19: #{rwkv_forward.34} parent=0 // pred_check_branch
    %354 = sbr.rel (0) target = $region21
  $region20: #{rwkv_forward.34} parent=0 // pred_region
    _
  $region21: #{rwkv_forward.34} parent=0 // pred_fallthru
    _
  // Predicated region
  $region22: #{rwkv_forward.34} parent=0 // pred_check
    _
  $region23: #{rwkv_forward.34} parent=0 // pred_check_branch
    %356 = sbr.rel (0) target = $region25
  $region24: #{rwkv_forward.34} parent=0 // pred_region
    _
  $region25: #{rwkv_forward.34} parent=0 // pred_fallthru
    _

// kernel: rwkv_forward.36
$region0: #{rwkv_forward.36}
  #allocation0 [shape = 'u32[]', space=smem, size = 0x4, offset = 0x4, fixed_abs, tag = 'smem constant byte address 0x4 - core index']
  #allocation1 [shape = 'u32[144,128]{1,0:T(1,128)}', space=vmem, size = 0x12000, scoped, tag = 'internal scratch']
  #allocation2 [shape = 'f32[16,128]{1,0:T(8,128)}', space=vmem, size = 0x2000, scoped, tag = 'scratch operand']
  %s0 = inlined_call_operand.vmem [shape: f32[16,128], index: 0, kind: input, shape index: {}]
  %s1 = inlined_call_operand.vmem [shape: f32[16,128], index: 1, kind: input, shape index: {}]
  %s2 = inlined_call_operand.vmem [shape: bf16[128,896], index: 2, kind: input, shape index: {}]
  %s3 = inlined_call_operand.vmem [shape: bf16[128,896], index: 3, kind: input, shape index: {}]
  %s4 = inlined_call_operand.vmem [shape: f32[16,896], index: 4, kind: output, shape index: {}]
  %s5 = sld [smem:[#allocation0]]
  $region173: #{rwkv_forward.36} parent=0
    _
  %s7 = ssub.s32 1, %s5
  %s8 = scalar_select 0, %s7, %s5
  $region1: #{rwkv_forward.36} parent=0
    #allocation3 [shape = 'u8[65536]{0}', space=vmem, size = 0x10000, scoped, tag = 'input window, operand 2']
    #allocation4 [shape = 'u8[65536]{0}', space=vmem, size = 0x10000, scoped, tag = 'input window, operand 3']
    #allocation5 [shape = 'u8[16384]{0}', space=vmem, size = 0x4000, scoped, tag = 'output window, operand 0']
    loop: start=0, step=1, limit=9
    $region2: #{rwkv_forward.36} parent=1 // loop_pre_header
      _
    $region3: #{rwkv_forward.36} parent=1 // loop_header
      %s10 = sphi 0, %s14
      %p11 = scmp.ge.s32.totalorder %s10, 9
      %s17 = sphi 0, %s36
      %s18 = sphi 0, %s32
      %s19 = sphi 0, %s28
      %s20 = sphi 0, %s17
      %s21 = sphi 0, %s18
      %s22 = sphi 0, %s19
      %s23 = sphi 0, %s20
      %s24 = sphi 0, %s21
      %s25 = sphi 0, %s22
      %s41 = sphi 0, %s43
      %s44 = sphi 0, %s41
      %s45 = sphi 0, %s44
      %s61 = sphi 0, %s45
      %s69 = sphi 0, %s71
      %s72 = sphi 0, %s69
      %s73 = sphi 0, %s72
      %s89 = sphi 0, %s73
      %s97 = sphi 0, %s99
      %s100 = sphi 0, %s97
      %s101 = sphi 0, %s100
      %s117 = sphi 0, %s101
      %s125 = sphi 0, %s127
      %s128 = sphi 0, %s125
      %s129 = sphi 0, %s128
      %s145 = sphi 0, %s129
      %s153 = sphi 0, %s155
      %s156 = sphi 0, %s153
      %s157 = sphi 0, %s156
      %s173 = sphi 0, %s157
    $region4: #{rwkv_forward.36} parent=1 // loop_header_branch
      %13 = sbr.rel (%p11) target = $region8
    $region5: #{rwkv_forward.36} parent=1 // loop_body
      %s15 = ssub.s32 %s10, 1
      %s16 = ssub.s32 %s10, 2
      %s26 = sadd.s32 1, %s19
      %p27 = scmp.ge.s32.totalorder %s26, 1
      %s28 = scalar_select %p27, 0, %s26
      %s29 = sadd.s32 1, %s18
      %s30 = scalar_select %p27, %s29, %s18
      %p31 = scmp.ge.s32.totalorder %s30, 7
      %s32 = scalar_select %p31, 0, %s30
      %s33 = sadd.s32 1, %s17
      %s34 = scalar_select %p31, %s33, %s17
      %p35 = scmp.ge.s32.totalorder %s34, 1
      %s36 = scalar_select %p35, 0, %s34
      %s37 = ssub.s32 %s17, %s36
      %s38 = ssub.s32 %s19, %s28
      %s39 = sor.u32 %s37, %s38
      %p40 = scmp.eq.s32.totalorder %s39, 0
      %s42 = sadd.s32 %s41, 1
      %s43 = scalar_select %p40, %s41, %s42
      %p46 = pneg %p40
      %p47 = scmp.eq.s32.totalorder %s10, 6
      %p48 = por %p46, %p47
      %p49 = scmp.ne.s32.totalorder %s41, %s44
      %p50 = scmp.eq.s32.totalorder %s10, 0
      %p51 = por %p49, %p50
      %p52 = scmp.ne.s32.totalorder %s41, %s44
      %p53 = scmp.eq.s32.totalorder %s15, 6
      %p54 = por %p52, %p53
      %p55 = scmp.ne.s32.totalorder %s44, %s45
      %p56 = scmp.eq.s32.totalorder %s15, 0
      %p57 = por %p55, %p56
      %p58 = scmp.ne.s32.totalorder %s44, %s45
      %p59 = scmp.eq.s32.totalorder %s16, 6
      %p60 = por %p58, %p59
      %p62 = scmp.ne.s32.totalorder %s45, %s61
      %p63 = scmp.eq.s32.totalorder %s16, 0
      %p64 = por %p62, %p63
      %s65 = ssub.s32 %s17, %s36
      %s66 = ssub.s32 %s19, %s28
      %s67 = sor.u32 %s65, %s66
      %p68 = scmp.eq.s32.totalorder %s67, 0
      %s70 = sadd.s32 %s69, 1
      %s71 = scalar_select %p68, %s69, %s70
      %p74 = pneg %p68
      %p75 = scmp.eq.s32.totalorder %s10, 6
      %p76 = por %p74, %p75
      %p77 = scmp.ne.s32.totalorder %s69, %s72
      %p78 = scmp.eq.s32.totalorder %s10, 0
      %p79 = por %p77, %p78
      %p80 = scmp.ne.s32.totalorder %s69, %s72
      %p81 = scmp.eq.s32.totalorder %s15, 6
      %p82 = por %p80, %p81
      %p83 = scmp.ne.s32.totalorder %s72, %s73
      %p84 = scmp.eq.s32.totalorder %s15, 0
      %p85 = por %p83, %p84
      %p86 = scmp.ne.s32.totalorder %s72, %s73
      %p87 = scmp.eq.s32.totalorder %s16, 6
      %p88 = por %p86, %p87
      %p90 = scmp.ne.s32.totalorder %s73, %s89
      %p91 = scmp.eq.s32.totalorder %s16, 0
      %p92 = por %p90, %p91
      %s93 = ssub.s32 %s19, %s28
      %s94 = ssub.s32 %s18, %s32
      %s95 = sor.u32 %s93, %s94
      %p96 = scmp.eq.s32.totalorder %s95, 0
      %s98 = sadd.s32 %s97, 1
      %s99 = scalar_select %p96, %s97, %s98
      %p102 = pneg %p96
      %p103 = scmp.eq.s32.totalorder %s10, 6
      %p104 = por %p102, %p103
      %p105 = scmp.ne.s32.totalorder %s97, %s100
      %p106 = scmp.eq.s32.totalorder %s10, 0
      %p107 = por %p105, %p106
      %p108 = scmp.ne.s32.totalorder %s97, %s100
      %p109 = scmp.eq.s32.totalorder %s15, 6
      %p110 = por %p108, %p109
      %p111 = scmp.ne.s32.totalorder %s100, %s101
      %p112 = scmp.eq.s32.totalorder %s15, 0
      %p113 = por %p111, %p112
      %p114 = scmp.ne.s32.totalorder %s100, %s101
      %p115 = scmp.eq.s32.totalorder %s16, 6
      %p116 = por %p114, %p115
      %p118 = scmp.ne.s32.totalorder %s101, %s117
      %p119 = scmp.eq.s32.totalorder %s16, 0
      %p120 = por %p118, %p119
      %s121 = ssub.s32 %s19, %s28
      %s122 = ssub.s32 %s18, %s32
      %s123 = sor.u32 %s121, %s122
      %p124 = scmp.eq.s32.totalorder %s123, 0
      %s126 = sadd.s32 %s125, 1
      %s127 = scalar_select %p124, %s125, %s126
      %p130 = pneg %p124
      %p131 = scmp.eq.s32.totalorder %s10, 6
      %p132 = por %p130, %p131
      %p133 = scmp.ne.s32.totalorder %s125, %s128
      %p134 = scmp.eq.s32.totalorder %s10, 0
      %p135 = por %p133, %p134
      %p136 = scmp.ne.s32.totalorder %s125, %s128
      %p137 = scmp.eq.s32.totalorder %s15, 6
      %p138 = por %p136, %p137
      %p139 = scmp.ne.s32.totalorder %s128, %s129
      %p140 = scmp.eq.s32.totalorder %s15, 0
      %p141 = por %p139, %p140
      %p142 = scmp.ne.s32.totalorder %s128, %s129
      %p143 = scmp.eq.s32.totalorder %s16, 6
      %p144 = por %p142, %p143
      %p146 = scmp.ne.s32.totalorder %s129, %s145
      %p147 = scmp.eq.s32.totalorder %s16, 0
      %p148 = por %p146, %p147
      %s149 = ssub.s32 %s17, %s36
      %s150 = ssub.s32 %s18, %s32
      %s151 = sor.u32 %s149, %s150
      %p152 = scmp.eq.s32.totalorder %s151, 0
      %s154 = sadd.s32 %s153, 1
      %s155 = scalar_select %p152, %s153, %s154
      %p158 = pneg %p152
      %p159 = scmp.eq.s32.totalorder %s10, 6
      %p160 = por %p158, %p159
      %p161 = scmp.ne.s32.totalorder %s153, %s156
      %p162 = scmp.eq.s32.totalorder %s10, 0
      %p163 = por %p161, %p162
      %p164 = scmp.ne.s32.totalorder %s153, %s156
      %p165 = scmp.eq.s32.totalorder %s15, 6
      %p166 = por %p164, %p165
      %p167 = scmp.ne.s32.totalorder %s156, %s157
      %p168 = scmp.eq.s32.totalorder %s15, 0
      %p169 = por %p167, %p168
      %p170 = scmp.ne.s32.totalorder %s156, %s157
      %p171 = scmp.eq.s32.totalorder %s16, 6
      %p172 = por %p170, %p171
      %p174 = scmp.ne.s32.totalorder %s157, %s173
      %p175 = scmp.eq.s32.totalorder %s16, 0
      %p176 = por %p174, %p175
      %p177 = scmp.le.s32.totalorder 1, %s10
      %p178 = scmp.lt.s32.totalorder %s10, 8
      %p179 = pnand %p177, %p178
      %p180 = pneg %p179
      // Predicated region
      $region9: #{rwkv_forward.36} parent=5 // pred_check
        _
      $region10: #{rwkv_forward.36} parent=5 // pred_check_branch
        %182 = sbr.rel (%p179) target = $region12
      $region11: #{rwkv_forward.36} parent=5 // pred_region
        %s183 = ssub.s32 %s10, 1
        // Predicated region
        $region13: #{rwkv_forward.36} parent=11 // pred_check
          %p184 = pneg %p57
        $region14: #{rwkv_forward.36} parent=11 // pred_check_branch
          %186 = sbr.rel (%p184) target = $region16
        $region15: #{rwkv_forward.36} parent=11 // pred_region
          %s187 = smul.u32 2, %s20
          %p188 = scmp.lt.s32.totalorder %s187, 1
          %s189 = scalar_select %p188, %s187, 1
          %p190 = scmp.lt.s32.totalorder %s22, 0
          %s191 = scalar_select %p190, %s22, 0
          %s192 = sadd.s32 %s191, %s189
          %s193 = smul.addr %s192, 8
          %s194 = scalar_lea.vmem %s0, %s193
          %s195 = smul.u32 2, %s20
        $region16: #{rwkv_forward.36} parent=11 // pred_fallthru
          _
        // Predicated region
        $region17: #{rwkv_forward.36} parent=11 // pred_check
          %p196 = pneg %p85
        $region18: #{rwkv_forward.36} parent=11 // pred_check_branch
          %198 = sbr.rel (%p196) target = $region20
        $region19: #{rwkv_forward.36} parent=11 // pred_region
          %s199 = smul.u32 2, %s20
          %p200 = scmp.lt.s32.totalorder %s199, 1
          %s201 = scalar_select %p200, %s199, 1
          %p202 = scmp.lt.s32.totalorder %s22, 0
          %s203 = scalar_select %p202, %s22, 0
          %s204 = sadd.s32 %s203, %s201
          %s205 = smul.addr %s204, 8
          %s206 = scalar_lea.vmem %s1, %s205
          %s207 = smul.u32 2, %s20
        $region20: #{rwkv_forward.36} parent=11 // pred_fallthru
          _
      $region12: #{rwkv_forward.36} parent=5 // pred_fallthru
        _
      %p208 = scmp.lt.s32.totalorder %s10, 7
      // Predicated region
      $region21: #{rwkv_forward.36} parent=5 // pred_check
        %p209 = pneg %p208
      $region22: #{rwkv_forward.36} parent=5 // pred_check_branch
        %211 = sbr.rel (%p209) target = $region24
      $region23: #{rwkv_forward.36} parent=5 // pred_region
        // Predicated region
        $region25: #{rwkv_forward.36} parent=23 // pred_check
          %p212 = pneg %p107
        $region26: #{rwkv_forward.36} parent=23 // pred_check_branch
          %214 = sbr.rel (%p212) target = $region28
        $region27: #{rwkv_forward.36} parent=23 // pred_region
          %s215 = sand.u32 %s97, 1
          %s216 = sand.u32 %s97, 1
          %s217 = smul.addr %s216, 64
          %s218 = scalar_lea.vmem [#allocation3], %s217
          %s219 = smul.u32 16, %s19
          %s220 = smul.addr %s219, 7
          %s221 = sadd.s32 %s18, %s220
          %s222 = smul.addr %s221, 4
          %s223 = scalar_lea.vmem %s2, %s222
          // Predicated region
          $region29: #{rwkv_forward.36} parent=27 // pred_check
            _
          $region30: #{rwkv_forward.36} parent=27 // pred_check_branch
            %225 = sbr.rel (0) target = $region32
          $region31: #{rwkv_forward.36} parent=27 // pred_region
            // Predicated region
            $region33: #{rwkv_forward.36} parent=31 // pred_check
              _
            $region34: #{rwkv_forward.36} parent=31 // pred_check_branch
              %227 = sbr.rel target = $region36
            $region35: #{rwkv_forward.36} parent=31 // pred_region
              // Predicated region
              $region48: #{rwkv_forward.36} parent=35 // pred_check
                _
              $region49: #{rwkv_forward.36} parent=35 // pred_check_branch
                %272 = sbr.rel (0) target = $region51
              $region50: #{rwkv_forward.36} parent=35 // pred_region
                loop: start=0, step=1, limit=1
                $region52: #{rwkv_forward.36} parent=50 // loop_pre_header
                  _
                $region53: #{rwkv_forward.36} parent=50 // loop_header
                  %s274 = sphi 0, %s278
                  %p275 = scmp.ge.s32.totalorder %s274, 1
                  %s279 = sphi %s223, %s223
                  %s280 = sphi %s218, %s218
                $region54: #{rwkv_forward.36} parent=50 // loop_header_branch
                  %277 = sbr.rel (%p275) target = $region58
                $region55: #{rwkv_forward.36} parent=50 // loop_body
                  _
                $region56: #{rwkv_forward.36} parent=50 // loop_footer
                  %s278 = sadd.s32 1, %s274
                $region57: #{rwkv_forward.36} parent=50 // loop_footer_branch
                  %273 = sbr.rel target = $region53
                $region58: #{rwkv_forward.36} parent=50 // loop_exit
                  _
                loop: start=0, step=1, limit=1
                $region59: #{rwkv_forward.36} parent=50 // loop_pre_header
                  _
                $region60: #{rwkv_forward.36} parent=50 // loop_header
                  %s283 = sphi 0, %s287
                  %p284 = scmp.ge.s32.totalorder %s283, 1
                  %s288 = sphi %s223, %s223
                  %s289 = sphi %s218, %s218
                $region61: #{rwkv_forward.36} parent=50 // loop_header_branch
                  %286 = sbr.rel (%p284) target = $region65
                $region62: #{rwkv_forward.36} parent=50 // loop_body
                  %v290 = vld [vmem:[%s288] sm:$0xf]
                  %291 = vst [vmem:[%s289] sm:$0xf] %v290
                  %v292 = vld [vmem:[%s288 + $0x1c] sm:$0xf]
                  %293 = vst [vmem:[%s289 + $0x4] sm:$0xf] %v292
                  %v294 = vld [vmem:[%s288 + $0x38] sm:$0xf]
                  %295 = vst [vmem:[%s289 + $0x8] sm:$0xf] %v294
                  %v296 = vld [vmem:[%s288 + $0x54] sm:$0xf]
                  %297 = vst [vmem:[%s289 + $0xc] sm:$0xf] %v296
                  %v298 = vld [vmem:[%s288 + $0x70] sm:$0xf]
                  %299 = vst [vmem:[%s289 + $0x10] sm:$0xf] %v298
                  %v300 = vld [vmem:[%s288 + $0x8c] sm:$0xf]
                  %301 = vst [vmem:[%s289 + $0x14] sm:$0xf] %v300
                  %v302 = vld [vmem:[%s288 + $0xa8] sm:$0xf]
                  %303 = vst [vmem:[%s289 + $0x18] sm:$0xf] %v302
                  %v304 = vld [vmem:[%s288 + $0xc4] sm:$0xf]
                  %305 = vst [vmem:[%s289 + $0x1c] sm:$0xf] %v304
                  %v306 = vld [vmem:[%s288 + $0xe0] sm:$0xf]
                  %307 = vst [vmem:[%s289 + $0x20] sm:$0xf] %v306
                  %v308 = vld [vmem:[%s288 + $0xfc] sm:$0xf]
                  %309 = vst [vmem:[%s289 + $0x24] sm:$0xf] %v308
                  %v310 = vld [vmem:[%s288 + $0x118] sm:$0xf]
                  %311 = vst [vmem:[%s289 + $0x28] sm:$0xf] %v310
                  %v312 = vld [vmem:[%s288 + $0x134] sm:$0xf]
                  %313 = vst [vmem:[%s289 + $0x2c] sm:$0xf] %v312
                  %v314 = vld [vmem:[%s288 + $0x150] sm:$0xf]
                  %315 = vst [vmem:[%s289 + $0x30] sm:$0xf] %v314
                  %v316 = vld [vmem:[%s288 + $0x16c] sm:$0xf]
                  %317 = vst [vmem:[%s289 + $0x34] sm:$0xf] %v316
                  %v318 = vld [vmem:[%s288 + $0x188] sm:$0xf]
                  %319 = vst [vmem:[%s289 + $0x38] sm:$0xf] %v318
                  %v320 = vld [vmem:[%s288 + $0x1a4] sm:$0xf]
                  %321 = vst [vmem:[%s289 + $0x3c] sm:$0xf] %v320
                $region63: #{rwkv_forward.36} parent=50 // loop_footer
                  %s287 = sadd.s32 1, %s283
                $region64: #{rwkv_forward.36} parent=50 // loop_footer_branch
                  %282 = sbr.rel target = $region60
                $region65: #{rwkv_forward.36} parent=50 // loop_exit
                  _
              $region51: #{rwkv_forward.36} parent=35 // pred_fallthru
                _
            $region36: #{rwkv_forward.36} parent=31 // pred_fallthru
              _
            // Predicated region
            $region37: #{rwkv_forward.36} parent=31 // pred_check
              _
            $region38: #{rwkv_forward.36} parent=31 // pred_check_branch
              %229 = sbr.rel (0) target = $region40
            $region39: #{rwkv_forward.36} parent=31 // pred_region
              loop: start=0, step=1, limit=1
              $region41: #{rwkv_forward.36} parent=39 // loop_pre_header
                _
              $region42: #{rwkv_forward.36} parent=39 // loop_header
                %s232 = sphi 0, %s236
                %p233 = scmp.ge.s32.totalorder %s232, 1
                %s237 = sphi %s223, %s223
                %s238 = sphi %s218, %s218
              $region43: #{rwkv_forward.36} parent=39 // loop_header_branch
                %235 = sbr.rel (%p233) target = $region47
              $region44: #{rwkv_forward.36} parent=39 // loop_body
                %v239 = vld [vmem:[%s237] sm:$0xf]
                %240 = vst [vmem:[%s238] sm:$0xf] %v239
                %v241 = vld [vmem:[%s237 + $0x1c] sm:$0xf]
                %242 = vst [vmem:[%s238 + $0x4] sm:$0xf] %v241
                %v243 = vld [vmem:[%s237 + $0x38] sm:$0xf]
                %244 = vst [vmem:[%s238 + $0x8] sm:$0xf] %v243
                %v245 = vld [vmem:[%s237 + $0x54] sm:$0xf]
                %246 = vst [vmem:[%s238 + $0xc] sm:$0xf] %v245
                %v247 = vld [vmem:[%s237 + $0x70] sm:$0xf]
                %248 = vst [vmem:[%s238 + $0x10] sm:$0xf] %v247
                %v249 = vld [vmem:[%s237 + $0x8c] sm:$0xf]
                %250 = vst [vmem:[%s238 + $0x14] sm:$0xf] %v249
                %v251 = vld [vmem:[%s237 + $0xa8] sm:$0xf]
                %252 = vst [vmem:[%s238 + $0x18] sm:$0xf] %v251
                %v253 = vld [vmem:[%s237 + $0xc4] sm:$0xf]
                %254 = vst [vmem:[%s238 + $0x1c] sm:$0xf] %v253
                %v255 = vld [vmem:[%s237 + $0xe0] sm:$0xf]
                %256 = vst [vmem:[%s238 + $0x20] sm:$0xf] %v255
                %v257 = vld [vmem:[%s237 + $0xfc] sm:$0xf]
                %258 = vst [vmem:[%s238 + $0x24] sm:$0xf] %v257
                %v259 = vld [vmem:[%s237 + $0x118] sm:$0xf]
                %260 = vst [vmem:[%s238 + $0x28] sm:$0xf] %v259
                %v261 = vld [vmem:[%s237 + $0x134] sm:$0xf]
                %262 = vst [vmem:[%s238 + $0x2c] sm:$0xf] %v261
                %v263 = vld [vmem:[%s237 + $0x150] sm:$0xf]
                %264 = vst [vmem:[%s238 + $0x30] sm:$0xf] %v263
                %v265 = vld [vmem:[%s237 + $0x16c] sm:$0xf]
                %266 = vst [vmem:[%s238 + $0x34] sm:$0xf] %v265
                %v267 = vld [vmem:[%s237 + $0x188] sm:$0xf]
                %268 = vst [vmem:[%s238 + $0x38] sm:$0xf] %v267
                %v269 = vld [vmem:[%s237 + $0x1a4] sm:$0xf]
                %270 = vst [vmem:[%s238 + $0x3c] sm:$0xf] %v269
              $region45: #{rwkv_forward.36} parent=39 // loop_footer
                %s236 = sadd.s32 1, %s232
              $region46: #{rwkv_forward.36} parent=39 // loop_footer_branch
                %231 = sbr.rel target = $region42
              $region47: #{rwkv_forward.36} parent=39 // loop_exit
                _
            $region40: #{rwkv_forward.36} parent=31 // pred_fallthru
              _
          $region32: #{rwkv_forward.36} parent=27 // pred_fallthru
            _
          %322 = vnop
        $region28: #{rwkv_forward.36} parent=23 // pred_fallthru
          _
        // Predicated region
        $region66: #{rwkv_forward.36} parent=23 // pred_check
          %p323 = pneg %p135
        $region67: #{rwkv_forward.36} parent=23 // pred_check_branch
          %325 = sbr.rel (%p323) target = $region69
        $region68: #{rwkv_forward.36} parent=23 // pred_region
          %s326 = sand.u32 %s125, 1
          %s327 = sand.u32 %s125, 1
          %s328 = smul.addr %s327, 64
          %s329 = scalar_lea.vmem [#allocation4], %s328
          %s330 = smul.u32 16, %s19
          %s331 = smul.addr %s330, 7
          %s332 = sadd.s32 %s18, %s331
          %s333 = smul.addr %s332, 4
          %s334 = scalar_lea.vmem %s3, %s333
          // Predicated region
          $region70: #{rwkv_forward.36} parent=68 // pred_check
            _
          $region71: #{rwkv_forward.36} parent=68 // pred_check_branch
            %336 = sbr.rel (0) target = $region73
          $region72: #{rwkv_forward.36} parent=68 // pred_region
            // Predicated region
            $region74: #{rwkv_forward.36} parent=72 // pred_check
              _
            $region75: #{rwkv_forward.36} parent=72 // pred_check_branch
              %338 = sbr.rel target = $region77
            $region76: #{rwkv_forward.36} parent=72 // pred_region
              // Predicated region
              $region89: #{rwkv_forward.36} parent=76 // pred_check
                _
              $region90: #{rwkv_forward.36} parent=76 // pred_check_branch
                %383 = sbr.rel (0) target = $region92
              $region91: #{rwkv_forward.36} parent=76 // pred_region
                loop: start=0, step=1, limit=1
                $region93: #{rwkv_forward.36} parent=91 // loop_pre_header
                  _
                $region94: #{rwkv_forward.36} parent=91 // loop_header
                  %s385 = sphi 0, %s389
                  %p386 = scmp.ge.s32.totalorder %s385, 1
                  %s390 = sphi %s334, %s334
                  %s391 = sphi %s329, %s329
                $region95: #{rwkv_forward.36} parent=91 // loop_header_branch
                  %388 = sbr.rel (%p386) target = $region99
                $region96: #{rwkv_forward.36} parent=91 // loop_body
                  _
                $region97: #{rwkv_forward.36} parent=91 // loop_footer
                  %s389 = sadd.s32 1, %s385
                $region98: #{rwkv_forward.36} parent=91 // loop_footer_branch
                  %384 = sbr.rel target = $region94
                $region99: #{rwkv_forward.36} parent=91 // loop_exit
                  _
                loop: start=0, step=1, limit=1
                $region100: #{rwkv_forward.36} parent=91 // loop_pre_header
                  _
                $region101: #{rwkv_forward.36} parent=91 // loop_header
                  %s394 = sphi 0, %s398
                  %p395 = scmp.ge.s32.totalorder %s394, 1
                  %s399 = sphi %s334, %s334
                  %s400 = sphi %s329, %s329
                $region102: #{rwkv_forward.36} parent=91 // loop_header_branch
                  %397 = sbr.rel (%p395) target = $region106
                $region103: #{rwkv_forward.36} parent=91 // loop_body
                  %v401 = vld [vmem:[%s399] sm:$0xf]
                  %402 = vst [vmem:[%s400] sm:$0xf] %v401
                  %v403 = vld [vmem:[%s399 + $0x1c] sm:$0xf]
                  %404 = vst [vmem:[%s400 + $0x4] sm:$0xf] %v403
                  %v405 = vld [vmem:[%s399 + $0x38] sm:$0xf]
                  %406 = vst [vmem:[%s400 + $0x8] sm:$0xf] %v405
                  %v407 = vld [vmem:[%s399 + $0x54] sm:$0xf]
                  %408 = vst [vmem:[%s400 + $0xc] sm:$0xf] %v407
                  %v409 = vld [vmem:[%s399 + $0x70] sm:$0xf]
                  %410 = vst [vmem:[%s400 + $0x10] sm:$0xf] %v409
                  %v411 = vld [vmem:[%s399 + $0x8c] sm:$0xf]
                  %412 = vst [vmem:[%s400 + $0x14] sm:$0xf] %v411
                  %v413 = vld [vmem:[%s399 + $0xa8] sm:$0xf]
                  %414 = vst [vmem:[%s400 + $0x18] sm:$0xf] %v413
                  %v415 = vld [vmem:[%s399 + $0xc4] sm:$0xf]
                  %416 = vst [vmem:[%s400 + $0x1c] sm:$0xf] %v415
                  %v417 = vld [vmem:[%s399 + $0xe0] sm:$0xf]
                  %418 = vst [vmem:[%s400 + $0x20] sm:$0xf] %v417
                  %v419 = vld [vmem:[%s399 + $0xfc] sm:$0xf]
                  %420 = vst [vmem:[%s400 + $0x24] sm:$0xf] %v419
                  %v421 = vld [vmem:[%s399 + $0x118] sm:$0xf]
                  %422 = vst [vmem:[%s400 + $0x28] sm:$0xf] %v421
                  %v423 = vld [vmem:[%s399 + $0x134] sm:$0xf]
                  %424 = vst [vmem:[%s400 + $0x2c] sm:$0xf] %v423
                  %v425 = vld [vmem:[%s399 + $0x150] sm:$0xf]
                  %426 = vst [vmem:[%s400 + $0x30] sm:$0xf] %v425
                  %v427 = vld [vmem:[%s399 + $0x16c] sm:$0xf]
                  %428 = vst [vmem:[%s400 + $0x34] sm:$0xf] %v427
                  %v429 = vld [vmem:[%s399 + $0x188] sm:$0xf]
                  %430 = vst [vmem:[%s400 + $0x38] sm:$0xf] %v429
                  %v431 = vld [vmem:[%s399 + $0x1a4] sm:$0xf]
                  %432 = vst [vmem:[%s400 + $0x3c] sm:$0xf] %v431
                $region104: #{rwkv_forward.36} parent=91 // loop_footer
                  %s398 = sadd.s32 1, %s394
                $region105: #{rwkv_forward.36} parent=91 // loop_footer_branch
                  %393 = sbr.rel target = $region101
                $region106: #{rwkv_forward.36} parent=91 // loop_exit
                  _
              $region92: #{rwkv_forward.36} parent=76 // pred_fallthru
                _
            $region77: #{rwkv_forward.36} parent=72 // pred_fallthru
              _
            // Predicated region
            $region78: #{rwkv_forward.36} parent=72 // pred_check
              _
            $region79: #{rwkv_forward.36} parent=72 // pred_check_branch
              %340 = sbr.rel (0) target = $region81
            $region80: #{rwkv_forward.36} parent=72 // pred_region
              loop: start=0, step=1, limit=1
              $region82: #{rwkv_forward.36} parent=80 // loop_pre_header
                _
              $region83: #{rwkv_forward.36} parent=80 // loop_header
                %s343 = sphi 0, %s347
                %p344 = scmp.ge.s32.totalorder %s343, 1
                %s348 = sphi %s334, %s334
                %s349 = sphi %s329, %s329
              $region84: #{rwkv_forward.36} parent=80 // loop_header_branch
                %346 = sbr.rel (%p344) target = $region88
              $region85: #{rwkv_forward.36} parent=80 // loop_body
                %v350 = vld [vmem:[%s348] sm:$0xf]
                %351 = vst [vmem:[%s349] sm:$0xf] %v350
                %v352 = vld [vmem:[%s348 + $0x1c] sm:$0xf]
                %353 = vst [vmem:[%s349 + $0x4] sm:$0xf] %v352
                %v354 = vld [vmem:[%s348 + $0x38] sm:$0xf]
                %355 = vst [vmem:[%s349 + $0x8] sm:$0xf] %v354
                %v356 = vld [vmem:[%s348 + $0x54] sm:$0xf]
                %357 = vst [vmem:[%s349 + $0xc] sm:$0xf] %v356
                %v358 = vld [vmem:[%s348 + $0x70] sm:$0xf]
                %359 = vst [vmem:[%s349 + $0x10] sm:$0xf] %v358
                %v360 = vld [vmem:[%s348 + $0x8c] sm:$0xf]
                %361 = vst [vmem:[%s349 + $0x14] sm:$0xf] %v360
                %v362 = vld [vmem:[%s348 + $0xa8] sm:$0xf]
                %363 = vst [vmem:[%s349 + $0x18] sm:$0xf] %v362
                %v364 = vld [vmem:[%s348 + $0xc4] sm:$0xf]
                %365 = vst [vmem:[%s349 + $0x1c] sm:$0xf] %v364
                %v366 = vld [vmem:[%s348 + $0xe0] sm:$0xf]
                %367 = vst [vmem:[%s349 + $0x20] sm:$0xf] %v366
                %v368 = vld [vmem:[%s348 + $0xfc] sm:$0xf]
                %369 = vst [vmem:[%s349 + $0x24] sm:$0xf] %v368
                %v370 = vld [vmem:[%s348 + $0x118] sm:$0xf]
                %371 = vst [vmem:[%s349 + $0x28] sm:$0xf] %v370
                %v372 = vld [vmem:[%s348 + $0x134] sm:$0xf]
                %373 = vst [vmem:[%s349 + $0x2c] sm:$0xf] %v372
                %v374 = vld [vmem:[%s348 + $0x150] sm:$0xf]
                %375 = vst [vmem:[%s349 + $0x30] sm:$0xf] %v374
                %v376 = vld [vmem:[%s348 + $0x16c] sm:$0xf]
                %377 = vst [vmem:[%s349 + $0x34] sm:$0xf] %v376
                %v378 = vld [vmem:[%s348 + $0x188] sm:$0xf]
                %379 = vst [vmem:[%s349 + $0x38] sm:$0xf] %v378
                %v380 = vld [vmem:[%s348 + $0x1a4] sm:$0xf]
                %381 = vst [vmem:[%s349 + $0x3c] sm:$0xf] %v380
              $region86: #{rwkv_forward.36} parent=80 // loop_footer
                %s347 = sadd.s32 1, %s343
              $region87: #{rwkv_forward.36} parent=80 // loop_footer_branch
                %342 = sbr.rel target = $region83
              $region88: #{rwkv_forward.36} parent=80 // loop_exit
                _
            $region81: #{rwkv_forward.36} parent=72 // pred_fallthru
              _
          $region73: #{rwkv_forward.36} parent=68 // pred_fallthru
            _
          %433 = vnop
        $region69: #{rwkv_forward.36} parent=23 // pred_fallthru
          _
      $region24: #{rwkv_forward.36} parent=5 // pred_fallthru
        _
      %p434 = scmp.le.s32.totalorder 1, %s10
      %p435 = scmp.lt.s32.totalorder %s10, 8
      %p436 = pnand %p434, %p435
      %p437 = pneg %p436
      // Predicated region
      $region107: #{rwkv_forward.36} parent=5 // pred_check
        _
      $region108: #{rwkv_forward.36} parent=5 // pred_check_branch
        %439 = sbr.rel (%p436) target = $region110
      $region109: #{rwkv_forward.36} parent=5 // pred_region
        %s440 = ssub.s32 %s10, 1
        %s441 = sand.u32 %s100, 1
        %s442 = sand.u32 %s100, 1
        %s443 = smul.addr %s442, 64
        %s444 = scalar_lea.vmem [#allocation3], %s443
        // Predicated region
        $region111: #{rwkv_forward.36} parent=109 // pred_check
          %p445 = pneg %p113
        $region112: #{rwkv_forward.36} parent=109 // pred_check_branch
          %447 = sbr.rel (%p445) target = $region114
        $region113: #{rwkv_forward.36} parent=109 // pred_region
          _
        $region114: #{rwkv_forward.36} parent=109 // pred_fallthru
          _
        %s448 = sand.u32 %s128, 1
        %s449 = sand.u32 %s128, 1
        %s450 = smul.addr %s449, 64
        %s451 = scalar_lea.vmem [#allocation4], %s450
        // Predicated region
        $region115: #{rwkv_forward.36} parent=109 // pred_check
          %p452 = pneg %p141
        $region116: #{rwkv_forward.36} parent=109 // pred_check_branch
          %454 = sbr.rel (%p452) target = $region118
        $region117: #{rwkv_forward.36} parent=109 // pred_region
          _
        $region118: #{rwkv_forward.36} parent=109 // pred_fallthru
          _
        %s455 = smul.u32 2, %s20
        %p456 = scmp.lt.s32.totalorder %s455, 1
        %s457 = scalar_select %p456, %s455, 1
        %p458 = scmp.lt.s32.totalorder %s22, 0
        %s459 = scalar_select %p458, %s22, 0
        %s460 = sadd.s32 %s459, %s457
        %s461 = smul.addr %s460, 8
        %s462 = scalar_lea.vmem %s0, %s461
        %p463 = pneg %p57
        %p464 = pneg %p54
        %s465 = smul.u32 2, %s20
        %p466 = scmp.lt.s32.totalorder %s465, 1
        %s467 = scalar_select %p466, %s465, 1
        %p468 = scmp.lt.s32.totalorder %s22, 0
        %s469 = scalar_select %p468, %s22, 0
        %s470 = sadd.s32 %s469, %s467
        %s471 = smul.addr %s470, 8
        %s472 = scalar_lea.vmem %s1, %s471
        %p473 = pneg %p85
        %p474 = pneg %p82
        %s475 = sand.u32 %s100, 1
        %s476 = sand.u32 %s100, 1
        %s477 = smul.addr %s476, 64
        %s478 = scalar_lea.vmem [#allocation3], %s477
        %p479 = pneg %p113
        %p480 = pneg %p110
        %s481 = sand.u32 %s128, 1
        %s482 = sand.u32 %s128, 1
        %s483 = smul.addr %s482, 64
        %s484 = scalar_lea.vmem [#allocation4], %s483
        %p485 = pneg %p141
        %p486 = pneg %p138
        %p487 = pneg %p169
        %p488 = pneg %p166
        %s489 = sand.u32 %s156, 1
        %s490 = sand.u32 %s156, 1
        %s491 = smul.addr %s490, 16
        %s492 = scalar_lea.vmem [#allocation5], %s491
        %s493 = smul.u32 2, %s20
        %p494 = scmp.lt.s32.totalorder %s493, 1
        %s495 = scalar_select %p494, %s493, 1
        %p496 = scmp.lt.s32.totalorder %s22, 0
        %s497 = scalar_select %p496, %s22, 0
        %s498 = sadd.s32 %s497, %s495
        %s499 = smul.addr %s498, 8
        %s500 = scalar_lea.vmem %s0, %s499
        %s501 = smul.u32 2, %s20
        %s502 = smul.u32 2, %s20
        %p503 = scmp.lt.s32.totalorder %s502, 1
        %s504 = scalar_select %p503, %s502, 1
        %p505 = scmp.lt.s32.totalorder %s22, 0
        %s506 = scalar_select %p505, %s22, 0
        %s507 = sadd.s32 %s506, %s504
        %s508 = smul.addr %s507, 8
        %s509 = scalar_lea.vmem %s1, %s508
        %s510 = smul.u32 2, %s20
        %s511 = smul.u32 16, %s22
        %s512 = smul.u32 16, %s22
        %s513 = smul.u32 2, %s20
        %p515 = scmp.eq.s32.totalorder %s22, 0
        // Predicated region
        $region119: #{rwkv_forward.36} parent=109 // pred_check
          %p516 = pneg %p515
        $region120: #{rwkv_forward.36} parent=109 // pred_check_branch
          %518 = sbr.rel (%p516) target = $region122
        $region121: #{rwkv_forward.36} parent=109 // pred_region
          %519 = vst [vmem:[#allocation2] sm:$0xff] 0.0
          %520 = vst [vmem:[#allocation2 + $0x8] sm:$0xff] 0.0
        $region122: #{rwkv_forward.36} parent=109 // pred_fallthru
          _
        %v521 = vld [vmem:[#allocation2] sm:$0xff]
        %v522 = vld [vmem:[#allocation2 + $0x8] sm:$0xff]
        %v523 = vld [vmem:[%s500] sm:$0xff]
        %v524 = vld [vmem:[%s500 + $0x8] sm:$0xff]
        %v525 = vpack.c.bf16 %v524, %v523
        %v526 = vld [vmem:[%s444] sm:$0xf]
        %v527 = vld [vmem:[%s444 + $0x4] sm:$0xf]
        %v528 = vld [vmem:[%s444 + $0x8] sm:$0xf]
        %v529 = vld [vmem:[%s444 + $0xc] sm:$0xf]
        %v530 = vld [vmem:[%s444 + $0x10] sm:$0xf]
        %v531 = vld [vmem:[%s444 + $0x14] sm:$0xf]
        %v532 = vld [vmem:[%s444 + $0x18] sm:$0xf]
        %v533 = vld [vmem:[%s444 + $0x1c] sm:$0xf]
        %v534 = vld [vmem:[%s444 + $0x20] sm:$0xf]
        %v535 = vld [vmem:[%s444 + $0x24] sm:$0xf]
        %v536 = vld [vmem:[%s444 + $0x28] sm:$0xf]
        %v537 = vld [vmem:[%s444 + $0x2c] sm:$0xf]
        %v538 = vld [vmem:[%s444 + $0x30] sm:$0xf]
        %v539 = vld [vmem:[%s444 + $0x34] sm:$0xf]
        %v540 = vld [vmem:[%s444 + $0x38] sm:$0xf]
        %v541 = vld [vmem:[%s444 + $0x3c] sm:$0xf]
        %v558 = vunpack.c.l.b16 %v526
        %v559 = vunpack.c.l.b16 %v527
        %v560 = vunpack.c.l.b16 %v528
        %v561 = vunpack.c.l.b16 %v529
        %v562 = vunpack.c.l.b16 %v530
        %v563 = vunpack.c.l.b16 %v531
        %v564 = vunpack.c.l.b16 %v532
        %v565 = vunpack.c.l.b16 %v533
        %v566 = vunpack.c.l.b16 %v534
        %v567 = vunpack.c.l.b16 %v535
        %v568 = vunpack.c.l.b16 %v536
        %v569 = vunpack.c.l.b16 %v537
        %v570 = vunpack.c.l.b16 %v538
        %v571 = vunpack.c.l.b16 %v539
        %v572 = vunpack.c.l.b16 %v540
        %v573 = vunpack.c.l.b16 %v541
        %v574 = vpack.c.b16 %v559, %v558
        %v575 = vpack.c.b16 %v561, %v560
        %v576 = vpack.c.b16 %v563, %v562
        %v577 = vpack.c.b16 %v565, %v564
        %v578 = vpack.c.b16 %v567, %v566
        %v579 = vpack.c.b16 %v569, %v568
        %v580 = vpack.c.b16 %v571, %v570
        %v581 = vpack.c.b16 %v573, %v572
        %590 = vmatprep.subr.bf16.mxu0 0
        %591 = vmatpush1.bf16.msra.mxu0 %v574
        %592 = vmatprep.subr.bf16.mxu0 0
        %593 = vmatpush1.bf16.msra.mxu0 %v575
        %594 = vmatprep.subr.bf16.mxu0 0
        %595 = vmatpush1.bf16.msra.mxu0 %v576
        %596 = vmatprep.subr.bf16.mxu0 0
        %597 = vmatpush1.bf16.msra.mxu0 %v577
        %598 = vmatprep.subr.bf16.mxu0 0
        %599 = vmatpush1.bf16.msra.mxu0 %v578
        %600 = vmatprep.subr.bf16.mxu0 0
        %601 = vmatpush1.bf16.msra.mxu0 %v579
        %602 = vmatprep.subr.bf16.mxu0 0
        %603 = vmatpush1.bf16.msra.mxu0 %v580
        %604 = vmatprep.subr.bf16.mxu0 0
        %605 = vmatpush1.bf16.msra.mxu0 %v581
        %606 = vmatprep.subr.bf16.mxu0 0
        %607 = vmatpush1.bf16.msra.mxu0 0
        %608 = vmatprep.subr.bf16.mxu0 0
        %609 = vmatpush1.bf16.msra.mxu0 0
        %610 = vmatprep.subr.bf16.mxu0 0
        %611 = vmatpush1.bf16.msra.mxu0 0
        %612 = vmatprep.subr.bf16.mxu0 0
        %613 = vmatpush1.bf16.msra.mxu0 0
        %614 = vmatprep.subr.bf16.mxu0 0
        %615 = vmatpush1.bf16.msra.mxu0 0
        %616 = vmatprep.subr.bf16.mxu0 0
        %617 = vmatpush1.bf16.msra.mxu0 0
        %618 = vmatprep.subr.bf16.mxu0 0
        %619 = vmatpush1.bf16.msra.mxu0 0
        %620 = vmatprep.subr.bf16.mxu0 0
        %621 = vmatpush1.bf16.msra.mxu0 0
        %622 = vmatprep.mubr.bf16.mxu0 0
        %623 = vmatmul.mubr.bf16.gmra.mrb[0].mxu0 %v525
        %v624 = vpop.f32.mrb[0].mxu0
        %v625 = vadd.f32 0.0, %v624
        %v626 = vpop.f32.mrb[0].mxu0
        %v627 = vpop.f32.mrb[0].mxu0
        %v628 = vadd.f32 0.0, %v627
        %v629 = vpop.f32.mrb[0].mxu0
        %630 = vdwg.mxu0
        %v631 = vadd.f32 %v521, %v625
        %v632 = vadd.f32 %v522, %v628
        %633 = vst [vmem:[#allocation2] sm:$0xff] %v631
        %634 = vst [vmem:[#allocation2 + $0x8] sm:$0xff] %v632
        %v635 = vld [vmem:[#allocation2] sm:$0xff]
        %v636 = vld [vmem:[#allocation2 + $0x8] sm:$0xff]
        %v637 = vld [vmem:[%s509] sm:$0xff]
        %v638 = vld [vmem:[%s509 + $0x8] sm:$0xff]
        %v639 = vpack.c.bf16 %v638, %v637
        %v640 = vld [vmem:[%s451] sm:$0xf]
        %v641 = vld [vmem:[%s451 + $0x4] sm:$0xf]
        %v642 = vld [vmem:[%s451 + $0x8] sm:$0xf]
        %v643 = vld [vmem:[%s451 + $0xc] sm:$0xf]
        %v644 = vld [vmem:[%s451 + $0x10] sm:$0xf]
        %v645 = vld [vmem:[%s451 + $0x14] sm:$0xf]
        %v646 = vld [vmem:[%s451 + $0x18] sm:$0xf]
        %v647 = vld [vmem:[%s451 + $0x1c] sm:$0xf]
        %v648 = vld [vmem:[%s451 + $0x20] sm:$0xf]
        %v649 = vld [vmem:[%s451 + $0x24] sm:$0xf]
        %v650 = vld [vmem:[%s451 + $0x28] sm:$0xf]
        %v651 = vld [vmem:[%s451 + $0x2c] sm:$0xf]
        %v652 = vld [vmem:[%s451 + $0x30] sm:$0xf]
        %v653 = vld [vmem:[%s451 + $0x34] sm:$0xf]
        %v654 = vld [vmem:[%s451 + $0x38] sm:$0xf]
        %v655 = vld [vmem:[%s451 + $0x3c] sm:$0xf]
        %v672 = vunpack.c.l.b16 %v640
        %v673 = vunpack.c.l.b16 %v641
        %v674 = vunpack.c.l.b16 %v642
        %v675 = vunpack.c.l.b16 %v643
        %v676 = vunpack.c.l.b16 %v644
        %v677 = vunpack.c.l.b16 %v645
        %v678 = vunpack.c.l.b16 %v646
        %v679 = vunpack.c.l.b16 %v647
        %v680 = vunpack.c.l.b16 %v648
        %v681 = vunpack.c.l.b16 %v649
        %v682 = vunpack.c.l.b16 %v650
        %v683 = vunpack.c.l.b16 %v651
        %v684 = vunpack.c.l.b16 %v652
        %v685 = vunpack.c.l.b16 %v653
        %v686 = vunpack.c.l.b16 %v654
        %v687 = vunpack.c.l.b16 %v655
        %v688 = vpack.c.b16 %v673, %v672
        %v689 = vpack.c.b16 %v675, %v674
        %v690 = vpack.c.b16 %v677, %v676
        %v691 = vpack.c.b16 %v679, %v678
        %v692 = vpack.c.b16 %v681, %v680
        %v693 = vpack.c.b16 %v683, %v682
        %v694 = vpack.c.b16 %v685, %v684
        %v695 = vpack.c.b16 %v687, %v686
        %704 = vmatprep.subr.bf16.mxu0 0
        %705 = vmatpush1.bf16.msra.mxu0 %v688
        %706 = vmatprep.subr.bf16.mxu0 0
        %707 = vmatpush1.bf16.msra.mxu0 %v689
        %708 = vmatprep.subr.bf16.mxu0 0
        %709 = vmatpush1.bf16.msra.mxu0 %v690
        %710 = vmatprep.subr.bf16.mxu0 0
        %711 = vmatpush1.bf16.msra.mxu0 %v691
        %712 = vmatprep.subr.bf16.mxu0 0
        %713 = vmatpush1.bf16.msra.mxu0 %v692
        %714 = vmatprep.subr.bf16.mxu0 0
        %715 = vmatpush1.bf16.msra.mxu0 %v693
        %716 = vmatprep.subr.bf16.mxu0 0
        %717 = vmatpush1.bf16.msra.mxu0 %v694
        %718 = vmatprep.subr.bf16.mxu0 0
        %719 = vmatpush1.bf16.msra.mxu0 %v695
        %720 = vmatprep.subr.bf16.mxu0 0
        %721 = vmatpush1.bf16.msra.mxu0 0
        %722 = vmatprep.subr.bf16.mxu0 0
        %723 = vmatpush1.bf16.msra.mxu0 0
        %724 = vmatprep.subr.bf16.mxu0 0
        %725 = vmatpush1.bf16.msra.mxu0 0
        %726 = vmatprep.subr.bf16.mxu0 0
        %727 = vmatpush1.bf16.msra.mxu0 0
        %728 = vmatprep.subr.bf16.mxu0 0
        %729 = vmatpush1.bf16.msra.mxu0 0
        %730 = vmatprep.subr.bf16.mxu0 0
        %731 = vmatpush1.bf16.msra.mxu0 0
        %732 = vmatprep.subr.bf16.mxu0 0
        %733 = vmatpush1.bf16.msra.mxu0 0
        %734 = vmatprep.subr.bf16.mxu0 0
        %735 = vmatpush1.bf16.msra.mxu0 0
        %736 = vmatprep.mubr.bf16.mxu0 0
        %737 = vmatmul.mubr.bf16.gmra.mrb[0].mxu0 %v639
        %v738 = vpop.f32.mrb[0].mxu0
        %v739 = vadd.f32 0.0, %v738
        %v740 = vpop.f32.mrb[0].mxu0
        %v741 = vpop.f32.mrb[0].mxu0
        %v742 = vadd.f32 0.0, %v741
        %v743 = vpop.f32.mrb[0].mxu0
        %744 = vdwg.mxu0
        %v745 = vadd.f32 %v635, %v739
        %v746 = vadd.f32 %v636, %v742
        %747 = vst [vmem:[#allocation2] sm:$0xff] %v745
        %748 = vst [vmem:[#allocation2 + $0x8] sm:$0xff] %v746
        // Predicated region
        $region123: #{rwkv_forward.36} parent=109 // pred_check
          %p749 = pneg %p515
        $region124: #{rwkv_forward.36} parent=109 // pred_check_branch
          %751 = sbr.rel (%p749) target = $region126
        $region125: #{rwkv_forward.36} parent=109 // pred_region
          %v752 = vld [vmem:[#allocation2] sm:$0xff]
          %v753 = vld [vmem:[#allocation2 + $0x8] sm:$0xff]
          %754 = vst [vmem:[%s492] sm:$0xff] %v752
          %755 = vst [vmem:[%s492 + $0x8] sm:$0xff] %v753
        $region126: #{rwkv_forward.36} parent=109 // pred_fallthru
          _
        %s756 = sand.u32 %s156, 1
        %s757 = sand.u32 %s156, 1
        %s758 = smul.addr %s757, 16
        %s759 = scalar_lea.vmem [#allocation5], %s758
        // Predicated region
        $region127: #{rwkv_forward.36} parent=109 // pred_check
          %p760 = pneg %p166
        $region128: #{rwkv_forward.36} parent=109 // pred_check_branch
          %762 = sbr.rel (%p760) target = $region130
        $region129: #{rwkv_forward.36} parent=109 // pred_region
          %s763 = smul.u32 2, %s20
          %s764 = smul.addr %s763, 7
          %s765 = sadd.s32 %s21, %s764
          %s766 = smul.addr %s765, 8
          %s767 = scalar_lea.vmem %s4, %s766
          // Predicated region
          $region131: #{rwkv_forward.36} parent=129 // pred_check
            _
          $region132: #{rwkv_forward.36} parent=129 // pred_check_branch
            %769 = sbr.rel (0) target = $region134
          $region133: #{rwkv_forward.36} parent=129 // pred_region
            // Predicated region
            $region135: #{rwkv_forward.36} parent=133 // pred_check
              _
            $region136: #{rwkv_forward.36} parent=133 // pred_check_branch
              %771 = sbr.rel (0) target = $region138
            $region137: #{rwkv_forward.36} parent=133 // pred_region
              // Predicated region
              $region150: #{rwkv_forward.36} parent=137 // pred_check
                _
              $region151: #{rwkv_forward.36} parent=137 // pred_check_branch
                %788 = sbr.rel (0) target = $region153
              $region152: #{rwkv_forward.36} parent=137 // pred_region
                loop: start=0, step=1, limit=1
                $region154: #{rwkv_forward.36} parent=152 // loop_pre_header
                  _
                $region155: #{rwkv_forward.36} parent=152 // loop_header
                  %s790 = sphi 0, %s794
                  %p791 = scmp.ge.s32.totalorder %s790, 1
                  %s795 = sphi %s759, %s759
                  %s796 = sphi %s767, %s767
                $region156: #{rwkv_forward.36} parent=152 // loop_header_branch
                  %793 = sbr.rel (%p791) target = $region160
                $region157: #{rwkv_forward.36} parent=152 // loop_body
                  %v797 = vld [vmem:[%s795] sm:$0xff]
                  %798 = vst [vmem:[%s796] sm:$0xff] %v797
                  %v799 = vld [vmem:[%s795 + $0x8] sm:$0xff]
                  %800 = vst [vmem:[%s796 + $0x38] sm:$0xff] %v799
                $region158: #{rwkv_forward.36} parent=152 // loop_footer
                  %s794 = sadd.s32 1, %s790
                $region159: #{rwkv_forward.36} parent=152 // loop_footer_branch
                  %789 = sbr.rel target = $region155
                $region160: #{rwkv_forward.36} parent=152 // loop_exit
                  _
              $region153: #{rwkv_forward.36} parent=137 // pred_fallthru
                _
              // Predicated region
              $region161: #{rwkv_forward.36} parent=137 // pred_check
                _
              $region162: #{rwkv_forward.36} parent=137 // pred_check_branch
                %802 = sbr.rel target = $region164
              $region163: #{rwkv_forward.36} parent=137 // pred_region
                _
              $region164: #{rwkv_forward.36} parent=137 // pred_fallthru
                _
            $region138: #{rwkv_forward.36} parent=133 // pred_fallthru
              _
            // Predicated region
            $region139: #{rwkv_forward.36} parent=133 // pred_check
              _
            $region140: #{rwkv_forward.36} parent=133 // pred_check_branch
              %773 = sbr.rel target = $region142
            $region141: #{rwkv_forward.36} parent=133 // pred_region
              loop: start=0, step=1, limit=1
              $region143: #{rwkv_forward.36} parent=141 // loop_pre_header
                _
              $region144: #{rwkv_forward.36} parent=141 // loop_header
                %s776 = sphi 0, %s780
                %p777 = scmp.ge.s32.totalorder %s776, 1
                %s781 = sphi %s759, %s759
                %s782 = sphi %s767, %s767
              $region145: #{rwkv_forward.36} parent=141 // loop_header_branch
                %779 = sbr.rel (%p777) target = $region149
              $region146: #{rwkv_forward.36} parent=141 // loop_body
                %v783 = vld [vmem:[%s781] sm:$0xff]
                %784 = vst [vmem:[%s782] sm:$0xff] %v783
                %v785 = vld [vmem:[%s781 + $0x8] sm:$0xff]
                %786 = vst [vmem:[%s782 + $0x38] sm:$0xff] %v785
              $region147: #{rwkv_forward.36} parent=141 // loop_footer
                %s780 = sadd.s32 1, %s776
              $region148: #{rwkv_forward.36} parent=141 // loop_footer_branch
                %775 = sbr.rel target = $region144
              $region149: #{rwkv_forward.36} parent=141 // loop_exit
                _
            $region142: #{rwkv_forward.36} parent=133 // pred_fallthru
              _
          $region134: #{rwkv_forward.36} parent=129 // pred_fallthru
            _
          %803 = vnop
        $region130: #{rwkv_forward.36} parent=109 // pred_fallthru
          _
      $region110: #{rwkv_forward.36} parent=5 // pred_fallthru
        _
      %p804 = scmp.le.s32.totalorder 2, %s10
      // Predicated region
      $region165: #{rwkv_forward.36} parent=5 // pred_check
        %p805 = pneg %p804
      $region166: #{rwkv_forward.36} parent=5 // pred_check_branch
        %807 = sbr.rel (%p805) target = $region168
      $region167: #{rwkv_forward.36} parent=5 // pred_region
        %s808 = ssub.s32 %s10, 2
        // Predicated region
        $region169: #{rwkv_forward.36} parent=167 // pred_check
          %p809 = pneg %p172
        $region170: #{rwkv_forward.36} parent=167 // pred_check_branch
          %811 = sbr.rel (%p809) target = $region172
        $region171: #{rwkv_forward.36} parent=167 // pred_region
          %s812 = sand.u32 %s157, 1
          %s813 = sand.u32 %s157, 1
          %s814 = smul.addr %s813, 16
          %s815 = scalar_lea.vmem [#allocation5], %s814
        $region172: #{rwkv_forward.36} parent=167 // pred_fallthru
          _
      $region168: #{rwkv_forward.36} parent=5 // pred_fallthru
        _
    $region6: #{rwkv_forward.36} parent=1 // loop_footer
      %s14 = sadd.s32 1, %s10
    $region7: #{rwkv_forward.36} parent=1 // loop_footer_branch
      %9 = sbr.rel target = $region3
    $region8: #{rwkv_forward.36} parent=1 // loop_exit
      _

// kernel: rwkv_forward.47
$region0: #{rwkv_forward.47}
  #allocation0 [shape = 'u32[]', space=smem, size = 0x4, offset = 0x4, fixed_abs, tag = 'smem constant byte address 0x4 - core index']
  #allocation1 [shape = 'u32[144,128]{1,0:T(1,128)}', space=vmem, size = 0x12000, scoped, tag = 'internal scratch']
  #allocation2 [shape = 'f32[16,64]{1,0:T(8,128)}', space=vmem, size = 0x2000, scoped, tag = 'scratch operand']
  %s0 = inlined_call_operand.vmem [shape: f32[16,128], index: 0, kind: input, shape index: {}]
  %s1 = inlined_call_operand.vmem [shape: bf16[128,64], index: 1, kind: input, shape index: {}]
  %s2 = inlined_call_operand.hbm [shape: f32[16,64], index: 2, kind: output, shape index: {}]
  %s3 = sld [smem:[#allocation0]]
  $region26: #{rwkv_forward.47} parent=0
    _
  %s5 = ssub.s32 1, %s3
  %s6 = scalar_select 0, %s5, %s3
  $region1: #{rwkv_forward.47} parent=0
    #allocation3 [shape = 'u8[8192]{0}', space=vmem, size = 0x2000, scoped, tag = 'output window, operand 0, single buffered']
    #allocation4 [shape = 's32[1]{0}', space=sflag, size = 0x4, scoped, tag = 'scoped memory for rwkv_forward.47']
    %7 = vsyncpa [#allocation4], 0
    // Predicated region
    $region2: #{rwkv_forward.47} parent=1 // pred_check
      _
    $region3: #{rwkv_forward.47} parent=1 // pred_check_branch
      %9 = sbr.rel (0) target = $region5
    $region4: #{rwkv_forward.47} parent=1 // pred_region
      _
    $region5: #{rwkv_forward.47} parent=1 // pred_fallthru
      _
    // Predicated region
    $region6: #{rwkv_forward.47} parent=1 // pred_check
      _
    $region7: #{rwkv_forward.47} parent=1 // pred_check_branch
      %11 = sbr.rel (0) target = $region9
    $region8: #{rwkv_forward.47} parent=1 // pred_region
      _
    $region9: #{rwkv_forward.47} parent=1 // pred_fallthru
      _
    %p13 = scmp.eq.s32.totalorder 0, 0
    // Predicated region
    $region10: #{rwkv_forward.47} parent=1 // pred_check
      %p14 = pneg %p13
    $region11: #{rwkv_forward.47} parent=1 // pred_check_branch
      %16 = sbr.rel (%p14) target = $region13
    $region12: #{rwkv_forward.47} parent=1 // pred_region
      %vm17 = vcmask 523264
      %18 = vst.msk [vmem:[#allocation2] sm:$0xff] %vm17, 0.0
      %19 = vst.msk [vmem:[#allocation2 + $0x8] sm:$0xff] %vm17, 0.0
    $region13: #{rwkv_forward.47} parent=1 // pred_fallthru
      _
    %v20 = vld [vmem:[%s0] sm:$0xff]
    %v21 = vld [vmem:[%s0 + $0x8] sm:$0xff]
    %v22 = vpack.c.bf16 %v21, %v20
    %v23 = vld [vmem:[#allocation2] sm:$0xff]
    %v24 = vld [vmem:[#allocation2 + $0x8] sm:$0xff]
    %v25 = vld [vmem:[%s1] sm:$0xf]
    %v26 = vld [vmem:[%s1 + $0x4] sm:$0xf]
    %v27 = vld [vmem:[%s1 + $0x8] sm:$0xf]
    %v28 = vld [vmem:[%s1 + $0xc] sm:$0xf]
    %v29 = vld [vmem:[%s1 + $0x10] sm:$0xf]
    %v30 = vld [vmem:[%s1 + $0x14] sm:$0xf]
    %v31 = vld [vmem:[%s1 + $0x18] sm:$0xf]
    %v32 = vld [vmem:[%s1 + $0x1c] sm:$0xf]
    %v33 = vld [vmem:[%s1 + $0x20] sm:$0xf]
    %v34 = vld [vmem:[%s1 + $0x24] sm:$0xf]
    %v35 = vld [vmem:[%s1 + $0x28] sm:$0xf]
    %v36 = vld [vmem:[%s1 + $0x2c] sm:$0xf]
    %v37 = vld [vmem:[%s1 + $0x30] sm:$0xf]
    %v38 = vld [vmem:[%s1 + $0x34] sm:$0xf]
    %v39 = vld [vmem:[%s1 + $0x38] sm:$0xf]
    %v40 = vld [vmem:[%s1 + $0x3c] sm:$0xf]
    %v57 = vunpack.c.l.b16 %v25
    %v58 = vunpack.c.l.b16 %v26
    %v59 = vunpack.c.l.b16 %v27
    %v60 = vunpack.c.l.b16 %v28
    %v61 = vunpack.c.l.b16 %v29
    %v62 = vunpack.c.l.b16 %v30
    %v63 = vunpack.c.l.b16 %v31
    %v64 = vunpack.c.l.b16 %v32
    %v65 = vunpack.c.l.b16 %v33
    %v66 = vunpack.c.l.b16 %v34
    %v67 = vunpack.c.l.b16 %v35
    %v68 = vunpack.c.l.b16 %v36
    %v69 = vunpack.c.l.b16 %v37
    %v70 = vunpack.c.l.b16 %v38
    %v71 = vunpack.c.l.b16 %v39
    %v72 = vunpack.c.l.b16 %v40
    %v73 = vpack.c.b16 %v58, %v57
    %v74 = vpack.c.b16 %v60, %v59
    %v75 = vpack.c.b16 %v62, %v61
    %v76 = vpack.c.b16 %v64, %v63
    %v77 = vpack.c.b16 %v66, %v65
    %v78 = vpack.c.b16 %v68, %v67
    %v79 = vpack.c.b16 %v70, %v69
    %v80 = vpack.c.b16 %v72, %v71
    %89 = vmatprep.subr.bf16.mxu0 0
    %90 = vmatpush1.bf16.msra.mxu0 %v73
    %91 = vmatprep.subr.bf16.mxu0 0
    %92 = vmatpush1.bf16.msra.mxu0 %v74
    %93 = vmatprep.subr.bf16.mxu0 0
    %94 = vmatpush1.bf16.msra.mxu0 %v75
    %95 = vmatprep.subr.bf16.mxu0 0
    %96 = vmatpush1.bf16.msra.mxu0 %v76
    %97 = vmatprep.subr.bf16.mxu0 0
    %98 = vmatpush1.bf16.msra.mxu0 %v77
    %99 = vmatprep.subr.bf16.mxu0 0
    %100 = vmatpush1.bf16.msra.mxu0 %v78
    %101 = vmatprep.subr.bf16.mxu0 0
    %102 = vmatpush1.bf16.msra.mxu0 %v79
    %103 = vmatprep.subr.bf16.mxu0 0
    %104 = vmatpush1.bf16.msra.mxu0 %v80
    %105 = vmatprep.subr.bf16.mxu0 0
    %106 = vmatpush1.bf16.msra.mxu0 0
    %107 = vmatprep.subr.bf16.mxu0 0
    %108 = vmatpush1.bf16.msra.mxu0 0
    %109 = vmatprep.subr.bf16.mxu0 0
    %110 = vmatpush1.bf16.msra.mxu0 0
    %111 = vmatprep.subr.bf16.mxu0 0
    %112 = vmatpush1.bf16.msra.mxu0 0
    %113 = vmatprep.subr.bf16.mxu0 0
    %114 = vmatpush1.bf16.msra.mxu0 0
    %115 = vmatprep.subr.bf16.mxu0 0
    %116 = vmatpush1.bf16.msra.mxu0 0
    %117 = vmatprep.subr.bf16.mxu0 0
    %118 = vmatpush1.bf16.msra.mxu0 0
    %119 = vmatprep.subr.bf16.mxu0 0
    %120 = vmatpush1.bf16.msra.mxu0 0
    %121 = vmatprep.mubr.bf16.mxu0 0
    %122 = vmatmul.mubr.bf16.gmra.mrb[0].mxu0 %v22
    %v123 = vpop.f32.mrb[0].mxu0
    %v124 = vadd.f32 0.0, %v123
    %v125 = vpop.f32.mrb[0].mxu0
    %v126 = vpop.f32.mrb[0].mxu0
    %v127 = vadd.f32 0.0, %v126
    %v128 = vpop.f32.mrb[0].mxu0
    %129 = vdwg.mxu0
    %v130 = vadd.f32 %v23, %v124
    %v131 = vadd.f32 %v24, %v127
    %vm132 = vcmask 523264
    %133 = vst.msk [vmem:[#allocation2] sm:$0xff] %vm132, %v130
    %134 = vst.msk [vmem:[#allocation2 + $0x8] sm:$0xff] %vm132, %v131
    // Predicated region
    $region14: #{rwkv_forward.47} parent=1 // pred_check
      %p135 = pneg %p13
    $region15: #{rwkv_forward.47} parent=1 // pred_check_branch
      %137 = sbr.rel (%p135) target = $region17
    $region16: #{rwkv_forward.47} parent=1 // pred_region
      %v138 = vld [vmem:[#allocation2] sm:$0xff]
      %v139 = vld [vmem:[#allocation2 + $0x8] sm:$0xff]
      %140 = vst.msk [vmem:[#allocation3] sm:$0xff] %vm132, %v138
      %141 = vst.msk [vmem:[#allocation3 + $0x8] sm:$0xff] %vm132, %v139
    $region17: #{rwkv_forward.47} parent=1 // pred_fallthru
      _
    // Predicated region
    $region18: #{rwkv_forward.47} parent=1 // pred_check
      _
    $region19: #{rwkv_forward.47} parent=1 // pred_check_branch
      %143 = sbr.rel (0) target = $region21
    $region20: #{rwkv_forward.47} parent=1 // pred_region
      %s145 = ssub.s32 256, 256
      %146 = vsyncadd [#allocation4], %s145
      %s147 = sshll.u32 [#allocation3], 4
      %s148 = int_to_ptr.vmem [resolvable:$true] %s147
      %153 = dma.vmem_to_hbm [thread:$0]  %s148, 256, %s2, [#allocation4], 128, 128, 8
    $region21: #{rwkv_forward.47} parent=1 // pred_fallthru
      _
    // Predicated region
    $region22: #{rwkv_forward.47} parent=1 // pred_check
      _
    $region23: #{rwkv_forward.47} parent=1 // pred_check_branch
      %155 = sbr.rel (0) target = $region25
    $region24: #{rwkv_forward.47} parent=1 // pred_region
      %156 = dma.done [#allocation4], 256
    $region25: #{rwkv_forward.47} parent=1 // pred_fallthru
      _
    %157 = vsyncpa [#allocation4], 1

// kernel: rwkv_forward.30
$region0: #{rwkv_forward.30}
  #allocation0 [shape = 'u32[]', space=smem, size = 0x4, offset = 0x4, fixed_abs, tag = 'smem constant byte address 0x4 - core index']
  #allocation1 [shape = 'u32[144,128]{1,0:T(1,128)}', space=vmem, size = 0x12000, scoped, tag = 'internal scratch']
  #allocation2 [shape = 'f32[64,64]{1,0:T(8,128)}', space=vmem, size = 0x8000, scoped, tag = 'scratch operand']
  #allocation3 [shape = 'f32[64,64]{1,0:T(8,128)}', space=vmem, size = 0x8000, scoped, tag = 'scratch operand']
  #allocation4 [shape = 'f32[8,64]{1,0:T(8,128)}', space=vmem, size = 0x1000, scoped, tag = 'scratch operand']
  #allocation5 [shape = 'f32[8,64]{1,0:T(8,128)}', space=vmem, size = 0x1000, scoped, tag = 'scratch operand']
  #allocation6 [shape = 'f32[8,64]{1,0:T(8,128)}', space=vmem, size = 0x1000, scoped, tag = 'scratch operand']
  #allocation7 [shape = 'f32[8,64]{1,0:T(8,128)}', space=vmem, size = 0x1000, scoped, tag = 'scratch operand']
  #allocation8 [shape = 'f32[8,64]{1,0:T(8,128)}', space=vmem, size = 0x1000, scoped, tag = 'scratch operand']
  #allocation9 [shape = 'f32[8,64]{1,0:T(8,128)}', space=vmem, size = 0x1000, scoped, tag = 'scratch operand']
  #allocation10 [shape = 'f32[8,64]{1,0:T(8,128)}', space=vmem, size = 0x1000, scoped, tag = 'scratch operand']
  #allocation11 [shape = 'f32[8,64]{1,0:T(8,128)}', space=vmem, size = 0x1000, scoped, tag = 'scratch operand']
  #allocation12 [shape = 'f32[8,64]{1,0:T(8,128)}', space=vmem, size = 0x1000, scoped, tag = 'scratch operand']
  #allocation13 [shape = 'f32[8,64]{1,0:T(8,128)}', space=vmem, size = 0x1000, scoped, tag = 'scratch operand']
  #allocation14 [shape = 'f32[8,64]{1,0:T(8,128)}', space=vmem, size = 0x1000, scoped, tag = 'scratch operand']
  #allocation15 [shape = 'f32[8,64]{1,0:T(8,128)}', space=vmem, size = 0x1000, scoped, tag = 'scratch operand']
  #allocation16 [shape = 'f32[8,64]{1,0:T(8,128)}', space=vmem, size = 0x1000, scoped, tag = 'scratch operand']
  #allocation17 [shape = 'f32[8,64]{1,0:T(8,128)}', space=vmem, size = 0x1000, scoped, tag = 'scratch operand']
  %s0 = inlined_call_operand.vmem [shape: f32[2,8,128], index: 0, kind: input, shape index: {}]
  %s1 = inlined_call_operand.vmem [shape: f32[2,8,128], index: 1, kind: input, shape index: {}]
  %s2 = inlined_call_operand.vmem [shape: f32[2,8,128], index: 2, kind: input, shape index: {}]
  %s3 = inlined_call_operand.vmem [shape: f32[2,8,128], index: 3, kind: input, shape index: {}]
  %s4 = inlined_call_operand.vmem [shape: f32[2,8,128], index: 4, kind: input, shape index: {}]
  %s5 = inlined_call_operand.vmem [shape: f32[1,128], index: 5, kind: input, shape index: {}]
  %s6 = inlined_call_operand.vmem [shape: f32[1,128], index: 6, kind: input, shape index: {}]
  %s7 = inlined_call_operand.vmem [shape: f32[1,128], index: 7, kind: input, shape index: {}]
  %s8 = inlined_call_operand.vmem [shape: f32[1,128], index: 8, kind: input, shape index: {}]
  %s9 = inlined_call_operand.vmem [shape: f32[1,128], index: 9, kind: input, shape index: {}]
  %s10 = inlined_call_operand.vmem [shape: f32[2,8,128], index: 10, kind: output, shape index: {}]
  %s11 = sld [smem:[#allocation0]]
  $region77: #{rwkv_forward.30} parent=0
    _
  %s13 = ssub.s32 1, %s11
  %s14 = scalar_select 0, %s13, %s11
  loop: start=0, step=1, limit=4
  $region2: #{rwkv_forward.30} parent=0 // loop_pre_header
    _
  $region3: #{rwkv_forward.30} parent=0 // loop_header
    %s16 = sphi 0, %s20
    %p17 = scmp.ge.s32.totalorder %s16, 4
    %s23 = sphi 0, %s42
    %s24 = sphi 0, %s38
    %s25 = sphi 0, %s34
    %s26 = sphi 0, %s23
    %s27 = sphi 0, %s24
    %s28 = sphi 0, %s25
    %s29 = sphi 0, %s26
    %s30 = sphi 0, %s27
    %s31 = sphi 0, %s28
    %s49 = sphi 0, %s51
    %s52 = sphi 0, %s49
    %s53 = sphi 0, %s52
    %s69 = sphi 0, %s53
    %s79 = sphi 0, %s81
    %s82 = sphi 0, %s79
    %s83 = sphi 0, %s82
    %s99 = sphi 0, %s83
    %s109 = sphi 0, %s111
    %s112 = sphi 0, %s109
    %s113 = sphi 0, %s112
    %s129 = sphi 0, %s113
    %s139 = sphi 0, %s141
    %s142 = sphi 0, %s139
    %s143 = sphi 0, %s142
    %s159 = sphi 0, %s143
    %s169 = sphi 0, %s171
    %s172 = sphi 0, %s169
    %s173 = sphi 0, %s172
    %s189 = sphi 0, %s173
    %s195 = sphi 0, %s197
    %s198 = sphi 0, %s195
    %s199 = sphi 0, %s198
    %s215 = sphi 0, %s199
    %s221 = sphi 0, %s223
    %s224 = sphi 0, %s221
    %s225 = sphi 0, %s224
    %s241 = sphi 0, %s225
    %s247 = sphi 0, %s249
    %s250 = sphi 0, %s247
    %s251 = sphi 0, %s250
    %s267 = sphi 0, %s251
    %s273 = sphi 0, %s275
    %s276 = sphi 0, %s273
    %s277 = sphi 0, %s276
    %s293 = sphi 0, %s277
    %s299 = sphi 0, %s301
    %s302 = sphi 0, %s299
    %s303 = sphi 0, %s302
    %s319 = sphi 0, %s303
    %s329 = sphi 0, %s331
    %s332 = sphi 0, %s329
    %s333 = sphi 0, %s332
    %s349 = sphi 0, %s333
  $region4: #{rwkv_forward.30} parent=0 // loop_header_branch
    %19 = sbr.rel (%p17) target = $region8
  $region5: #{rwkv_forward.30} parent=0 // loop_body
    %s21 = ssub.s32 %s16, 1
    %s22 = ssub.s32 %s16, 2
    %s32 = sadd.s32 1, %s25
    %p33 = scmp.ge.s32.totalorder %s32, 1
    %s34 = scalar_select %p33, 0, %s32
    %s35 = sadd.s32 1, %s24
    %s36 = scalar_select %p33, %s35, %s24
    %p37 = scmp.ge.s32.totalorder %s36, 1
    %s38 = scalar_select %p37, 0, %s36
    %s39 = sadd.s32 1, %s23
    %s40 = scalar_select %p37, %s39, %s23
    %p41 = scmp.ge.s32.totalorder %s40, 2
    %s42 = scalar_select %p41, 0, %s40
    %s43 = ssub.s32 %s23, %s42
    %s44 = ssub.s32 %s25, %s34
    %s45 = sor.u32 %s43, %s44
    %s46 = ssub.s32 %s24, %s38
    %s47 = sor.u32 %s45, %s46
    %p48 = scmp.eq.s32.totalorder %s47, 0
    %s50 = sadd.s32 %s49, 1
    %s51 = scalar_select %p48, %s49, %s50
    %p54 = pneg %p48
    %p55 = scmp.eq.s32.totalorder %s16, 1
    %p56 = por %p54, %p55
    %p57 = scmp.ne.s32.totalorder %s49, %s52
    %p58 = scmp.eq.s32.totalorder %s16, 0
    %p59 = por %p57, %p58
    %p60 = scmp.ne.s32.totalorder %s49, %s52
    %p61 = scmp.eq.s32.totalorder %s21, 1
    %p62 = por %p60, %p61
    %p63 = scmp.ne.s32.totalorder %s52, %s53
    %p64 = scmp.eq.s32.totalorder %s21, 0
    %p65 = por %p63, %p64
    %p66 = scmp.ne.s32.totalorder %s52, %s53
    %p67 = scmp.eq.s32.totalorder %s22, 1
    %p68 = por %p66, %p67
    %p70 = scmp.ne.s32.totalorder %s53, %s69
    %p71 = scmp.eq.s32.totalorder %s22, 0
    %p72 = por %p70, %p71
    %s73 = ssub.s32 %s23, %s42
    %s74 = ssub.s32 %s25, %s34
    %s75 = sor.u32 %s73, %s74
    %s76 = ssub.s32 %s24, %s38
    %s77 = sor.u32 %s75, %s76
    %p78 = scmp.eq.s32.totalorder %s77, 0
    %s80 = sadd.s32 %s79, 1
    %s81 = scalar_select %p78, %s79, %s80
    %p84 = pneg %p78
    %p85 = scmp.eq.s32.totalorder %s16, 1
    %p86 = por %p84, %p85
    %p87 = scmp.ne.s32.totalorder %s79, %s82
    %p88 = scmp.eq.s32.totalorder %s16, 0
    %p89 = por %p87, %p88
    %p90 = scmp.ne.s32.totalorder %s79, %s82
    %p91 = scmp.eq.s32.totalorder %s21, 1
    %p92 = por %p90, %p91
    %p93 = scmp.ne.s32.totalorder %s82, %s83
    %p94 = scmp.eq.s32.totalorder %s21, 0
    %p95 = por %p93, %p94
    %p96 = scmp.ne.s32.totalorder %s82, %s83
    %p97 = scmp.eq.s32.totalorder %s22, 1
    %p98 = por %p96, %p97
    %p100 = scmp.ne.s32.totalorder %s83, %s99
    %p101 = scmp.eq.s32.totalorder %s22, 0
    %p102 = por %p100, %p101
    %s103 = ssub.s32 %s23, %s42
    %s104 = ssub.s32 %s25, %s34
    %s105 = sor.u32 %s103, %s104
    %s106 = ssub.s32 %s24, %s38
    %s107 = sor.u32 %s105, %s106
    %p108 = scmp.eq.s32.totalorder %s107, 0
    %s110 = sadd.s32 %s109, 1
    %s111 = scalar_select %p108, %s109, %s110
    %p114 = pneg %p108
    %p115 = scmp.eq.s32.totalorder %s16, 1
    %p116 = por %p114, %p115
    %p117 = scmp.ne.s32.totalorder %s109, %s112
    %p118 = scmp.eq.s32.totalorder %s16, 0
    %p119 = por %p117, %p118
    %p120 = scmp.ne.s32.totalorder %s109, %s112
    %p121 = scmp.eq.s32.totalorder %s21, 1
    %p122 = por %p120, %p121
    %p123 = scmp.ne.s32.totalorder %s112, %s113
    %p124 = scmp.eq.s32.totalorder %s21, 0
    %p125 = por %p123, %p124
    %p126 = scmp.ne.s32.totalorder %s112, %s113
    %p127 = scmp.eq.s32.totalorder %s22, 1
    %p128 = por %p126, %p127
    %p130 = scmp.ne.s32.totalorder %s113, %s129
    %p131 = scmp.eq.s32.totalorder %s22, 0
    %p132 = por %p130, %p131
    %s133 = ssub.s32 %s23, %s42
    %s134 = ssub.s32 %s25, %s34
    %s135 = sor.u32 %s133, %s134
    %s136 = ssub.s32 %s24, %s38
    %s137 = sor.u32 %s135, %s136
    %p138 = scmp.eq.s32.totalorder %s137, 0
    %s140 = sadd.s32 %s139, 1
    %s141 = scalar_select %p138, %s139, %s140
    %p144 = pneg %p138
    %p145 = scmp.eq.s32.totalorder %s16, 1
    %p146 = por %p144, %p145
    %p147 = scmp.ne.s32.totalorder %s139, %s142
    %p148 = scmp.eq.s32.totalorder %s16, 0
    %p149 = por %p147, %p148
    %p150 = scmp.ne.s32.totalorder %s139, %s142
    %p151 = scmp.eq.s32.totalorder %s21, 1
    %p152 = por %p150, %p151
    %p153 = scmp.ne.s32.totalorder %s142, %s143
    %p154 = scmp.eq.s32.totalorder %s21, 0
    %p155 = por %p153, %p154
    %p156 = scmp.ne.s32.totalorder %s142, %s143
    %p157 = scmp.eq.s32.totalorder %s22, 1
    %p158 = por %p156, %p157
    %p160 = scmp.ne.s32.totalorder %s143, %s159
    %p161 = scmp.eq.s32.totalorder %s22, 0
    %p162 = por %p160, %p161
    %s163 = ssub.s32 %s23, %s42
    %s164 = ssub.s32 %s25, %s34
    %s165 = sor.u32 %s163, %s164
    %s166 = ssub.s32 %s24, %s38
    %s167 = sor.u32 %s165, %s166
    %p168 = scmp.eq.s32.totalorder %s167, 0
    %s170 = sadd.s32 %s169, 1
    %s171 = scalar_select %p168, %s169, %s170
    %p174 = pneg %p168
    %p175 = scmp.eq.s32.totalorder %s16, 1
    %p176 = por %p174, %p175
    %p177 = scmp.ne.s32.totalorder %s169, %s172
    %p178 = scmp.eq.s32.totalorder %s16, 0
    %p179 = por %p177, %p178
    %p180 = scmp.ne.s32.totalorder %s169, %s172
    %p181 = scmp.eq.s32.totalorder %s21, 1
    %p182 = por %p180, %p181
    %p183 = scmp.ne.s32.totalorder %s172, %s173
    %p184 = scmp.eq.s32.totalorder %s21, 0
    %p185 = por %p183, %p184
    %p186 = scmp.ne.s32.totalorder %s172, %s173
    %p187 = scmp.eq.s32.totalorder %s22, 1
    %p188 = por %p186, %p187
    %p190 = scmp.ne.s32.totalorder %s173, %s189
    %p191 = scmp.eq.s32.totalorder %s22, 0
    %p192 = por %p190, %p191
    %s193 = ssub.s32 %s24, %s38
    %p194 = scmp.eq.s32.totalorder %s193, 0
    %s196 = sadd.s32 %s195, 1
    %s197 = scalar_select %p194, %s195, %s196
    %p200 = pneg %p194
    %p201 = scmp.eq.s32.totalorder %s16, 1
    %p202 = por %p200, %p201
    %p203 = scmp.ne.s32.totalorder %s195, %s198
    %p204 = scmp.eq.s32.totalorder %s16, 0
    %p205 = por %p203, %p204
    %p206 = scmp.ne.s32.totalorder %s195, %s198
    %p207 = scmp.eq.s32.totalorder %s21, 1
    %p208 = por %p206, %p207
    %p209 = scmp.ne.s32.totalorder %s198, %s199
    %p210 = scmp.eq.s32.totalorder %s21, 0
    %p211 = por %p209, %p210
    %p212 = scmp.ne.s32.totalorder %s198, %s199
    %p213 = scmp.eq.s32.totalorder %s22, 1
    %p214 = por %p212, %p213
    %p216 = scmp.ne.s32.totalorder %s199, %s215
    %p217 = scmp.eq.s32.totalorder %s22, 0
    %p218 = por %p216, %p217
    %s219 = ssub.s32 %s24, %s38
    %p220 = scmp.eq.s32.totalorder %s219, 0
    %s222 = sadd.s32 %s221, 1
    %s223 = scalar_select %p220, %s221, %s222
    %p226 = pneg %p220
    %p227 = scmp.eq.s32.totalorder %s16, 1
    %p228 = por %p226, %p227
    %p229 = scmp.ne.s32.totalorder %s221, %s224
    %p230 = scmp.eq.s32.totalorder %s16, 0
    %p231 = por %p229, %p230
    %p232 = scmp.ne.s32.totalorder %s221, %s224
    %p233 = scmp.eq.s32.totalorder %s21, 1
    %p234 = por %p232, %p233
    %p235 = scmp.ne.s32.totalorder %s224, %s225
    %p236 = scmp.eq.s32.totalorder %s21, 0
    %p237 = por %p235, %p236
    %p238 = scmp.ne.s32.totalorder %s224, %s225
    %p239 = scmp.eq.s32.totalorder %s22, 1
    %p240 = por %p238, %p239
    %p242 = scmp.ne.s32.totalorder %s225, %s241
    %p243 = scmp.eq.s32.totalorder %s22, 0
    %p244 = por %p242, %p243
    %s245 = ssub.s32 %s24, %s38
    %p246 = scmp.eq.s32.totalorder %s245, 0
    %s248 = sadd.s32 %s247, 1
    %s249 = scalar_select %p246, %s247, %s248
    %p252 = pneg %p246
    %p253 = scmp.eq.s32.totalorder %s16, 1
    %p254 = por %p252, %p253
    %p255 = scmp.ne.s32.totalorder %s247, %s250
    %p256 = scmp.eq.s32.totalorder %s16, 0
    %p257 = por %p255, %p256
    %p258 = scmp.ne.s32.totalorder %s247, %s250
    %p259 = scmp.eq.s32.totalorder %s21, 1
    %p260 = por %p258, %p259
    %p261 = scmp.ne.s32.totalorder %s250, %s251
    %p262 = scmp.eq.s32.totalorder %s21, 0
    %p263 = por %p261, %p262
    %p264 = scmp.ne.s32.totalorder %s250, %s251
    %p265 = scmp.eq.s32.totalorder %s22, 1
    %p266 = por %p264, %p265
    %p268 = scmp.ne.s32.totalorder %s251, %s267
    %p269 = scmp.eq.s32.totalorder %s22, 0
    %p270 = por %p268, %p269
    %s271 = ssub.s32 %s24, %s38
    %p272 = scmp.eq.s32.totalorder %s271, 0
    %s274 = sadd.s32 %s273, 1
    %s275 = scalar_select %p272, %s273, %s274
    %p278 = pneg %p272
    %p279 = scmp.eq.s32.totalorder %s16, 1
    %p280 = por %p278, %p279
    %p281 = scmp.ne.s32.totalorder %s273, %s276
    %p282 = scmp.eq.s32.totalorder %s16, 0
    %p283 = por %p281, %p282
    %p284 = scmp.ne.s32.totalorder %s273, %s276
    %p285 = scmp.eq.s32.totalorder %s21, 1
    %p286 = por %p284, %p285
    %p287 = scmp.ne.s32.totalorder %s276, %s277
    %p288 = scmp.eq.s32.totalorder %s21, 0
    %p289 = por %p287, %p288
    %p290 = scmp.ne.s32.totalorder %s276, %s277
    %p291 = scmp.eq.s32.totalorder %s22, 1
    %p292 = por %p290, %p291
    %p294 = scmp.ne.s32.totalorder %s277, %s293
    %p295 = scmp.eq.s32.totalorder %s22, 0
    %p296 = por %p294, %p295
    %s297 = ssub.s32 %s24, %s38
    %p298 = scmp.eq.s32.totalorder %s297, 0
    %s300 = sadd.s32 %s299, 1
    %s301 = scalar_select %p298, %s299, %s300
    %p304 = pneg %p298
    %p305 = scmp.eq.s32.totalorder %s16, 1
    %p306 = por %p304, %p305
    %p307 = scmp.ne.s32.totalorder %s299, %s302
    %p308 = scmp.eq.s32.totalorder %s16, 0
    %p309 = por %p307, %p308
    %p310 = scmp.ne.s32.totalorder %s299, %s302
    %p311 = scmp.eq.s32.totalorder %s21, 1
    %p312 = por %p310, %p311
    %p313 = scmp.ne.s32.totalorder %s302, %s303
    %p314 = scmp.eq.s32.totalorder %s21, 0
    %p315 = por %p313, %p314
    %p316 = scmp.ne.s32.totalorder %s302, %s303
    %p317 = scmp.eq.s32.totalorder %s22, 1
    %p318 = por %p316, %p317
    %p320 = scmp.ne.s32.totalorder %s303, %s319
    %p321 = scmp.eq.s32.totalorder %s22, 0
    %p322 = por %p320, %p321
    %s323 = ssub.s32 %s23, %s42
    %s324 = ssub.s32 %s25, %s34
    %s325 = sor.u32 %s323, %s324
    %s326 = ssub.s32 %s24, %s38
    %s327 = sor.u32 %s325, %s326
    %p328 = scmp.eq.s32.totalorder %s327, 0
    %s330 = sadd.s32 %s329, 1
    %s331 = scalar_select %p328, %s329, %s330
    %p334 = pneg %p328
    %p335 = scmp.eq.s32.totalorder %s16, 1
    %p336 = por %p334, %p335
    %p337 = scmp.ne.s32.totalorder %s329, %s332
    %p338 = scmp.eq.s32.totalorder %s16, 0
    %p339 = por %p337, %p338
    %p340 = scmp.ne.s32.totalorder %s329, %s332
    %p341 = scmp.eq.s32.totalorder %s21, 1
    %p342 = por %p340, %p341
    %p343 = scmp.ne.s32.totalorder %s332, %s333
    %p344 = scmp.eq.s32.totalorder %s21, 0
    %p345 = por %p343, %p344
    %p346 = scmp.ne.s32.totalorder %s332, %s333
    %p347 = scmp.eq.s32.totalorder %s22, 1
    %p348 = por %p346, %p347
    %p350 = scmp.ne.s32.totalorder %s333, %s349
    %p351 = scmp.eq.s32.totalorder %s22, 0
    %p352 = por %p350, %p351
    %p353 = scmp.le.s32.totalorder 1, %s16
    %p354 = scmp.lt.s32.totalorder %s16, 3
    %p355 = pnand %p353, %p354
    %p356 = pneg %p355
    // Predicated region
    $region9: #{rwkv_forward.30} parent=5 // pred_check
      _
    $region10: #{rwkv_forward.30} parent=5 // pred_check_branch
      %358 = sbr.rel (%p355) target = $region12
    $region11: #{rwkv_forward.30} parent=5 // pred_region
      %s359 = ssub.s32 %s16, 1
      // Predicated region
      $region13: #{rwkv_forward.30} parent=11 // pred_check
        %p360 = pneg %p211
      $region14: #{rwkv_forward.30} parent=11 // pred_check_branch
        %362 = sbr.rel (%p360) target = $region16
      $region15: #{rwkv_forward.30} parent=11 // pred_region
        %p363 = scmp.lt.s32.totalorder %s27, 0
        %s364 = scalar_select %p363, %s27, 0
        %s365 = scalar_lea.vmem %s5, %s364
      $region16: #{rwkv_forward.30} parent=11 // pred_fallthru
        _
      // Predicated region
      $region17: #{rwkv_forward.30} parent=11 // pred_check
        %p366 = pneg %p237
      $region18: #{rwkv_forward.30} parent=11 // pred_check_branch
        %368 = sbr.rel (%p366) target = $region20
      $region19: #{rwkv_forward.30} parent=11 // pred_region
        %p369 = scmp.lt.s32.totalorder %s27, 0
        %s370 = scalar_select %p369, %s27, 0
        %s371 = scalar_lea.vmem %s6, %s370
      $region20: #{rwkv_forward.30} parent=11 // pred_fallthru
        _
      // Predicated region
      $region21: #{rwkv_forward.30} parent=11 // pred_check
        %p372 = pneg %p263
      $region22: #{rwkv_forward.30} parent=11 // pred_check_branch
        %374 = sbr.rel (%p372) target = $region24
      $region23: #{rwkv_forward.30} parent=11 // pred_region
        %p375 = scmp.lt.s32.totalorder %s27, 0
        %s376 = scalar_select %p375, %s27, 0
        %s377 = scalar_lea.vmem %s7, %s376
      $region24: #{rwkv_forward.30} parent=11 // pred_fallthru
        _
      // Predicated region
      $region25: #{rwkv_forward.30} parent=11 // pred_check
        %p378 = pneg %p289
      $region26: #{rwkv_forward.30} parent=11 // pred_check_branch
        %380 = sbr.rel (%p378) target = $region28
      $region27: #{rwkv_forward.30} parent=11 // pred_region
        %p381 = scmp.lt.s32.totalorder %s27, 0
        %s382 = scalar_select %p381, %s27, 0
        %s383 = scalar_lea.vmem %s8, %s382
      $region28: #{rwkv_forward.30} parent=11 // pred_fallthru
        _
      // Predicated region
      $region29: #{rwkv_forward.30} parent=11 // pred_check
        %p384 = pneg %p315
      $region30: #{rwkv_forward.30} parent=11 // pred_check_branch
        %386 = sbr.rel (%p384) target = $region32
      $region31: #{rwkv_forward.30} parent=11 // pred_region
        %p387 = scmp.lt.s32.totalorder %s27, 0
        %s388 = scalar_select %p387, %s27, 0
        %s389 = scalar_lea.vmem %s9, %s388
      $region32: #{rwkv_forward.30} parent=11 // pred_fallthru
        _
    $region12: #{rwkv_forward.30} parent=5 // pred_fallthru
      _
    %p390 = scmp.lt.s32.totalorder %s16, 2
    // Predicated region
    $region33: #{rwkv_forward.30} parent=5 // pred_check
      %p391 = pneg %p390
    $region34: #{rwkv_forward.30} parent=5 // pred_check_branch
      %393 = sbr.rel (%p391) target = $region36
    $region35: #{rwkv_forward.30} parent=5 // pred_region
      // Predicated region
      $region37: #{rwkv_forward.30} parent=35 // pred_check
        %p394 = pneg %p59
      $region38: #{rwkv_forward.30} parent=35 // pred_check_branch
        %396 = sbr.rel (%p394) target = $region40
      $region39: #{rwkv_forward.30} parent=35 // pred_region
        %p397 = scmp.lt.s32.totalorder %s23, 1
        %s398 = scalar_select %p397, %s23, 1
        %p399 = scmp.lt.s32.totalorder %s25, 0
        %s400 = scalar_select %p399, %s25, 0
        %p401 = scmp.lt.s32.totalorder %s24, 0
        %s402 = scalar_select %p401, %s24, 0
        %s403 = sadd.s32 %s402, %s400
        %s404 = sadd.s32 %s403, %s398
        %s405 = smul.addr %s404, 8
        %s406 = scalar_lea.vmem %s0, %s405
      $region40: #{rwkv_forward.30} parent=35 // pred_fallthru
        _
      // Predicated region
      $region41: #{rwkv_forward.30} parent=35 // pred_check
        %p407 = pneg %p89
      $region42: #{rwkv_forward.30} parent=35 // pred_check_branch
        %409 = sbr.rel (%p407) target = $region44
      $region43: #{rwkv_forward.30} parent=35 // pred_region
        %p410 = scmp.lt.s32.totalorder %s23, 1
        %s411 = scalar_select %p410, %s23, 1
        %p412 = scmp.lt.s32.totalorder %s25, 0
        %s413 = scalar_select %p412, %s25, 0
        %p414 = scmp.lt.s32.totalorder %s24, 0
        %s415 = scalar_select %p414, %s24, 0
        %s416 = sadd.s32 %s415, %s413
        %s417 = sadd.s32 %s416, %s411
        %s418 = smul.addr %s417, 8
        %s419 = scalar_lea.vmem %s1, %s418
      $region44: #{rwkv_forward.30} parent=35 // pred_fallthru
        _
      // Predicated region
      $region45: #{rwkv_forward.30} parent=35 // pred_check
        %p420 = pneg %p119
      $region46: #{rwkv_forward.30} parent=35 // pred_check_branch
        %422 = sbr.rel (%p420) target = $region48
      $region47: #{rwkv_forward.30} parent=35 // pred_region
        %p423 = scmp.lt.s32.totalorder %s23, 1
        %s424 = scalar_select %p423, %s23, 1
        %p425 = scmp.lt.s32.totalorder %s25, 0
        %s426 = scalar_select %p425, %s25, 0
        %p427 = scmp.lt.s32.totalorder %s24, 0
        %s428 = scalar_select %p427, %s24, 0
        %s429 = sadd.s32 %s428, %s426
        %s430 = sadd.s32 %s429, %s424
        %s431 = smul.addr %s430, 8
        %s432 = scalar_lea.vmem %s2, %s431
      $region48: #{rwkv_forward.30} parent=35 // pred_fallthru
        _
      // Predicated region
      $region49: #{rwkv_forward.30} parent=35 // pred_check
        %p433 = pneg %p149
      $region50: #{rwkv_forward.30} parent=35 // pred_check_branch
        %435 = sbr.rel (%p433) target = $region52
      $region51: #{rwkv_forward.30} parent=35 // pred_region
        %p436 = scmp.lt.s32.totalorder %s23, 1
        %s437 = scalar_select %p436, %s23, 1
        %p438 = scmp.lt.s32.totalorder %s25, 0
        %s439 = scalar_select %p438, %s25, 0
        %p440 = scmp.lt.s32.totalorder %s24, 0
        %s441 = scalar_select %p440, %s24, 0
        %s442 = sadd.s32 %s441, %s439
        %s443 = sadd.s32 %s442, %s437
        %s444 = smul.addr %s443, 8
        %s445 = scalar_lea.vmem %s3, %s444
      $region52: #{rwkv_forward.30} parent=35 // pred_fallthru
        _
      // Predicated region
      $region53: #{rwkv_forward.30} parent=35 // pred_check
        %p446 = pneg %p179
      $region54: #{rwkv_forward.30} parent=35 // pred_check_branch
        %448 = sbr.rel (%p446) target = $region56
      $region55: #{rwkv_forward.30} parent=35 // pred_region
        %p449 = scmp.lt.s32.totalorder %s23, 1
        %s450 = scalar_select %p449, %s23, 1
        %p451 = scmp.lt.s32.totalorder %s25, 0
        %s452 = scalar_select %p451, %s25, 0
        %p453 = scmp.lt.s32.totalorder %s24, 0
        %s454 = scalar_select %p453, %s24, 0
        %s455 = sadd.s32 %s454, %s452
        %s456 = sadd.s32 %s455, %s450
        %s457 = smul.addr %s456, 8
        %s458 = scalar_lea.vmem %s4, %s457
      $region56: #{rwkv_forward.30} parent=35 // pred_fallthru
        _
    $region36: #{rwkv_forward.30} parent=5 // pred_fallthru
      _
    %p459 = scmp.le.s32.totalorder 1, %s16
    %p460 = scmp.lt.s32.totalorder %s16, 3
    %p461 = pnand %p459, %p460
    %p462 = pneg %p461
    // Predicated region
    $region57: #{rwkv_forward.30} parent=5 // pred_check
      _
    $region58: #{rwkv_forward.30} parent=5 // pred_check_branch
      %464 = sbr.rel (%p461) target = $region60
    $region59: #{rwkv_forward.30} parent=5 // pred_region
      %s465 = ssub.s32 %s16, 1
      %p466 = scmp.lt.s32.totalorder %s26, 1
      %s467 = scalar_select %p466, %s26, 1
      %p468 = scmp.lt.s32.totalorder %s28, 0
      %s469 = scalar_select %p468, %s28, 0
      %p470 = scmp.lt.s32.totalorder %s27, 0
      %s471 = scalar_select %p470, %s27, 0
      %s472 = sadd.s32 %s471, %s469
      %s473 = sadd.s32 %s472, %s467
      %s474 = smul.addr %s473, 8
      %s475 = scalar_lea.vmem %s0, %s474
      %p476 = pneg %p65
      %p477 = pneg %p62
      %p478 = scmp.lt.s32.totalorder %s26, 1
      %s479 = scalar_select %p478, %s26, 1
      %p480 = scmp.lt.s32.totalorder %s28, 0
      %s481 = scalar_select %p480, %s28, 0
      %p482 = scmp.lt.s32.totalorder %s27, 0
      %s483 = scalar_select %p482, %s27, 0
      %s484 = sadd.s32 %s483, %s481
      %s485 = sadd.s32 %s484, %s479
      %s486 = smul.addr %s485, 8
      %s487 = scalar_lea.vmem %s1, %s486
      %p488 = pneg %p95
      %p489 = pneg %p92
      %p490 = scmp.lt.s32.totalorder %s26, 1
      %s491 = scalar_select %p490, %s26, 1
      %p492 = scmp.lt.s32.totalorder %s28, 0
      %s493 = scalar_select %p492, %s28, 0
      %p494 = scmp.lt.s32.totalorder %s27, 0
      %s495 = scalar_select %p494, %s27, 0
      %s496 = sadd.s32 %s495, %s493
      %s497 = sadd.s32 %s496, %s491
      %s498 = smul.addr %s497, 8
      %s499 = scalar_lea.vmem %s2, %s498
      %p500 = pneg %p125
      %p501 = pneg %p122
      %p502 = scmp.lt.s32.totalorder %s26, 1
      %s503 = scalar_select %p502, %s26, 1
      %p504 = scmp.lt.s32.totalorder %s28, 0
      %s505 = scalar_select %p504, %s28, 0
      %p506 = scmp.lt.s32.totalorder %s27, 0
      %s507 = scalar_select %p506, %s27, 0
      %s508 = sadd.s32 %s507, %s505
      %s509 = sadd.s32 %s508, %s503
      %s510 = smul.addr %s509, 8
      %s511 = scalar_lea.vmem %s3, %s510
      %p512 = pneg %p155
      %p513 = pneg %p152
      %p514 = scmp.lt.s32.totalorder %s26, 1
      %s515 = scalar_select %p514, %s26, 1
      %p516 = scmp.lt.s32.totalorder %s28, 0
      %s517 = scalar_select %p516, %s28, 0
      %p518 = scmp.lt.s32.totalorder %s27, 0
      %s519 = scalar_select %p518, %s27, 0
      %s520 = sadd.s32 %s519, %s517
      %s521 = sadd.s32 %s520, %s515
      %s522 = smul.addr %s521, 8
      %s523 = scalar_lea.vmem %s4, %s522
      %p524 = pneg %p185
      %p525 = pneg %p182
      %p526 = scmp.lt.s32.totalorder %s27, 0
      %s527 = scalar_select %p526, %s27, 0
      %s528 = scalar_lea.vmem %s5, %s527
      %p529 = pneg %p211
      %p530 = pneg %p208
      %p531 = scmp.lt.s32.totalorder %s27, 0
      %s532 = scalar_select %p531, %s27, 0
      %s533 = scalar_lea.vmem %s6, %s532
      %p534 = pneg %p237
      %p535 = pneg %p234
      %p536 = scmp.lt.s32.totalorder %s27, 0
      %s537 = scalar_select %p536, %s27, 0
      %s538 = scalar_lea.vmem %s7, %s537
      %p539 = pneg %p263
      %p540 = pneg %p260
      %p541 = scmp.lt.s32.totalorder %s27, 0
      %s542 = scalar_select %p541, %s27, 0
      %s543 = scalar_lea.vmem %s8, %s542
      %p544 = pneg %p289
      %p545 = pneg %p286
      %p546 = scmp.lt.s32.totalorder %s27, 0
      %s547 = scalar_select %p546, %s27, 0
      %s548 = scalar_lea.vmem %s9, %s547
      %p549 = pneg %p315
      %p550 = pneg %p312
      %p551 = pneg %p345
      %p552 = pneg %p342
      %p553 = scmp.lt.s32.totalorder %s26, 1
      %s554 = scalar_select %p553, %s26, 1
      %p555 = scmp.lt.s32.totalorder %s28, 0
      %s556 = scalar_select %p555, %s28, 0
      %p557 = scmp.lt.s32.totalorder %s27, 0
      %s558 = scalar_select %p557, %s27, 0
      %s559 = sadd.s32 %s558, %s556
      %s560 = sadd.s32 %s559, %s554
      %s561 = smul.addr %s560, 8
      %s562 = scalar_lea.vmem %s10, %s561
      %p563 = scmp.lt.s32.totalorder %s26, 1
      %s564 = scalar_select %p563, %s26, 1
      %p565 = scmp.lt.s32.totalorder %s28, 0
      %s566 = scalar_select %p565, %s28, 0
      %p567 = scmp.lt.s32.totalorder %s27, 0
      %s568 = scalar_select %p567, %s27, 0
      %s569 = sadd.s32 %s568, %s566
      %s570 = sadd.s32 %s569, %s564
      %s571 = smul.addr %s570, 8
      %s572 = scalar_lea.vmem %s0, %s571
      %p573 = scmp.lt.s32.totalorder %s26, 1
      %s574 = scalar_select %p573, %s26, 1
      %p575 = scmp.lt.s32.totalorder %s28, 0
      %s576 = scalar_select %p575, %s28, 0
      %p577 = scmp.lt.s32.totalorder %s27, 0
      %s578 = scalar_select %p577, %s27, 0
      %s579 = sadd.s32 %s578, %s576
      %s580 = sadd.s32 %s579, %s574
      %s581 = smul.addr %s580, 8
      %s582 = scalar_lea.vmem %s1, %s581
      %p583 = scmp.lt.s32.totalorder %s26, 1
      %s584 = scalar_select %p583, %s26, 1
      %p585 = scmp.lt.s32.totalorder %s28, 0
      %s586 = scalar_select %p585, %s28, 0
      %p587 = scmp.lt.s32.totalorder %s27, 0
      %s588 = scalar_select %p587, %s27, 0
      %s589 = sadd.s32 %s588, %s586
      %s590 = sadd.s32 %s589, %s584
      %s591 = smul.addr %s590, 8
      %s592 = scalar_lea.vmem %s2, %s591
      %p593 = scmp.lt.s32.totalorder %s26, 1
      %s594 = scalar_select %p593, %s26, 1
      %p595 = scmp.lt.s32.totalorder %s28, 0
      %s596 = scalar_select %p595, %s28, 0
      %p597 = scmp.lt.s32.totalorder %s27, 0
      %s598 = scalar_select %p597, %s27, 0
      %s599 = sadd.s32 %s598, %s596
      %s600 = sadd.s32 %s599, %s594
      %s601 = smul.addr %s600, 8
      %s602 = scalar_lea.vmem %s3, %s601
      %p603 = scmp.lt.s32.totalorder %s26, 1
      %s604 = scalar_select %p603, %s26, 1
      %p605 = scmp.lt.s32.totalorder %s28, 0
      %s606 = scalar_select %p605, %s28, 0
      %p607 = scmp.lt.s32.totalorder %s27, 0
      %s608 = scalar_select %p607, %s27, 0
      %s609 = sadd.s32 %s608, %s606
      %s610 = sadd.s32 %s609, %s604
      %s611 = smul.addr %s610, 8
      %s612 = scalar_lea.vmem %s4, %s611
      %p613 = scmp.lt.s32.totalorder %s27, 0
      %s614 = scalar_select %p613, %s27, 0
      %s615 = scalar_lea.vmem %s5, %s614
      %p616 = scmp.lt.s32.totalorder %s27, 0
      %s617 = scalar_select %p616, %s27, 0
      %s618 = scalar_lea.vmem %s6, %s617
      %p619 = scmp.lt.s32.totalorder %s27, 0
      %s620 = scalar_select %p619, %s27, 0
      %s621 = scalar_lea.vmem %s7, %s620
      %p622 = scmp.lt.s32.totalorder %s27, 0
      %s623 = scalar_select %p622, %s27, 0
      %s624 = scalar_lea.vmem %s8, %s623
      %p625 = scmp.lt.s32.totalorder %s27, 0
      %s626 = scalar_select %p625, %s27, 0
      %s627 = scalar_lea.vmem %s9, %s626
      %p628 = scmp.lt.s32.totalorder %s26, 1
      %s629 = scalar_select %p628, %s26, 1
      %p630 = scmp.lt.s32.totalorder %s28, 0
      %s631 = scalar_select %p630, %s28, 0
      %p632 = scmp.lt.s32.totalorder %s27, 0
      %s633 = scalar_select %p632, %s27, 0
      %s634 = sadd.s32 %s633, %s631
      %s635 = sadd.s32 %s634, %s629
      %s636 = smul.addr %s635, 8
      %s637 = scalar_lea.vmem %s10, %s636
      %p638 = scmp.eq.s32.totalorder %s28, 0
      // Predicated region
      $region61: #{rwkv_forward.30} parent=59 // pred_check
        %p639 = pneg %p638
      $region62: #{rwkv_forward.30} parent=59 // pred_check_branch
        %641 = sbr.rel (%p639) target = $region64
      $region63: #{rwkv_forward.30} parent=59 // pred_region
        %vm642 = vcmask 523264
        %643 = vst.msk [vmem:[#allocation2] sm:$0xff] %vm642, 0.0
        %644 = vst.msk [vmem:[#allocation2 + $0x8] sm:$0xff] %vm642, 0.0
        %645 = vst.msk [vmem:[#allocation2 + $0x10] sm:$0xff] %vm642, 0.0
        %646 = vst.msk [vmem:[#allocation2 + $0x18] sm:$0xff] %vm642, 0.0
        %647 = vst.msk [vmem:[#allocation2 + $0x20] sm:$0xff] %vm642, 0.0
        %648 = vst.msk [vmem:[#allocation2 + $0x28] sm:$0xff] %vm642, 0.0
        %649 = vst.msk [vmem:[#allocation2 + $0x30] sm:$0xff] %vm642, 0.0
        %650 = vst.msk [vmem:[#allocation2 + $0x38] sm:$0xff] %vm642, 0.0
        %651 = vst.msk [vmem:[#allocation3] sm:$0xff] %vm642, 0.0
        %652 = vst.msk [vmem:[#allocation3 + $0x8] sm:$0xff] %vm642, 0.0
        %653 = vst.msk [vmem:[#allocation3 + $0x10] sm:$0xff] %vm642, 0.0
        %654 = vst.msk [vmem:[#allocation3 + $0x18] sm:$0xff] %vm642, 0.0
        %655 = vst.msk [vmem:[#allocation3 + $0x20] sm:$0xff] %vm642, 0.0
        %656 = vst.msk [vmem:[#allocation3 + $0x28] sm:$0xff] %vm642, 0.0
        %657 = vst.msk [vmem:[#allocation3 + $0x30] sm:$0xff] %vm642, 0.0
        %658 = vst.msk [vmem:[#allocation3 + $0x38] sm:$0xff] %vm642, 0.0
      $region64: #{rwkv_forward.30} parent=59 // pred_fallthru
        _
      %v659 = vld [vmem:[%s572] sm:$0xff]
      %v660 = vld [vmem:[%s592] sm:$0xff]
      %v661 = vld [vmem:[%s602] sm:$0xff]
      %v662 = vld [vmem:[%s612] sm:$0xff]
      %v663 = vld [vmem:[%s582] sm:$0xff]
      %v664 = vmul.f32 %v663, 1.442695
      %v665 = vpow.pop %v664
      %v666 = vsub.f32 0.0, %v665
      %v667 = vmul.f32 %v666, 1.442695
      %v668 = vpow.pop %v667
      %v669 = vsub.f32 %v662, 1.0
      %v670 = vld [vmem:[%s618] sm:$0x1]
      %v672 = vlaneseq
      %v673 = vshrl.u32 %v672, 7
      %v674 = vsub.s32 0, %v673
      %v675 = vrot.slane %v670, %v674
      %v677 = vmul.f32 %v669, %v675
      %v678 = vadd.f32 %v677, 1.0
      %v679 = vmul.f32 %v660, %v678
      %v680 = vld [vmem:[%s615] sm:$0x1]
      %v682 = vlaneseq
      %v683 = vshrl.u32 %v682, 7
      %v684 = vsub.s32 0, %v683
      %v685 = vrot.slane %v680, %v684
      %v687 = vmul.f32 %v660, %v685
      %v688 = vld [vmem:[%s624] sm:$0x1]
      %v689 = vld [vmem:[%s627] sm:$0x1]
      %v690 = vld [vmem:[%s621] sm:$0x1]
      %v691 = vlaneseq
      %v692 = vshrl.u32 %v691, 7
      %v693 = vadd.s32 %v692, 8
      %v694 = vadd.s32 %v692, 16
      %v695 = vadd.s32 %v692, 24
      %v696 = vadd.s32 %v692, 32
      %v697 = vadd.s32 %v692, 40
      %v698 = vadd.s32 %v692, 48
      %v699 = vadd.s32 %v692, 56
      %v700 = vlaneseq
      %v701 = vand.u32 %v700, 127
      %vm702 = vcmp.eq.s32.totalorder %v692, %v701
      %vm703 = vcmp.eq.s32.totalorder %v693, %v701
      %vm704 = vcmp.eq.s32.totalorder %v694, %v701
      %vm705 = vcmp.eq.s32.totalorder %v695, %v701
      %vm706 = vcmp.eq.s32.totalorder %v696, %v701
      %vm707 = vcmp.eq.s32.totalorder %v697, %v701
      %vm708 = vcmp.eq.s32.totalorder %v698, %v701
      %vm709 = vcmp.eq.s32.totalorder %v699, %v701
      %v710 = vsel %vm702, 1, 0
      %v711 = vsel %vm703, 1, 0
      %v712 = vsel %vm704, 1, 0
      %v713 = vsel %vm705, 1, 0
      %v714 = vsel %vm706, 1, 0
      %v715 = vsel %vm707, 1, 0
      %v716 = vsel %vm708, 1, 0
      %v717 = vsel %vm709, 1, 0
      %v718 = vcvt.s32.f32 %v710
      %v719 = vcvt.s32.f32 %v711
      %v720 = vcvt.s32.f32 %v712
      %v721 = vcvt.s32.f32 %v713
      %v722 = vcvt.s32.f32 %v714
      %v723 = vcvt.s32.f32 %v715
      %v724 = vcvt.s32.f32 %v716
      %v725 = vcvt.s32.f32 %v717
      %v726 = vmul.f32 %v687, %v687
      %vm727 = vcmask 523264
      %v728 = vsel %vm727, %v726, 0.0
      %729 = vadd.xlane.f32.xlu0 %v728
      %v730 = vpop.xlane.xlu0 %729
      %v731 = vmax.f32 %v730, 1e-24
      %v732 = vrsqrt.pop %v731
      %v733 = vmul.f32 %v687, %v732
      %734 = vst.msk [vmem:[#allocation4] sm:$0xff] %vm727, %v659
      %735 = vst.msk [vmem:[#allocation5] sm:$0xff] %vm727, %v668
      %736 = vst.msk [vmem:[#allocation6] sm:$0xff] %vm727, %v679
      %v737 = vsub.f32 0.0, %v733
      %738 = vst.msk [vmem:[#allocation7] sm:$0xff] %vm727, %v737
      %v739 = vmul.f32 %v733, %v662
      %740 = vst.msk [vmem:[#allocation8] sm:$0xff] %vm727, %v739
      %741 = vst.msk [vmem:[#allocation9] sm:$0xff] %vm727, %v661
      %743 = vrot.lane.b32.xlu0 %v726, 64
      %v744 = vpop.permute.xlu0 %743
      %v746 = vsel %vm727, %v744, 0.0
      %747 = vadd.xlane.f32.xlu0 %v746
      %v748 = vpop.xlane.xlu0 %747
      %v749 = vmax.f32 %v748, 1e-24
      %v750 = vrsqrt.pop %v749
      %v751 = vmul.f32 %v687, %v750
      %753 = vrot.lane.b32.xlu0 %v659, 64
      %v754 = vpop.permute.xlu0 %753
      %756 = vst.msk [vmem:[#allocation11] sm:$0xff] %vm727, %v754
      %758 = vrot.lane.b32.xlu0 %v668, 64
      %v759 = vpop.permute.xlu0 %758
      %761 = vst.msk [vmem:[#allocation12] sm:$0xff] %vm727, %v759
      %763 = vrot.lane.b32.xlu0 %v679, 64
      %v764 = vpop.permute.xlu0 %763
      %766 = vst.msk [vmem:[#allocation13] sm:$0xff] %vm727, %v764
      %v767 = vsub.f32 0.0, %v751
      %769 = vrot.lane.b32.xlu0 %v767, 64
      %v770 = vpop.permute.xlu0 %769
      %772 = vst.msk [vmem:[#allocation14] sm:$0xff] %vm727, %v770
      %v773 = vmul.f32 %v751, %v662
      %775 = vrot.lane.b32.xlu0 %v773, 64
      %v776 = vpop.permute.xlu0 %775
      %778 = vst.msk [vmem:[#allocation15] sm:$0xff] %vm727, %v776
      %780 = vrot.lane.b32.xlu0 %v661, 64
      %v781 = vpop.permute.xlu0 %780
      %783 = vst.msk [vmem:[#allocation16] sm:$0xff] %vm727, %v781
      %v784 = vld [vmem:[#allocation2] sm:$0xff]
      %v785 = vld [vmem:[#allocation2 + $0x8] sm:$0xff]
      %v786 = vld [vmem:[#allocation2 + $0x10] sm:$0xff]
      %v787 = vld [vmem:[#allocation2 + $0x18] sm:$0xff]
      %v788 = vld [vmem:[#allocation2 + $0x20] sm:$0xff]
      %v789 = vld [vmem:[#allocation2 + $0x28] sm:$0xff]
      %v790 = vld [vmem:[#allocation2 + $0x30] sm:$0xff]
      %v791 = vld [vmem:[#allocation2 + $0x38] sm:$0xff]
      %v792 = vld [vmem:[#allocation3] sm:$0xff]
      %v793 = vld [vmem:[#allocation3 + $0x8] sm:$0xff]
      %v794 = vld [vmem:[#allocation3 + $0x10] sm:$0xff]
      %v795 = vld [vmem:[#allocation3 + $0x18] sm:$0xff]
      %v796 = vld [vmem:[#allocation3 + $0x20] sm:$0xff]
      %v797 = vld [vmem:[#allocation3 + $0x28] sm:$0xff]
      %v798 = vld [vmem:[#allocation3 + $0x30] sm:$0xff]
      %v799 = vld [vmem:[#allocation3 + $0x38] sm:$0xff]
      %v800 = vld [vmem:[#allocation4] sm:$0x1]
      %v801 = vld [vmem:[#allocation5] sm:$0x1]
      %v802 = vld [vmem:[#allocation6] sm:$0x1]
      %v803 = vld [vmem:[#allocation7] sm:$0x1]
      %v804 = vld [vmem:[#allocation8] sm:$0x1]
      %v805 = vld [vmem:[#allocation9] sm:$0x1]
      %v806 = vlaneseq
      %v807 = vshrl.u32 %v806, 7
      %v808 = vsub.s32 0, %v807
      %v809 = vrot.slane %v805, %v808
      %v810 = vmul.f32 %v809, %v718
      %v811 = vmul.f32 %v809, %v719
      %v812 = vmul.f32 %v809, %v720
      %v813 = vmul.f32 %v809, %v721
      %v814 = vmul.f32 %v809, %v722
      %v815 = vmul.f32 %v809, %v723
      %v816 = vmul.f32 %v809, %v724
      %v817 = vmul.f32 %v809, %v725
      %v818 = vsel %vm727, %v810, 0.0
      %819 = vadd.xlane.f32.xlu0 %v818
      %v820 = vpop.xlane.xlu0 %819
      %v821 = vsel %vm727, %v811, 0.0
      %822 = vadd.xlane.f32.xlu0 %v821
      %v823 = vpop.xlane.xlu0 %822
      %v824 = vsel %vm727, %v812, 0.0
      %825 = vadd.xlane.f32.xlu0 %v824
      %v826 = vpop.xlane.xlu0 %825
      %v827 = vsel %vm727, %v813, 0.0
      %828 = vadd.xlane.f32.xlu0 %v827
      %v829 = vpop.xlane.xlu0 %828
      %v830 = vsel %vm727, %v814, 0.0
      %831 = vadd.xlane.f32.xlu0 %v830
      %v832 = vpop.xlane.xlu0 %831
      %v833 = vsel %vm727, %v815, 0.0
      %834 = vadd.xlane.f32.xlu0 %v833
      %v835 = vpop.xlane.xlu0 %834
      %v836 = vsel %vm727, %v816, 0.0
      %837 = vadd.xlane.f32.xlu0 %v836
      %v838 = vpop.xlane.xlu0 %837
      %v839 = vsel %vm727, %v817, 0.0
      %840 = vadd.xlane.f32.xlu0 %v839
      %v841 = vpop.xlane.xlu0 %840
      %v842 = vlaneseq
      %v843 = vshrl.u32 %v842, 7
      %v844 = vsub.s32 0, %v843
      %v845 = vrot.slane %v803, %v844
      %v846 = vmul.f32 %v784, %v845
      %v847 = vmul.f32 %v785, %v845
      %v848 = vmul.f32 %v786, %v845
      %v849 = vmul.f32 %v787, %v845
      %v850 = vmul.f32 %v788, %v845
      %v851 = vmul.f32 %v789, %v845
      %v852 = vmul.f32 %v790, %v845
      %v853 = vmul.f32 %v791, %v845
      %v854 = vsel %vm727, %v846, 0.0
      %855 = vadd.xlane.f32.xlu0 %v854
      %v856 = vpop.xlane.xlu0 %855
      %v857 = vsel %vm727, %v847, 0.0
      %858 = vadd.xlane.f32.xlu0 %v857
      %v859 = vpop.xlane.xlu0 %858
      %v860 = vsel %vm727, %v848, 0.0
      %861 = vadd.xlane.f32.xlu0 %v860
      %v862 = vpop.xlane.xlu0 %861
      %v863 = vsel %vm727, %v849, 0.0
      %864 = vadd.xlane.f32.xlu0 %v863
      %v865 = vpop.xlane.xlu0 %864
      %v866 = vsel %vm727, %v850, 0.0
      %867 = vadd.xlane.f32.xlu0 %v866
      %v868 = vpop.xlane.xlu0 %867
      %v869 = vsel %vm727, %v851, 0.0
      %870 = vadd.xlane.f32.xlu0 %v869
      %v871 = vpop.xlane.xlu0 %870
      %v872 = vsel %vm727, %v852, 0.0
      %873 = vadd.xlane.f32.xlu0 %v872
      %v874 = vpop.xlane.xlu0 %873
      %v875 = vsel %vm727, %v853, 0.0
      %876 = vadd.xlane.f32.xlu0 %v875
      %v877 = vpop.xlane.xlu0 %876
      %v878 = vlaneseq
      %v879 = vshrl.u32 %v878, 7
      %v880 = vsub.s32 0, %v879
      %v881 = vrot.slane %v801, %v880
      %v882 = vmul.f32 %v784, %v881
      %v883 = vmul.f32 %v785, %v881
      %v884 = vmul.f32 %v786, %v881
      %v885 = vmul.f32 %v787, %v881
      %v886 = vmul.f32 %v788, %v881
      %v887 = vmul.f32 %v789, %v881
      %v888 = vmul.f32 %v790, %v881
      %v889 = vmul.f32 %v791, %v881
      %v890 = vlaneseq
      %v891 = vshrl.u32 %v890, 7
      %v892 = vsub.s32 0, %v891
      %v893 = vrot.slane %v804, %v892
      %v894 = vmul.f32 %v856, %v893
      %v895 = vmul.f32 %v859, %v893
      %v896 = vmul.f32 %v862, %v893
      %v897 = vmul.f32 %v865, %v893
      %v898 = vmul.f32 %v868, %v893
      %v899 = vmul.f32 %v871, %v893
      %v900 = vmul.f32 %v874, %v893
      %v901 = vmul.f32 %v877, %v893
      %v902 = vadd.f32 %v882, %v894
      %v903 = vadd.f32 %v883, %v895
      %v904 = vadd.f32 %v884, %v896
      %v905 = vadd.f32 %v885, %v897
      %v906 = vadd.f32 %v886, %v898
      %v907 = vadd.f32 %v887, %v899
      %v908 = vadd.f32 %v888, %v900
      %v909 = vadd.f32 %v889, %v901
      %v910 = vlaneseq
      %v911 = vshrl.u32 %v910, 7
      %v912 = vsub.s32 0, %v911
      %v913 = vrot.slane %v802, %v912
      %v914 = vmul.f32 %v820, %v913
      %v915 = vmul.f32 %v823, %v913
      %v916 = vmul.f32 %v826, %v913
      %v917 = vmul.f32 %v829, %v913
      %v918 = vmul.f32 %v832, %v913
      %v919 = vmul.f32 %v835, %v913
      %v920 = vmul.f32 %v838, %v913
      %v921 = vmul.f32 %v841, %v913
      %v922 = vadd.f32 %v902, %v914
      %v923 = vadd.f32 %v903, %v915
      %v924 = vadd.f32 %v904, %v916
      %v925 = vadd.f32 %v905, %v917
      %v926 = vadd.f32 %v906, %v918
      %v927 = vadd.f32 %v907, %v919
      %v928 = vadd.f32 %v908, %v920
      %v929 = vadd.f32 %v909, %v921
      %v930 = vlaneseq
      %v931 = vshrl.u32 %v930, 7
      %v932 = vsub.s32 0, %v931
      %v933 = vrot.slane %v800, %v932
      %v934 = vmul.f32 %v922, %v933
      %v935 = vmul.f32 %v923, %v933
      %v936 = vmul.f32 %v924, %v933
      %v937 = vmul.f32 %v925, %v933
      %v938 = vmul.f32 %v926, %v933
      %v939 = vmul.f32 %v927, %v933
      %v940 = vmul.f32 %v928, %v933
      %v941 = vmul.f32 %v929, %v933
      %v942 = vsel %vm727, %v934, 0.0
      %943 = vadd.xlane.f32.xlu0 %v942
      %v944 = vpop.xlane.xlu0 %943
      %v945 = vsel %vm727, %v935, 0.0
      %946 = vadd.xlane.f32.xlu0 %v945
      %v947 = vpop.xlane.xlu0 %946
      %v948 = vsel %vm727, %v936, 0.0
      %949 = vadd.xlane.f32.xlu0 %v948
      %v950 = vpop.xlane.xlu0 %949
      %v951 = vsel %vm727, %v937, 0.0
      %952 = vadd.xlane.f32.xlu0 %v951
      %v953 = vpop.xlane.xlu0 %952
      %v954 = vsel %vm727, %v938, 0.0
      %955 = vadd.xlane.f32.xlu0 %v954
      %v956 = vpop.xlane.xlu0 %955
      %v957 = vsel %vm727, %v939, 0.0
      %958 = vadd.xlane.f32.xlu0 %v957
      %v959 = vpop.xlane.xlu0 %958
      %v960 = vsel %vm727, %v940, 0.0
      %961 = vadd.xlane.f32.xlu0 %v960
      %v962 = vpop.xlane.xlu0 %961
      %v963 = vsel %vm727, %v941, 0.0
      %964 = vadd.xlane.f32.xlu0 %v963
      %v965 = vpop.xlane.xlu0 %964
      %v966 = vmul.f32 %v944, %v718
      %v967 = vmul.f32 %v947, %v719
      %v968 = vmul.f32 %v950, %v720
      %v969 = vmul.f32 %v953, %v721
      %v970 = vmul.f32 %v956, %v722
      %v971 = vmul.f32 %v959, %v723
      %v972 = vmul.f32 %v962, %v724
      %v973 = vmul.f32 %v965, %v725
      %v974 = vsel %vm727, %v966, 0.0
      %v975 = vsel %vm727, %v967, 0.0
      %v976 = vadd.f32 %v974, %v975
      %v977 = vsel %vm727, %v968, 0.0
      %v978 = vadd.f32 %v976, %v977
      %v979 = vsel %vm727, %v969, 0.0
      %v980 = vadd.f32 %v978, %v979
      %v981 = vsel %vm727, %v970, 0.0
      %v982 = vadd.f32 %v980, %v981
      %v983 = vsel %vm727, %v971, 0.0
      %v984 = vadd.f32 %v982, %v983
      %v985 = vsel %vm727, %v972, 0.0
      %v986 = vadd.f32 %v984, %v985
      %v987 = vsel %vm727, %v973, 0.0
      %v988 = vadd.f32 %v986, %v987
      %v989 = vrot.slane %v988, 4
      %v990 = vadd.f32 %v988, %v989
      %v991 = vrot.slane %v990, 2
      %v992 = vadd.f32 %v990, %v991
      %v993 = vrot.slane %v992, 1
      %v994 = vadd.f32 %v992, %v993
      %vm995 = vcmask 516096
      %996 = vst.msk [vmem:[#allocation10] sm:$0x1] %vm995, %v994
      %v997 = vld [vmem:[#allocation11] sm:$0x1]
      %v998 = vld [vmem:[#allocation12] sm:$0x1]
      %v999 = vld [vmem:[#allocation13] sm:$0x1]
      %v1000 = vld [vmem:[#allocation14] sm:$0x1]
      %v1001 = vld [vmem:[#allocation15] sm:$0x1]
      %v1002 = vld [vmem:[#allocation16] sm:$0x1]
      %v1003 = vlaneseq
      %v1004 = vshrl.u32 %v1003, 7
      %v1005 = vsub.s32 0, %v1004
      %v1006 = vrot.slane %v1002, %v1005
      %v1007 = vmul.f32 %v1006, %v718
      %v1008 = vmul.f32 %v1006, %v719
      %v1009 = vmul.f32 %v1006, %v720
      %v1010 = vmul.f32 %v1006, %v721
      %v1011 = vmul.f32 %v1006, %v722
      %v1012 = vmul.f32 %v1006, %v723
      %v1013 = vmul.f32 %v1006, %v724
      %v1014 = vmul.f32 %v1006, %v725
      %v1015 = vsel %vm727, %v1007, 0.0
      %1016 = vadd.xlane.f32.xlu0 %v1015
      %v1017 = vpop.xlane.xlu0 %1016
      %v1018 = vsel %vm727, %v1008, 0.0
      %1019 = vadd.xlane.f32.xlu0 %v1018
      %v1020 = vpop.xlane.xlu0 %1019
      %v1021 = vsel %vm727, %v1009, 0.0
      %1022 = vadd.xlane.f32.xlu0 %v1021
      %v1023 = vpop.xlane.xlu0 %1022
      %v1024 = vsel %vm727, %v1010, 0.0
      %1025 = vadd.xlane.f32.xlu0 %v1024
      %v1026 = vpop.xlane.xlu0 %1025
      %v1027 = vsel %vm727, %v1011, 0.0
      %1028 = vadd.xlane.f32.xlu0 %v1027
      %v1029 = vpop.xlane.xlu0 %1028
      %v1030 = vsel %vm727, %v1012, 0.0
      %1031 = vadd.xlane.f32.xlu0 %v1030
      %v1032 = vpop.xlane.xlu0 %1031
      %v1033 = vsel %vm727, %v1013, 0.0
      %1034 = vadd.xlane.f32.xlu0 %v1033
      %v1035 = vpop.xlane.xlu0 %1034
      %v1036 = vsel %vm727, %v1014, 0.0
      %1037 = vadd.xlane.f32.xlu0 %v1036
      %v1038 = vpop.xlane.xlu0 %1037
      %v1039 = vlaneseq
      %v1040 = vshrl.u32 %v1039, 7
      %v1041 = vsub.s32 0, %v1040
      %v1042 = vrot.slane %v1000, %v1041
      %v1043 = vmul.f32 %v792, %v1042
      %v1044 = vmul.f32 %v793, %v1042
      %v1045 = vmul.f32 %v794, %v1042
      %v1046 = vmul.f32 %v795, %v1042
      %v1047 = vmul.f32 %v796, %v1042
      %v1048 = vmul.f32 %v797, %v1042
      %v1049 = vmul.f32 %v798, %v1042
      %v1050 = vmul.f32 %v799, %v1042
      %v1051 = vsel %vm727, %v1043, 0.0
      %1052 = vadd.xlane.f32.xlu0 %v1051
      %v1053 = vpop.xlane.xlu0 %1052
      %v1054 = vsel %vm727, %v1044, 0.0
      %1055 = vadd.xlane.f32.xlu0 %v1054
      %v1056 = vpop.xlane.xlu0 %1055
      %v1057 = vsel %vm727, %v1045, 0.0
      %1058 = vadd.xlane.f32.xlu0 %v1057
      %v1059 = vpop.xlane.xlu0 %1058
      %v1060 = vsel %vm727, %v1046, 0.0
      %1061 = vadd.xlane.f32.xlu0 %v1060
      %v1062 = vpop.xlane.xlu0 %1061
      %v1063 = vsel %vm727, %v1047, 0.0
      %1064 = vadd.xlane.f32.xlu0 %v1063
      %v1065 = vpop.xlane.xlu0 %1064
      %v1066 = vsel %vm727, %v1048, 0.0
      %1067 = vadd.xlane.f32.xlu0 %v1066
      %v1068 = vpop.xlane.xlu0 %1067
      %v1069 = vsel %vm727, %v1049, 0.0
      %1070 = vadd.xlane.f32.xlu0 %v1069
      %v1071 = vpop.xlane.xlu0 %1070
      %v1072 = vsel %vm727, %v1050, 0.0
      %1073 = vadd.xlane.f32.xlu0 %v1072
      %v1074 = vpop.xlane.xlu0 %1073
      %v1075 = vlaneseq
      %v1076 = vshrl.u32 %v1075, 7
      %v1077 = vsub.s32 0, %v1076
      %v1078 = vrot.slane %v998, %v1077
      %v1079 = vmul.f32 %v792, %v1078
      %v1080 = vmul.f32 %v793, %v1078
      %v1081 = vmul.f32 %v794, %v1078
      %v1082 = vmul.f32 %v795, %v1078
      %v1083 = vmul.f32 %v796, %v1078
      %v1084 = vmul.f32 %v797, %v1078
      %v1085 = vmul.f32 %v798, %v1078
      %v1086 = vmul.f32 %v799, %v1078
      %v1087 = vlaneseq
      %v1088 = vshrl.u32 %v1087, 7
      %v1089 = vsub.s32 0, %v1088
      %v1090 = vrot.slane %v1001, %v1089
      %v1091 = vmul.f32 %v1053, %v1090
      %v1092 = vmul.f32 %v1056, %v1090
      %v1093 = vmul.f32 %v1059, %v1090
      %v1094 = vmul.f32 %v1062, %v1090
      %v1095 = vmul.f32 %v1065, %v1090
      %v1096 = vmul.f32 %v1068, %v1090
      %v1097 = vmul.f32 %v1071, %v1090
      %v1098 = vmul.f32 %v1074, %v1090
      %v1099 = vadd.f32 %v1079, %v1091
      %v1100 = vadd.f32 %v1080, %v1092
      %v1101 = vadd.f32 %v1081, %v1093
      %v1102 = vadd.f32 %v1082, %v1094
      %v1103 = vadd.f32 %v1083, %v1095
      %v1104 = vadd.f32 %v1084, %v1096
      %v1105 = vadd.f32 %v1085, %v1097
      %v1106 = vadd.f32 %v1086, %v1098
      %v1107 = vlaneseq
      %v1108 = vshrl.u32 %v1107, 7
      %v1109 = vsub.s32 0, %v1108
      %v1110 = vrot.slane %v999, %v1109
      %v1111 = vmul.f32 %v1017, %v1110
      %v1112 = vmul.f32 %v1020, %v1110
      %v1113 = vmul.f32 %v1023, %v1110
      %v1114 = vmul.f32 %v1026, %v1110
      %v1115 = vmul.f32 %v1029, %v1110
      %v1116 = vmul.f32 %v1032, %v1110
      %v1117 = vmul.f32 %v1035, %v1110
      %v1118 = vmul.f32 %v1038, %v1110
      %v1119 = vadd.f32 %v1099, %v1111
      %v1120 = vadd.f32 %v1100, %v1112
      %v1121 = vadd.f32 %v1101, %v1113
      %v1122 = vadd.f32 %v1102, %v1114
      %v1123 = vadd.f32 %v1103, %v1115
      %v1124 = vadd.f32 %v1104, %v1116
      %v1125 = vadd.f32 %v1105, %v1117
      %v1126 = vadd.f32 %v1106, %v1118
      %v1127 = vlaneseq
      %v1128 = vshrl.u32 %v1127, 7
      %v1129 = vsub.s32 0, %v1128
      %v1130 = vrot.slane %v997, %v1129
      %v1131 = vmul.f32 %v1119, %v1130
      %v1132 = vmul.f32 %v1120, %v1130
      %v1133 = vmul.f32 %v1121, %v1130
      %v1134 = vmul.f32 %v1122, %v1130
      %v1135 = vmul.f32 %v1123, %v1130
      %v1136 = vmul.f32 %v1124, %v1130
      %v1137 = vmul.f32 %v1125, %v1130
      %v1138 = vmul.f32 %v1126, %v1130
      %v1139 = vsel %vm727, %v1131, 0.0
      %1140 = vadd.xlane.f32.xlu0 %v1139
      %v1141 = vpop.xlane.xlu0 %1140
      %v1142 = vsel %vm727, %v1132, 0.0
      %1143 = vadd.xlane.f32.xlu0 %v1142
      %v1144 = vpop.xlane.xlu0 %1143
      %v1145 = vsel %vm727, %v1133, 0.0
      %1146 = vadd.xlane.f32.xlu0 %v1145
      %v1147 = vpop.xlane.xlu0 %1146
      %v1148 = vsel %vm727, %v1134, 0.0
      %1149 = vadd.xlane.f32.xlu0 %v1148
      %v1150 = vpop.xlane.xlu0 %1149
      %v1151 = vsel %vm727, %v1135, 0.0
      %1152 = vadd.xlane.f32.xlu0 %v1151
      %v1153 = vpop.xlane.xlu0 %1152
      %v1154 = vsel %vm727, %v1136, 0.0
      %1155 = vadd.xlane.f32.xlu0 %v1154
      %v1156 = vpop.xlane.xlu0 %1155
      %v1157 = vsel %vm727, %v1137, 0.0
      %1158 = vadd.xlane.f32.xlu0 %v1157
      %v1159 = vpop.xlane.xlu0 %1158
      %v1160 = vsel %vm727, %v1138, 0.0
      %1161 = vadd.xlane.f32.xlu0 %v1160
      %v1162 = vpop.xlane.xlu0 %1161
      %v1163 = vmul.f32 %v1141, %v718
      %v1164 = vmul.f32 %v1144, %v719
      %v1165 = vmul.f32 %v1147, %v720
      %v1166 = vmul.f32 %v1150, %v721
      %v1167 = vmul.f32 %v1153, %v722
      %v1168 = vmul.f32 %v1156, %v723
      %v1169 = vmul.f32 %v1159, %v724
      %v1170 = vmul.f32 %v1162, %v725
      %v1171 = vsel %vm727, %v1163, 0.0
      %v1172 = vsel %vm727, %v1164, 0.0
      %v1173 = vadd.f32 %v1171, %v1172
      %v1174 = vsel %vm727, %v1165, 0.0
      %v1175 = vadd.f32 %v1173, %v1174
      %v1176 = vsel %vm727, %v1166, 0.0
      %v1177 = vadd.f32 %v1175, %v1176
      %v1178 = vsel %vm727, %v1167, 0.0
      %v1179 = vadd.f32 %v1177, %v1178
      %v1180 = vsel %vm727, %v1168, 0.0
      %v1181 = vadd.f32 %v1179, %v1180
      %v1182 = vsel %vm727, %v1169, 0.0
      %v1183 = vadd.f32 %v1181, %v1182
      %v1184 = vsel %vm727, %v1170, 0.0
      %v1185 = vadd.f32 %v1183, %v1184
      %v1186 = vrot.slane %v1185, 4
      %v1187 = vadd.f32 %v1185, %v1186
      %v1188 = vrot.slane %v1187, 2
      %v1189 = vadd.f32 %v1187, %v1188
      %v1190 = vrot.slane %v1189, 1
      %v1191 = vadd.f32 %v1189, %v1190
      %1192 = vst.msk [vmem:[#allocation17] sm:$0x1] %vm995, %v1191
      %v1193 = vld [vmem:[#allocation4 + $0x1] sm:$0x1]
      %v1194 = vld [vmem:[#allocation5 + $0x1] sm:$0x1]
      %v1195 = vld [vmem:[#allocation6 + $0x1] sm:$0x1]
      %v1196 = vld [vmem:[#allocation7 + $0x1] sm:$0x1]
      %v1197 = vld [vmem:[#allocation8 + $0x1] sm:$0x1]
      %v1198 = vld [vmem:[#allocation9 + $0x1] sm:$0x1]
      %v1199 = vlaneseq
      %v1200 = vshrl.u32 %v1199, 7
      %v1201 = vsub.s32 0, %v1200
      %v1202 = vrot.slane %v1198, %v1201
      %v1203 = vmul.f32 %v1202, %v718
      %v1204 = vmul.f32 %v1202, %v719
      %v1205 = vmul.f32 %v1202, %v720
      %v1206 = vmul.f32 %v1202, %v721
      %v1207 = vmul.f32 %v1202, %v722
      %v1208 = vmul.f32 %v1202, %v723
      %v1209 = vmul.f32 %v1202, %v724
      %v1210 = vmul.f32 %v1202, %v725
      %v1211 = vsel %vm727, %v1203, 0.0
      %1212 = vadd.xlane.f32.xlu0 %v1211
      %v1213 = vpop.xlane.xlu0 %1212
      %v1214 = vsel %vm727, %v1204, 0.0
      %1215 = vadd.xlane.f32.xlu0 %v1214
      %v1216 = vpop.xlane.xlu0 %1215
      %v1217 = vsel %vm727, %v1205, 0.0
      %1218 = vadd.xlane.f32.xlu0 %v1217
      %v1219 = vpop.xlane.xlu0 %1218
      %v1220 = vsel %vm727, %v1206, 0.0
      %1221 = vadd.xlane.f32.xlu0 %v1220
      %v1222 = vpop.xlane.xlu0 %1221
      %v1223 = vsel %vm727, %v1207, 0.0
      %1224 = vadd.xlane.f32.xlu0 %v1223
      %v1225 = vpop.xlane.xlu0 %1224
      %v1226 = vsel %vm727, %v1208, 0.0
      %1227 = vadd.xlane.f32.xlu0 %v1226
      %v1228 = vpop.xlane.xlu0 %1227
      %v1229 = vsel %vm727, %v1209, 0.0
      %1230 = vadd.xlane.f32.xlu0 %v1229
      %v1231 = vpop.xlane.xlu0 %1230
      %v1232 = vsel %vm727, %v1210, 0.0
      %1233 = vadd.xlane.f32.xlu0 %v1232
      %v1234 = vpop.xlane.xlu0 %1233
      %v1235 = vlaneseq
      %v1236 = vshrl.u32 %v1235, 7
      %v1237 = vsub.s32 0, %v1236
      %v1238 = vrot.slane %v1196, %v1237
      %v1239 = vmul.f32 %v922, %v1238
      %v1240 = vmul.f32 %v923, %v1238
      %v1241 = vmul.f32 %v924, %v1238
      %v1242 = vmul.f32 %v925, %v1238
      %v1243 = vmul.f32 %v926, %v1238
      %v1244 = vmul.f32 %v927, %v1238
      %v1245 = vmul.f32 %v928, %v1238
      %v1246 = vmul.f32 %v929, %v1238
      %v1247 = vsel %vm727, %v1239, 0.0
      %1248 = vadd.xlane.f32.xlu0 %v1247
      %v1249 = vpop.xlane.xlu0 %1248
      %v1250 = vsel %vm727, %v1240, 0.0
      %1251 = vadd.xlane.f32.xlu0 %v1250
      %v1252 = vpop.xlane.xlu0 %1251
      %v1253 = vsel %vm727, %v1241, 0.0
      %1254 = vadd.xlane.f32.xlu0 %v1253
      %v1255 = vpop.xlane.xlu0 %1254
      %v1256 = vsel %vm727, %v1242, 0.0
      %1257 = vadd.xlane.f32.xlu0 %v1256
      %v1258 = vpop.xlane.xlu0 %1257
      %v1259 = vsel %vm727, %v1243, 0.0
      %1260 = vadd.xlane.f32.xlu0 %v1259
      %v1261 = vpop.xlane.xlu0 %1260
      %v1262 = vsel %vm727, %v1244, 0.0
      %1263 = vadd.xlane.f32.xlu0 %v1262
      %v1264 = vpop.xlane.xlu0 %1263
      %v1265 = vsel %vm727, %v1245, 0.0
      %1266 = vadd.xlane.f32.xlu0 %v1265
      %v1267 = vpop.xlane.xlu0 %1266
      %v1268 = vsel %vm727, %v1246, 0.0
      %1269 = vadd.xlane.f32.xlu0 %v1268
      %v1270 = vpop.xlane.xlu0 %1269
      %v1271 = vlaneseq
      %v1272 = vshrl.u32 %v1271, 7
      %v1273 = vsub.s32 0, %v1272
      %v1274 = vrot.slane %v1194, %v1273
      %v1275 = vmul.f32 %v922, %v1274
      %v1276 = vmul.f32 %v923, %v1274
      %v1277 = vmul.f32 %v924, %v1274
      %v1278 = vmul.f32 %v925, %v1274
      %v1279 = vmul.f32 %v926, %v1274
      %v1280 = vmul.f32 %v927, %v1274
      %v1281 = vmul.f32 %v928, %v1274
      %v1282 = vmul.f32 %v929, %v1274
      %v1283 = vlaneseq
      %v1284 = vshrl.u32 %v1283, 7
      %v1285 = vsub.s32 0, %v1284
      %v1286 = vrot.slane %v1197, %v1285
      %v1287 = vmul.f32 %v1249, %v1286
      %v1288 = vmul.f32 %v1252, %v1286
      %v1289 = vmul.f32 %v1255, %v1286
      %v1290 = vmul.f32 %v1258, %v1286
      %v1291 = vmul.f32 %v1261, %v1286
      %v1292 = vmul.f32 %v1264, %v1286
      %v1293 = vmul.f32 %v1267, %v1286
      %v1294 = vmul.f32 %v1270, %v1286
      %v1295 = vadd.f32 %v1275, %v1287
      %v1296 = vadd.f32 %v1276, %v1288
      %v1297 = vadd.f32 %v1277, %v1289
      %v1298 = vadd.f32 %v1278, %v1290
      %v1299 = vadd.f32 %v1279, %v1291
      %v1300 = vadd.f32 %v1280, %v1292
      %v1301 = vadd.f32 %v1281, %v1293
      %v1302 = vadd.f32 %v1282, %v1294
      %v1303 = vlaneseq
      %v1304 = vshrl.u32 %v1303, 7
      %v1305 = vsub.s32 0, %v1304
      %v1306 = vrot.slane %v1195, %v1305
      %v1307 = vmul.f32 %v1213, %v1306
      %v1308 = vmul.f32 %v1216, %v1306
      %v1309 = vmul.f32 %v1219, %v1306
      %v1310 = vmul.f32 %v1222, %v1306
      %v1311 = vmul.f32 %v1225, %v1306
      %v1312 = vmul.f32 %v1228, %v1306
      %v1313 = vmul.f32 %v1231, %v1306
      %v1314 = vmul.f32 %v1234, %v1306
      %v1315 = vadd.f32 %v1295, %v1307
      %v1316 = vadd.f32 %v1296, %v1308
      %v1317 = vadd.f32 %v1297, %v1309
      %v1318 = vadd.f32 %v1298, %v1310
      %v1319 = vadd.f32 %v1299, %v1311
      %v1320 = vadd.f32 %v1300, %v1312
      %v1321 = vadd.f32 %v1301, %v1313
      %v1322 = vadd.f32 %v1302, %v1314
      %v1323 = vlaneseq
      %v1324 = vshrl.u32 %v1323, 7
      %v1325 = vsub.s32 0, %v1324
      %v1326 = vrot.slane %v1193, %v1325
      %v1327 = vmul.f32 %v1315, %v1326
      %v1328 = vmul.f32 %v1316, %v1326
      %v1329 = vmul.f32 %v1317, %v1326
      %v1330 = vmul.f32 %v1318, %v1326
      %v1331 = vmul.f32 %v1319, %v1326
      %v1332 = vmul.f32 %v1320, %v1326
      %v1333 = vmul.f32 %v1321, %v1326
      %v1334 = vmul.f32 %v1322, %v1326
      %v1335 = vsel %vm727, %v1327, 0.0
      %1336 = vadd.xlane.f32.xlu0 %v1335
      %v1337 = vpop.xlane.xlu0 %1336
      %v1338 = vsel %vm727, %v1328, 0.0
      %1339 = vadd.xlane.f32.xlu0 %v1338
      %v1340 = vpop.xlane.xlu0 %1339
      %v1341 = vsel %vm727, %v1329, 0.0
      %1342 = vadd.xlane.f32.xlu0 %v1341
      %v1343 = vpop.xlane.xlu0 %1342
      %v1344 = vsel %vm727, %v1330, 0.0
      %1345 = vadd.xlane.f32.xlu0 %v1344
      %v1346 = vpop.xlane.xlu0 %1345
      %v1347 = vsel %vm727, %v1331, 0.0
      %1348 = vadd.xlane.f32.xlu0 %v1347
      %v1349 = vpop.xlane.xlu0 %1348
      %v1350 = vsel %vm727, %v1332, 0.0
      %1351 = vadd.xlane.f32.xlu0 %v1350
      %v1352 = vpop.xlane.xlu0 %1351
      %v1353 = vsel %vm727, %v1333, 0.0
      %1354 = vadd.xlane.f32.xlu0 %v1353
      %v1355 = vpop.xlane.xlu0 %1354
      %v1356 = vsel %vm727, %v1334, 0.0
      %1357 = vadd.xlane.f32.xlu0 %v1356
      %v1358 = vpop.xlane.xlu0 %1357
      %v1359 = vmul.f32 %v1337, %v718
      %v1360 = vmul.f32 %v1340, %v719
      %v1361 = vmul.f32 %v1343, %v720
      %v1362 = vmul.f32 %v1346, %v721
      %v1363 = vmul.f32 %v1349, %v722
      %v1364 = vmul.f32 %v1352, %v723
      %v1365 = vmul.f32 %v1355, %v724
      %v1366 = vmul.f32 %v1358, %v725
      %v1367 = vsel %vm727, %v1359, 0.0
      %v1368 = vsel %vm727, %v1360, 0.0
      %v1369 = vadd.f32 %v1367, %v1368
      %v1370 = vsel %vm727, %v1361, 0.0
      %v1371 = vadd.f32 %v1369, %v1370
      %v1372 = vsel %vm727, %v1362, 0.0
      %v1373 = vadd.f32 %v1371, %v1372
      %v1374 = vsel %vm727, %v1363, 0.0
      %v1375 = vadd.f32 %v1373, %v1374
      %v1376 = vsel %vm727, %v1364, 0.0
      %v1377 = vadd.f32 %v1375, %v1376
      %v1378 = vsel %vm727, %v1365, 0.0
      %v1379 = vadd.f32 %v1377, %v1378
      %v1380 = vsel %vm727, %v1366, 0.0
      %v1381 = vadd.f32 %v1379, %v1380
      %v1382 = vrot.slane %v1381, 4
      %v1383 = vadd.f32 %v1381, %v1382
      %v1384 = vrot.slane %v1383, 2
      %v1385 = vadd.f32 %v1383, %v1384
      %v1386 = vrot.slane %v1385, 1
      %v1387 = vadd.f32 %v1385, %v1386
      %1388 = vst.msk [vmem:[#allocation10 + $0x1] sm:$0x1] %vm995, %v1387
      %v1389 = vld [vmem:[#allocation11 + $0x1] sm:$0x1]
      %v1390 = vld [vmem:[#allocation12 + $0x1] sm:$0x1]
      %v1391 = vld [vmem:[#allocation13 + $0x1] sm:$0x1]
      %v1392 = vld [vmem:[#allocation14 + $0x1] sm:$0x1]
      %v1393 = vld [vmem:[#allocation15 + $0x1] sm:$0x1]
      %v1394 = vld [vmem:[#allocation16 + $0x1] sm:$0x1]
      %v1395 = vlaneseq
      %v1396 = vshrl.u32 %v1395, 7
      %v1397 = vsub.s32 0, %v1396
      %v1398 = vrot.slane %v1394, %v1397
      %v1399 = vmul.f32 %v1398, %v718
      %v1400 = vmul.f32 %v1398, %v719
      %v1401 = vmul.f32 %v1398, %v720
      %v1402 = vmul.f32 %v1398, %v721
      %v1403 = vmul.f32 %v1398, %v722
      %v1404 = vmul.f32 %v1398, %v723
      %v1405 = vmul.f32 %v1398, %v724
      %v1406 = vmul.f32 %v1398, %v725
      %v1407 = vsel %vm727, %v1399, 0.0
      %1408 = vadd.xlane.f32.xlu0 %v1407
      %v1409 = vpop.xlane.xlu0 %1408
      %v1410 = vsel %vm727, %v1400, 0.0
      %1411 = vadd.xlane.f32.xlu0 %v1410
      %v1412 = vpop.xlane.xlu0 %1411
      %v1413 = vsel %vm727, %v1401, 0.0
      %1414 = vadd.xlane.f32.xlu0 %v1413
      %v1415 = vpop.xlane.xlu0 %1414
      %v1416 = vsel %vm727, %v1402, 0.0
      %1417 = vadd.xlane.f32.xlu0 %v1416
      %v1418 = vpop.xlane.xlu0 %1417
      %v1419 = vsel %vm727, %v1403, 0.0
      %1420 = vadd.xlane.f32.xlu0 %v1419
      %v1421 = vpop.xlane.xlu0 %1420
      %v1422 = vsel %vm727, %v1404, 0.0
      %1423 = vadd.xlane.f32.xlu0 %v1422
      %v1424 = vpop.xlane.xlu0 %1423
      %v1425 = vsel %vm727, %v1405, 0.0
      %1426 = vadd.xlane.f32.xlu0 %v1425
      %v1427 = vpop.xlane.xlu0 %1426
      %v1428 = vsel %vm727, %v1406, 0.0
      %1429 = vadd.xlane.f32.xlu0 %v1428
      %v1430 = vpop.xlane.xlu0 %1429
      %v1431 = vlaneseq
      %v1432 = vshrl.u32 %v1431, 7
      %v1433 = vsub.s32 0, %v1432
      %v1434 = vrot.slane %v1392, %v1433
      %v1435 = vmul.f32 %v1119, %v1434
      %v1436 = vmul.f32 %v1120, %v1434
      %v1437 = vmul.f32 %v1121, %v1434
      %v1438 = vmul.f32 %v1122, %v1434
      %v1439 = vmul.f32 %v1123, %v1434
      %v1440 = vmul.f32 %v1124, %v1434
      %v1441 = vmul.f32 %v1125, %v1434
      %v1442 = vmul.f32 %v1126, %v1434
      %v1443 = vsel %vm727, %v1435, 0.0
      %1444 = vadd.xlane.f32.xlu0 %v1443
      %v1445 = vpop.xlane.xlu0 %1444
      %v1446 = vsel %vm727, %v1436, 0.0
      %1447 = vadd.xlane.f32.xlu0 %v1446
      %v1448 = vpop.xlane.xlu0 %1447
      %v1449 = vsel %vm727, %v1437, 0.0
      %1450 = vadd.xlane.f32.xlu0 %v1449
      %v1451 = vpop.xlane.xlu0 %1450
      %v1452 = vsel %vm727, %v1438, 0.0
      %1453 = vadd.xlane.f32.xlu0 %v1452
      %v1454 = vpop.xlane.xlu0 %1453
      %v1455 = vsel %vm727, %v1439, 0.0
      %1456 = vadd.xlane.f32.xlu0 %v1455
      %v1457 = vpop.xlane.xlu0 %1456
      %v1458 = vsel %vm727, %v1440, 0.0
      %1459 = vadd.xlane.f32.xlu0 %v1458
      %v1460 = vpop.xlane.xlu0 %1459
      %v1461 = vsel %vm727, %v1441, 0.0
      %1462 = vadd.xlane.f32.xlu0 %v1461
      %v1463 = vpop.xlane.xlu0 %1462
      %v1464 = vsel %vm727, %v1442, 0.0
      %1465 = vadd.xlane.f32.xlu0 %v1464
      %v1466 = vpop.xlane.xlu0 %1465
      %v1467 = vlaneseq
      %v1468 = vshrl.u32 %v1467, 7
      %v1469 = vsub.s32 0, %v1468
      %v1470 = vrot.slane %v1390, %v1469
      %v1471 = vmul.f32 %v1119, %v1470
      %v1472 = vmul.f32 %v1120, %v1470
      %v1473 = vmul.f32 %v1121, %v1470
      %v1474 = vmul.f32 %v1122, %v1470
      %v1475 = vmul.f32 %v1123, %v1470
      %v1476 = vmul.f32 %v1124, %v1470
      %v1477 = vmul.f32 %v1125, %v1470
      %v1478 = vmul.f32 %v1126, %v1470
      %v1479 = vlaneseq
      %v1480 = vshrl.u32 %v1479, 7
      %v1481 = vsub.s32 0, %v1480
      %v1482 = vrot.slane %v1393, %v1481
      %v1483 = vmul.f32 %v1445, %v1482
      %v1484 = vmul.f32 %v1448, %v1482
      %v1485 = vmul.f32 %v1451, %v1482
      %v1486 = vmul.f32 %v1454, %v1482
      %v1487 = vmul.f32 %v1457, %v1482
      %v1488 = vmul.f32 %v1460, %v1482
      %v1489 = vmul.f32 %v1463, %v1482
      %v1490 = vmul.f32 %v1466, %v1482
      %v1491 = vadd.f32 %v1471, %v1483
      %v1492 = vadd.f32 %v1472, %v1484
      %v1493 = vadd.f32 %v1473, %v1485
      %v1494 = vadd.f32 %v1474, %v1486
      %v1495 = vadd.f32 %v1475, %v1487
      %v1496 = vadd.f32 %v1476, %v1488
      %v1497 = vadd.f32 %v1477, %v1489
      %v1498 = vadd.f32 %v1478, %v1490
      %v1499 = vlaneseq
      %v1500 = vshrl.u32 %v1499, 7
      %v1501 = vsub.s32 0, %v1500
      %v1502 = vrot.slane %v1391, %v1501
      %v1503 = vmul.f32 %v1409, %v1502
      %v1504 = vmul.f32 %v1412, %v1502
      %v1505 = vmul.f32 %v1415, %v1502
      %v1506 = vmul.f32 %v1418, %v1502
      %v1507 = vmul.f32 %v1421, %v1502
      %v1508 = vmul.f32 %v1424, %v1502
      %v1509 = vmul.f32 %v1427, %v1502
      %v1510 = vmul.f32 %v1430, %v1502
      %v1511 = vadd.f32 %v1491, %v1503
      %v1512 = vadd.f32 %v1492, %v1504
      %v1513 = vadd.f32 %v1493, %v1505
      %v1514 = vadd.f32 %v1494, %v1506
      %v1515 = vadd.f32 %v1495, %v1507
      %v1516 = vadd.f32 %v1496, %v1508
      %v1517 = vadd.f32 %v1497, %v1509
      %v1518 = vadd.f32 %v1498, %v1510
      %v1519 = vlaneseq
      %v1520 = vshrl.u32 %v1519, 7
      %v1521 = vsub.s32 0, %v1520
      %v1522 = vrot.slane %v1389, %v1521
      %v1523 = vmul.f32 %v1511, %v1522
      %v1524 = vmul.f32 %v1512, %v1522
      %v1525 = vmul.f32 %v1513, %v1522
      %v1526 = vmul.f32 %v1514, %v1522
      %v1527 = vmul.f32 %v1515, %v1522
      %v1528 = vmul.f32 %v1516, %v1522
      %v1529 = vmul.f32 %v1517, %v1522
      %v1530 = vmul.f32 %v1518, %v1522
      %v1531 = vsel %vm727, %v1523, 0.0
      %1532 = vadd.xlane.f32.xlu0 %v1531
      %v1533 = vpop.xlane.xlu0 %1532
      %v1534 = vsel %vm727, %v1524, 0.0
      %1535 = vadd.xlane.f32.xlu0 %v1534
      %v1536 = vpop.xlane.xlu0 %1535
      %v1537 = vsel %vm727, %v1525, 0.0
      %1538 = vadd.xlane.f32.xlu0 %v1537
      %v1539 = vpop.xlane.xlu0 %1538
      %v1540 = vsel %vm727, %v1526, 0.0
      %1541 = vadd.xlane.f32.xlu0 %v1540
      %v1542 = vpop.xlane.xlu0 %1541
      %v1543 = vsel %vm727, %v1527, 0.0
      %1544 = vadd.xlane.f32.xlu0 %v1543
      %v1545 = vpop.xlane.xlu0 %1544
      %v1546 = vsel %vm727, %v1528, 0.0
      %1547 = vadd.xlane.f32.xlu0 %v1546
      %v1548 = vpop.xlane.xlu0 %1547
      %v1549 = vsel %vm727, %v1529, 0.0
      %1550 = vadd.xlane.f32.xlu0 %v1549
      %v1551 = vpop.xlane.xlu0 %1550
      %v1552 = vsel %vm727, %v1530, 0.0
      %1553 = vadd.xlane.f32.xlu0 %v1552
      %v1554 = vpop.xlane.xlu0 %1553
      %v1555 = vmul.f32 %v1533, %v718
      %v1556 = vmul.f32 %v1536, %v719
      %v1557 = vmul.f32 %v1539, %v720
      %v1558 = vmul.f32 %v1542, %v721
      %v1559 = vmul.f32 %v1545, %v722
      %v1560 = vmul.f32 %v1548, %v723
      %v1561 = vmul.f32 %v1551, %v724
      %v1562 = vmul.f32 %v1554, %v725
      %v1563 = vsel %vm727, %v1555, 0.0
      %v1564 = vsel %vm727, %v1556, 0.0
      %v1565 = vadd.f32 %v1563, %v1564
      %v1566 = vsel %vm727, %v1557, 0.0
      %v1567 = vadd.f32 %v1565, %v1566
      %v1568 = vsel %vm727, %v1558, 0.0
      %v1569 = vadd.f32 %v1567, %v1568
      %v1570 = vsel %vm727, %v1559, 0.0
      %v1571 = vadd.f32 %v1569, %v1570
      %v1572 = vsel %vm727, %v1560, 0.0
      %v1573 = vadd.f32 %v1571, %v1572
      %v1574 = vsel %vm727, %v1561, 0.0
      %v1575 = vadd.f32 %v1573, %v1574
      %v1576 = vsel %vm727, %v1562, 0.0
      %v1577 = vadd.f32 %v1575, %v1576
      %v1578 = vrot.slane %v1577, 4
      %v1579 = vadd.f32 %v1577, %v1578
      %v1580 = vrot.slane %v1579, 2
      %v1581 = vadd.f32 %v1579, %v1580
      %v1582 = vrot.slane %v1581, 1
      %v1583 = vadd.f32 %v1581, %v1582
      %1584 = vst.msk [vmem:[#allocation17 + $0x1] sm:$0x1] %vm995, %v1583
      %v1585 = vld [vmem:[#allocation4 + $0x2] sm:$0x1]
      %v1586 = vld [vmem:[#allocation5 + $0x2] sm:$0x1]
      %v1587 = vld [vmem:[#allocation6 + $0x2] sm:$0x1]
      %v1588 = vld [vmem:[#allocation7 + $0x2] sm:$0x1]
      %v1589 = vld [vmem:[#allocation8 + $0x2] sm:$0x1]
      %v1590 = vld [vmem:[#allocation9 + $0x2] sm:$0x1]
      %v1591 = vlaneseq
      %v1592 = vshrl.u32 %v1591, 7
      %v1593 = vsub.s32 0, %v1592
      %v1594 = vrot.slane %v1590, %v1593
      %v1595 = vmul.f32 %v1594, %v718
      %v1596 = vmul.f32 %v1594, %v719
      %v1597 = vmul.f32 %v1594, %v720
      %v1598 = vmul.f32 %v1594, %v721
      %v1599 = vmul.f32 %v1594, %v722
      %v1600 = vmul.f32 %v1594, %v723
      %v1601 = vmul.f32 %v1594, %v724
      %v1602 = vmul.f32 %v1594, %v725
      %v1603 = vsel %vm727, %v1595, 0.0
      %1604 = vadd.xlane.f32.xlu0 %v1603
      %v1605 = vpop.xlane.xlu0 %1604
      %v1606 = vsel %vm727, %v1596, 0.0
      %1607 = vadd.xlane.f32.xlu0 %v1606
      %v1608 = vpop.xlane.xlu0 %1607
      %v1609 = vsel %vm727, %v1597, 0.0
      %1610 = vadd.xlane.f32.xlu0 %v1609
      %v1611 = vpop.xlane.xlu0 %1610
      %v1612 = vsel %vm727, %v1598, 0.0
      %1613 = vadd.xlane.f32.xlu0 %v1612
      %v1614 = vpop.xlane.xlu0 %1613
      %v1615 = vsel %vm727, %v1599, 0.0
      %1616 = vadd.xlane.f32.xlu0 %v1615
      %v1617 = vpop.xlane.xlu0 %1616
      %v1618 = vsel %vm727, %v1600, 0.0
      %1619 = vadd.xlane.f32.xlu0 %v1618
      %v1620 = vpop.xlane.xlu0 %1619
      %v1621 = vsel %vm727, %v1601, 0.0
      %1622 = vadd.xlane.f32.xlu0 %v1621
      %v1623 = vpop.xlane.xlu0 %1622
      %v1624 = vsel %vm727, %v1602, 0.0
      %1625 = vadd.xlane.f32.xlu0 %v1624
      %v1626 = vpop.xlane.xlu0 %1625
      %v1627 = vlaneseq
      %v1628 = vshrl.u32 %v1627, 7
      %v1629 = vsub.s32 0, %v1628
      %v1630 = vrot.slane %v1588, %v1629
      %v1631 = vmul.f32 %v1315, %v1630
      %v1632 = vmul.f32 %v1316, %v1630
      %v1633 = vmul.f32 %v1317, %v1630
      %v1634 = vmul.f32 %v1318, %v1630
      %v1635 = vmul.f32 %v1319, %v1630
      %v1636 = vmul.f32 %v1320, %v1630
      %v1637 = vmul.f32 %v1321, %v1630
      %v1638 = vmul.f32 %v1322, %v1630
      %v1639 = vsel %vm727, %v1631, 0.0
      %1640 = vadd.xlane.f32.xlu0 %v1639
      %v1641 = vpop.xlane.xlu0 %1640
      %v1642 = vsel %vm727, %v1632, 0.0
      %1643 = vadd.xlane.f32.xlu0 %v1642
      %v1644 = vpop.xlane.xlu0 %1643
      %v1645 = vsel %vm727, %v1633, 0.0
      %1646 = vadd.xlane.f32.xlu0 %v1645
      %v1647 = vpop.xlane.xlu0 %1646
      %v1648 = vsel %vm727, %v1634, 0.0
      %1649 = vadd.xlane.f32.xlu0 %v1648
      %v1650 = vpop.xlane.xlu0 %1649
      %v1651 = vsel %vm727, %v1635, 0.0
      %1652 = vadd.xlane.f32.xlu0 %v1651
      %v1653 = vpop.xlane.xlu0 %1652
      %v1654 = vsel %vm727, %v1636, 0.0
      %1655 = vadd.xlane.f32.xlu0 %v1654
      %v1656 = vpop.xlane.xlu0 %1655
      %v1657 = vsel %vm727, %v1637, 0.0
      %1658 = vadd.xlane.f32.xlu0 %v1657
      %v1659 = vpop.xlane.xlu0 %1658
      %v1660 = vsel %vm727, %v1638, 0.0
      %1661 = vadd.xlane.f32.xlu0 %v1660
      %v1662 = vpop.xlane.xlu0 %1661
      %v1663 = vlaneseq
      %v1664 = vshrl.u32 %v1663, 7
      %v1665 = vsub.s32 0, %v1664
      %v1666 = vrot.slane %v1586, %v1665
      %v1667 = vmul.f32 %v1315, %v1666
      %v1668 = vmul.f32 %v1316, %v1666
      %v1669 = vmul.f32 %v1317, %v1666
      %v1670 = vmul.f32 %v1318, %v1666
      %v1671 = vmul.f32 %v1319, %v1666
      %v1672 = vmul.f32 %v1320, %v1666
      %v1673 = vmul.f32 %v1321, %v1666
      %v1674 = vmul.f32 %v1322, %v1666
      %v1675 = vlaneseq
      %v1676 = vshrl.u32 %v1675, 7
      %v1677 = vsub.s32 0, %v1676
      %v1678 = vrot.slane %v1589, %v1677
      %v1679 = vmul.f32 %v1641, %v1678
      %v1680 = vmul.f32 %v1644, %v1678
      %v1681 = vmul.f32 %v1647, %v1678
      %v1682 = vmul.f32 %v1650, %v1678
      %v1683 = vmul.f32 %v1653, %v1678
      %v1684 = vmul.f32 %v1656, %v1678
      %v1685 = vmul.f32 %v1659, %v1678
      %v1686 = vmul.f32 %v1662, %v1678
      %v1687 = vadd.f32 %v1667, %v1679
      %v1688 = vadd.f32 %v1668, %v1680
      %v1689 = vadd.f32 %v1669, %v1681
      %v1690 = vadd.f32 %v1670, %v1682
      %v1691 = vadd.f32 %v1671, %v1683
      %v1692 = vadd.f32 %v1672, %v1684
      %v1693 = vadd.f32 %v1673, %v1685
      %v1694 = vadd.f32 %v1674, %v1686
      %v1695 = vlaneseq
      %v1696 = vshrl.u32 %v1695, 7
      %v1697 = vsub.s32 0, %v1696
      %v1698 = vrot.slane %v1587, %v1697
      %v1699 = vmul.f32 %v1605, %v1698
      %v1700 = vmul.f32 %v1608, %v1698
      %v1701 = vmul.f32 %v1611, %v1698
      %v1702 = vmul.f32 %v1614, %v1698
      %v1703 = vmul.f32 %v1617, %v1698
      %v1704 = vmul.f32 %v1620, %v1698
      %v1705 = vmul.f32 %v1623, %v1698
      %v1706 = vmul.f32 %v1626, %v1698
      %v1707 = vadd.f32 %v1687, %v1699
      %v1708 = vadd.f32 %v1688, %v1700
      %v1709 = vadd.f32 %v1689, %v1701
      %v1710 = vadd.f32 %v1690, %v1702
      %v1711 = vadd.f32 %v1691, %v1703
      %v1712 = vadd.f32 %v1692, %v1704
      %v1713 = vadd.f32 %v1693, %v1705
      %v1714 = vadd.f32 %v1694, %v1706
      %v1715 = vlaneseq
      %v1716 = vshrl.u32 %v1715, 7
      %v1717 = vsub.s32 0, %v1716
      %v1718 = vrot.slane %v1585, %v1717
      %v1719 = vmul.f32 %v1707, %v1718
      %v1720 = vmul.f32 %v1708, %v1718
      %v1721 = vmul.f32 %v1709, %v1718
      %v1722 = vmul.f32 %v1710, %v1718
      %v1723 = vmul.f32 %v1711, %v1718
      %v1724 = vmul.f32 %v1712, %v1718
      %v1725 = vmul.f32 %v1713, %v1718
      %v1726 = vmul.f32 %v1714, %v1718
      %v1727 = vsel %vm727, %v1719, 0.0
      %1728 = vadd.xlane.f32.xlu0 %v1727
      %v1729 = vpop.xlane.xlu0 %1728
      %v1730 = vsel %vm727, %v1720, 0.0
      %1731 = vadd.xlane.f32.xlu0 %v1730
      %v1732 = vpop.xlane.xlu0 %1731
      %v1733 = vsel %vm727, %v1721, 0.0
      %1734 = vadd.xlane.f32.xlu0 %v1733
      %v1735 = vpop.xlane.xlu0 %1734
      %v1736 = vsel %vm727, %v1722, 0.0
      %1737 = vadd.xlane.f32.xlu0 %v1736
      %v1738 = vpop.xlane.xlu0 %1737
      %v1739 = vsel %vm727, %v1723, 0.0
      %1740 = vadd.xlane.f32.xlu0 %v1739
      %v1741 = vpop.xlane.xlu0 %1740
      %v1742 = vsel %vm727, %v1724, 0.0
      %1743 = vadd.xlane.f32.xlu0 %v1742
      %v1744 = vpop.xlane.xlu0 %1743
      %v1745 = vsel %vm727, %v1725, 0.0
      %1746 = vadd.xlane.f32.xlu0 %v1745
      %v1747 = vpop.xlane.xlu0 %1746
      %v1748 = vsel %vm727, %v1726, 0.0
      %1749 = vadd.xlane.f32.xlu0 %v1748
      %v1750 = vpop.xlane.xlu0 %1749
      %v1751 = vmul.f32 %v1729, %v718
      %v1752 = vmul.f32 %v1732, %v719
      %v1753 = vmul.f32 %v1735, %v720
      %v1754 = vmul.f32 %v1738, %v721
      %v1755 = vmul.f32 %v1741, %v722
      %v1756 = vmul.f32 %v1744, %v723
      %v1757 = vmul.f32 %v1747, %v724
      %v1758 = vmul.f32 %v1750, %v725
      %v1759 = vsel %vm727, %v1751, 0.0
      %v1760 = vsel %vm727, %v1752, 0.0
      %v1761 = vadd.f32 %v1759, %v1760
      %v1762 = vsel %vm727, %v1753, 0.0
      %v1763 = vadd.f32 %v1761, %v1762
      %v1764 = vsel %vm727, %v1754, 0.0
      %v1765 = vadd.f32 %v1763, %v1764
      %v1766 = vsel %vm727, %v1755, 0.0
      %v1767 = vadd.f32 %v1765, %v1766
      %v1768 = vsel %vm727, %v1756, 0.0
      %v1769 = vadd.f32 %v1767, %v1768
      %v1770 = vsel %vm727, %v1757, 0.0
      %v1771 = vadd.f32 %v1769, %v1770
      %v1772 = vsel %vm727, %v1758, 0.0
      %v1773 = vadd.f32 %v1771, %v1772
      %v1774 = vrot.slane %v1773, 4
      %v1775 = vadd.f32 %v1773, %v1774
      %v1776 = vrot.slane %v1775, 2
      %v1777 = vadd.f32 %v1775, %v1776
      %v1778 = vrot.slane %v1777, 1
      %v1779 = vadd.f32 %v1777, %v1778
      %1780 = vst.msk [vmem:[#allocation10 + $0x2] sm:$0x1] %vm995, %v1779
      %v1781 = vld [vmem:[#allocation11 + $0x2] sm:$0x1]
      %v1782 = vld [vmem:[#allocation12 + $0x2] sm:$0x1]
      %v1783 = vld [vmem:[#allocation13 + $0x2] sm:$0x1]
      %v1784 = vld [vmem:[#allocation14 + $0x2] sm:$0x1]
      %v1785 = vld [vmem:[#allocation15 + $0x2] sm:$0x1]
      %v1786 = vld [vmem:[#allocation16 + $0x2] sm:$0x1]
      %v1787 = vlaneseq
      %v1788 = vshrl.u32 %v1787, 7
      %v1789 = vsub.s32 0, %v1788
      %v1790 = vrot.slane %v1786, %v1789
      %v1791 = vmul.f32 %v1790, %v718
      %v1792 = vmul.f32 %v1790, %v719
      %v1793 = vmul.f32 %v1790, %v720
      %v1794 = vmul.f32 %v1790, %v721
      %v1795 = vmul.f32 %v1790, %v722
      %v1796 = vmul.f32 %v1790, %v723
      %v1797 = vmul.f32 %v1790, %v724
      %v1798 = vmul.f32 %v1790, %v725
      %v1799 = vsel %vm727, %v1791, 0.0
      %1800 = vadd.xlane.f32.xlu0 %v1799
      %v1801 = vpop.xlane.xlu0 %1800
      %v1802 = vsel %vm727, %v1792, 0.0
      %1803 = vadd.xlane.f32.xlu0 %v1802
      %v1804 = vpop.xlane.xlu0 %1803
      %v1805 = vsel %vm727, %v1793, 0.0
      %1806 = vadd.xlane.f32.xlu0 %v1805
      %v1807 = vpop.xlane.xlu0 %1806
      %v1808 = vsel %vm727, %v1794, 0.0
      %1809 = vadd.xlane.f32.xlu0 %v1808
      %v1810 = vpop.xlane.xlu0 %1809
      %v1811 = vsel %vm727, %v1795, 0.0
      %1812 = vadd.xlane.f32.xlu0 %v1811
      %v1813 = vpop.xlane.xlu0 %1812
      %v1814 = vsel %vm727, %v1796, 0.0
      %1815 = vadd.xlane.f32.xlu0 %v1814
      %v1816 = vpop.xlane.xlu0 %1815
      %v1817 = vsel %vm727, %v1797, 0.0
      %1818 = vadd.xlane.f32.xlu0 %v1817
      %v1819 = vpop.xlane.xlu0 %1818
      %v1820 = vsel %vm727, %v1798, 0.0
      %1821 = vadd.xlane.f32.xlu0 %v1820
      %v1822 = vpop.xlane.xlu0 %1821
      %v1823 = vlaneseq
      %v1824 = vshrl.u32 %v1823, 7
      %v1825 = vsub.s32 0, %v1824
      %v1826 = vrot.slane %v1784, %v1825
      %v1827 = vmul.f32 %v1511, %v1826
      %v1828 = vmul.f32 %v1512, %v1826
      %v1829 = vmul.f32 %v1513, %v1826
      %v1830 = vmul.f32 %v1514, %v1826
      %v1831 = vmul.f32 %v1515, %v1826
      %v1832 = vmul.f32 %v1516, %v1826
      %v1833 = vmul.f32 %v1517, %v1826
      %v1834 = vmul.f32 %v1518, %v1826
      %v1835 = vsel %vm727, %v1827, 0.0
      %1836 = vadd.xlane.f32.xlu0 %v1835
      %v1837 = vpop.xlane.xlu0 %1836
      %v1838 = vsel %vm727, %v1828, 0.0
      %1839 = vadd.xlane.f32.xlu0 %v1838
      %v1840 = vpop.xlane.xlu0 %1839
      %v1841 = vsel %vm727, %v1829, 0.0
      %1842 = vadd.xlane.f32.xlu0 %v1841
      %v1843 = vpop.xlane.xlu0 %1842
      %v1844 = vsel %vm727, %v1830, 0.0
      %1845 = vadd.xlane.f32.xlu0 %v1844
      %v1846 = vpop.xlane.xlu0 %1845
      %v1847 = vsel %vm727, %v1831, 0.0
      %1848 = vadd.xlane.f32.xlu0 %v1847
      %v1849 = vpop.xlane.xlu0 %1848
      %v1850 = vsel %vm727, %v1832, 0.0
      %1851 = vadd.xlane.f32.xlu0 %v1850
      %v1852 = vpop.xlane.xlu0 %1851
      %v1853 = vsel %vm727, %v1833, 0.0
      %1854 = vadd.xlane.f32.xlu0 %v1853
      %v1855 = vpop.xlane.xlu0 %1854
      %v1856 = vsel %vm727, %v1834, 0.0
      %1857 = vadd.xlane.f32.xlu0 %v1856
      %v1858 = vpop.xlane.xlu0 %1857
      %v1859 = vlaneseq
      %v1860 = vshrl.u32 %v1859, 7
      %v1861 = vsub.s32 0, %v1860
      %v1862 = vrot.slane %v1782, %v1861
      %v1863 = vmul.f32 %v1511, %v1862
      %v1864 = vmul.f32 %v1512, %v1862
      %v1865 = vmul.f32 %v1513, %v1862
      %v1866 = vmul.f32 %v1514, %v1862
      %v1867 = vmul.f32 %v1515, %v1862
      %v1868 = vmul.f32 %v1516, %v1862
      %v1869 = vmul.f32 %v1517, %v1862
      %v1870 = vmul.f32 %v1518, %v1862
      %v1871 = vlaneseq
      %v1872 = vshrl.u32 %v1871, 7
      %v1873 = vsub.s32 0, %v1872
      %v1874 = vrot.slane %v1785, %v1873
      %v1875 = vmul.f32 %v1837, %v1874
      %v1876 = vmul.f32 %v1840, %v1874
      %v1877 = vmul.f32 %v1843, %v1874
      %v1878 = vmul.f32 %v1846, %v1874
      %v1879 = vmul.f32 %v1849, %v1874
      %v1880 = vmul.f32 %v1852, %v1874
      %v1881 = vmul.f32 %v1855, %v1874
      %v1882 = vmul.f32 %v1858, %v1874
      %v1883 = vadd.f32 %v1863, %v1875
      %v1884 = vadd.f32 %v1864, %v1876
      %v1885 = vadd.f32 %v1865, %v1877
      %v1886 = vadd.f32 %v1866, %v1878
      %v1887 = vadd.f32 %v1867, %v1879
      %v1888 = vadd.f32 %v1868, %v1880
      %v1889 = vadd.f32 %v1869, %v1881
      %v1890 = vadd.f32 %v1870, %v1882
      %v1891 = vlaneseq
      %v1892 = vshrl.u32 %v1891, 7
      %v1893 = vsub.s32 0, %v1892
      %v1894 = vrot.slane %v1783, %v1893
      %v1895 = vmul.f32 %v1801, %v1894
      %v1896 = vmul.f32 %v1804, %v1894
      %v1897 = vmul.f32 %v1807, %v1894
      %v1898 = vmul.f32 %v1810, %v1894
      %v1899 = vmul.f32 %v1813, %v1894
      %v1900 = vmul.f32 %v1816, %v1894
      %v1901 = vmul.f32 %v1819, %v1894
      %v1902 = vmul.f32 %v1822, %v1894
      %v1903 = vadd.f32 %v1883, %v1895
      %v1904 = vadd.f32 %v1884, %v1896
      %v1905 = vadd.f32 %v1885, %v1897
      %v1906 = vadd.f32 %v1886, %v1898
      %v1907 = vadd.f32 %v1887, %v1899
      %v1908 = vadd.f32 %v1888, %v1900
      %v1909 = vadd.f32 %v1889, %v1901
      %v1910 = vadd.f32 %v1890, %v1902
      %v1911 = vlaneseq
      %v1912 = vshrl.u32 %v1911, 7
      %v1913 = vsub.s32 0, %v1912
      %v1914 = vrot.slane %v1781, %v1913
      %v1915 = vmul.f32 %v1903, %v1914
      %v1916 = vmul.f32 %v1904, %v1914
      %v1917 = vmul.f32 %v1905, %v1914
      %v1918 = vmul.f32 %v1906, %v1914
      %v1919 = vmul.f32 %v1907, %v1914
      %v1920 = vmul.f32 %v1908, %v1914
      %v1921 = vmul.f32 %v1909, %v1914
      %v1922 = vmul.f32 %v1910, %v1914
      %v1923 = vsel %vm727, %v1915, 0.0
      %1924 = vadd.xlane.f32.xlu0 %v1923
      %v1925 = vpop.xlane.xlu0 %1924
      %v1926 = vsel %vm727, %v1916, 0.0
      %1927 = vadd.xlane.f32.xlu0 %v1926
      %v1928 = vpop.xlane.xlu0 %1927
      %v1929 = vsel %vm727, %v1917, 0.0
      %1930 = vadd.xlane.f32.xlu0 %v1929
      %v1931 = vpop.xlane.xlu0 %1930
      %v1932 = vsel %vm727, %v1918, 0.0
      %1933 = vadd.xlane.f32.xlu0 %v1932
      %v1934 = vpop.xlane.xlu0 %1933
      %v1935 = vsel %vm727, %v1919, 0.0
      %1936 = vadd.xlane.f32.xlu0 %v1935
      %v1937 = vpop.xlane.xlu0 %1936
      %v1938 = vsel %vm727, %v1920, 0.0
      %1939 = vadd.xlane.f32.xlu0 %v1938
      %v1940 = vpop.xlane.xlu0 %1939
      %v1941 = vsel %vm727, %v1921, 0.0
      %1942 = vadd.xlane.f32.xlu0 %v1941
      %v1943 = vpop.xlane.xlu0 %1942
      %v1944 = vsel %vm727, %v1922, 0.0
      %1945 = vadd.xlane.f32.xlu0 %v1944
      %v1946 = vpop.xlane.xlu0 %1945
      %v1947 = vmul.f32 %v1925, %v718
      %v1948 = vmul.f32 %v1928, %v719
      %v1949 = vmul.f32 %v1931, %v720
      %v1950 = vmul.f32 %v1934, %v721
      %v1951 = vmul.f32 %v1937, %v722
      %v1952 = vmul.f32 %v1940, %v723
      %v1953 = vmul.f32 %v1943, %v724
      %v1954 = vmul.f32 %v1946, %v725
      %v1955 = vsel %vm727, %v1947, 0.0
      %v1956 = vsel %vm727, %v1948, 0.0
      %v1957 = vadd.f32 %v1955, %v1956
      %v1958 = vsel %vm727, %v1949, 0.0
      %v1959 = vadd.f32 %v1957, %v1958
      %v1960 = vsel %vm727, %v1950, 0.0
      %v1961 = vadd.f32 %v1959, %v1960
      %v1962 = vsel %vm727, %v1951, 0.0
      %v1963 = vadd.f32 %v1961, %v1962
      %v1964 = vsel %vm727, %v1952, 0.0
      %v1965 = vadd.f32 %v1963, %v1964
      %v1966 = vsel %vm727, %v1953, 0.0
      %v1967 = vadd.f32 %v1965, %v1966
      %v1968 = vsel %vm727, %v1954, 0.0
      %v1969 = vadd.f32 %v1967, %v1968
      %v1970 = vrot.slane %v1969, 4
      %v1971 = vadd.f32 %v1969, %v1970
      %v1972 = vrot.slane %v1971, 2
      %v1973 = vadd.f32 %v1971, %v1972
      %v1974 = vrot.slane %v1973, 1
      %v1975 = vadd.f32 %v1973, %v1974
      %1976 = vst.msk [vmem:[#allocation17 + $0x2] sm:$0x1] %vm995, %v1975
      %v1977 = vld [vmem:[#allocation4 + $0x3] sm:$0x1]
      %v1978 = vld [vmem:[#allocation5 + $0x3] sm:$0x1]
      %v1979 = vld [vmem:[#allocation6 + $0x3] sm:$0x1]
      %v1980 = vld [vmem:[#allocation7 + $0x3] sm:$0x1]
      %v1981 = vld [vmem:[#allocation8 + $0x3] sm:$0x1]
      %v1982 = vld [vmem:[#allocation9 + $0x3] sm:$0x1]
      %v1983 = vlaneseq
      %v1984 = vshrl.u32 %v1983, 7
      %v1985 = vsub.s32 0, %v1984
      %v1986 = vrot.slane %v1982, %v1985
      %v1987 = vmul.f32 %v1986, %v718
      %v1988 = vmul.f32 %v1986, %v719
      %v1989 = vmul.f32 %v1986, %v720
      %v1990 = vmul.f32 %v1986, %v721
      %v1991 = vmul.f32 %v1986, %v722
      %v1992 = vmul.f32 %v1986, %v723
      %v1993 = vmul.f32 %v1986, %v724
      %v1994 = vmul.f32 %v1986, %v725
      %v1995 = vsel %vm727, %v1987, 0.0
      %1996 = vadd.xlane.f32.xlu0 %v1995
      %v1997 = vpop.xlane.xlu0 %1996
      %v1998 = vsel %vm727, %v1988, 0.0
      %1999 = vadd.xlane.f32.xlu0 %v1998
      %v2000 = vpop.xlane.xlu0 %1999
      %v2001 = vsel %vm727, %v1989, 0.0
      %2002 = vadd.xlane.f32.xlu0 %v2001
      %v2003 = vpop.xlane.xlu0 %2002
      %v2004 = vsel %vm727, %v1990, 0.0
      %2005 = vadd.xlane.f32.xlu0 %v2004
      %v2006 = vpop.xlane.xlu0 %2005
      %v2007 = vsel %vm727, %v1991, 0.0
      %2008 = vadd.xlane.f32.xlu0 %v2007
      %v2009 = vpop.xlane.xlu0 %2008
      %v2010 = vsel %vm727, %v1992, 0.0
      %2011 = vadd.xlane.f32.xlu0 %v2010
      %v2012 = vpop.xlane.xlu0 %2011
      %v2013 = vsel %vm727, %v1993, 0.0
      %2014 = vadd.xlane.f32.xlu0 %v2013
      %v2015 = vpop.xlane.xlu0 %2014
      %v2016 = vsel %vm727, %v1994, 0.0
      %2017 = vadd.xlane.f32.xlu0 %v2016
      %v2018 = vpop.xlane.xlu0 %2017
      %v2019 = vlaneseq
      %v2020 = vshrl.u32 %v2019, 7
      %v2021 = vsub.s32 0, %v2020
      %v2022 = vrot.slane %v1980, %v2021
      %v2023 = vmul.f32 %v1707, %v2022
      %v2024 = vmul.f32 %v1708, %v2022
      %v2025 = vmul.f32 %v1709, %v2022
      %v2026 = vmul.f32 %v1710, %v2022
      %v2027 = vmul.f32 %v1711, %v2022
      %v2028 = vmul.f32 %v1712, %v2022
      %v2029 = vmul.f32 %v1713, %v2022
      %v2030 = vmul.f32 %v1714, %v2022
      %v2031 = vsel %vm727, %v2023, 0.0
      %2032 = vadd.xlane.f32.xlu0 %v2031
      %v2033 = vpop.xlane.xlu0 %2032
      %v2034 = vsel %vm727, %v2024, 0.0
      %2035 = vadd.xlane.f32.xlu0 %v2034
      %v2036 = vpop.xlane.xlu0 %2035
      %v2037 = vsel %vm727, %v2025, 0.0
      %2038 = vadd.xlane.f32.xlu0 %v2037
      %v2039 = vpop.xlane.xlu0 %2038
      %v2040 = vsel %vm727, %v2026, 0.0
      %2041 = vadd.xlane.f32.xlu0 %v2040
      %v2042 = vpop.xlane.xlu0 %2041
      %v2043 = vsel %vm727, %v2027, 0.0
      %2044 = vadd.xlane.f32.xlu0 %v2043
      %v2045 = vpop.xlane.xlu0 %2044
      %v2046 = vsel %vm727, %v2028, 0.0
      %2047 = vadd.xlane.f32.xlu0 %v2046
      %v2048 = vpop.xlane.xlu0 %2047
      %v2049 = vsel %vm727, %v2029, 0.0
      %2050 = vadd.xlane.f32.xlu0 %v2049
      %v2051 = vpop.xlane.xlu0 %2050
      %v2052 = vsel %vm727, %v2030, 0.0
      %2053 = vadd.xlane.f32.xlu0 %v2052
      %v2054 = vpop.xlane.xlu0 %2053
      %v2055 = vlaneseq
      %v2056 = vshrl.u32 %v2055, 7
      %v2057 = vsub.s32 0, %v2056
      %v2058 = vrot.slane %v1978, %v2057
      %v2059 = vmul.f32 %v1707, %v2058
      %v2060 = vmul.f32 %v1708, %v2058
      %v2061 = vmul.f32 %v1709, %v2058
      %v2062 = vmul.f32 %v1710, %v2058
      %v2063 = vmul.f32 %v1711, %v2058
      %v2064 = vmul.f32 %v1712, %v2058
      %v2065 = vmul.f32 %v1713, %v2058
      %v2066 = vmul.f32 %v1714, %v2058
      %v2067 = vlaneseq
      %v2068 = vshrl.u32 %v2067, 7
      %v2069 = vsub.s32 0, %v2068
      %v2070 = vrot.slane %v1981, %v2069
      %v2071 = vmul.f32 %v2033, %v2070
      %v2072 = vmul.f32 %v2036, %v2070
      %v2073 = vmul.f32 %v2039, %v2070
      %v2074 = vmul.f32 %v2042, %v2070
      %v2075 = vmul.f32 %v2045, %v2070
      %v2076 = vmul.f32 %v2048, %v2070
      %v2077 = vmul.f32 %v2051, %v2070
      %v2078 = vmul.f32 %v2054, %v2070
      %v2079 = vadd.f32 %v2059, %v2071
      %v2080 = vadd.f32 %v2060, %v2072
      %v2081 = vadd.f32 %v2061, %v2073
      %v2082 = vadd.f32 %v2062, %v2074
      %v2083 = vadd.f32 %v2063, %v2075
      %v2084 = vadd.f32 %v2064, %v2076
      %v2085 = vadd.f32 %v2065, %v2077
      %v2086 = vadd.f32 %v2066, %v2078
      %v2087 = vlaneseq
      %v2088 = vshrl.u32 %v2087, 7
      %v2089 = vsub.s32 0, %v2088
      %v2090 = vrot.slane %v1979, %v2089
      %v2091 = vmul.f32 %v1997, %v2090
      %v2092 = vmul.f32 %v2000, %v2090
      %v2093 = vmul.f32 %v2003, %v2090
      %v2094 = vmul.f32 %v2006, %v2090
      %v2095 = vmul.f32 %v2009, %v2090
      %v2096 = vmul.f32 %v2012, %v2090
      %v2097 = vmul.f32 %v2015, %v2090
      %v2098 = vmul.f32 %v2018, %v2090
      %v2099 = vadd.f32 %v2079, %v2091
      %v2100 = vadd.f32 %v2080, %v2092
      %v2101 = vadd.f32 %v2081, %v2093
      %v2102 = vadd.f32 %v2082, %v2094
      %v2103 = vadd.f32 %v2083, %v2095
      %v2104 = vadd.f32 %v2084, %v2096
      %v2105 = vadd.f32 %v2085, %v2097
      %v2106 = vadd.f32 %v2086, %v2098
      %v2107 = vlaneseq
      %v2108 = vshrl.u32 %v2107, 7
      %v2109 = vsub.s32 0, %v2108
      %v2110 = vrot.slane %v1977, %v2109
      %v2111 = vmul.f32 %v2099, %v2110
      %v2112 = vmul.f32 %v2100, %v2110
      %v2113 = vmul.f32 %v2101, %v2110
      %v2114 = vmul.f32 %v2102, %v2110
      %v2115 = vmul.f32 %v2103, %v2110
      %v2116 = vmul.f32 %v2104, %v2110
      %v2117 = vmul.f32 %v2105, %v2110
      %v2118 = vmul.f32 %v2106, %v2110
      %v2119 = vsel %vm727, %v2111, 0.0
      %2120 = vadd.xlane.f32.xlu0 %v2119
      %v2121 = vpop.xlane.xlu0 %2120
      %v2122 = vsel %vm727, %v2112, 0.0
      %2123 = vadd.xlane.f32.xlu0 %v2122
      %v2124 = vpop.xlane.xlu0 %2123
      %v2125 = vsel %vm727, %v2113, 0.0
      %2126 = vadd.xlane.f32.xlu0 %v2125
      %v2127 = vpop.xlane.xlu0 %2126
      %v2128 = vsel %vm727, %v2114, 0.0
      %2129 = vadd.xlane.f32.xlu0 %v2128
      %v2130 = vpop.xlane.xlu0 %2129
      %v2131 = vsel %vm727, %v2115, 0.0
      %2132 = vadd.xlane.f32.xlu0 %v2131
      %v2133 = vpop.xlane.xlu0 %2132
      %v2134 = vsel %vm727, %v2116, 0.0
      %2135 = vadd.xlane.f32.xlu0 %v2134
      %v2136 = vpop.xlane.xlu0 %2135
      %v2137 = vsel %vm727, %v2117, 0.0
      %2138 = vadd.xlane.f32.xlu0 %v2137
      %v2139 = vpop.xlane.xlu0 %2138
      %v2140 = vsel %vm727, %v2118, 0.0
      %2141 = vadd.xlane.f32.xlu0 %v2140
      %v2142 = vpop.xlane.xlu0 %2141
      %v2143 = vmul.f32 %v2121, %v718
      %v2144 = vmul.f32 %v2124, %v719
      %v2145 = vmul.f32 %v2127, %v720
      %v2146 = vmul.f32 %v2130, %v721
      %v2147 = vmul.f32 %v2133, %v722
      %v2148 = vmul.f32 %v2136, %v723
      %v2149 = vmul.f32 %v2139, %v724
      %v2150 = vmul.f32 %v2142, %v725
      %v2151 = vsel %vm727, %v2143, 0.0
      %v2152 = vsel %vm727, %v2144, 0.0
      %v2153 = vadd.f32 %v2151, %v2152
      %v2154 = vsel %vm727, %v2145, 0.0
      %v2155 = vadd.f32 %v2153, %v2154
      %v2156 = vsel %vm727, %v2146, 0.0
      %v2157 = vadd.f32 %v2155, %v2156
      %v2158 = vsel %vm727, %v2147, 0.0
      %v2159 = vadd.f32 %v2157, %v2158
      %v2160 = vsel %vm727, %v2148, 0.0
      %v2161 = vadd.f32 %v2159, %v2160
      %v2162 = vsel %vm727, %v2149, 0.0
      %v2163 = vadd.f32 %v2161, %v2162
      %v2164 = vsel %vm727, %v2150, 0.0
      %v2165 = vadd.f32 %v2163, %v2164
      %v2166 = vrot.slane %v2165, 4
      %v2167 = vadd.f32 %v2165, %v2166
      %v2168 = vrot.slane %v2167, 2
      %v2169 = vadd.f32 %v2167, %v2168
      %v2170 = vrot.slane %v2169, 1
      %v2171 = vadd.f32 %v2169, %v2170
      %2172 = vst.msk [vmem:[#allocation10 + $0x3] sm:$0x1] %vm995, %v2171
      %v2173 = vld [vmem:[#allocation11 + $0x3] sm:$0x1]
      %v2174 = vld [vmem:[#allocation12 + $0x3] sm:$0x1]
      %v2175 = vld [vmem:[#allocation13 + $0x3] sm:$0x1]
      %v2176 = vld [vmem:[#allocation14 + $0x3] sm:$0x1]
      %v2177 = vld [vmem:[#allocation15 + $0x3] sm:$0x1]
      %v2178 = vld [vmem:[#allocation16 + $0x3] sm:$0x1]
      %v2179 = vlaneseq
      %v2180 = vshrl.u32 %v2179, 7
      %v2181 = vsub.s32 0, %v2180
      %v2182 = vrot.slane %v2178, %v2181
      %v2183 = vmul.f32 %v2182, %v718
      %v2184 = vmul.f32 %v2182, %v719
      %v2185 = vmul.f32 %v2182, %v720
      %v2186 = vmul.f32 %v2182, %v721
      %v2187 = vmul.f32 %v2182, %v722
      %v2188 = vmul.f32 %v2182, %v723
      %v2189 = vmul.f32 %v2182, %v724
      %v2190 = vmul.f32 %v2182, %v725
      %v2191 = vsel %vm727, %v2183, 0.0
      %2192 = vadd.xlane.f32.xlu0 %v2191
      %v2193 = vpop.xlane.xlu0 %2192
      %v2194 = vsel %vm727, %v2184, 0.0
      %2195 = vadd.xlane.f32.xlu0 %v2194
      %v2196 = vpop.xlane.xlu0 %2195
      %v2197 = vsel %vm727, %v2185, 0.0
      %2198 = vadd.xlane.f32.xlu0 %v2197
      %v2199 = vpop.xlane.xlu0 %2198
      %v2200 = vsel %vm727, %v2186, 0.0
      %2201 = vadd.xlane.f32.xlu0 %v2200
      %v2202 = vpop.xlane.xlu0 %2201
      %v2203 = vsel %vm727, %v2187, 0.0
      %2204 = vadd.xlane.f32.xlu0 %v2203
      %v2205 = vpop.xlane.xlu0 %2204
      %v2206 = vsel %vm727, %v2188, 0.0
      %2207 = vadd.xlane.f32.xlu0 %v2206
      %v2208 = vpop.xlane.xlu0 %2207
      %v2209 = vsel %vm727, %v2189, 0.0
      %2210 = vadd.xlane.f32.xlu0 %v2209
      %v2211 = vpop.xlane.xlu0 %2210
      %v2212 = vsel %vm727, %v2190, 0.0
      %2213 = vadd.xlane.f32.xlu0 %v2212
      %v2214 = vpop.xlane.xlu0 %2213
      %v2215 = vlaneseq
      %v2216 = vshrl.u32 %v2215, 7
      %v2217 = vsub.s32 0, %v2216
      %v2218 = vrot.slane %v2176, %v2217
      %v2219 = vmul.f32 %v1903, %v2218
      %v2220 = vmul.f32 %v1904, %v2218
      %v2221 = vmul.f32 %v1905, %v2218
      %v2222 = vmul.f32 %v1906, %v2218
      %v2223 = vmul.f32 %v1907, %v2218
      %v2224 = vmul.f32 %v1908, %v2218
      %v2225 = vmul.f32 %v1909, %v2218
      %v2226 = vmul.f32 %v1910, %v2218
      %v2227 = vsel %vm727, %v2219, 0.0
      %2228 = vadd.xlane.f32.xlu0 %v2227
      %v2229 = vpop.xlane.xlu0 %2228
      %v2230 = vsel %vm727, %v2220, 0.0
      %2231 = vadd.xlane.f32.xlu0 %v2230
      %v2232 = vpop.xlane.xlu0 %2231
      %v2233 = vsel %vm727, %v2221, 0.0
      %2234 = vadd.xlane.f32.xlu0 %v2233
      %v2235 = vpop.xlane.xlu0 %2234
      %v2236 = vsel %vm727, %v2222, 0.0
      %2237 = vadd.xlane.f32.xlu0 %v2236
      %v2238 = vpop.xlane.xlu0 %2237
      %v2239 = vsel %vm727, %v2223, 0.0
      %2240 = vadd.xlane.f32.xlu0 %v2239
      %v2241 = vpop.xlane.xlu0 %2240
      %v2242 = vsel %vm727, %v2224, 0.0
      %2243 = vadd.xlane.f32.xlu0 %v2242
      %v2244 = vpop.xlane.xlu0 %2243
      %v2245 = vsel %vm727, %v2225, 0.0
      %2246 = vadd.xlane.f32.xlu0 %v2245
      %v2247 = vpop.xlane.xlu0 %2246
      %v2248 = vsel %vm727, %v2226, 0.0
      %2249 = vadd.xlane.f32.xlu0 %v2248
      %v2250 = vpop.xlane.xlu0 %2249
      %v2251 = vlaneseq
      %v2252 = vshrl.u32 %v2251, 7
      %v2253 = vsub.s32 0, %v2252
      %v2254 = vrot.slane %v2174, %v2253
      %v2255 = vmul.f32 %v1903, %v2254
      %v2256 = vmul.f32 %v1904, %v2254
      %v2257 = vmul.f32 %v1905, %v2254
      %v2258 = vmul.f32 %v1906, %v2254
      %v2259 = vmul.f32 %v1907, %v2254
      %v2260 = vmul.f32 %v1908, %v2254
      %v2261 = vmul.f32 %v1909, %v2254
      %v2262 = vmul.f32 %v1910, %v2254
      %v2263 = vlaneseq
      %v2264 = vshrl.u32 %v2263, 7
      %v2265 = vsub.s32 0, %v2264
      %v2266 = vrot.slane %v2177, %v2265
      %v2267 = vmul.f32 %v2229, %v2266
      %v2268 = vmul.f32 %v2232, %v2266
      %v2269 = vmul.f32 %v2235, %v2266
      %v2270 = vmul.f32 %v2238, %v2266
      %v2271 = vmul.f32 %v2241, %v2266
      %v2272 = vmul.f32 %v2244, %v2266
      %v2273 = vmul.f32 %v2247, %v2266
      %v2274 = vmul.f32 %v2250, %v2266
      %v2275 = vadd.f32 %v2255, %v2267
      %v2276 = vadd.f32 %v2256, %v2268
      %v2277 = vadd.f32 %v2257, %v2269
      %v2278 = vadd.f32 %v2258, %v2270
      %v2279 = vadd.f32 %v2259, %v2271
      %v2280 = vadd.f32 %v2260, %v2272
      %v2281 = vadd.f32 %v2261, %v2273
      %v2282 = vadd.f32 %v2262, %v2274
      %v2283 = vlaneseq
      %v2284 = vshrl.u32 %v2283, 7
      %v2285 = vsub.s32 0, %v2284
      %v2286 = vrot.slane %v2175, %v2285
      %v2287 = vmul.f32 %v2193, %v2286
      %v2288 = vmul.f32 %v2196, %v2286
      %v2289 = vmul.f32 %v2199, %v2286
      %v2290 = vmul.f32 %v2202, %v2286
      %v2291 = vmul.f32 %v2205, %v2286
      %v2292 = vmul.f32 %v2208, %v2286
      %v2293 = vmul.f32 %v2211, %v2286
      %v2294 = vmul.f32 %v2214, %v2286
      %v2295 = vadd.f32 %v2275, %v2287
      %v2296 = vadd.f32 %v2276, %v2288
      %v2297 = vadd.f32 %v2277, %v2289
      %v2298 = vadd.f32 %v2278, %v2290
      %v2299 = vadd.f32 %v2279, %v2291
      %v2300 = vadd.f32 %v2280, %v2292
      %v2301 = vadd.f32 %v2281, %v2293
      %v2302 = vadd.f32 %v2282, %v2294
      %v2303 = vlaneseq
      %v2304 = vshrl.u32 %v2303, 7
      %v2305 = vsub.s32 0, %v2304
      %v2306 = vrot.slane %v2173, %v2305
      %v2307 = vmul.f32 %v2295, %v2306
      %v2308 = vmul.f32 %v2296, %v2306
      %v2309 = vmul.f32 %v2297, %v2306
      %v2310 = vmul.f32 %v2298, %v2306
      %v2311 = vmul.f32 %v2299, %v2306
      %v2312 = vmul.f32 %v2300, %v2306
      %v2313 = vmul.f32 %v2301, %v2306
      %v2314 = vmul.f32 %v2302, %v2306
      %v2315 = vsel %vm727, %v2307, 0.0
      %2316 = vadd.xlane.f32.xlu0 %v2315
      %v2317 = vpop.xlane.xlu0 %2316
      %v2318 = vsel %vm727, %v2308, 0.0
      %2319 = vadd.xlane.f32.xlu0 %v2318
      %v2320 = vpop.xlane.xlu0 %2319
      %v2321 = vsel %vm727, %v2309, 0.0
      %2322 = vadd.xlane.f32.xlu0 %v2321
      %v2323 = vpop.xlane.xlu0 %2322
      %v2324 = vsel %vm727, %v2310, 0.0
      %2325 = vadd.xlane.f32.xlu0 %v2324
      %v2326 = vpop.xlane.xlu0 %2325
      %v2327 = vsel %vm727, %v2311, 0.0
      %2328 = vadd.xlane.f32.xlu0 %v2327
      %v2329 = vpop.xlane.xlu0 %2328
      %v2330 = vsel %vm727, %v2312, 0.0
      %2331 = vadd.xlane.f32.xlu0 %v2330
      %v2332 = vpop.xlane.xlu0 %2331
      %v2333 = vsel %vm727, %v2313, 0.0
      %2334 = vadd.xlane.f32.xlu0 %v2333
      %v2335 = vpop.xlane.xlu0 %2334
      %v2336 = vsel %vm727, %v2314, 0.0
      %2337 = vadd.xlane.f32.xlu0 %v2336
      %v2338 = vpop.xlane.xlu0 %2337
      %v2339 = vmul.f32 %v2317, %v718
      %v2340 = vmul.f32 %v2320, %v719
      %v2341 = vmul.f32 %v2323, %v720
      %v2342 = vmul.f32 %v2326, %v721
      %v2343 = vmul.f32 %v2329, %v722
      %v2344 = vmul.f32 %v2332, %v723
      %v2345 = vmul.f32 %v2335, %v724
      %v2346 = vmul.f32 %v2338, %v725
      %v2347 = vsel %vm727, %v2339, 0.0
      %v2348 = vsel %vm727, %v2340, 0.0
      %v2349 = vadd.f32 %v2347, %v2348
      %v2350 = vsel %vm727, %v2341, 0.0
      %v2351 = vadd.f32 %v2349, %v2350
      %v2352 = vsel %vm727, %v2342, 0.0
      %v2353 = vadd.f32 %v2351, %v2352
      %v2354 = vsel %vm727, %v2343, 0.0
      %v2355 = vadd.f32 %v2353, %v2354
      %v2356 = vsel %vm727, %v2344, 0.0
      %v2357 = vadd.f32 %v2355, %v2356
      %v2358 = vsel %vm727, %v2345, 0.0
      %v2359 = vadd.f32 %v2357, %v2358
      %v2360 = vsel %vm727, %v2346, 0.0
      %v2361 = vadd.f32 %v2359, %v2360
      %v2362 = vrot.slane %v2361, 4
      %v2363 = vadd.f32 %v2361, %v2362
      %v2364 = vrot.slane %v2363, 2
      %v2365 = vadd.f32 %v2363, %v2364
      %v2366 = vrot.slane %v2365, 1
      %v2367 = vadd.f32 %v2365, %v2366
      %2368 = vst.msk [vmem:[#allocation17 + $0x3] sm:$0x1] %vm995, %v2367
      %v2369 = vld [vmem:[#allocation4 + $0x4] sm:$0x1]
      %v2370 = vld [vmem:[#allocation5 + $0x4] sm:$0x1]
      %v2371 = vld [vmem:[#allocation6 + $0x4] sm:$0x1]
      %v2372 = vld [vmem:[#allocation7 + $0x4] sm:$0x1]
      %v2373 = vld [vmem:[#allocation8 + $0x4] sm:$0x1]
      %v2374 = vld [vmem:[#allocation9 + $0x4] sm:$0x1]
      %v2375 = vlaneseq
      %v2376 = vshrl.u32 %v2375, 7
      %v2377 = vsub.s32 0, %v2376
      %v2378 = vrot.slane %v2374, %v2377
      %v2379 = vmul.f32 %v2378, %v718
      %v2380 = vmul.f32 %v2378, %v719
      %v2381 = vmul.f32 %v2378, %v720
      %v2382 = vmul.f32 %v2378, %v721
      %v2383 = vmul.f32 %v2378, %v722
      %v2384 = vmul.f32 %v2378, %v723
      %v2385 = vmul.f32 %v2378, %v724
      %v2386 = vmul.f32 %v2378, %v725
      %v2387 = vsel %vm727, %v2379, 0.0
      %2388 = vadd.xlane.f32.xlu0 %v2387
      %v2389 = vpop.xlane.xlu0 %2388
      %v2390 = vsel %vm727, %v2380, 0.0
      %2391 = vadd.xlane.f32.xlu0 %v2390
      %v2392 = vpop.xlane.xlu0 %2391
      %v2393 = vsel %vm727, %v2381, 0.0
      %2394 = vadd.xlane.f32.xlu0 %v2393
      %v2395 = vpop.xlane.xlu0 %2394
      %v2396 = vsel %vm727, %v2382, 0.0
      %2397 = vadd.xlane.f32.xlu0 %v2396
      %v2398 = vpop.xlane.xlu0 %2397
      %v2399 = vsel %vm727, %v2383, 0.0
      %2400 = vadd.xlane.f32.xlu0 %v2399
      %v2401 = vpop.xlane.xlu0 %2400
      %v2402 = vsel %vm727, %v2384, 0.0
      %2403 = vadd.xlane.f32.xlu0 %v2402
      %v2404 = vpop.xlane.xlu0 %2403
      %v2405 = vsel %vm727, %v2385, 0.0
      %2406 = vadd.xlane.f32.xlu0 %v2405
      %v2407 = vpop.xlane.xlu0 %2406
      %v2408 = vsel %vm727, %v2386, 0.0
      %2409 = vadd.xlane.f32.xlu0 %v2408
      %v2410 = vpop.xlane.xlu0 %2409
      %v2411 = vlaneseq
      %v2412 = vshrl.u32 %v2411, 7
      %v2413 = vsub.s32 0, %v2412
      %v2414 = vrot.slane %v2372, %v2413
      %v2415 = vmul.f32 %v2099, %v2414
      %v2416 = vmul.f32 %v2100, %v2414
      %v2417 = vmul.f32 %v2101, %v2414
      %v2418 = vmul.f32 %v2102, %v2414
      %v2419 = vmul.f32 %v2103, %v2414
      %v2420 = vmul.f32 %v2104, %v2414
      %v2421 = vmul.f32 %v2105, %v2414
      %v2422 = vmul.f32 %v2106, %v2414
      %v2423 = vsel %vm727, %v2415, 0.0
      %2424 = vadd.xlane.f32.xlu0 %v2423
      %v2425 = vpop.xlane.xlu0 %2424
      %v2426 = vsel %vm727, %v2416, 0.0
      %2427 = vadd.xlane.f32.xlu0 %v2426
      %v2428 = vpop.xlane.xlu0 %2427
      %v2429 = vsel %vm727, %v2417, 0.0
      %2430 = vadd.xlane.f32.xlu0 %v2429
      %v2431 = vpop.xlane.xlu0 %2430
      %v2432 = vsel %vm727, %v2418, 0.0
      %2433 = vadd.xlane.f32.xlu0 %v2432
      %v2434 = vpop.xlane.xlu0 %2433
      %v2435 = vsel %vm727, %v2419, 0.0
      %2436 = vadd.xlane.f32.xlu0 %v2435
      %v2437 = vpop.xlane.xlu0 %2436
      %v2438 = vsel %vm727, %v2420, 0.0
      %2439 = vadd.xlane.f32.xlu0 %v2438
      %v2440 = vpop.xlane.xlu0 %2439
      %v2441 = vsel %vm727, %v2421, 0.0
      %2442 = vadd.xlane.f32.xlu0 %v2441
      %v2443 = vpop.xlane.xlu0 %2442
      %v2444 = vsel %vm727, %v2422, 0.0
      %2445 = vadd.xlane.f32.xlu0 %v2444
      %v2446 = vpop.xlane.xlu0 %2445
      %v2447 = vlaneseq
      %v2448 = vshrl.u32 %v2447, 7
      %v2449 = vsub.s32 0, %v2448
      %v2450 = vrot.slane %v2370, %v2449
      %v2451 = vmul.f32 %v2099, %v2450
      %v2452 = vmul.f32 %v2100, %v2450
      %v2453 = vmul.f32 %v2101, %v2450
      %v2454 = vmul.f32 %v2102, %v2450
      %v2455 = vmul.f32 %v2103, %v2450
      %v2456 = vmul.f32 %v2104, %v2450
      %v2457 = vmul.f32 %v2105, %v2450
      %v2458 = vmul.f32 %v2106, %v2450
      %v2459 = vlaneseq
      %v2460 = vshrl.u32 %v2459, 7
      %v2461 = vsub.s32 0, %v2460
      %v2462 = vrot.slane %v2373, %v2461
      %v2463 = vmul.f32 %v2425, %v2462
      %v2464 = vmul.f32 %v2428, %v2462
      %v2465 = vmul.f32 %v2431, %v2462
      %v2466 = vmul.f32 %v2434, %v2462
      %v2467 = vmul.f32 %v2437, %v2462
      %v2468 = vmul.f32 %v2440, %v2462
      %v2469 = vmul.f32 %v2443, %v2462
      %v2470 = vmul.f32 %v2446, %v2462
      %v2471 = vadd.f32 %v2451, %v2463
      %v2472 = vadd.f32 %v2452, %v2464
      %v2473 = vadd.f32 %v2453, %v2465
      %v2474 = vadd.f32 %v2454, %v2466
      %v2475 = vadd.f32 %v2455, %v2467
      %v2476 = vadd.f32 %v2456, %v2468
      %v2477 = vadd.f32 %v2457, %v2469
      %v2478 = vadd.f32 %v2458, %v2470
      %v2479 = vlaneseq
      %v2480 = vshrl.u32 %v2479, 7
      %v2481 = vsub.s32 0, %v2480
      %v2482 = vrot.slane %v2371, %v2481
      %v2483 = vmul.f32 %v2389, %v2482
      %v2484 = vmul.f32 %v2392, %v2482
      %v2485 = vmul.f32 %v2395, %v2482
      %v2486 = vmul.f32 %v2398, %v2482
      %v2487 = vmul.f32 %v2401, %v2482
      %v2488 = vmul.f32 %v2404, %v2482
      %v2489 = vmul.f32 %v2407, %v2482
      %v2490 = vmul.f32 %v2410, %v2482
      %v2491 = vadd.f32 %v2471, %v2483
      %v2492 = vadd.f32 %v2472, %v2484
      %v2493 = vadd.f32 %v2473, %v2485
      %v2494 = vadd.f32 %v2474, %v2486
      %v2495 = vadd.f32 %v2475, %v2487
      %v2496 = vadd.f32 %v2476, %v2488
      %v2497 = vadd.f32 %v2477, %v2489
      %v2498 = vadd.f32 %v2478, %v2490
      %v2499 = vlaneseq
      %v2500 = vshrl.u32 %v2499, 7
      %v2501 = vsub.s32 0, %v2500
      %v2502 = vrot.slane %v2369, %v2501
      %v2503 = vmul.f32 %v2491, %v2502
      %v2504 = vmul.f32 %v2492, %v2502
      %v2505 = vmul.f32 %v2493, %v2502
      %v2506 = vmul.f32 %v2494, %v2502
      %v2507 = vmul.f32 %v2495, %v2502
      %v2508 = vmul.f32 %v2496, %v2502
      %v2509 = vmul.f32 %v2497, %v2502
      %v2510 = vmul.f32 %v2498, %v2502
      %v2511 = vsel %vm727, %v2503, 0.0
      %2512 = vadd.xlane.f32.xlu0 %v2511
      %v2513 = vpop.xlane.xlu0 %2512
      %v2514 = vsel %vm727, %v2504, 0.0
      %2515 = vadd.xlane.f32.xlu0 %v2514
      %v2516 = vpop.xlane.xlu0 %2515
      %v2517 = vsel %vm727, %v2505, 0.0
      %2518 = vadd.xlane.f32.xlu0 %v2517
      %v2519 = vpop.xlane.xlu0 %2518
      %v2520 = vsel %vm727, %v2506, 0.0
      %2521 = vadd.xlane.f32.xlu0 %v2520
      %v2522 = vpop.xlane.xlu0 %2521
      %v2523 = vsel %vm727, %v2507, 0.0
      %2524 = vadd.xlane.f32.xlu0 %v2523
      %v2525 = vpop.xlane.xlu0 %2524
      %v2526 = vsel %vm727, %v2508, 0.0
      %2527 = vadd.xlane.f32.xlu0 %v2526
      %v2528 = vpop.xlane.xlu0 %2527
      %v2529 = vsel %vm727, %v2509, 0.0
      %2530 = vadd.xlane.f32.xlu0 %v2529
      %v2531 = vpop.xlane.xlu0 %2530
      %v2532 = vsel %vm727, %v2510, 0.0
      %2533 = vadd.xlane.f32.xlu0 %v2532
      %v2534 = vpop.xlane.xlu0 %2533
      %v2535 = vmul.f32 %v2513, %v718
      %v2536 = vmul.f32 %v2516, %v719
      %v2537 = vmul.f32 %v2519, %v720
      %v2538 = vmul.f32 %v2522, %v721
      %v2539 = vmul.f32 %v2525, %v722
      %v2540 = vmul.f32 %v2528, %v723
      %v2541 = vmul.f32 %v2531, %v724
      %v2542 = vmul.f32 %v2534, %v725
      %v2543 = vsel %vm727, %v2535, 0.0
      %v2544 = vsel %vm727, %v2536, 0.0
      %v2545 = vadd.f32 %v2543, %v2544
      %v2546 = vsel %vm727, %v2537, 0.0
      %v2547 = vadd.f32 %v2545, %v2546
      %v2548 = vsel %vm727, %v2538, 0.0
      %v2549 = vadd.f32 %v2547, %v2548
      %v2550 = vsel %vm727, %v2539, 0.0
      %v2551 = vadd.f32 %v2549, %v2550
      %v2552 = vsel %vm727, %v2540, 0.0
      %v2553 = vadd.f32 %v2551, %v2552
      %v2554 = vsel %vm727, %v2541, 0.0
      %v2555 = vadd.f32 %v2553, %v2554
      %v2556 = vsel %vm727, %v2542, 0.0
      %v2557 = vadd.f32 %v2555, %v2556
      %v2558 = vrot.slane %v2557, 4
      %v2559 = vadd.f32 %v2557, %v2558
      %v2560 = vrot.slane %v2559, 2
      %v2561 = vadd.f32 %v2559, %v2560
      %v2562 = vrot.slane %v2561, 1
      %v2563 = vadd.f32 %v2561, %v2562
      %2564 = vst.msk [vmem:[#allocation10 + $0x4] sm:$0x1] %vm995, %v2563
      %v2565 = vld [vmem:[#allocation11 + $0x4] sm:$0x1]
      %v2566 = vld [vmem:[#allocation12 + $0x4] sm:$0x1]
      %v2567 = vld [vmem:[#allocation13 + $0x4] sm:$0x1]
      %v2568 = vld [vmem:[#allocation14 + $0x4] sm:$0x1]
      %v2569 = vld [vmem:[#allocation15 + $0x4] sm:$0x1]
      %v2570 = vld [vmem:[#allocation16 + $0x4] sm:$0x1]
      %v2571 = vlaneseq
      %v2572 = vshrl.u32 %v2571, 7
      %v2573 = vsub.s32 0, %v2572
      %v2574 = vrot.slane %v2570, %v2573
      %v2575 = vmul.f32 %v2574, %v718
      %v2576 = vmul.f32 %v2574, %v719
      %v2577 = vmul.f32 %v2574, %v720
      %v2578 = vmul.f32 %v2574, %v721
      %v2579 = vmul.f32 %v2574, %v722
      %v2580 = vmul.f32 %v2574, %v723
      %v2581 = vmul.f32 %v2574, %v724
      %v2582 = vmul.f32 %v2574, %v725
      %v2583 = vsel %vm727, %v2575, 0.0
      %2584 = vadd.xlane.f32.xlu0 %v2583
      %v2585 = vpop.xlane.xlu0 %2584
      %v2586 = vsel %vm727, %v2576, 0.0
      %2587 = vadd.xlane.f32.xlu0 %v2586
      %v2588 = vpop.xlane.xlu0 %2587
      %v2589 = vsel %vm727, %v2577, 0.0
      %2590 = vadd.xlane.f32.xlu0 %v2589
      %v2591 = vpop.xlane.xlu0 %2590
      %v2592 = vsel %vm727, %v2578, 0.0
      %2593 = vadd.xlane.f32.xlu0 %v2592
      %v2594 = vpop.xlane.xlu0 %2593
      %v2595 = vsel %vm727, %v2579, 0.0
      %2596 = vadd.xlane.f32.xlu0 %v2595
      %v2597 = vpop.xlane.xlu0 %2596
      %v2598 = vsel %vm727, %v2580, 0.0
      %2599 = vadd.xlane.f32.xlu0 %v2598
      %v2600 = vpop.xlane.xlu0 %2599
      %v2601 = vsel %vm727, %v2581, 0.0
      %2602 = vadd.xlane.f32.xlu0 %v2601
      %v2603 = vpop.xlane.xlu0 %2602
      %v2604 = vsel %vm727, %v2582, 0.0
      %2605 = vadd.xlane.f32.xlu0 %v2604
      %v2606 = vpop.xlane.xlu0 %2605
      %v2607 = vlaneseq
      %v2608 = vshrl.u32 %v2607, 7
      %v2609 = vsub.s32 0, %v2608
      %v2610 = vrot.slane %v2568, %v2609
      %v2611 = vmul.f32 %v2295, %v2610
      %v2612 = vmul.f32 %v2296, %v2610
      %v2613 = vmul.f32 %v2297, %v2610
      %v2614 = vmul.f32 %v2298, %v2610
      %v2615 = vmul.f32 %v2299, %v2610
      %v2616 = vmul.f32 %v2300, %v2610
      %v2617 = vmul.f32 %v2301, %v2610
      %v2618 = vmul.f32 %v2302, %v2610
      %v2619 = vsel %vm727, %v2611, 0.0
      %2620 = vadd.xlane.f32.xlu0 %v2619
      %v2621 = vpop.xlane.xlu0 %2620
      %v2622 = vsel %vm727, %v2612, 0.0
      %2623 = vadd.xlane.f32.xlu0 %v2622
      %v2624 = vpop.xlane.xlu0 %2623
      %v2625 = vsel %vm727, %v2613, 0.0
      %2626 = vadd.xlane.f32.xlu0 %v2625
      %v2627 = vpop.xlane.xlu0 %2626
      %v2628 = vsel %vm727, %v2614, 0.0
      %2629 = vadd.xlane.f32.xlu0 %v2628
      %v2630 = vpop.xlane.xlu0 %2629
      %v2631 = vsel %vm727, %v2615, 0.0
      %2632 = vadd.xlane.f32.xlu0 %v2631
      %v2633 = vpop.xlane.xlu0 %2632
      %v2634 = vsel %vm727, %v2616, 0.0
      %2635 = vadd.xlane.f32.xlu0 %v2634
      %v2636 = vpop.xlane.xlu0 %2635
      %v2637 = vsel %vm727, %v2617, 0.0
      %2638 = vadd.xlane.f32.xlu0 %v2637
      %v2639 = vpop.xlane.xlu0 %2638
      %v2640 = vsel %vm727, %v2618, 0.0
      %2641 = vadd.xlane.f32.xlu0 %v2640
      %v2642 = vpop.xlane.xlu0 %2641
      %v2643 = vlaneseq
      %v2644 = vshrl.u32 %v2643, 7
      %v2645 = vsub.s32 0, %v2644
      %v2646 = vrot.slane %v2566, %v2645
      %v2647 = vmul.f32 %v2295, %v2646
      %v2648 = vmul.f32 %v2296, %v2646
      %v2649 = vmul.f32 %v2297, %v2646
      %v2650 = vmul.f32 %v2298, %v2646
      %v2651 = vmul.f32 %v2299, %v2646
      %v2652 = vmul.f32 %v2300, %v2646
      %v2653 = vmul.f32 %v2301, %v2646
      %v2654 = vmul.f32 %v2302, %v2646
      %v2655 = vlaneseq
      %v2656 = vshrl.u32 %v2655, 7
      %v2657 = vsub.s32 0, %v2656
      %v2658 = vrot.slane %v2569, %v2657
      %v2659 = vmul.f32 %v2621, %v2658
      %v2660 = vmul.f32 %v2624, %v2658
      %v2661 = vmul.f32 %v2627, %v2658
      %v2662 = vmul.f32 %v2630, %v2658
      %v2663 = vmul.f32 %v2633, %v2658
      %v2664 = vmul.f32 %v2636, %v2658
      %v2665 = vmul.f32 %v2639, %v2658
      %v2666 = vmul.f32 %v2642, %v2658
      %v2667 = vadd.f32 %v2647, %v2659
      %v2668 = vadd.f32 %v2648, %v2660
      %v2669 = vadd.f32 %v2649, %v2661
      %v2670 = vadd.f32 %v2650, %v2662
      %v2671 = vadd.f32 %v2651, %v2663
      %v2672 = vadd.f32 %v2652, %v2664
      %v2673 = vadd.f32 %v2653, %v2665
      %v2674 = vadd.f32 %v2654, %v2666
      %v2675 = vlaneseq
      %v2676 = vshrl.u32 %v2675, 7
      %v2677 = vsub.s32 0, %v2676
      %v2678 = vrot.slane %v2567, %v2677
      %v2679 = vmul.f32 %v2585, %v2678
      %v2680 = vmul.f32 %v2588, %v2678
      %v2681 = vmul.f32 %v2591, %v2678
      %v2682 = vmul.f32 %v2594, %v2678
      %v2683 = vmul.f32 %v2597, %v2678
      %v2684 = vmul.f32 %v2600, %v2678
      %v2685 = vmul.f32 %v2603, %v2678
      %v2686 = vmul.f32 %v2606, %v2678
      %v2687 = vadd.f32 %v2667, %v2679
      %v2688 = vadd.f32 %v2668, %v2680
      %v2689 = vadd.f32 %v2669, %v2681
      %v2690 = vadd.f32 %v2670, %v2682
      %v2691 = vadd.f32 %v2671, %v2683
      %v2692 = vadd.f32 %v2672, %v2684
      %v2693 = vadd.f32 %v2673, %v2685
      %v2694 = vadd.f32 %v2674, %v2686
      %v2695 = vlaneseq
      %v2696 = vshrl.u32 %v2695, 7
      %v2697 = vsub.s32 0, %v2696
      %v2698 = vrot.slane %v2565, %v2697
      %v2699 = vmul.f32 %v2687, %v2698
      %v2700 = vmul.f32 %v2688, %v2698
      %v2701 = vmul.f32 %v2689, %v2698
      %v2702 = vmul.f32 %v2690, %v2698
      %v2703 = vmul.f32 %v2691, %v2698
      %v2704 = vmul.f32 %v2692, %v2698
      %v2705 = vmul.f32 %v2693, %v2698
      %v2706 = vmul.f32 %v2694, %v2698
      %v2707 = vsel %vm727, %v2699, 0.0
      %2708 = vadd.xlane.f32.xlu0 %v2707
      %v2709 = vpop.xlane.xlu0 %2708
      %v2710 = vsel %vm727, %v2700, 0.0
      %2711 = vadd.xlane.f32.xlu0 %v2710
      %v2712 = vpop.xlane.xlu0 %2711
      %v2713 = vsel %vm727, %v2701, 0.0
      %2714 = vadd.xlane.f32.xlu0 %v2713
      %v2715 = vpop.xlane.xlu0 %2714
      %v2716 = vsel %vm727, %v2702, 0.0
      %2717 = vadd.xlane.f32.xlu0 %v2716
      %v2718 = vpop.xlane.xlu0 %2717
      %v2719 = vsel %vm727, %v2703, 0.0
      %2720 = vadd.xlane.f32.xlu0 %v2719
      %v2721 = vpop.xlane.xlu0 %2720
      %v2722 = vsel %vm727, %v2704, 0.0
      %2723 = vadd.xlane.f32.xlu0 %v2722
      %v2724 = vpop.xlane.xlu0 %2723
      %v2725 = vsel %vm727, %v2705, 0.0
      %2726 = vadd.xlane.f32.xlu0 %v2725
      %v2727 = vpop.xlane.xlu0 %2726
      %v2728 = vsel %vm727, %v2706, 0.0
      %2729 = vadd.xlane.f32.xlu0 %v2728
      %v2730 = vpop.xlane.xlu0 %2729
      %v2731 = vmul.f32 %v2709, %v718
      %v2732 = vmul.f32 %v2712, %v719
      %v2733 = vmul.f32 %v2715, %v720
      %v2734 = vmul.f32 %v2718, %v721
      %v2735 = vmul.f32 %v2721, %v722
      %v2736 = vmul.f32 %v2724, %v723
      %v2737 = vmul.f32 %v2727, %v724
      %v2738 = vmul.f32 %v2730, %v725
      %v2739 = vsel %vm727, %v2731, 0.0
      %v2740 = vsel %vm727, %v2732, 0.0
      %v2741 = vadd.f32 %v2739, %v2740
      %v2742 = vsel %vm727, %v2733, 0.0
      %v2743 = vadd.f32 %v2741, %v2742
      %v2744 = vsel %vm727, %v2734, 0.0
      %v2745 = vadd.f32 %v2743, %v2744
      %v2746 = vsel %vm727, %v2735, 0.0
      %v2747 = vadd.f32 %v2745, %v2746
      %v2748 = vsel %vm727, %v2736, 0.0
      %v2749 = vadd.f32 %v2747, %v2748
      %v2750 = vsel %vm727, %v2737, 0.0
      %v2751 = vadd.f32 %v2749, %v2750
      %v2752 = vsel %vm727, %v2738, 0.0
      %v2753 = vadd.f32 %v2751, %v2752
      %v2754 = vrot.slane %v2753, 4
      %v2755 = vadd.f32 %v2753, %v2754
      %v2756 = vrot.slane %v2755, 2
      %v2757 = vadd.f32 %v2755, %v2756
      %v2758 = vrot.slane %v2757, 1
      %v2759 = vadd.f32 %v2757, %v2758
      %2760 = vst.msk [vmem:[#allocation17 + $0x4] sm:$0x1] %vm995, %v2759
      %v2761 = vld [vmem:[#allocation4 + $0x5] sm:$0x1]
      %v2762 = vld [vmem:[#allocation5 + $0x5] sm:$0x1]
      %v2763 = vld [vmem:[#allocation6 + $0x5] sm:$0x1]
      %v2764 = vld [vmem:[#allocation7 + $0x5] sm:$0x1]
      %v2765 = vld [vmem:[#allocation8 + $0x5] sm:$0x1]
      %v2766 = vld [vmem:[#allocation9 + $0x5] sm:$0x1]
      %v2767 = vlaneseq
      %v2768 = vshrl.u32 %v2767, 7
      %v2769 = vsub.s32 0, %v2768
      %v2770 = vrot.slane %v2766, %v2769
      %v2771 = vmul.f32 %v2770, %v718
      %v2772 = vmul.f32 %v2770, %v719
      %v2773 = vmul.f32 %v2770, %v720
      %v2774 = vmul.f32 %v2770, %v721
      %v2775 = vmul.f32 %v2770, %v722
      %v2776 = vmul.f32 %v2770, %v723
      %v2777 = vmul.f32 %v2770, %v724
      %v2778 = vmul.f32 %v2770, %v725
      %v2779 = vsel %vm727, %v2771, 0.0
      %2780 = vadd.xlane.f32.xlu0 %v2779
      %v2781 = vpop.xlane.xlu0 %2780
      %v2782 = vsel %vm727, %v2772, 0.0
      %2783 = vadd.xlane.f32.xlu0 %v2782
      %v2784 = vpop.xlane.xlu0 %2783
      %v2785 = vsel %vm727, %v2773, 0.0
      %2786 = vadd.xlane.f32.xlu0 %v2785
      %v2787 = vpop.xlane.xlu0 %2786
      %v2788 = vsel %vm727, %v2774, 0.0
      %2789 = vadd.xlane.f32.xlu0 %v2788
      %v2790 = vpop.xlane.xlu0 %2789
      %v2791 = vsel %vm727, %v2775, 0.0
      %2792 = vadd.xlane.f32.xlu0 %v2791
      %v2793 = vpop.xlane.xlu0 %2792
      %v2794 = vsel %vm727, %v2776, 0.0
      %2795 = vadd.xlane.f32.xlu0 %v2794
      %v2796 = vpop.xlane.xlu0 %2795
      %v2797 = vsel %vm727, %v2777, 0.0
      %2798 = vadd.xlane.f32.xlu0 %v2797
      %v2799 = vpop.xlane.xlu0 %2798
      %v2800 = vsel %vm727, %v2778, 0.0
      %2801 = vadd.xlane.f32.xlu0 %v2800
      %v2802 = vpop.xlane.xlu0 %2801
      %v2803 = vlaneseq
      %v2804 = vshrl.u32 %v2803, 7
      %v2805 = vsub.s32 0, %v2804
      %v2806 = vrot.slane %v2764, %v2805
      %v2807 = vmul.f32 %v2491, %v2806
      %v2808 = vmul.f32 %v2492, %v2806
      %v2809 = vmul.f32 %v2493, %v2806
      %v2810 = vmul.f32 %v2494, %v2806
      %v2811 = vmul.f32 %v2495, %v2806
      %v2812 = vmul.f32 %v2496, %v2806
      %v2813 = vmul.f32 %v2497, %v2806
      %v2814 = vmul.f32 %v2498, %v2806
      %v2815 = vsel %vm727, %v2807, 0.0
      %2816 = vadd.xlane.f32.xlu0 %v2815
      %v2817 = vpop.xlane.xlu0 %2816
      %v2818 = vsel %vm727, %v2808, 0.0
      %2819 = vadd.xlane.f32.xlu0 %v2818
      %v2820 = vpop.xlane.xlu0 %2819
      %v2821 = vsel %vm727, %v2809, 0.0
      %2822 = vadd.xlane.f32.xlu0 %v2821
      %v2823 = vpop.xlane.xlu0 %2822
      %v2824 = vsel %vm727, %v2810, 0.0
      %2825 = vadd.xlane.f32.xlu0 %v2824
      %v2826 = vpop.xlane.xlu0 %2825
      %v2827 = vsel %vm727, %v2811, 0.0
      %2828 = vadd.xlane.f32.xlu0 %v2827
      %v2829 = vpop.xlane.xlu0 %2828
      %v2830 = vsel %vm727, %v2812, 0.0
      %2831 = vadd.xlane.f32.xlu0 %v2830
      %v2832 = vpop.xlane.xlu0 %2831
      %v2833 = vsel %vm727, %v2813, 0.0
      %2834 = vadd.xlane.f32.xlu0 %v2833
      %v2835 = vpop.xlane.xlu0 %2834
      %v2836 = vsel %vm727, %v2814, 0.0
      %2837 = vadd.xlane.f32.xlu0 %v2836
      %v2838 = vpop.xlane.xlu0 %2837
      %v2839 = vlaneseq
      %v2840 = vshrl.u32 %v2839, 7
      %v2841 = vsub.s32 0, %v2840
      %v2842 = vrot.slane %v2762, %v2841
      %v2843 = vmul.f32 %v2491, %v2842
      %v2844 = vmul.f32 %v2492, %v2842
      %v2845 = vmul.f32 %v2493, %v2842
      %v2846 = vmul.f32 %v2494, %v2842
      %v2847 = vmul.f32 %v2495, %v2842
      %v2848 = vmul.f32 %v2496, %v2842
      %v2849 = vmul.f32 %v2497, %v2842
      %v2850 = vmul.f32 %v2498, %v2842
      %v2851 = vlaneseq
      %v2852 = vshrl.u32 %v2851, 7
      %v2853 = vsub.s32 0, %v2852
      %v2854 = vrot.slane %v2765, %v2853
      %v2855 = vmul.f32 %v2817, %v2854
      %v2856 = vmul.f32 %v2820, %v2854
      %v2857 = vmul.f32 %v2823, %v2854
      %v2858 = vmul.f32 %v2826, %v2854
      %v2859 = vmul.f32 %v2829, %v2854
      %v2860 = vmul.f32 %v2832, %v2854
      %v2861 = vmul.f32 %v2835, %v2854
      %v2862 = vmul.f32 %v2838, %v2854
      %v2863 = vadd.f32 %v2843, %v2855
      %v2864 = vadd.f32 %v2844, %v2856
      %v2865 = vadd.f32 %v2845, %v2857
      %v2866 = vadd.f32 %v2846, %v2858
      %v2867 = vadd.f32 %v2847, %v2859
      %v2868 = vadd.f32 %v2848, %v2860
      %v2869 = vadd.f32 %v2849, %v2861
      %v2870 = vadd.f32 %v2850, %v2862
      %v2871 = vlaneseq
      %v2872 = vshrl.u32 %v2871, 7
      %v2873 = vsub.s32 0, %v2872
      %v2874 = vrot.slane %v2763, %v2873
      %v2875 = vmul.f32 %v2781, %v2874
      %v2876 = vmul.f32 %v2784, %v2874
      %v2877 = vmul.f32 %v2787, %v2874
      %v2878 = vmul.f32 %v2790, %v2874
      %v2879 = vmul.f32 %v2793, %v2874
      %v2880 = vmul.f32 %v2796, %v2874
      %v2881 = vmul.f32 %v2799, %v2874
      %v2882 = vmul.f32 %v2802, %v2874
      %v2883 = vadd.f32 %v2863, %v2875
      %v2884 = vadd.f32 %v2864, %v2876
      %v2885 = vadd.f32 %v2865, %v2877
      %v2886 = vadd.f32 %v2866, %v2878
      %v2887 = vadd.f32 %v2867, %v2879
      %v2888 = vadd.f32 %v2868, %v2880
      %v2889 = vadd.f32 %v2869, %v2881
      %v2890 = vadd.f32 %v2870, %v2882
      %v2891 = vlaneseq
      %v2892 = vshrl.u32 %v2891, 7
      %v2893 = vsub.s32 0, %v2892
      %v2894 = vrot.slane %v2761, %v2893
      %v2895 = vmul.f32 %v2883, %v2894
      %v2896 = vmul.f32 %v2884, %v2894
      %v2897 = vmul.f32 %v2885, %v2894
      %v2898 = vmul.f32 %v2886, %v2894
      %v2899 = vmul.f32 %v2887, %v2894
      %v2900 = vmul.f32 %v2888, %v2894
      %v2901 = vmul.f32 %v2889, %v2894
      %v2902 = vmul.f32 %v2890, %v2894
      %v2903 = vsel %vm727, %v2895, 0.0
      %2904 = vadd.xlane.f32.xlu0 %v2903
      %v2905 = vpop.xlane.xlu0 %2904
      %v2906 = vsel %vm727, %v2896, 0.0
      %2907 = vadd.xlane.f32.xlu0 %v2906
      %v2908 = vpop.xlane.xlu0 %2907
      %v2909 = vsel %vm727, %v2897, 0.0
      %2910 = vadd.xlane.f32.xlu0 %v2909
      %v2911 = vpop.xlane.xlu0 %2910
      %v2912 = vsel %vm727, %v2898, 0.0
      %2913 = vadd.xlane.f32.xlu0 %v2912
      %v2914 = vpop.xlane.xlu0 %2913
      %v2915 = vsel %vm727, %v2899, 0.0
      %2916 = vadd.xlane.f32.xlu0 %v2915
      %v2917 = vpop.xlane.xlu0 %2916
      %v2918 = vsel %vm727, %v2900, 0.0
      %2919 = vadd.xlane.f32.xlu0 %v2918
      %v2920 = vpop.xlane.xlu0 %2919
      %v2921 = vsel %vm727, %v2901, 0.0
      %2922 = vadd.xlane.f32.xlu0 %v2921
      %v2923 = vpop.xlane.xlu0 %2922
      %v2924 = vsel %vm727, %v2902, 0.0
      %2925 = vadd.xlane.f32.xlu0 %v2924
      %v2926 = vpop.xlane.xlu0 %2925
      %v2927 = vmul.f32 %v2905, %v718
      %v2928 = vmul.f32 %v2908, %v719
      %v2929 = vmul.f32 %v2911, %v720
      %v2930 = vmul.f32 %v2914, %v721
      %v2931 = vmul.f32 %v2917, %v722
      %v2932 = vmul.f32 %v2920, %v723
      %v2933 = vmul.f32 %v2923, %v724
      %v2934 = vmul.f32 %v2926, %v725
      %v2935 = vsel %vm727, %v2927, 0.0
      %v2936 = vsel %vm727, %v2928, 0.0
      %v2937 = vadd.f32 %v2935, %v2936
      %v2938 = vsel %vm727, %v2929, 0.0
      %v2939 = vadd.f32 %v2937, %v2938
      %v2940 = vsel %vm727, %v2930, 0.0
      %v2941 = vadd.f32 %v2939, %v2940
      %v2942 = vsel %vm727, %v2931, 0.0
      %v2943 = vadd.f32 %v2941, %v2942
      %v2944 = vsel %vm727, %v2932, 0.0
      %v2945 = vadd.f32 %v2943, %v2944
      %v2946 = vsel %vm727, %v2933, 0.0
      %v2947 = vadd.f32 %v2945, %v2946
      %v2948 = vsel %vm727, %v2934, 0.0
      %v2949 = vadd.f32 %v2947, %v2948
      %v2950 = vrot.slane %v2949, 4
      %v2951 = vadd.f32 %v2949, %v2950
      %v2952 = vrot.slane %v2951, 2
      %v2953 = vadd.f32 %v2951, %v2952
      %v2954 = vrot.slane %v2953, 1
      %v2955 = vadd.f32 %v2953, %v2954
      %2956 = vst.msk [vmem:[#allocation10 + $0x5] sm:$0x1] %vm995, %v2955
      %v2957 = vld [vmem:[#allocation11 + $0x5] sm:$0x1]
      %v2958 = vld [vmem:[#allocation12 + $0x5] sm:$0x1]
      %v2959 = vld [vmem:[#allocation13 + $0x5] sm:$0x1]
      %v2960 = vld [vmem:[#allocation14 + $0x5] sm:$0x1]
      %v2961 = vld [vmem:[#allocation15 + $0x5] sm:$0x1]
      %v2962 = vld [vmem:[#allocation16 + $0x5] sm:$0x1]
      %v2963 = vlaneseq
      %v2964 = vshrl.u32 %v2963, 7
      %v2965 = vsub.s32 0, %v2964
      %v2966 = vrot.slane %v2962, %v2965
      %v2967 = vmul.f32 %v2966, %v718
      %v2968 = vmul.f32 %v2966, %v719
      %v2969 = vmul.f32 %v2966, %v720
      %v2970 = vmul.f32 %v2966, %v721
      %v2971 = vmul.f32 %v2966, %v722
      %v2972 = vmul.f32 %v2966, %v723
      %v2973 = vmul.f32 %v2966, %v724
      %v2974 = vmul.f32 %v2966, %v725
      %v2975 = vsel %vm727, %v2967, 0.0
      %2976 = vadd.xlane.f32.xlu0 %v2975
      %v2977 = vpop.xlane.xlu0 %2976
      %v2978 = vsel %vm727, %v2968, 0.0
      %2979 = vadd.xlane.f32.xlu0 %v2978
      %v2980 = vpop.xlane.xlu0 %2979
      %v2981 = vsel %vm727, %v2969, 0.0
      %2982 = vadd.xlane.f32.xlu0 %v2981
      %v2983 = vpop.xlane.xlu0 %2982
      %v2984 = vsel %vm727, %v2970, 0.0
      %2985 = vadd.xlane.f32.xlu0 %v2984
      %v2986 = vpop.xlane.xlu0 %2985
      %v2987 = vsel %vm727, %v2971, 0.0
      %2988 = vadd.xlane.f32.xlu0 %v2987
      %v2989 = vpop.xlane.xlu0 %2988
      %v2990 = vsel %vm727, %v2972, 0.0
      %2991 = vadd.xlane.f32.xlu0 %v2990
      %v2992 = vpop.xlane.xlu0 %2991
      %v2993 = vsel %vm727, %v2973, 0.0
      %2994 = vadd.xlane.f32.xlu0 %v2993
      %v2995 = vpop.xlane.xlu0 %2994
      %v2996 = vsel %vm727, %v2974, 0.0
      %2997 = vadd.xlane.f32.xlu0 %v2996
      %v2998 = vpop.xlane.xlu0 %2997
      %v2999 = vlaneseq
      %v3000 = vshrl.u32 %v2999, 7
      %v3001 = vsub.s32 0, %v3000
      %v3002 = vrot.slane %v2960, %v3001
      %v3003 = vmul.f32 %v2687, %v3002
      %v3004 = vmul.f32 %v2688, %v3002
      %v3005 = vmul.f32 %v2689, %v3002
      %v3006 = vmul.f32 %v2690, %v3002
      %v3007 = vmul.f32 %v2691, %v3002
      %v3008 = vmul.f32 %v2692, %v3002
      %v3009 = vmul.f32 %v2693, %v3002
      %v3010 = vmul.f32 %v2694, %v3002
      %v3011 = vsel %vm727, %v3003, 0.0
      %3012 = vadd.xlane.f32.xlu0 %v3011
      %v3013 = vpop.xlane.xlu0 %3012
      %v3014 = vsel %vm727, %v3004, 0.0
      %3015 = vadd.xlane.f32.xlu0 %v3014
      %v3016 = vpop.xlane.xlu0 %3015
      %v3017 = vsel %vm727, %v3005, 0.0
      %3018 = vadd.xlane.f32.xlu0 %v3017
      %v3019 = vpop.xlane.xlu0 %3018
      %v3020 = vsel %vm727, %v3006, 0.0
      %3021 = vadd.xlane.f32.xlu0 %v3020
      %v3022 = vpop.xlane.xlu0 %3021
      %v3023 = vsel %vm727, %v3007, 0.0
      %3024 = vadd.xlane.f32.xlu0 %v3023
      %v3025 = vpop.xlane.xlu0 %3024
      %v3026 = vsel %vm727, %v3008, 0.0
      %3027 = vadd.xlane.f32.xlu0 %v3026
      %v3028 = vpop.xlane.xlu0 %3027
      %v3029 = vsel %vm727, %v3009, 0.0
      %3030 = vadd.xlane.f32.xlu0 %v3029
      %v3031 = vpop.xlane.xlu0 %3030
      %v3032 = vsel %vm727, %v3010, 0.0
      %3033 = vadd.xlane.f32.xlu0 %v3032
      %v3034 = vpop.xlane.xlu0 %3033
      %v3035 = vlaneseq
      %v3036 = vshrl.u32 %v3035, 7
      %v3037 = vsub.s32 0, %v3036
      %v3038 = vrot.slane %v2958, %v3037
      %v3039 = vmul.f32 %v2687, %v3038
      %v3040 = vmul.f32 %v2688, %v3038
      %v3041 = vmul.f32 %v2689, %v3038
      %v3042 = vmul.f32 %v2690, %v3038
      %v3043 = vmul.f32 %v2691, %v3038
      %v3044 = vmul.f32 %v2692, %v3038
      %v3045 = vmul.f32 %v2693, %v3038
      %v3046 = vmul.f32 %v2694, %v3038
      %v3047 = vlaneseq
      %v3048 = vshrl.u32 %v3047, 7
      %v3049 = vsub.s32 0, %v3048
      %v3050 = vrot.slane %v2961, %v3049
      %v3051 = vmul.f32 %v3013, %v3050
      %v3052 = vmul.f32 %v3016, %v3050
      %v3053 = vmul.f32 %v3019, %v3050
      %v3054 = vmul.f32 %v3022, %v3050
      %v3055 = vmul.f32 %v3025, %v3050
      %v3056 = vmul.f32 %v3028, %v3050
      %v3057 = vmul.f32 %v3031, %v3050
      %v3058 = vmul.f32 %v3034, %v3050
      %v3059 = vadd.f32 %v3039, %v3051
      %v3060 = vadd.f32 %v3040, %v3052
      %v3061 = vadd.f32 %v3041, %v3053
      %v3062 = vadd.f32 %v3042, %v3054
      %v3063 = vadd.f32 %v3043, %v3055
      %v3064 = vadd.f32 %v3044, %v3056
      %v3065 = vadd.f32 %v3045, %v3057
      %v3066 = vadd.f32 %v3046, %v3058
      %v3067 = vlaneseq
      %v3068 = vshrl.u32 %v3067, 7
      %v3069 = vsub.s32 0, %v3068
      %v3070 = vrot.slane %v2959, %v3069
      %v3071 = vmul.f32 %v2977, %v3070
      %v3072 = vmul.f32 %v2980, %v3070
      %v3073 = vmul.f32 %v2983, %v3070
      %v3074 = vmul.f32 %v2986, %v3070
      %v3075 = vmul.f32 %v2989, %v3070
      %v3076 = vmul.f32 %v2992, %v3070
      %v3077 = vmul.f32 %v2995, %v3070
      %v3078 = vmul.f32 %v2998, %v3070
      %v3079 = vadd.f32 %v3059, %v3071
      %v3080 = vadd.f32 %v3060, %v3072
      %v3081 = vadd.f32 %v3061, %v3073
      %v3082 = vadd.f32 %v3062, %v3074
      %v3083 = vadd.f32 %v3063, %v3075
      %v3084 = vadd.f32 %v3064, %v3076
      %v3085 = vadd.f32 %v3065, %v3077
      %v3086 = vadd.f32 %v3066, %v3078
      %v3087 = vlaneseq
      %v3088 = vshrl.u32 %v3087, 7
      %v3089 = vsub.s32 0, %v3088
      %v3090 = vrot.slane %v2957, %v3089
      %v3091 = vmul.f32 %v3079, %v3090
      %v3092 = vmul.f32 %v3080, %v3090
      %v3093 = vmul.f32 %v3081, %v3090
      %v3094 = vmul.f32 %v3082, %v3090
      %v3095 = vmul.f32 %v3083, %v3090
      %v3096 = vmul.f32 %v3084, %v3090
      %v3097 = vmul.f32 %v3085, %v3090
      %v3098 = vmul.f32 %v3086, %v3090
      %v3099 = vsel %vm727, %v3091, 0.0
      %3100 = vadd.xlane.f32.xlu0 %v3099
      %v3101 = vpop.xlane.xlu0 %3100
      %v3102 = vsel %vm727, %v3092, 0.0
      %3103 = vadd.xlane.f32.xlu0 %v3102
      %v3104 = vpop.xlane.xlu0 %3103
      %v3105 = vsel %vm727, %v3093, 0.0
      %3106 = vadd.xlane.f32.xlu0 %v3105
      %v3107 = vpop.xlane.xlu0 %3106
      %v3108 = vsel %vm727, %v3094, 0.0
      %3109 = vadd.xlane.f32.xlu0 %v3108
      %v3110 = vpop.xlane.xlu0 %3109
      %v3111 = vsel %vm727, %v3095, 0.0
      %3112 = vadd.xlane.f32.xlu0 %v3111
      %v3113 = vpop.xlane.xlu0 %3112
      %v3114 = vsel %vm727, %v3096, 0.0
      %3115 = vadd.xlane.f32.xlu0 %v3114
      %v3116 = vpop.xlane.xlu0 %3115
      %v3117 = vsel %vm727, %v3097, 0.0
      %3118 = vadd.xlane.f32.xlu0 %v3117
      %v3119 = vpop.xlane.xlu0 %3118
      %v3120 = vsel %vm727, %v3098, 0.0
      %3121 = vadd.xlane.f32.xlu0 %v3120
      %v3122 = vpop.xlane.xlu0 %3121
      %v3123 = vmul.f32 %v3101, %v718
      %v3124 = vmul.f32 %v3104, %v719
      %v3125 = vmul.f32 %v3107, %v720
      %v3126 = vmul.f32 %v3110, %v721
      %v3127 = vmul.f32 %v3113, %v722
      %v3128 = vmul.f32 %v3116, %v723
      %v3129 = vmul.f32 %v3119, %v724
      %v3130 = vmul.f32 %v3122, %v725
      %v3131 = vsel %vm727, %v3123, 0.0
      %v3132 = vsel %vm727, %v3124, 0.0
      %v3133 = vadd.f32 %v3131, %v3132
      %v3134 = vsel %vm727, %v3125, 0.0
      %v3135 = vadd.f32 %v3133, %v3134
      %v3136 = vsel %vm727, %v3126, 0.0
      %v3137 = vadd.f32 %v3135, %v3136
      %v3138 = vsel %vm727, %v3127, 0.0
      %v3139 = vadd.f32 %v3137, %v3138
      %v3140 = vsel %vm727, %v3128, 0.0
      %v3141 = vadd.f32 %v3139, %v3140
      %v3142 = vsel %vm727, %v3129, 0.0
      %v3143 = vadd.f32 %v3141, %v3142
      %v3144 = vsel %vm727, %v3130, 0.0
      %v3145 = vadd.f32 %v3143, %v3144
      %v3146 = vrot.slane %v3145, 4
      %v3147 = vadd.f32 %v3145, %v3146
      %v3148 = vrot.slane %v3147, 2
      %v3149 = vadd.f32 %v3147, %v3148
      %v3150 = vrot.slane %v3149, 1
      %v3151 = vadd.f32 %v3149, %v3150
      %3152 = vst.msk [vmem:[#allocation17 + $0x5] sm:$0x1] %vm995, %v3151
      %v3153 = vld [vmem:[#allocation4 + $0x6] sm:$0x1]
      %v3154 = vld [vmem:[#allocation5 + $0x6] sm:$0x1]
      %v3155 = vld [vmem:[#allocation6 + $0x6] sm:$0x1]
      %v3156 = vld [vmem:[#allocation7 + $0x6] sm:$0x1]
      %v3157 = vld [vmem:[#allocation8 + $0x6] sm:$0x1]
      %v3158 = vld [vmem:[#allocation9 + $0x6] sm:$0x1]
      %v3159 = vlaneseq
      %v3160 = vshrl.u32 %v3159, 7
      %v3161 = vsub.s32 0, %v3160
      %v3162 = vrot.slane %v3158, %v3161
      %v3163 = vmul.f32 %v3162, %v718
      %v3164 = vmul.f32 %v3162, %v719
      %v3165 = vmul.f32 %v3162, %v720
      %v3166 = vmul.f32 %v3162, %v721
      %v3167 = vmul.f32 %v3162, %v722
      %v3168 = vmul.f32 %v3162, %v723
      %v3169 = vmul.f32 %v3162, %v724
      %v3170 = vmul.f32 %v3162, %v725
      %v3171 = vsel %vm727, %v3163, 0.0
      %3172 = vadd.xlane.f32.xlu0 %v3171
      %v3173 = vpop.xlane.xlu0 %3172
      %v3174 = vsel %vm727, %v3164, 0.0
      %3175 = vadd.xlane.f32.xlu0 %v3174
      %v3176 = vpop.xlane.xlu0 %3175
      %v3177 = vsel %vm727, %v3165, 0.0
      %3178 = vadd.xlane.f32.xlu0 %v3177
      %v3179 = vpop.xlane.xlu0 %3178
      %v3180 = vsel %vm727, %v3166, 0.0
      %3181 = vadd.xlane.f32.xlu0 %v3180
      %v3182 = vpop.xlane.xlu0 %3181
      %v3183 = vsel %vm727, %v3167, 0.0
      %3184 = vadd.xlane.f32.xlu0 %v3183
      %v3185 = vpop.xlane.xlu0 %3184
      %v3186 = vsel %vm727, %v3168, 0.0
      %3187 = vadd.xlane.f32.xlu0 %v3186
      %v3188 = vpop.xlane.xlu0 %3187
      %v3189 = vsel %vm727, %v3169, 0.0
      %3190 = vadd.xlane.f32.xlu0 %v3189
      %v3191 = vpop.xlane.xlu0 %3190
      %v3192 = vsel %vm727, %v3170, 0.0
      %3193 = vadd.xlane.f32.xlu0 %v3192
      %v3194 = vpop.xlane.xlu0 %3193
      %v3195 = vlaneseq
      %v3196 = vshrl.u32 %v3195, 7
      %v3197 = vsub.s32 0, %v3196
      %v3198 = vrot.slane %v3156, %v3197
      %v3199 = vmul.f32 %v2883, %v3198
      %v3200 = vmul.f32 %v2884, %v3198
      %v3201 = vmul.f32 %v2885, %v3198
      %v3202 = vmul.f32 %v2886, %v3198
      %v3203 = vmul.f32 %v2887, %v3198
      %v3204 = vmul.f32 %v2888, %v3198
      %v3205 = vmul.f32 %v2889, %v3198
      %v3206 = vmul.f32 %v2890, %v3198
      %v3207 = vsel %vm727, %v3199, 0.0
      %3208 = vadd.xlane.f32.xlu0 %v3207
      %v3209 = vpop.xlane.xlu0 %3208
      %v3210 = vsel %vm727, %v3200, 0.0
      %3211 = vadd.xlane.f32.xlu0 %v3210
      %v3212 = vpop.xlane.xlu0 %3211
      %v3213 = vsel %vm727, %v3201, 0.0
      %3214 = vadd.xlane.f32.xlu0 %v3213
      %v3215 = vpop.xlane.xlu0 %3214
      %v3216 = vsel %vm727, %v3202, 0.0
      %3217 = vadd.xlane.f32.xlu0 %v3216
      %v3218 = vpop.xlane.xlu0 %3217
      %v3219 = vsel %vm727, %v3203, 0.0
      %3220 = vadd.xlane.f32.xlu0 %v3219
      %v3221 = vpop.xlane.xlu0 %3220
      %v3222 = vsel %vm727, %v3204, 0.0
      %3223 = vadd.xlane.f32.xlu0 %v3222
      %v3224 = vpop.xlane.xlu0 %3223
      %v3225 = vsel %vm727, %v3205, 0.0
      %3226 = vadd.xlane.f32.xlu0 %v3225
      %v3227 = vpop.xlane.xlu0 %3226
      %v3228 = vsel %vm727, %v3206, 0.0
      %3229 = vadd.xlane.f32.xlu0 %v3228
      %v3230 = vpop.xlane.xlu0 %3229
      %v3231 = vlaneseq
      %v3232 = vshrl.u32 %v3231, 7
      %v3233 = vsub.s32 0, %v3232
      %v3234 = vrot.slane %v3154, %v3233
      %v3235 = vmul.f32 %v2883, %v3234
      %v3236 = vmul.f32 %v2884, %v3234
      %v3237 = vmul.f32 %v2885, %v3234
      %v3238 = vmul.f32 %v2886, %v3234
      %v3239 = vmul.f32 %v2887, %v3234
      %v3240 = vmul.f32 %v2888, %v3234
      %v3241 = vmul.f32 %v2889, %v3234
      %v3242 = vmul.f32 %v2890, %v3234
      %v3243 = vlaneseq
      %v3244 = vshrl.u32 %v3243, 7
      %v3245 = vsub.s32 0, %v3244
      %v3246 = vrot.slane %v3157, %v3245
      %v3247 = vmul.f32 %v3209, %v3246
      %v3248 = vmul.f32 %v3212, %v3246
      %v3249 = vmul.f32 %v3215, %v3246
      %v3250 = vmul.f32 %v3218, %v3246
      %v3251 = vmul.f32 %v3221, %v3246
      %v3252 = vmul.f32 %v3224, %v3246
      %v3253 = vmul.f32 %v3227, %v3246
      %v3254 = vmul.f32 %v3230, %v3246
      %v3255 = vadd.f32 %v3235, %v3247
      %v3256 = vadd.f32 %v3236, %v3248
      %v3257 = vadd.f32 %v3237, %v3249
      %v3258 = vadd.f32 %v3238, %v3250
      %v3259 = vadd.f32 %v3239, %v3251
      %v3260 = vadd.f32 %v3240, %v3252
      %v3261 = vadd.f32 %v3241, %v3253
      %v3262 = vadd.f32 %v3242, %v3254
      %v3263 = vlaneseq
      %v3264 = vshrl.u32 %v3263, 7
      %v3265 = vsub.s32 0, %v3264
      %v3266 = vrot.slane %v3155, %v3265
      %v3267 = vmul.f32 %v3173, %v3266
      %v3268 = vmul.f32 %v3176, %v3266
      %v3269 = vmul.f32 %v3179, %v3266
      %v3270 = vmul.f32 %v3182, %v3266
      %v3271 = vmul.f32 %v3185, %v3266
      %v3272 = vmul.f32 %v3188, %v3266
      %v3273 = vmul.f32 %v3191, %v3266
      %v3274 = vmul.f32 %v3194, %v3266
      %v3275 = vadd.f32 %v3255, %v3267
      %v3276 = vadd.f32 %v3256, %v3268
      %v3277 = vadd.f32 %v3257, %v3269
      %v3278 = vadd.f32 %v3258, %v3270
      %v3279 = vadd.f32 %v3259, %v3271
      %v3280 = vadd.f32 %v3260, %v3272
      %v3281 = vadd.f32 %v3261, %v3273
      %v3282 = vadd.f32 %v3262, %v3274
      %v3283 = vlaneseq
      %v3284 = vshrl.u32 %v3283, 7
      %v3285 = vsub.s32 0, %v3284
      %v3286 = vrot.slane %v3153, %v3285
      %v3287 = vmul.f32 %v3275, %v3286
      %v3288 = vmul.f32 %v3276, %v3286
      %v3289 = vmul.f32 %v3277, %v3286
      %v3290 = vmul.f32 %v3278, %v3286
      %v3291 = vmul.f32 %v3279, %v3286
      %v3292 = vmul.f32 %v3280, %v3286
      %v3293 = vmul.f32 %v3281, %v3286
      %v3294 = vmul.f32 %v3282, %v3286
      %v3295 = vsel %vm727, %v3287, 0.0
      %3296 = vadd.xlane.f32.xlu0 %v3295
      %v3297 = vpop.xlane.xlu0 %3296
      %v3298 = vsel %vm727, %v3288, 0.0
      %3299 = vadd.xlane.f32.xlu0 %v3298
      %v3300 = vpop.xlane.xlu0 %3299
      %v3301 = vsel %vm727, %v3289, 0.0
      %3302 = vadd.xlane.f32.xlu0 %v3301
      %v3303 = vpop.xlane.xlu0 %3302
      %v3304 = vsel %vm727, %v3290, 0.0
      %3305 = vadd.xlane.f32.xlu0 %v3304
      %v3306 = vpop.xlane.xlu0 %3305
      %v3307 = vsel %vm727, %v3291, 0.0
      %3308 = vadd.xlane.f32.xlu0 %v3307
      %v3309 = vpop.xlane.xlu0 %3308
      %v3310 = vsel %vm727, %v3292, 0.0
      %3311 = vadd.xlane.f32.xlu0 %v3310
      %v3312 = vpop.xlane.xlu0 %3311
      %v3313 = vsel %vm727, %v3293, 0.0
      %3314 = vadd.xlane.f32.xlu0 %v3313
      %v3315 = vpop.xlane.xlu0 %3314
      %v3316 = vsel %vm727, %v3294, 0.0
      %3317 = vadd.xlane.f32.xlu0 %v3316
      %v3318 = vpop.xlane.xlu0 %3317
      %v3319 = vmul.f32 %v3297, %v718
      %v3320 = vmul.f32 %v3300, %v719
      %v3321 = vmul.f32 %v3303, %v720
      %v3322 = vmul.f32 %v3306, %v721
      %v3323 = vmul.f32 %v3309, %v722
      %v3324 = vmul.f32 %v3312, %v723
      %v3325 = vmul.f32 %v3315, %v724
      %v3326 = vmul.f32 %v3318, %v725
      %v3327 = vsel %vm727, %v3319, 0.0
      %v3328 = vsel %vm727, %v3320, 0.0
      %v3329 = vadd.f32 %v3327, %v3328
      %v3330 = vsel %vm727, %v3321, 0.0
      %v3331 = vadd.f32 %v3329, %v3330
      %v3332 = vsel %vm727, %v3322, 0.0
      %v3333 = vadd.f32 %v3331, %v3332
      %v3334 = vsel %vm727, %v3323, 0.0
      %v3335 = vadd.f32 %v3333, %v3334
      %v3336 = vsel %vm727, %v3324, 0.0
      %v3337 = vadd.f32 %v3335, %v3336
      %v3338 = vsel %vm727, %v3325, 0.0
      %v3339 = vadd.f32 %v3337, %v3338
      %v3340 = vsel %vm727, %v3326, 0.0
      %v3341 = vadd.f32 %v3339, %v3340
      %v3342 = vrot.slane %v3341, 4
      %v3343 = vadd.f32 %v3341, %v3342
      %v3344 = vrot.slane %v3343, 2
      %v3345 = vadd.f32 %v3343, %v3344
      %v3346 = vrot.slane %v3345, 1
      %v3347 = vadd.f32 %v3345, %v3346
      %3348 = vst.msk [vmem:[#allocation10 + $0x6] sm:$0x1] %vm995, %v3347
      %v3349 = vld [vmem:[#allocation11 + $0x6] sm:$0x1]
      %v3350 = vld [vmem:[#allocation12 + $0x6] sm:$0x1]
      %v3351 = vld [vmem:[#allocation13 + $0x6] sm:$0x1]
      %v3352 = vld [vmem:[#allocation14 + $0x6] sm:$0x1]
      %v3353 = vld [vmem:[#allocation15 + $0x6] sm:$0x1]
      %v3354 = vld [vmem:[#allocation16 + $0x6] sm:$0x1]
      %v3355 = vlaneseq
      %v3356 = vshrl.u32 %v3355, 7
      %v3357 = vsub.s32 0, %v3356
      %v3358 = vrot.slane %v3354, %v3357
      %v3359 = vmul.f32 %v3358, %v718
      %v3360 = vmul.f32 %v3358, %v719
      %v3361 = vmul.f32 %v3358, %v720
      %v3362 = vmul.f32 %v3358, %v721
      %v3363 = vmul.f32 %v3358, %v722
      %v3364 = vmul.f32 %v3358, %v723
      %v3365 = vmul.f32 %v3358, %v724
      %v3366 = vmul.f32 %v3358, %v725
      %v3367 = vsel %vm727, %v3359, 0.0
      %3368 = vadd.xlane.f32.xlu0 %v3367
      %v3369 = vpop.xlane.xlu0 %3368
      %v3370 = vsel %vm727, %v3360, 0.0
      %3371 = vadd.xlane.f32.xlu0 %v3370
      %v3372 = vpop.xlane.xlu0 %3371
      %v3373 = vsel %vm727, %v3361, 0.0
      %3374 = vadd.xlane.f32.xlu0 %v3373
      %v3375 = vpop.xlane.xlu0 %3374
      %v3376 = vsel %vm727, %v3362, 0.0
      %3377 = vadd.xlane.f32.xlu0 %v3376
      %v3378 = vpop.xlane.xlu0 %3377
      %v3379 = vsel %vm727, %v3363, 0.0
      %3380 = vadd.xlane.f32.xlu0 %v3379
      %v3381 = vpop.xlane.xlu0 %3380
      %v3382 = vsel %vm727, %v3364, 0.0
      %3383 = vadd.xlane.f32.xlu0 %v3382
      %v3384 = vpop.xlane.xlu0 %3383
      %v3385 = vsel %vm727, %v3365, 0.0
      %3386 = vadd.xlane.f32.xlu0 %v3385
      %v3387 = vpop.xlane.xlu0 %3386
      %v3388 = vsel %vm727, %v3366, 0.0
      %3389 = vadd.xlane.f32.xlu0 %v3388
      %v3390 = vpop.xlane.xlu0 %3389
      %v3391 = vlaneseq
      %v3392 = vshrl.u32 %v3391, 7
      %v3393 = vsub.s32 0, %v3392
      %v3394 = vrot.slane %v3352, %v3393
      %v3395 = vmul.f32 %v3079, %v3394
      %v3396 = vmul.f32 %v3080, %v3394
      %v3397 = vmul.f32 %v3081, %v3394
      %v3398 = vmul.f32 %v3082, %v3394
      %v3399 = vmul.f32 %v3083, %v3394
      %v3400 = vmul.f32 %v3084, %v3394
      %v3401 = vmul.f32 %v3085, %v3394
      %v3402 = vmul.f32 %v3086, %v3394
      %v3403 = vsel %vm727, %v3395, 0.0
      %3404 = vadd.xlane.f32.xlu0 %v3403
      %v3405 = vpop.xlane.xlu0 %3404
      %v3406 = vsel %vm727, %v3396, 0.0
      %3407 = vadd.xlane.f32.xlu0 %v3406
      %v3408 = vpop.xlane.xlu0 %3407
      %v3409 = vsel %vm727, %v3397, 0.0
      %3410 = vadd.xlane.f32.xlu0 %v3409
      %v3411 = vpop.xlane.xlu0 %3410
      %v3412 = vsel %vm727, %v3398, 0.0
      %3413 = vadd.xlane.f32.xlu0 %v3412
      %v3414 = vpop.xlane.xlu0 %3413
      %v3415 = vsel %vm727, %v3399, 0.0
      %3416 = vadd.xlane.f32.xlu0 %v3415
      %v3417 = vpop.xlane.xlu0 %3416
      %v3418 = vsel %vm727, %v3400, 0.0
      %3419 = vadd.xlane.f32.xlu0 %v3418
      %v3420 = vpop.xlane.xlu0 %3419
      %v3421 = vsel %vm727, %v3401, 0.0
      %3422 = vadd.xlane.f32.xlu0 %v3421
      %v3423 = vpop.xlane.xlu0 %3422
      %v3424 = vsel %vm727, %v3402, 0.0
      %3425 = vadd.xlane.f32.xlu0 %v3424
      %v3426 = vpop.xlane.xlu0 %3425
      %v3427 = vlaneseq
      %v3428 = vshrl.u32 %v3427, 7
      %v3429 = vsub.s32 0, %v3428
      %v3430 = vrot.slane %v3350, %v3429
      %v3431 = vmul.f32 %v3079, %v3430
      %v3432 = vmul.f32 %v3080, %v3430
      %v3433 = vmul.f32 %v3081, %v3430
      %v3434 = vmul.f32 %v3082, %v3430
      %v3435 = vmul.f32 %v3083, %v3430
      %v3436 = vmul.f32 %v3084, %v3430
      %v3437 = vmul.f32 %v3085, %v3430
      %v3438 = vmul.f32 %v3086, %v3430
      %v3439 = vlaneseq
      %v3440 = vshrl.u32 %v3439, 7
      %v3441 = vsub.s32 0, %v3440
      %v3442 = vrot.slane %v3353, %v3441
      %v3443 = vmul.f32 %v3405, %v3442
      %v3444 = vmul.f32 %v3408, %v3442
      %v3445 = vmul.f32 %v3411, %v3442
      %v3446 = vmul.f32 %v3414, %v3442
      %v3447 = vmul.f32 %v3417, %v3442
      %v3448 = vmul.f32 %v3420, %v3442
      %v3449 = vmul.f32 %v3423, %v3442
      %v3450 = vmul.f32 %v3426, %v3442
      %v3451 = vadd.f32 %v3431, %v3443
      %v3452 = vadd.f32 %v3432, %v3444
      %v3453 = vadd.f32 %v3433, %v3445
      %v3454 = vadd.f32 %v3434, %v3446
      %v3455 = vadd.f32 %v3435, %v3447
      %v3456 = vadd.f32 %v3436, %v3448
      %v3457 = vadd.f32 %v3437, %v3449
      %v3458 = vadd.f32 %v3438, %v3450
      %v3459 = vlaneseq
      %v3460 = vshrl.u32 %v3459, 7
      %v3461 = vsub.s32 0, %v3460
      %v3462 = vrot.slane %v3351, %v3461
      %v3463 = vmul.f32 %v3369, %v3462
      %v3464 = vmul.f32 %v3372, %v3462
      %v3465 = vmul.f32 %v3375, %v3462
      %v3466 = vmul.f32 %v3378, %v3462
      %v3467 = vmul.f32 %v3381, %v3462
      %v3468 = vmul.f32 %v3384, %v3462
      %v3469 = vmul.f32 %v3387, %v3462
      %v3470 = vmul.f32 %v3390, %v3462
      %v3471 = vadd.f32 %v3451, %v3463
      %v3472 = vadd.f32 %v3452, %v3464
      %v3473 = vadd.f32 %v3453, %v3465
      %v3474 = vadd.f32 %v3454, %v3466
      %v3475 = vadd.f32 %v3455, %v3467
      %v3476 = vadd.f32 %v3456, %v3468
      %v3477 = vadd.f32 %v3457, %v3469
      %v3478 = vadd.f32 %v3458, %v3470
      %v3479 = vlaneseq
      %v3480 = vshrl.u32 %v3479, 7
      %v3481 = vsub.s32 0, %v3480
      %v3482 = vrot.slane %v3349, %v3481
      %v3483 = vmul.f32 %v3471, %v3482
      %v3484 = vmul.f32 %v3472, %v3482
      %v3485 = vmul.f32 %v3473, %v3482
      %v3486 = vmul.f32 %v3474, %v3482
      %v3487 = vmul.f32 %v3475, %v3482
      %v3488 = vmul.f32 %v3476, %v3482
      %v3489 = vmul.f32 %v3477, %v3482
      %v3490 = vmul.f32 %v3478, %v3482
      %v3491 = vsel %vm727, %v3483, 0.0
      %3492 = vadd.xlane.f32.xlu0 %v3491
      %v3493 = vpop.xlane.xlu0 %3492
      %v3494 = vsel %vm727, %v3484, 0.0
      %3495 = vadd.xlane.f32.xlu0 %v3494
      %v3496 = vpop.xlane.xlu0 %3495
      %v3497 = vsel %vm727, %v3485, 0.0
      %3498 = vadd.xlane.f32.xlu0 %v3497
      %v3499 = vpop.xlane.xlu0 %3498
      %v3500 = vsel %vm727, %v3486, 0.0
      %3501 = vadd.xlane.f32.xlu0 %v3500
      %v3502 = vpop.xlane.xlu0 %3501
      %v3503 = vsel %vm727, %v3487, 0.0
      %3504 = vadd.xlane.f32.xlu0 %v3503
      %v3505 = vpop.xlane.xlu0 %3504
      %v3506 = vsel %vm727, %v3488, 0.0
      %3507 = vadd.xlane.f32.xlu0 %v3506
      %v3508 = vpop.xlane.xlu0 %3507
      %v3509 = vsel %vm727, %v3489, 0.0
      %3510 = vadd.xlane.f32.xlu0 %v3509
      %v3511 = vpop.xlane.xlu0 %3510
      %v3512 = vsel %vm727, %v3490, 0.0
      %3513 = vadd.xlane.f32.xlu0 %v3512
      %v3514 = vpop.xlane.xlu0 %3513
      %v3515 = vmul.f32 %v3493, %v718
      %v3516 = vmul.f32 %v3496, %v719
      %v3517 = vmul.f32 %v3499, %v720
      %v3518 = vmul.f32 %v3502, %v721
      %v3519 = vmul.f32 %v3505, %v722
      %v3520 = vmul.f32 %v3508, %v723
      %v3521 = vmul.f32 %v3511, %v724
      %v3522 = vmul.f32 %v3514, %v725
      %v3523 = vsel %vm727, %v3515, 0.0
      %v3524 = vsel %vm727, %v3516, 0.0
      %v3525 = vadd.f32 %v3523, %v3524
      %v3526 = vsel %vm727, %v3517, 0.0
      %v3527 = vadd.f32 %v3525, %v3526
      %v3528 = vsel %vm727, %v3518, 0.0
      %v3529 = vadd.f32 %v3527, %v3528
      %v3530 = vsel %vm727, %v3519, 0.0
      %v3531 = vadd.f32 %v3529, %v3530
      %v3532 = vsel %vm727, %v3520, 0.0
      %v3533 = vadd.f32 %v3531, %v3532
      %v3534 = vsel %vm727, %v3521, 0.0
      %v3535 = vadd.f32 %v3533, %v3534
      %v3536 = vsel %vm727, %v3522, 0.0
      %v3537 = vadd.f32 %v3535, %v3536
      %v3538 = vrot.slane %v3537, 4
      %v3539 = vadd.f32 %v3537, %v3538
      %v3540 = vrot.slane %v3539, 2
      %v3541 = vadd.f32 %v3539, %v3540
      %v3542 = vrot.slane %v3541, 1
      %v3543 = vadd.f32 %v3541, %v3542
      %3544 = vst.msk [vmem:[#allocation17 + $0x6] sm:$0x1] %vm995, %v3543
      %v3545 = vld [vmem:[#allocation4 + $0x7] sm:$0x1]
      %v3546 = vld [vmem:[#allocation5 + $0x7] sm:$0x1]
      %v3547 = vld [vmem:[#allocation6 + $0x7] sm:$0x1]
      %v3548 = vld [vmem:[#allocation7 + $0x7] sm:$0x1]
      %v3549 = vld [vmem:[#allocation8 + $0x7] sm:$0x1]
      %v3550 = vld [vmem:[#allocation9 + $0x7] sm:$0x1]
      %v3551 = vlaneseq
      %v3552 = vshrl.u32 %v3551, 7
      %v3553 = vsub.s32 0, %v3552
      %v3554 = vrot.slane %v3550, %v3553
      %v3555 = vmul.f32 %v3554, %v718
      %v3556 = vmul.f32 %v3554, %v719
      %v3557 = vmul.f32 %v3554, %v720
      %v3558 = vmul.f32 %v3554, %v721
      %v3559 = vmul.f32 %v3554, %v722
      %v3560 = vmul.f32 %v3554, %v723
      %v3561 = vmul.f32 %v3554, %v724
      %v3562 = vmul.f32 %v3554, %v725
      %v3563 = vsel %vm727, %v3555, 0.0
      %3564 = vadd.xlane.f32.xlu0 %v3563
      %v3565 = vpop.xlane.xlu0 %3564
      %v3566 = vsel %vm727, %v3556, 0.0
      %3567 = vadd.xlane.f32.xlu0 %v3566
      %v3568 = vpop.xlane.xlu0 %3567
      %v3569 = vsel %vm727, %v3557, 0.0
      %3570 = vadd.xlane.f32.xlu0 %v3569
      %v3571 = vpop.xlane.xlu0 %3570
      %v3572 = vsel %vm727, %v3558, 0.0
      %3573 = vadd.xlane.f32.xlu0 %v3572
      %v3574 = vpop.xlane.xlu0 %3573
      %v3575 = vsel %vm727, %v3559, 0.0
      %3576 = vadd.xlane.f32.xlu0 %v3575
      %v3577 = vpop.xlane.xlu0 %3576
      %v3578 = vsel %vm727, %v3560, 0.0
      %3579 = vadd.xlane.f32.xlu0 %v3578
      %v3580 = vpop.xlane.xlu0 %3579
      %v3581 = vsel %vm727, %v3561, 0.0
      %3582 = vadd.xlane.f32.xlu0 %v3581
      %v3583 = vpop.xlane.xlu0 %3582
      %v3584 = vsel %vm727, %v3562, 0.0
      %3585 = vadd.xlane.f32.xlu0 %v3584
      %v3586 = vpop.xlane.xlu0 %3585
      %v3587 = vlaneseq
      %v3588 = vshrl.u32 %v3587, 7
      %v3589 = vsub.s32 0, %v3588
      %v3590 = vrot.slane %v3548, %v3589
      %v3591 = vmul.f32 %v3275, %v3590
      %v3592 = vmul.f32 %v3276, %v3590
      %v3593 = vmul.f32 %v3277, %v3590
      %v3594 = vmul.f32 %v3278, %v3590
      %v3595 = vmul.f32 %v3279, %v3590
      %v3596 = vmul.f32 %v3280, %v3590
      %v3597 = vmul.f32 %v3281, %v3590
      %v3598 = vmul.f32 %v3282, %v3590
      %v3599 = vsel %vm727, %v3591, 0.0
      %3600 = vadd.xlane.f32.xlu0 %v3599
      %v3601 = vpop.xlane.xlu0 %3600
      %v3602 = vsel %vm727, %v3592, 0.0
      %3603 = vadd.xlane.f32.xlu0 %v3602
      %v3604 = vpop.xlane.xlu0 %3603
      %v3605 = vsel %vm727, %v3593, 0.0
      %3606 = vadd.xlane.f32.xlu0 %v3605
      %v3607 = vpop.xlane.xlu0 %3606
      %v3608 = vsel %vm727, %v3594, 0.0
      %3609 = vadd.xlane.f32.xlu0 %v3608
      %v3610 = vpop.xlane.xlu0 %3609
      %v3611 = vsel %vm727, %v3595, 0.0
      %3612 = vadd.xlane.f32.xlu0 %v3611
      %v3613 = vpop.xlane.xlu0 %3612
      %v3614 = vsel %vm727, %v3596, 0.0
      %3615 = vadd.xlane.f32.xlu0 %v3614
      %v3616 = vpop.xlane.xlu0 %3615
      %v3617 = vsel %vm727, %v3597, 0.0
      %3618 = vadd.xlane.f32.xlu0 %v3617
      %v3619 = vpop.xlane.xlu0 %3618
      %v3620 = vsel %vm727, %v3598, 0.0
      %3621 = vadd.xlane.f32.xlu0 %v3620
      %v3622 = vpop.xlane.xlu0 %3621
      %v3623 = vlaneseq
      %v3624 = vshrl.u32 %v3623, 7
      %v3625 = vsub.s32 0, %v3624
      %v3626 = vrot.slane %v3546, %v3625
      %v3627 = vmul.f32 %v3275, %v3626
      %v3628 = vmul.f32 %v3276, %v3626
      %v3629 = vmul.f32 %v3277, %v3626
      %v3630 = vmul.f32 %v3278, %v3626
      %v3631 = vmul.f32 %v3279, %v3626
      %v3632 = vmul.f32 %v3280, %v3626
      %v3633 = vmul.f32 %v3281, %v3626
      %v3634 = vmul.f32 %v3282, %v3626
      %v3635 = vlaneseq
      %v3636 = vshrl.u32 %v3635, 7
      %v3637 = vsub.s32 0, %v3636
      %v3638 = vrot.slane %v3549, %v3637
      %v3639 = vmul.f32 %v3601, %v3638
      %v3640 = vmul.f32 %v3604, %v3638
      %v3641 = vmul.f32 %v3607, %v3638
      %v3642 = vmul.f32 %v3610, %v3638
      %v3643 = vmul.f32 %v3613, %v3638
      %v3644 = vmul.f32 %v3616, %v3638
      %v3645 = vmul.f32 %v3619, %v3638
      %v3646 = vmul.f32 %v3622, %v3638
      %v3647 = vadd.f32 %v3627, %v3639
      %v3648 = vadd.f32 %v3628, %v3640
      %v3649 = vadd.f32 %v3629, %v3641
      %v3650 = vadd.f32 %v3630, %v3642
      %v3651 = vadd.f32 %v3631, %v3643
      %v3652 = vadd.f32 %v3632, %v3644
      %v3653 = vadd.f32 %v3633, %v3645
      %v3654 = vadd.f32 %v3634, %v3646
      %v3655 = vlaneseq
      %v3656 = vshrl.u32 %v3655, 7
      %v3657 = vsub.s32 0, %v3656
      %v3658 = vrot.slane %v3547, %v3657
      %v3659 = vmul.f32 %v3565, %v3658
      %v3660 = vmul.f32 %v3568, %v3658
      %v3661 = vmul.f32 %v3571, %v3658
      %v3662 = vmul.f32 %v3574, %v3658
      %v3663 = vmul.f32 %v3577, %v3658
      %v3664 = vmul.f32 %v3580, %v3658
      %v3665 = vmul.f32 %v3583, %v3658
      %v3666 = vmul.f32 %v3586, %v3658
      %v3667 = vadd.f32 %v3647, %v3659
      %v3668 = vadd.f32 %v3648, %v3660
      %v3669 = vadd.f32 %v3649, %v3661
      %v3670 = vadd.f32 %v3650, %v3662
      %v3671 = vadd.f32 %v3651, %v3663
      %v3672 = vadd.f32 %v3652, %v3664
      %v3673 = vadd.f32 %v3653, %v3665
      %v3674 = vadd.f32 %v3654, %v3666
      %v3675 = vlaneseq
      %v3676 = vshrl.u32 %v3675, 7
      %v3677 = vsub.s32 0, %v3676
      %v3678 = vrot.slane %v3545, %v3677
      %v3679 = vmul.f32 %v3667, %v3678
      %v3680 = vmul.f32 %v3668, %v3678
      %v3681 = vmul.f32 %v3669, %v3678
      %v3682 = vmul.f32 %v3670, %v3678
      %v3683 = vmul.f32 %v3671, %v3678
      %v3684 = vmul.f32 %v3672, %v3678
      %v3685 = vmul.f32 %v3673, %v3678
      %v3686 = vmul.f32 %v3674, %v3678
      %v3687 = vsel %vm727, %v3679, 0.0
      %3688 = vadd.xlane.f32.xlu0 %v3687
      %v3689 = vpop.xlane.xlu0 %3688
      %v3690 = vsel %vm727, %v3680, 0.0
      %3691 = vadd.xlane.f32.xlu0 %v3690
      %v3692 = vpop.xlane.xlu0 %3691
      %v3693 = vsel %vm727, %v3681, 0.0
      %3694 = vadd.xlane.f32.xlu0 %v3693
      %v3695 = vpop.xlane.xlu0 %3694
      %v3696 = vsel %vm727, %v3682, 0.0
      %3697 = vadd.xlane.f32.xlu0 %v3696
      %v3698 = vpop.xlane.xlu0 %3697
      %v3699 = vsel %vm727, %v3683, 0.0
      %3700 = vadd.xlane.f32.xlu0 %v3699
      %v3701 = vpop.xlane.xlu0 %3700
      %v3702 = vsel %vm727, %v3684, 0.0
      %3703 = vadd.xlane.f32.xlu0 %v3702
      %v3704 = vpop.xlane.xlu0 %3703
      %v3705 = vsel %vm727, %v3685, 0.0
      %3706 = vadd.xlane.f32.xlu0 %v3705
      %v3707 = vpop.xlane.xlu0 %3706
      %v3708 = vsel %vm727, %v3686, 0.0
      %3709 = vadd.xlane.f32.xlu0 %v3708
      %v3710 = vpop.xlane.xlu0 %3709
      %v3711 = vmul.f32 %v3689, %v718
      %v3712 = vmul.f32 %v3692, %v719
      %v3713 = vmul.f32 %v3695, %v720
      %v3714 = vmul.f32 %v3698, %v721
      %v3715 = vmul.f32 %v3701, %v722
      %v3716 = vmul.f32 %v3704, %v723
      %v3717 = vmul.f32 %v3707, %v724
      %v3718 = vmul.f32 %v3710, %v725
      %v3719 = vsel %vm727, %v3711, 0.0
      %v3720 = vsel %vm727, %v3712, 0.0
      %v3721 = vadd.f32 %v3719, %v3720
      %v3722 = vsel %vm727, %v3713, 0.0
      %v3723 = vadd.f32 %v3721, %v3722
      %v3724 = vsel %vm727, %v3714, 0.0
      %v3725 = vadd.f32 %v3723, %v3724
      %v3726 = vsel %vm727, %v3715, 0.0
      %v3727 = vadd.f32 %v3725, %v3726
      %v3728 = vsel %vm727, %v3716, 0.0
      %v3729 = vadd.f32 %v3727, %v3728
      %v3730 = vsel %vm727, %v3717, 0.0
      %v3731 = vadd.f32 %v3729, %v3730
      %v3732 = vsel %vm727, %v3718, 0.0
      %v3733 = vadd.f32 %v3731, %v3732
      %v3734 = vrot.slane %v3733, 4
      %v3735 = vadd.f32 %v3733, %v3734
      %v3736 = vrot.slane %v3735, 2
      %v3737 = vadd.f32 %v3735, %v3736
      %v3738 = vrot.slane %v3737, 1
      %v3739 = vadd.f32 %v3737, %v3738
      %3740 = vst.msk [vmem:[#allocation10 + $0x7] sm:$0x1] %vm995, %v3739
      %v3741 = vld [vmem:[#allocation11 + $0x7] sm:$0x1]
      %v3742 = vld [vmem:[#allocation12 + $0x7] sm:$0x1]
      %v3743 = vld [vmem:[#allocation13 + $0x7] sm:$0x1]
      %v3744 = vld [vmem:[#allocation14 + $0x7] sm:$0x1]
      %v3745 = vld [vmem:[#allocation15 + $0x7] sm:$0x1]
      %v3746 = vld [vmem:[#allocation16 + $0x7] sm:$0x1]
      %v3747 = vlaneseq
      %v3748 = vshrl.u32 %v3747, 7
      %v3749 = vsub.s32 0, %v3748
      %v3750 = vrot.slane %v3746, %v3749
      %v3751 = vmul.f32 %v3750, %v718
      %v3752 = vmul.f32 %v3750, %v719
      %v3753 = vmul.f32 %v3750, %v720
      %v3754 = vmul.f32 %v3750, %v721
      %v3755 = vmul.f32 %v3750, %v722
      %v3756 = vmul.f32 %v3750, %v723
      %v3757 = vmul.f32 %v3750, %v724
      %v3758 = vmul.f32 %v3750, %v725
      %v3759 = vsel %vm727, %v3751, 0.0
      %3760 = vadd.xlane.f32.xlu0 %v3759
      %v3761 = vpop.xlane.xlu0 %3760
      %v3762 = vsel %vm727, %v3752, 0.0
      %3763 = vadd.xlane.f32.xlu0 %v3762
      %v3764 = vpop.xlane.xlu0 %3763
      %v3765 = vsel %vm727, %v3753, 0.0
      %3766 = vadd.xlane.f32.xlu0 %v3765
      %v3767 = vpop.xlane.xlu0 %3766
      %v3768 = vsel %vm727, %v3754, 0.0
      %3769 = vadd.xlane.f32.xlu0 %v3768
      %v3770 = vpop.xlane.xlu0 %3769
      %v3771 = vsel %vm727, %v3755, 0.0
      %3772 = vadd.xlane.f32.xlu0 %v3771
      %v3773 = vpop.xlane.xlu0 %3772
      %v3774 = vsel %vm727, %v3756, 0.0
      %3775 = vadd.xlane.f32.xlu0 %v3774
      %v3776 = vpop.xlane.xlu0 %3775
      %v3777 = vsel %vm727, %v3757, 0.0
      %3778 = vadd.xlane.f32.xlu0 %v3777
      %v3779 = vpop.xlane.xlu0 %3778
      %v3780 = vsel %vm727, %v3758, 0.0
      %3781 = vadd.xlane.f32.xlu0 %v3780
      %v3782 = vpop.xlane.xlu0 %3781
      %v3783 = vlaneseq
      %v3784 = vshrl.u32 %v3783, 7
      %v3785 = vsub.s32 0, %v3784
      %v3786 = vrot.slane %v3744, %v3785
      %v3787 = vmul.f32 %v3471, %v3786
      %v3788 = vmul.f32 %v3472, %v3786
      %v3789 = vmul.f32 %v3473, %v3786
      %v3790 = vmul.f32 %v3474, %v3786
      %v3791 = vmul.f32 %v3475, %v3786
      %v3792 = vmul.f32 %v3476, %v3786
      %v3793 = vmul.f32 %v3477, %v3786
      %v3794 = vmul.f32 %v3478, %v3786
      %v3795 = vsel %vm727, %v3787, 0.0
      %3796 = vadd.xlane.f32.xlu0 %v3795
      %v3797 = vpop.xlane.xlu0 %3796
      %v3798 = vsel %vm727, %v3788, 0.0
      %3799 = vadd.xlane.f32.xlu0 %v3798
      %v3800 = vpop.xlane.xlu0 %3799
      %v3801 = vsel %vm727, %v3789, 0.0
      %3802 = vadd.xlane.f32.xlu0 %v3801
      %v3803 = vpop.xlane.xlu0 %3802
      %v3804 = vsel %vm727, %v3790, 0.0
      %3805 = vadd.xlane.f32.xlu0 %v3804
      %v3806 = vpop.xlane.xlu0 %3805
      %v3807 = vsel %vm727, %v3791, 0.0
      %3808 = vadd.xlane.f32.xlu0 %v3807
      %v3809 = vpop.xlane.xlu0 %3808
      %v3810 = vsel %vm727, %v3792, 0.0
      %3811 = vadd.xlane.f32.xlu0 %v3810
      %v3812 = vpop.xlane.xlu0 %3811
      %v3813 = vsel %vm727, %v3793, 0.0
      %3814 = vadd.xlane.f32.xlu0 %v3813
      %v3815 = vpop.xlane.xlu0 %3814
      %v3816 = vsel %vm727, %v3794, 0.0
      %3817 = vadd.xlane.f32.xlu0 %v3816
      %v3818 = vpop.xlane.xlu0 %3817
      %v3819 = vlaneseq
      %v3820 = vshrl.u32 %v3819, 7
      %v3821 = vsub.s32 0, %v3820
      %v3822 = vrot.slane %v3742, %v3821
      %v3823 = vmul.f32 %v3471, %v3822
      %v3824 = vmul.f32 %v3472, %v3822
      %v3825 = vmul.f32 %v3473, %v3822
      %v3826 = vmul.f32 %v3474, %v3822
      %v3827 = vmul.f32 %v3475, %v3822
      %v3828 = vmul.f32 %v3476, %v3822
      %v3829 = vmul.f32 %v3477, %v3822
      %v3830 = vmul.f32 %v3478, %v3822
      %v3831 = vlaneseq
      %v3832 = vshrl.u32 %v3831, 7
      %v3833 = vsub.s32 0, %v3832
      %v3834 = vrot.slane %v3745, %v3833
      %v3835 = vmul.f32 %v3797, %v3834
      %v3836 = vmul.f32 %v3800, %v3834
      %v3837 = vmul.f32 %v3803, %v3834
      %v3838 = vmul.f32 %v3806, %v3834
      %v3839 = vmul.f32 %v3809, %v3834
      %v3840 = vmul.f32 %v3812, %v3834
      %v3841 = vmul.f32 %v3815, %v3834
      %v3842 = vmul.f32 %v3818, %v3834
      %v3843 = vadd.f32 %v3823, %v3835
      %v3844 = vadd.f32 %v3824, %v3836
      %v3845 = vadd.f32 %v3825, %v3837
      %v3846 = vadd.f32 %v3826, %v3838
      %v3847 = vadd.f32 %v3827, %v3839
      %v3848 = vadd.f32 %v3828, %v3840
      %v3849 = vadd.f32 %v3829, %v3841
      %v3850 = vadd.f32 %v3830, %v3842
      %v3851 = vlaneseq
      %v3852 = vshrl.u32 %v3851, 7
      %v3853 = vsub.s32 0, %v3852
      %v3854 = vrot.slane %v3743, %v3853
      %v3855 = vmul.f32 %v3761, %v3854
      %v3856 = vmul.f32 %v3764, %v3854
      %v3857 = vmul.f32 %v3767, %v3854
      %v3858 = vmul.f32 %v3770, %v3854
      %v3859 = vmul.f32 %v3773, %v3854
      %v3860 = vmul.f32 %v3776, %v3854
      %v3861 = vmul.f32 %v3779, %v3854
      %v3862 = vmul.f32 %v3782, %v3854
      %v3863 = vadd.f32 %v3843, %v3855
      %v3864 = vadd.f32 %v3844, %v3856
      %v3865 = vadd.f32 %v3845, %v3857
      %v3866 = vadd.f32 %v3846, %v3858
      %v3867 = vadd.f32 %v3847, %v3859
      %v3868 = vadd.f32 %v3848, %v3860
      %v3869 = vadd.f32 %v3849, %v3861
      %v3870 = vadd.f32 %v3850, %v3862
      %v3871 = vlaneseq
      %v3872 = vshrl.u32 %v3871, 7
      %v3873 = vsub.s32 0, %v3872
      %v3874 = vrot.slane %v3741, %v3873
      %v3875 = vmul.f32 %v3863, %v3874
      %v3876 = vmul.f32 %v3864, %v3874
      %v3877 = vmul.f32 %v3865, %v3874
      %v3878 = vmul.f32 %v3866, %v3874
      %v3879 = vmul.f32 %v3867, %v3874
      %v3880 = vmul.f32 %v3868, %v3874
      %v3881 = vmul.f32 %v3869, %v3874
      %v3882 = vmul.f32 %v3870, %v3874
      %v3883 = vsel %vm727, %v3875, 0.0
      %3884 = vadd.xlane.f32.xlu0 %v3883
      %v3885 = vpop.xlane.xlu0 %3884
      %v3886 = vsel %vm727, %v3876, 0.0
      %3887 = vadd.xlane.f32.xlu0 %v3886
      %v3888 = vpop.xlane.xlu0 %3887
      %v3889 = vsel %vm727, %v3877, 0.0
      %3890 = vadd.xlane.f32.xlu0 %v3889
      %v3891 = vpop.xlane.xlu0 %3890
      %v3892 = vsel %vm727, %v3878, 0.0
      %3893 = vadd.xlane.f32.xlu0 %v3892
      %v3894 = vpop.xlane.xlu0 %3893
      %v3895 = vsel %vm727, %v3879, 0.0
      %3896 = vadd.xlane.f32.xlu0 %v3895
      %v3897 = vpop.xlane.xlu0 %3896
      %v3898 = vsel %vm727, %v3880, 0.0
      %3899 = vadd.xlane.f32.xlu0 %v3898
      %v3900 = vpop.xlane.xlu0 %3899
      %v3901 = vsel %vm727, %v3881, 0.0
      %3902 = vadd.xlane.f32.xlu0 %v3901
      %v3903 = vpop.xlane.xlu0 %3902
      %v3904 = vsel %vm727, %v3882, 0.0
      %3905 = vadd.xlane.f32.xlu0 %v3904
      %v3906 = vpop.xlane.xlu0 %3905
      %v3907 = vmul.f32 %v3885, %v718
      %v3908 = vmul.f32 %v3888, %v719
      %v3909 = vmul.f32 %v3891, %v720
      %v3910 = vmul.f32 %v3894, %v721
      %v3911 = vmul.f32 %v3897, %v722
      %v3912 = vmul.f32 %v3900, %v723
      %v3913 = vmul.f32 %v3903, %v724
      %v3914 = vmul.f32 %v3906, %v725
      %v3915 = vsel %vm727, %v3907, 0.0
      %v3916 = vsel %vm727, %v3908, 0.0
      %v3917 = vadd.f32 %v3915, %v3916
      %v3918 = vsel %vm727, %v3909, 0.0
      %v3919 = vadd.f32 %v3917, %v3918
      %v3920 = vsel %vm727, %v3910, 0.0
      %v3921 = vadd.f32 %v3919, %v3920
      %v3922 = vsel %vm727, %v3911, 0.0
      %v3923 = vadd.f32 %v3921, %v3922
      %v3924 = vsel %vm727, %v3912, 0.0
      %v3925 = vadd.f32 %v3923, %v3924
      %v3926 = vsel %vm727, %v3913, 0.0
      %v3927 = vadd.f32 %v3925, %v3926
      %v3928 = vsel %vm727, %v3914, 0.0
      %v3929 = vadd.f32 %v3927, %v3928
      %v3930 = vrot.slane %v3929, 4
      %v3931 = vadd.f32 %v3929, %v3930
      %v3932 = vrot.slane %v3931, 2
      %v3933 = vadd.f32 %v3931, %v3932
      %v3934 = vrot.slane %v3933, 1
      %v3935 = vadd.f32 %v3933, %v3934
      %3936 = vst.msk [vmem:[#allocation17 + $0x7] sm:$0x1] %vm995, %v3935
      %3937 = vst.msk [vmem:[#allocation2] sm:$0xff] %vm727, %v3667
      %3938 = vst.msk [vmem:[#allocation2 + $0x8] sm:$0xff] %vm727, %v3668
      %3939 = vst.msk [vmem:[#allocation2 + $0x10] sm:$0xff] %vm727, %v3669
      %3940 = vst.msk [vmem:[#allocation2 + $0x18] sm:$0xff] %vm727, %v3670
      %3941 = vst.msk [vmem:[#allocation2 + $0x20] sm:$0xff] %vm727, %v3671
      %3942 = vst.msk [vmem:[#allocation2 + $0x28] sm:$0xff] %vm727, %v3672
      %3943 = vst.msk [vmem:[#allocation2 + $0x30] sm:$0xff] %vm727, %v3673
      %3944 = vst.msk [vmem:[#allocation2 + $0x38] sm:$0xff] %vm727, %v3674
      %3945 = vst.msk [vmem:[#allocation3] sm:$0xff] %vm727, %v3863
      %3946 = vst.msk [vmem:[#allocation3 + $0x8] sm:$0xff] %vm727, %v3864
      %3947 = vst.msk [vmem:[#allocation3 + $0x10] sm:$0xff] %vm727, %v3865
      %3948 = vst.msk [vmem:[#allocation3 + $0x18] sm:$0xff] %vm727, %v3866
      %3949 = vst.msk [vmem:[#allocation3 + $0x20] sm:$0xff] %vm727, %v3867
      %3950 = vst.msk [vmem:[#allocation3 + $0x28] sm:$0xff] %vm727, %v3868
      %3951 = vst.msk [vmem:[#allocation3 + $0x30] sm:$0xff] %vm727, %v3869
      %3952 = vst.msk [vmem:[#allocation3 + $0x38] sm:$0xff] %vm727, %v3870
      %v3953 = vld [vmem:[#allocation10] sm:$0xff]
      %v3954 = vsel %vm727, %v3953, 0.0
      %3955 = vadd.xlane.f32.xlu0 %v3954
      %v3956 = vpop.xlane.xlu0 %3955
      %v3957 = vrcp.pop 64.0
      %v3958 = vmul.f32 %v3956, %v3957
      %v3959 = vsub.f32 %v3953, %v3958
      %v3960 = vmul.f32 %v3959, %v3959
      %v3961 = vsel %vm727, %v3960, 0.0
      %3962 = vadd.xlane.f32.xlu0 %v3961
      %v3963 = vpop.xlane.xlu0 %3962
      %v3964 = vmul.f32 %v3963, %v3957
      %v3965 = vadd.f32 %v3964, 0.00064
      %v3966 = vrsqrt.pop %v3965
      %v3967 = vmul.f32 %v3959, %v3966
      %v3969 = vlaneseq
      %v3970 = vshrl.u32 %v3969, 7
      %v3971 = vsub.s32 0, %v3970
      %v3972 = vrot.slane %v688, %v3971
      %v3974 = vmul.f32 %v3967, %v3972
      %v3976 = vlaneseq
      %v3977 = vshrl.u32 %v3976, 7
      %v3978 = vsub.s32 0, %v3977
      %v3979 = vrot.slane %v689, %v3978
      %v3981 = vadd.f32 %v3974, %v3979
      %v3982 = vld [vmem:[#allocation4] sm:$0xff]
      %v3983 = vld [vmem:[#allocation6] sm:$0xff]
      %v3984 = vmul.f32 %v3982, %v3983
      %v3986 = vlaneseq
      %v3987 = vshrl.u32 %v3986, 7
      %v3988 = vsub.s32 0, %v3987
      %v3989 = vrot.slane %v690, %v3988
      %v3991 = vmul.f32 %v3984, %v3989
      %v3992 = vsel %vm727, %v3991, 0.0
      %3993 = vadd.xlane.f32.xlu0 %v3992
      %v3994 = vpop.xlane.xlu0 %3993
      %v3995 = vld [vmem:[#allocation9] sm:$0xff]
      %v3996 = vmul.f32 %v3994, %v3995
      %v3997 = vadd.f32 %v3981, %v3996
      %v3998 = vld [vmem:[#allocation17] sm:$0xff]
      %v3999 = vsel %vm727, %v3998, 0.0
      %4000 = vadd.xlane.f32.xlu0 %v3999
      %v4001 = vpop.xlane.xlu0 %4000
      %v4002 = vmul.f32 %v4001, %v3957
      %v4003 = vsub.f32 %v3998, %v4002
      %v4004 = vmul.f32 %v4003, %v4003
      %v4005 = vsel %vm727, %v4004, 0.0
      %4006 = vadd.xlane.f32.xlu0 %v4005
      %v4007 = vpop.xlane.xlu0 %4006
      %v4008 = vmul.f32 %v4007, %v3957
      %v4009 = vadd.f32 %v4008, 0.00064
      %v4010 = vrsqrt.pop %v4009
      %v4011 = vmul.f32 %v4003, %v4010
      %4012 = vrot.lane.b32.xlu0 %v3972, 64
      %v4013 = vpop.permute.xlu0 %4012
      %v4015 = vmul.f32 %v4011, %v4013
      %4016 = vrot.lane.b32.xlu0 %v3979, 64
      %v4017 = vpop.permute.xlu0 %4016
      %v4019 = vadd.f32 %v4015, %v4017
      %v4020 = vld [vmem:[#allocation11] sm:$0xff]
      %v4021 = vld [vmem:[#allocation13] sm:$0xff]
      %v4022 = vmul.f32 %v4020, %v4021
      %4023 = vrot.lane.b32.xlu0 %v3989, 64
      %v4024 = vpop.permute.xlu0 %4023
      %v4026 = vmul.f32 %v4022, %v4024
      %v4027 = vsel %vm727, %v4026, 0.0
      %4028 = vadd.xlane.f32.xlu0 %v4027
      %v4029 = vpop.xlane.xlu0 %4028
      %v4030 = vld [vmem:[#allocation16] sm:$0xff]
      %v4031 = vmul.f32 %v4029, %v4030
      %v4032 = vadd.f32 %v4019, %v4031
      %4034 = vrot.lane.b32.xlu0 %v4032, 64
      %v4035 = vpop.permute.xlu0 %4034
      %v4037 = vsel %vm727, %v3997, %v4035
      %4038 = vst [vmem:[%s637] sm:$0xff] %v4037
      %p4039 = scmp.lt.s32.totalorder %s26, 1
      %s4040 = scalar_select %p4039, %s26, 1
      %p4041 = scmp.lt.s32.totalorder %s28, 0
      %s4042 = scalar_select %p4041, %s28, 0
      %p4043 = scmp.lt.s32.totalorder %s27, 0
      %s4044 = scalar_select %p4043, %s27, 0
      %s4045 = sadd.s32 %s4044, %s4042
      %s4046 = sadd.s32 %s4045, %s4040
      %s4047 = smul.addr %s4046, 8
      %s4048 = scalar_lea.vmem %s10, %s4047
      // Predicated region
      $region65: #{rwkv_forward.30} parent=59 // pred_check
        %p4049 = pneg %p342
      $region66: #{rwkv_forward.30} parent=59 // pred_check_branch
        %4051 = sbr.rel (%p4049) target = $region68
      $region67: #{rwkv_forward.30} parent=59 // pred_region
        _
      $region68: #{rwkv_forward.30} parent=59 // pred_fallthru
        _
    $region60: #{rwkv_forward.30} parent=5 // pred_fallthru
      _
    %p4052 = scmp.le.s32.totalorder 2, %s16
    // Predicated region
    $region69: #{rwkv_forward.30} parent=5 // pred_check
      %p4053 = pneg %p4052
    $region70: #{rwkv_forward.30} parent=5 // pred_check_branch
      %4055 = sbr.rel (%p4053) target = $region72
    $region71: #{rwkv_forward.30} parent=5 // pred_region
      %s4056 = ssub.s32 %s16, 2
      // Predicated region
      $region73: #{rwkv_forward.30} parent=71 // pred_check
        %p4057 = pneg %p348
      $region74: #{rwkv_forward.30} parent=71 // pred_check_branch
        %4059 = sbr.rel (%p4057) target = $region76
      $region75: #{rwkv_forward.30} parent=71 // pred_region
        %p4060 = scmp.lt.s32.totalorder %s29, 1
        %s4061 = scalar_select %p4060, %s29, 1
        %p4062 = scmp.lt.s32.totalorder %s31, 0
        %s4063 = scalar_select %p4062, %s31, 0
        %p4064 = scmp.lt.s32.totalorder %s30, 0
        %s4065 = scalar_select %p4064, %s30, 0
        %s4066 = sadd.s32 %s4065, %s4063
        %s4067 = sadd.s32 %s4066, %s4061
        %s4068 = smul.addr %s4067, 8
        %s4069 = scalar_lea.vmem %s10, %s4068
      $region76: #{rwkv_forward.30} parent=71 // pred_fallthru
        _
    $region72: #{rwkv_forward.30} parent=5 // pred_fallthru
      _
  $region6: #{rwkv_forward.30} parent=0 // loop_footer
    %s20 = sadd.s32 1, %s16
  $region7: #{rwkv_forward.30} parent=0 // loop_footer_branch
    %15 = sbr.rel target = $region3
  $region8: #{rwkv_forward.30} parent=0 // loop_exit
    _

</llo_original>
